<compile_context>
chip_gen: v5e
topology: v5e:2x2
jax: 0.10.0
libtpu: 0.0.40
codegen_flags: <defaults>
</compile_context>

<pallas_src>
import jax
import jax.numpy as jnp
from jax.experimental import pallas as pl
from jax.experimental.pallas import tpu as pltpu

# ---------------------------------------------------------------- config ----
NUM_CLASSES = 2                      # classifier outputs num_classes - 1 = 1
EMBED_DIMS = [8, 16, 32, 64]         # logical stand-in encoder.embed_dims
IN_CHANNELS = 3
LN_EPS = 1e-5                        # torch.nn.LayerNorm default
C_PAD = 128                          # lane-dense padded channel width
CLS_PAD = 128                        # lane-dense padded classifier output width
MAX_ROW_TILE = 1024                  # token rows per grid step (review: 512-2048)
VMEM_LIMIT = 32 * 1024 * 1024        # safe on v5e / v6e / v7x


def _round_up(n, m):
    return ((n + m - 1) // m) * m


HID_PADS = [max(128, _round_up(4 * c, 128)) for c in EMBED_DIMS]  # [128,128,128,256]

WEIGHT_KEYS = ("pe_w", "pe_b", "ln1_g", "ln1_b", "mlp_g", "mlp_b",
               "w1", "b1", "w2", "b2", "ln2_g", "ln2_b")


# ----------------------------------------------------------- fused kernel ----
def _make_stage_kernel(c_real, head):
    """One fused stage: patch-embed -> LN1 -> residual MLP -> LN2 [-> GAP+cls]."""
    inv_c = 1.0 / float(c_real)

    def _ln(x, g, b):
        # Single-pass moments over the *logical* channel count; padded lanes of
        # x are exactly zero and g/b are zero there, so this matches the
        # unpadded model (var clamped >= 0, all in f32).
        mu = jnp.sum(x, axis=-1, keepdims=True) * inv_c
        ex2 = jnp.sum(x * x, axis=-1, keepdims=True) * inv_c
        var = jnp.maximum(ex2 - mu * mu, 0.0)
        return (x - mu) * jax.lax.rsqrt(var + LN_EPS) * g + b

    def kernel(p_ref, pe_w, pe_b, g1, b1, gm, bm, w1, bb1, w2, bb2, g2, b2, *rest):
        # patch embed (bf16 MXU, f32 accumulate) + LN1
        x = jnp.dot(p_ref[...], pe_w[...],
                    preferred_element_type=jnp.float32) + pe_b[...]
        x = _ln(x, g1[...], b1[...])

        # residual MLP block: x + fc2(gelu(fc1(LN(x))))
        h = _ln(x, gm[...], bm[...])
        h = jnp.dot(h.astype(jnp.bfloat16), w1[...],
                    preferred_element_type=jnp.float32) + bb1[...]
        # TODO(synk): torch nn.GELU uses erf; the tanh approximation is kept to
        #             guarantee Mosaic lowering on all TPU generations.
        h = jax.nn.gelu(h)
        h = jnp.dot(h.astype(jnp.bfloat16), w2[...],
                    preferred_element_type=jnp.float32) + bb2[...]
        x = _ln(x + h, g2[...], b2[...])

        if head is None:
            out_ref, = rest
            out_ref[...] = x.astype(out_ref.dtype)
        else:
            # fused GAP (adaptive_avg_pool2d to 1x1) + bias-free 1x1-conv
            # classifier, all in f32.  Tokens are batch-major, so GAP for batch
            # b is a masked row-sum over its contiguous npb rows.
            bsz, npb = head
            cls_w_ref, cls_ref = rest
            inv_npb = 1.0 / float(npb)
            rows = x.shape[0]
            row_id = jax.lax.broadcasted_iota(jnp.int32, (rows, 1), 0)
            for b in range(bsz):                      # bsz is a static Python int
                sel = ((row_id >= b * npb) &
                       (row_id < (b + 1) * npb)).astype(jnp.float32)
                pooled = jnp.sum(x * sel, axis=0, keepdims=True) * inv_npb
                cls_ref[pl.ds(b, 1), :] = jnp.dot(
                    pooled, cls_w_ref[...], preferred_element_type=jnp.float32)

    return kernel


# --------------------------------------------------------------- launcher ----
def _pick_row_tile(rows, max_tile, align=8):
    """Largest exact-divisor tile <= max_tile, preferring >= 2 tiles (megacore)."""
    if rows <= 2 * align:
        return rows
    cap = min(max_tile, max(align, rows // 2))
    t = max(align, (cap // align) * align)
    while t > align and rows % t:
        t -= align
    return t if rows % t == 0 else rows


def _full_spec(a):
    nd = a.ndim
    return pl.BlockSpec(a.shape, lambda r, _nd=nd: (0,) * _nd)


def _run_stage(p, st, c_real, *, head=None, cls_w=None):
    """One fused encoder stage as a single row-tiled pallas_call."""
    n, k = p.shape
    if head is None:
        t = _pick_row_tile(n, MAX_ROW_TILE)
        dims = ("parallel",)            # megacore-shardable row tiles
    else:
        t = n                           # stage-4 token count is tiny; one tile
        dims = ("arbitrary",)
    grid = (n // t,)

    kernel = _make_stage_kernel(c_real, head)

    ins = [p] + [st[kk] for kk in WEIGHT_KEYS]
    in_specs = [pl.BlockSpec((t, k), lambda r: (r, 0))]
    in_specs += [_full_spec(st[kk]) for kk in WEIGHT_KEYS]

    if head is None:
        out_shape = jax.ShapeDtypeStruct((n, C_PAD), jnp.bfloat16)
        out_specs = pl.BlockSpec((t, C_PAD), lambda r: (r, 0))
    else:
        ins.append(cls_w)
        in_specs.append(_full_spec(cls_w))
        out_shape = jax.ShapeDtypeStruct((head[0], CLS_PAD), jnp.float32)
        out_specs = pl.BlockSpec((head[0], CLS_PAD), lambda r: (0, 0))

    return pl.pallas_call(
        kernel,
        out_shape=out_shape,
        grid=grid,
        in_specs=in_specs,
        out_specs=out_specs,
        compiler_params=pltpu.CompilerParams(
            dimension_semantics=dims,
            vmem_limit_bytes=VMEM_LIMIT,
        ),
    )(*ins)


# ------------------------------------------------------------------- glue ----
def _stage1_patches(diff_nchw):
    """|x1-x2| (NCHW) -> stage-1 4x4 patch slab in Morton token order, bf16.

    Token order per batch is (I, J, a_y, a_x, b_y, b_x, c_y, c_x) over the
    stage-1 grid (h1, w1) with i1 = ((I*2+a_y)*2+b_y)*2+c_y (same for j1), so
    every later 2x2 grouping is 4 consecutive rows => a free XLA reshape.
    Per-token feature order is (py, px, ch), matching pe_w's (s, s, cin) rows.
    """
    B, C, H, W = diff_nchw.shape
    h1, w1 = H // 4, W // 4
    p = diff_nchw.reshape(B, C, h1 // 8, 2, 2, 2, 4, w1 // 8, 2, 2, 2, 4)
    #                     0  1     2    3  4  5  6     7    8  9 10  11
    p = p.transpose(0, 2, 7, 3, 8, 4, 9, 5, 10, 6, 11, 1)
    return p.reshape(B * h1 * w1, 4 * 4 * C).astype(jnp.bfloat16)


# --------------------------------------------------------------- parameters --
def _padded_gamma(c_log):
    return jnp.zeros((1, C_PAD), jnp.float32).at[:, :c_log].set(1.0)


def _dense_weight(key, din_log, din_pad, dout_log, dout_pad, scale=0.02):
    w = scale * jax.random.normal(key, (din_log, dout_log), jnp.float32)
    W = jnp.zeros((din_pad, dout_pad), jnp.float32).at[:din_log, :dout_log].set(w)
    return W.astype(jnp.bfloat16)


def _patch_weight(key, s, cin_log, cin_pad, cout_log, scale=0.02):
    # (s, s, cin, cout) -> (s*s*cin_pad, C_PAD); row order (dy, dx, cin)
    w = scale * jax.random.normal(key, (s, s, cin_log, cout_log), jnp.float32)
    W = jnp.zeros((s, s, cin_pad, C_PAD), jnp.float32)
    W = W.at[:, :, :cin_log, :cout_log].set(w)
    return W.reshape(s * s * cin_pad, C_PAD).astype(jnp.bfloat16)


def init_params(key):
    """Array-only pytree (static strides / dims live in module constants)."""
    stages = []
    cin_log, cin_pad, s = IN_CHANNELS, IN_CHANNELS, 4   # stage 1: 4x4 on raw image
    k = key
    for i, cout in enumerate(EMBED_DIMS):
        k, k_pe, k_w1, k_w2 = jax.random.split(k, 4)
        hid_log, hid_pad = 4 * cout, HID_PADS[i]
        stages.append(dict(
            pe_w=_patch_weight(k_pe, s, cin_log, cin_pad, cout),
            pe_b=jnp.zeros((1, C_PAD), jnp.float32),
            ln1_g=_padded_gamma(cout),
            ln1_b=jnp.zeros((1, C_PAD), jnp.float32),
            mlp_g=_padded_gamma(cout),
            mlp_b=jnp.zeros((1, C_PAD), jnp.float32),
            w1=_dense_weight(k_w1, cout, C_PAD, hid_log, hid_pad),
            b1=jnp.zeros((1, hid_pad), jnp.float32),
            w2=_dense_weight(k_w2, hid_log, hid_pad, cout, C_PAD),
            b2=jnp.zeros((1, C_PAD), jnp.float32),
            ln2_g=_padded_gamma(cout),
            ln2_b=jnp.zeros((1, C_PAD), jnp.float32),
        ))
        cin_log, cin_pad, s = cout, C_PAD, 2            # later stages: 2x2 on tokens
    k, k_cls = jax.random.split(k)
    # classifier: Conv2d(in_channels[3], num_classes-1, kernel_size=1, bias=False)
    # kept in f32 so the GAP'd features are classified in f32 (torch fidelity).
    w = 0.02 * jax.random.normal(k_cls, (EMBED_DIMS[3], NUM_CLASSES - 1), jnp.float32)
    cls_w = jnp.zeros((C_PAD, CLS_PAD), jnp.float32)
    cls_w = cls_w.at[:EMBED_DIMS[3], :NUM_CLASSES - 1].set(w)
    return {"stages": stages, "cls_w": cls_w}


# ----------------------------------------------------------------- forward ----
def transwcd_single_forward(params, x1_nchw, x2_nchw):
    """Mirrors TransWCD_single.forward(x1, x2, cam_only=False), pooling='gap'."""
    B, _, H, W = x1_nchw.shape
    assert H % 32 == 0 and W % 32 == 0, "H, W must be multiples of 32 (stride of _c4)"

    # x = |x1 - x2| once in XLA, then bf16 Morton-ordered patch slab (stage 1).
    diff = jnp.abs(x1_nchw - x2_nchw)
    p = _stage1_patches(diff)                                   # (B*h1*w1, 48) bf16

    tok = _run_stage(p, params["stages"][0], EMBED_DIMS[0])     # (rows1, 128) bf16
    for i in (1, 2):
        # 2x2 patch grouping is a free row-major reshape thanks to Morton order.
        tok = _run_stage(tok.reshape(-1, 4 * C_PAD),
                         params["stages"][i], EMBED_DIMS[i])

    # stage 4 fused with GAP + 1x1-conv classifier (no _c4 HBM round trip).
    npb = (H // 32) * (W // 32)
    cls_pad = _run_stage(tok.reshape(-1, 4 * C_PAD),
                         params["stages"][3], EMBED_DIMS[3],
                         head=(B, npb), cls_w=params["cls_w"])

    # nn.Dropout2d(0.1) on _c4 is eval-mode identity and does not affect cls_x4.
    return cls_pad[:, : NUM_CLASSES - 1]


# -------------------------------------------------------------------- main ----
if __name__ == "__main__":
    key = jax.random.PRNGKey(0)
    k1, k2 = jax.random.split(key)

    # small NCHW inputs; H, W must be multiples of 32 (feature stride of _c4)
    x1 = jax.random.normal(k1, (2, 3, 64, 64), jnp.float32)
    x2 = jax.random.normal(k2, (2, 3, 64, 64), jnp.float32)

    params = init_params(jax.random.PRNGKey(42))

    cls = jax.jit(transwcd_single_forward)(params, x1, x2)
    cls = jax.block_until_ready(cls)

    assert cls.shape == (2, NUM_CLASSES - 1), cls.shape
    assert bool(jnp.all(jnp.isfinite(cls)))
    print("KERNEL_OK")
</pallas_src>

<mosaic_0001>
module attributes {stable_mosaic.version = 11 : i64} {
  func.func @kernel(%arg0: i32, %arg1: memref<256x48xbf16, #tpu.memory_space<vmem>>, %arg2: memref<48x128xbf16, #tpu.memory_space<vmem>>, %arg3: memref<1x128xf32, #tpu.memory_space<vmem>>, %arg4: memref<1x128xf32, #tpu.memory_space<vmem>>, %arg5: memref<1x128xf32, #tpu.memory_space<vmem>>, %arg6: memref<1x128xf32, #tpu.memory_space<vmem>>, %arg7: memref<1x128xf32, #tpu.memory_space<vmem>>, %arg8: memref<128x128xbf16, #tpu.memory_space<vmem>>, %arg9: memref<1x128xf32, #tpu.memory_space<vmem>>, %arg10: memref<128x128xbf16, #tpu.memory_space<vmem>>, %arg11: memref<1x128xf32, #tpu.memory_space<vmem>>, %arg12: memref<1x128xf32, #tpu.memory_space<vmem>>, %arg13: memref<1x128xf32, #tpu.memory_space<vmem>>, %arg14: memref<256x128xbf16, #tpu.memory_space<vmem>>) attributes {dimension_semantics = [#tpu.dimension_semantics<parallel>], iteration_bounds = array<i64: 2>, scalar_prefetch = 0 : i64, scratch_operands = 0 : i64, tpu.core_type = #tpu.core_type<tc>, window_params = [{transform_indices = @transform_0, window_bounds = array<i64: 256, 48>}, {pipeline_mode = #tpu.pipeline_mode<synchronous>, transform_indices = @transform_1, window_bounds = array<i64: 48, 128>}, {pipeline_mode = #tpu.pipeline_mode<synchronous>, transform_indices = @transform_2, window_bounds = array<i64: 1, 128>}, {pipeline_mode = #tpu.pipeline_mode<synchronous>, transform_indices = @transform_3, window_bounds = array<i64: 1, 128>}, {pipeline_mode = #tpu.pipeline_mode<synchronous>, transform_indices = @transform_4, window_bounds = array<i64: 1, 128>}, {pipeline_mode = #tpu.pipeline_mode<synchronous>, transform_indices = @transform_5, window_bounds = array<i64: 1, 128>}, {pipeline_mode = #tpu.pipeline_mode<synchronous>, transform_indices = @transform_6, window_bounds = array<i64: 1, 128>}, {pipeline_mode = #tpu.pipeline_mode<synchronous>, transform_indices = @transform_7, window_bounds = array<i64: 128, 128>}, {pipeline_mode = #tpu.pipeline_mode<synchronous>, transform_indices = @transform_8, window_bounds = array<i64: 1, 128>}, {pipeline_mode = #tpu.pipeline_mode<synchronous>, transform_indices = @transform_9, window_bounds = array<i64: 128, 128>}, {pipeline_mode = #tpu.pipeline_mode<synchronous>, transform_indices = @transform_10, window_bounds = array<i64: 1, 128>}, {pipeline_mode = #tpu.pipeline_mode<synchronous>, transform_indices = @transform_11, window_bounds = array<i64: 1, 128>}, {pipeline_mode = #tpu.pipeline_mode<synchronous>, transform_indices = @transform_12, window_bounds = array<i64: 1, 128>}, {transform_indices = @transform_13, window_bounds = array<i64: 256, 128>}]} {
    %c0 = arith.constant 0 : index
    %c0_0 = arith.constant 0 : index
    %0 = vector.load %arg1[%c0, %c0_0] : memref<256x48xbf16, #tpu.memory_space<vmem>>, vector<256x48xbf16>
    %c0_1 = arith.constant 0 : index
    %c0_2 = arith.constant 0 : index
    %1 = vector.load %arg2[%c0_1, %c0_2] : memref<48x128xbf16, #tpu.memory_space<vmem>>, vector<48x128xbf16>
    %cst = arith.constant dense<0.000000e+00> : vector<256x128xf32>
    %2 = tpu.matmul %0, %1, %cst {dimension_numbers = #tpu.dot_dimension_numbers<[1], [0], [0], [1], [0, 0, 1, 1], [], []>} : vector<256x48xbf16>, vector<48x128xbf16>, vector<256x128xf32> -> vector<256x128xf32>
    %c0_3 = arith.constant 0 : index
    %c0_4 = arith.constant 0 : index
    %3 = vector.load %arg3[%c0_3, %c0_4] : memref<1x128xf32, #tpu.memory_space<vmem>>, vector<1x128xf32>
    %4 = vector.broadcast %3 : vector<1x128xf32> to vector<256x128xf32>
    %5 = arith.addf %2, %4 : vector<256x128xf32>
    %c0_5 = arith.constant 0 : index
    %c0_6 = arith.constant 0 : index
    %6 = vector.load %arg4[%c0_5, %c0_6] : memref<1x128xf32, #tpu.memory_space<vmem>>, vector<1x128xf32>
    %c0_7 = arith.constant 0 : index
    %c0_8 = arith.constant 0 : index
    %7 = vector.load %arg5[%c0_7, %c0_8] : memref<1x128xf32, #tpu.memory_space<vmem>>, vector<1x128xf32>
    %cst_9 = arith.constant dense<0.000000e+00> : vector<256xf32>
    %8 = vector.multi_reduction <add>, %5, %cst_9 [1] : vector<256x128xf32> to vector<256xf32>
    %9 = vector.shape_cast %8 : vector<256xf32> to vector<256x1xf32>
    %cst_10 = arith.constant 1.250000e-01 : f32
    %10 = vector.broadcast %cst_10 : f32 to vector<256x1xf32>
    %11 = arith.mulf %9, %10 : vector<256x1xf32>
    %12 = arith.mulf %5, %5 : vector<256x128xf32>
    %cst_11 = arith.constant dense<0.000000e+00> : vector<256xf32>
    %13 = vector.multi_reduction <add>, %12, %cst_11 [1] : vector<256x128xf32> to vector<256xf32>
    %14 = vector.shape_cast %13 : vector<256xf32> to vector<256x1xf32>
    %cst_12 = arith.constant 1.250000e-01 : f32
    %15 = vector.broadcast %cst_12 : f32 to vector<256x1xf32>
    %16 = arith.mulf %14, %15 : vector<256x1xf32>
    %17 = arith.mulf %11, %11 : vector<256x1xf32>
    %18 = arith.subf %16, %17 : vector<256x1xf32>
    %cst_13 = arith.constant 0.000000e+00 : f32
    %19 = vector.broadcast %cst_13 : f32 to vector<256x1xf32>
    %20 = arith.maximumf %18, %19 : vector<256x1xf32>
    %21 = vector.broadcast %11 : vector<256x1xf32> to vector<256x128xf32>
    %22 = arith.subf %5, %21 : vector<256x128xf32>
    %cst_14 = arith.constant 9.99999974E-6 : f32
    %23 = vector.broadcast %cst_14 : f32 to vector<256x1xf32>
    %24 = arith.addf %20, %23 : vector<256x1xf32>
    %25 = math.rsqrt %24 : vector<256x1xf32>
    %26 = vector.broadcast %25 : vector<256x1xf32> to vector<256x128xf32>
    %27 = arith.mulf %22, %26 : vector<256x128xf32>
    %28 = vector.broadcast %6 : vector<1x128xf32> to vector<256x128xf32>
    %29 = arith.mulf %27, %28 : vector<256x128xf32>
    %30 = vector.broadcast %7 : vector<1x128xf32> to vector<256x128xf32>
    %31 = arith.addf %29, %30 : vector<256x128xf32>
    %c0_15 = arith.constant 0 : index
    %c0_16 = arith.constant 0 : index
    %32 = vector.load %arg6[%c0_15, %c0_16] : memref<1x128xf32, #tpu.memory_space<vmem>>, vector<1x128xf32>
    %c0_17 = arith.constant 0 : index
    %c0_18 = arith.constant 0 : index
    %33 = vector.load %arg7[%c0_17, %c0_18] : memref<1x128xf32, #tpu.memory_space<vmem>>, vector<1x128xf32>
    %cst_19 = arith.constant dense<0.000000e+00> : vector<256xf32>
    %34 = vector.multi_reduction <add>, %31, %cst_19 [1] : vector<256x128xf32> to vector<256xf32>
    %35 = vector.shape_cast %34 : vector<256xf32> to vector<256x1xf32>
    %cst_20 = arith.constant 1.250000e-01 : f32
    %36 = vector.broadcast %cst_20 : f32 to vector<256x1xf32>
    %37 = arith.mulf %35, %36 : vector<256x1xf32>
    %38 = arith.mulf %31, %31 : vector<256x128xf32>
    %cst_21 = arith.constant dense<0.000000e+00> : vector<256xf32>
    %39 = vector.multi_reduction <add>, %38, %cst_21 [1] : vector<256x128xf32> to vector<256xf32>
    %40 = vector.shape_cast %39 : vector<256xf32> to vector<256x1xf32>
    %cst_22 = arith.constant 1.250000e-01 : f32
    %41 = vector.broadcast %cst_22 : f32 to vector<256x1xf32>
    %42 = arith.mulf %40, %41 : vector<256x1xf32>
    %43 = arith.mulf %37, %37 : vector<256x1xf32>
    %44 = arith.subf %42, %43 : vector<256x1xf32>
    %cst_23 = arith.constant 0.000000e+00 : f32
    %45 = vector.broadcast %cst_23 : f32 to vector<256x1xf32>
    %46 = arith.maximumf %44, %45 : vector<256x1xf32>
    %47 = vector.broadcast %37 : vector<256x1xf32> to vector<256x128xf32>
    %48 = arith.subf %31, %47 : vector<256x128xf32>
    %cst_24 = arith.constant 9.99999974E-6 : f32
    %49 = vector.broadcast %cst_24 : f32 to vector<256x1xf32>
    %50 = arith.addf %46, %49 : vector<256x1xf32>
    %51 = math.rsqrt %50 : vector<256x1xf32>
    %52 = vector.broadcast %51 : vector<256x1xf32> to vector<256x128xf32>
    %53 = arith.mulf %48, %52 : vector<256x128xf32>
    %54 = vector.broadcast %32 : vector<1x128xf32> to vector<256x128xf32>
    %55 = arith.mulf %53, %54 : vector<256x128xf32>
    %56 = vector.broadcast %33 : vector<1x128xf32> to vector<256x128xf32>
    %57 = arith.addf %55, %56 : vector<256x128xf32>
    %58 = arith.truncf %57 : vector<256x128xf32> to vector<256x128xbf16>
    %c0_25 = arith.constant 0 : index
    %c0_26 = arith.constant 0 : index
    %59 = vector.load %arg8[%c0_25, %c0_26] : memref<128x128xbf16, #tpu.memory_space<vmem>>, vector<128x128xbf16>
    %cst_27 = arith.constant dense<0.000000e+00> : vector<256x128xf32>
    %60 = tpu.matmul %58, %59, %cst_27 {dimension_numbers = #tpu.dot_dimension_numbers<[1], [0], [0], [1], [0, 0, 1, 1], [], []>} : vector<256x128xbf16>, vector<128x128xbf16>, vector<256x128xf32> -> vector<256x128xf32>
    %c0_28 = arith.constant 0 : index
    %c0_29 = arith.constant 0 : index
    %61 = vector.load %arg9[%c0_28, %c0_29] : memref<1x128xf32, #tpu.memory_space<vmem>>, vector<1x128xf32>
    %62 = vector.broadcast %61 : vector<1x128xf32> to vector<256x128xf32>
    %63 = arith.addf %60, %62 : vector<256x128xf32>
    %64 = arith.mulf %63, %63 : vector<256x128xf32>
    %65 = arith.mulf %63, %64 : vector<256x128xf32>
    %cst_30 = arith.constant 4.471500e-02 : f32
    %66 = vector.broadcast %cst_30 : f32 to vector<256x128xf32>
    %67 = arith.mulf %66, %65 : vector<256x128xf32>
    %68 = arith.addf %63, %67 : vector<256x128xf32>
    %cst_31 = arith.constant 0.797884583 : f32
    %69 = vector.broadcast %cst_31 : f32 to vector<256x128xf32>
    %70 = arith.mulf %69, %68 : vector<256x128xf32>
    %71 = math.tanh %70 : vector<256x128xf32>
    %cst_32 = arith.constant 1.000000e+00 : f32
    %72 = vector.broadcast %cst_32 : f32 to vector<256x128xf32>
    %73 = arith.addf %72, %71 : vector<256x128xf32>
    %cst_33 = arith.constant 5.000000e-01 : f32
    %74 = vector.broadcast %cst_33 : f32 to vector<256x128xf32>
    %75 = arith.mulf %74, %73 : vector<256x128xf32>
    %76 = arith.mulf %63, %75 : vector<256x128xf32>
    %77 = arith.truncf %76 : vector<256x128xf32> to vector<256x128xbf16>
    %c0_34 = arith.constant 0 : index
    %c0_35 = arith.constant 0 : index
    %78 = vector.load %arg10[%c0_34, %c0_35] : memref<128x128xbf16, #tpu.memory_space<vmem>>, vector<128x128xbf16>
    %cst_36 = arith.constant dense<0.000000e+00> : vector<256x128xf32>
    %79 = tpu.matmul %77, %78, %cst_36 {dimension_numbers = #tpu.dot_dimension_numbers<[1], [0], [0], [1], [0, 0, 1, 1], [], []>} : vector<256x128xbf16>, vector<128x128xbf16>, vector<256x128xf32> -> vector<256x128xf32>
    %c0_37 = arith.constant 0 : index
    %c0_38 = arith.constant 0 : index
    %80 = vector.load %arg11[%c0_37, %c0_38] : memref<1x128xf32, #tpu.memory_space<vmem>>, vector<1x128xf32>
    %81 = vector.broadcast %80 : vector<1x128xf32> to vector<256x128xf32>
    %82 = arith.addf %79, %81 : vector<256x128xf32>
    %83 = arith.addf %31, %82 : vector<256x128xf32>
    %c0_39 = arith.constant 0 : index
    %c0_40 = arith.constant 0 : index
    %84 = vector.load %arg12[%c0_39, %c0_40] : memref<1x128xf32, #tpu.memory_space<vmem>>, vector<1x128xf32>
    %c0_41 = arith.constant 0 : index
    %c0_42 = arith.constant 0 : index
    %85 = vector.load %arg13[%c0_41, %c0_42] : memref<1x128xf32, #tpu.memory_space<vmem>>, vector<1x128xf32>
    %cst_43 = arith.constant dense<0.000000e+00> : vector<256xf32>
    %86 = vector.multi_reduction <add>, %83, %cst_43 [1] : vector<256x128xf32> to vector<256xf32>
    %87 = vector.shape_cast %86 : vector<256xf32> to vector<256x1xf32>
    %cst_44 = arith.constant 1.250000e-01 : f32
    %88 = vector.broadcast %cst_44 : f32 to vector<256x1xf32>
    %89 = arith.mulf %87, %88 : vector<256x1xf32>
    %90 = arith.mulf %83, %83 : vector<256x128xf32>
    %cst_45 = arith.constant dense<0.000000e+00> : vector<256xf32>
    %91 = vector.multi_reduction <add>, %90, %cst_45 [1] : vector<256x128xf32> to vector<256xf32>
    %92 = vector.shape_cast %91 : vector<256xf32> to vector<256x1xf32>
    %cst_46 = arith.constant 1.250000e-01 : f32
    %93 = vector.broadcast %cst_46 : f32 to vector<256x1xf32>
    %94 = arith.mulf %92, %93 : vector<256x1xf32>
    %95 = arith.mulf %89, %89 : vector<256x1xf32>
    %96 = arith.subf %94, %95 : vector<256x1xf32>
    %cst_47 = arith.constant 0.000000e+00 : f32
    %97 = vector.broadcast %cst_47 : f32 to vector<256x1xf32>
    %98 = arith.maximumf %96, %97 : vector<256x1xf32>
    %99 = vector.broadcast %89 : vector<256x1xf32> to vector<256x128xf32>
    %100 = arith.subf %83, %99 : vector<256x128xf32>
    %cst_48 = arith.constant 9.99999974E-6 : f32
    %101 = vector.broadcast %cst_48 : f32 to vector<256x1xf32>
    %102 = arith.addf %98, %101 : vector<256x1xf32>
    %103 = math.rsqrt %102 : vector<256x1xf32>
    %104 = vector.broadcast %103 : vector<256x1xf32> to vector<256x128xf32>
    %105 = arith.mulf %100, %104 : vector<256x128xf32>
    %106 = vector.broadcast %84 : vector<1x128xf32> to vector<256x128xf32>
    %107 = arith.mulf %105, %106 : vector<256x128xf32>
    %108 = vector.broadcast %85 : vector<1x128xf32> to vector<256x128xf32>
    %109 = arith.addf %107, %108 : vector<256x128xf32>
    %110 = arith.truncf %109 : vector<256x128xf32> to vector<256x128xbf16>
    %c0_49 = arith.constant 0 : index
    %c0_50 = arith.constant 0 : index
    %111 = vector.load %arg14[%c0_49, %c0_50] : memref<256x128xbf16, #tpu.memory_space<vmem>>, vector<256x128xbf16>
    tpu.vector_store %arg14[%c0_49, %c0_50], %110 {strides = array<i32>} : memref<256x128xbf16, #tpu.memory_space<vmem>>, vector<256x128xbf16>,
    return
  }
  func.func @transform_0(%arg0: i32) -> (i32, i32) {
    %c0_i32 = arith.constant 0 : i32
    %c0_i32_0 = arith.constant 0 : i32
    return %arg0, %c0_i32 : i32, i32
  }
  func.func @transform_1(%arg0: i32) -> (i32, i32) {
    %c0_i32 = arith.constant 0 : i32
    %c0_i32_0 = arith.constant 0 : i32
    %c0_i32_1 = arith.constant 0 : i32
    return %c0_i32, %c0_i32_0 : i32, i32
  }
  func.func @transform_2(%arg0: i32) -> (i32, i32) {
    %c0_i32 = arith.constant 0 : i32
    %c0_i32_0 = arith.constant 0 : i32
    %c0_i32_1 = arith.constant 0 : i32
    return %c0_i32, %c0_i32_0 : i32, i32
  }
  func.func @transform_3(%arg0: i32) -> (i32, i32) {
    %c0_i32 = arith.constant 0 : i32
    %c0_i32_0 = arith.constant 0 : i32
    %c0_i32_1 = arith.constant 0 : i32
    return %c0_i32, %c0_i32_0 : i32, i32
  }
  func.func @transform_4(%arg0: i32) -> (i32, i32) {
    %c0_i32 = arith.constant 0 : i32
    %c0_i32_0 = arith.constant 0 : i32
    %c0_i32_1 = arith.constant 0 : i32
    return %c0_i32, %c0_i32_0 : i32, i32
  }
  func.func @transform_5(%arg0: i32) -> (i32, i32) {
    %c0_i32 = arith.constant 0 : i32
    %c0_i32_0 = arith.constant 0 : i32
    %c0_i32_1 = arith.constant 0 : i32
    return %c0_i32, %c0_i32_0 : i32, i32
  }
  func.func @transform_6(%arg0: i32) -> (i32, i32) {
    %c0_i32 = arith.constant 0 : i32
    %c0_i32_0 = arith.constant 0 : i32
    %c0_i32_1 = arith.constant 0 : i32
    return %c0_i32, %c0_i32_0 : i32, i32
  }
  func.func @transform_7(%arg0: i32) -> (i32, i32) {
    %c0_i32 = arith.constant 0 : i32
    %c0_i32_0 = arith.constant 0 : i32
    %c0_i32_1 = arith.constant 0 : i32
    return %c0_i32, %c0_i32_0 : i32, i32
  }
  func.func @transform_8(%arg0: i32) -> (i32, i32) {
    %c0_i32 = arith.constant 0 : i32
    %c0_i32_0 = arith.constant 0 : i32
    %c0_i32_1 = arith.constant 0 : i32
    return %c0_i32, %c0_i32_0 : i32, i32
  }
  func.func @transform_9(%arg0: i32) -> (i32, i32) {
    %c0_i32 = arith.constant 0 : i32
    %c0_i32_0 = arith.constant 0 : i32
    %c0_i32_1 = arith.constant 0 : i32
    return %c0_i32, %c0_i32_0 : i32, i32
  }
  func.func @transform_10(%arg0: i32) -> (i32, i32) {
    %c0_i32 = arith.constant 0 : i32
    %c0_i32_0 = arith.constant 0 : i32
    %c0_i32_1 = arith.constant 0 : i32
    return %c0_i32, %c0_i32_0 : i32, i32
  }
  func.func @transform_11(%arg0: i32) -> (i32, i32) {
    %c0_i32 = arith.constant 0 : i32
    %c0_i32_0 = arith.constant 0 : i32
    %c0_i32_1 = arith.constant 0 : i32
    return %c0_i32, %c0_i32_0 : i32, i32
  }
  func.func @transform_12(%arg0: i32) -> (i32, i32) {
    %c0_i32 = arith.constant 0 : i32
    %c0_i32_0 = arith.constant 0 : i32
    %c0_i32_1 = arith.constant 0 : i32
    return %c0_i32, %c0_i32_0 : i32, i32
  }
  func.func @transform_13(%arg0: i32) -> (i32, i32) {
    %c0_i32 = arith.constant 0 : i32
    %c0_i32_0 = arith.constant 0 : i32
    return %arg0, %c0_i32 : i32, i32
  }
}

module attributes {stable_mosaic.version = 11 : i64} {
  func.func @kernel(%arg0: i32, %arg1: memref<64x512xbf16, #tpu.memory_space<vmem>>, %arg2: memref<512x128xbf16, #tpu.memory_space<vmem>>, %arg3: memref<1x128xf32, #tpu.memory_space<vmem>>, %arg4: memref<1x128xf32, #tpu.memory_space<vmem>>, %arg5: memref<1x128xf32, #tpu.memory_space<vmem>>, %arg6: memref<1x128xf32, #tpu.memory_space<vmem>>, %arg7: memref<1x128xf32, #tpu.memory_space<vmem>>, %arg8: memref<128x128xbf16, #tpu.memory_space<vmem>>, %arg9: memref<1x128xf32, #tpu.memory_space<vmem>>, %arg10: memref<128x128xbf16, #tpu.memory_space<vmem>>, %arg11: memref<1x128xf32, #tpu.memory_space<vmem>>, %arg12: memref<1x128xf32, #tpu.memory_space<vmem>>, %arg13: memref<1x128xf32, #tpu.memory_space<vmem>>, %arg14: memref<64x128xbf16, #tpu.memory_space<vmem>>) attributes {dimension_semantics = [#tpu.dimension_semantics<parallel>], iteration_bounds = array<i64: 2>, scalar_prefetch = 0 : i64, scratch_operands = 0 : i64, tpu.core_type = #tpu.core_type<tc>, window_params = [{transform_indices = @transform_0, window_bounds = array<i64: 64, 512>}, {pipeline_mode = #tpu.pipeline_mode<synchronous>, transform_indices = @transform_1, window_bounds = array<i64: 512, 128>}, {pipeline_mode = #tpu.pipeline_mode<synchronous>, transform_indices = @transform_2, window_bounds = array<i64: 1, 128>}, {pipeline_mode = #tpu.pipeline_mode<synchronous>, transform_indices = @transform_3, window_bounds = array<i64: 1, 128>}, {pipeline_mode = #tpu.pipeline_mode<synchronous>, transform_indices = @transform_4, window_bounds = array<i64: 1, 128>}, {pipeline_mode = #tpu.pipeline_mode<synchronous>, transform_indices = @transform_5, window_bounds = array<i64: 1, 128>}, {pipeline_mode = #tpu.pipeline_mode<synchronous>, transform_indices = @transform_6, window_bounds = array<i64: 1, 128>}, {pipeline_mode = #tpu.pipeline_mode<synchronous>, transform_indices = @transform_7, window_bounds = array<i64: 128, 128>}, {pipeline_mode = #tpu.pipeline_mode<synchronous>, transform_indices = @transform_8, window_bounds = array<i64: 1, 128>}, {pipeline_mode = #tpu.pipeline_mode<synchronous>, transform_indices = @transform_9, window_bounds = array<i64: 128, 128>}, {pipeline_mode = #tpu.pipeline_mode<synchronous>, transform_indices = @transform_10, window_bounds = array<i64: 1, 128>}, {pipeline_mode = #tpu.pipeline_mode<synchronous>, transform_indices = @transform_11, window_bounds = array<i64: 1, 128>}, {pipeline_mode = #tpu.pipeline_mode<synchronous>, transform_indices = @transform_12, window_bounds = array<i64: 1, 128>}, {transform_indices = @transform_13, window_bounds = array<i64: 64, 128>}]} {
    %c0 = arith.constant 0 : index
    %c0_0 = arith.constant 0 : index
    %0 = vector.load %arg1[%c0, %c0_0] : memref<64x512xbf16, #tpu.memory_space<vmem>>, vector<64x512xbf16>
    %c0_1 = arith.constant 0 : index
    %c0_2 = arith.constant 0 : index
    %1 = vector.load %arg2[%c0_1, %c0_2] : memref<512x128xbf16, #tpu.memory_space<vmem>>, vector<512x128xbf16>
    %cst = arith.constant dense<0.000000e+00> : vector<64x128xf32>
    %2 = tpu.matmul %0, %1, %cst {dimension_numbers = #tpu.dot_dimension_numbers<[1], [0], [0], [1], [0, 0, 1, 1], [], []>} : vector<64x512xbf16>, vector<512x128xbf16>, vector<64x128xf32> -> vector<64x128xf32>
    %c0_3 = arith.constant 0 : index
    %c0_4 = arith.constant 0 : index
    %3 = vector.load %arg3[%c0_3, %c0_4] : memref<1x128xf32, #tpu.memory_space<vmem>>, vector<1x128xf32>
    %4 = vector.broadcast %3 : vector<1x128xf32> to vector<64x128xf32>
    %5 = arith.addf %2, %4 : vector<64x128xf32>
    %c0_5 = arith.constant 0 : index
    %c0_6 = arith.constant 0 : index
    %6 = vector.load %arg4[%c0_5, %c0_6] : memref<1x128xf32, #tpu.memory_space<vmem>>, vector<1x128xf32>
    %c0_7 = arith.constant 0 : index
    %c0_8 = arith.constant 0 : index
    %7 = vector.load %arg5[%c0_7, %c0_8] : memref<1x128xf32, #tpu.memory_space<vmem>>, vector<1x128xf32>
    %cst_9 = arith.constant dense<0.000000e+00> : vector<64xf32>
    %8 = vector.multi_reduction <add>, %5, %cst_9 [1] : vector<64x128xf32> to vector<64xf32>
    %9 = vector.shape_cast %8 : vector<64xf32> to vector<64x1xf32>
    %cst_10 = arith.constant 6.250000e-02 : f32
    %10 = vector.broadcast %cst_10 : f32 to vector<64x1xf32>
    %11 = arith.mulf %9, %10 : vector<64x1xf32>
    %12 = arith.mulf %5, %5 : vector<64x128xf32>
    %cst_11 = arith.constant dense<0.000000e+00> : vector<64xf32>
    %13 = vector.multi_reduction <add>, %12, %cst_11 [1] : vector<64x128xf32> to vector<64xf32>
    %14 = vector.shape_cast %13 : vector<64xf32> to vector<64x1xf32>
    %cst_12 = arith.constant 6.250000e-02 : f32
    %15 = vector.broadcast %cst_12 : f32 to vector<64x1xf32>
    %16 = arith.mulf %14, %15 : vector<64x1xf32>
    %17 = arith.mulf %11, %11 : vector<64x1xf32>
    %18 = arith.subf %16, %17 : vector<64x1xf32>
    %cst_13 = arith.constant 0.000000e+00 : f32
    %19 = vector.broadcast %cst_13 : f32 to vector<64x1xf32>
    %20 = arith.maximumf %18, %19 : vector<64x1xf32>
    %21 = vector.broadcast %11 : vector<64x1xf32> to vector<64x128xf32>
    %22 = arith.subf %5, %21 : vector<64x128xf32>
    %cst_14 = arith.constant 9.99999974E-6 : f32
    %23 = vector.broadcast %cst_14 : f32 to vector<64x1xf32>
    %24 = arith.addf %20, %23 : vector<64x1xf32>
    %25 = math.rsqrt %24 : vector<64x1xf32>
    %26 = vector.broadcast %25 : vector<64x1xf32> to vector<64x128xf32>
    %27 = arith.mulf %22, %26 : vector<64x128xf32>
    %28 = vector.broadcast %6 : vector<1x128xf32> to vector<64x128xf32>
    %29 = arith.mulf %27, %28 : vector<64x128xf32>
    %30 = vector.broadcast %7 : vector<1x128xf32> to vector<64x128xf32>
    %31 = arith.addf %29, %30 : vector<64x128xf32>
    %c0_15 = arith.constant 0 : index
    %c0_16 = arith.constant 0 : index
    %32 = vector.load %arg6[%c0_15, %c0_16] : memref<1x128xf32, #tpu.memory_space<vmem>>, vector<1x128xf32>
    %c0_17 = arith.constant 0 : index
    %c0_18 = arith.constant 0 : index
    %33 = vector.load %arg7[%c0_17, %c0_18] : memref<1x128xf32, #tpu.memory_space<vmem>>, vector<1x128xf32>
    %cst_19 = arith.constant dense<0.000000e+00> : vector<64xf32>
    %34 = vector.multi_reduction <add>, %31, %cst_19 [1] : vector<64x128xf32> to vector<64xf32>
    %35 = vector.shape_cast %34 : vector<64xf32> to vector<64x1xf32>
    %cst_20 = arith.constant 6.250000e-02 : f32
    %36 = vector.broadcast %cst_20 : f32 to vector<64x1xf32>
    %37 = arith.mulf %35, %36 : vector<64x1xf32>
    %38 = arith.mulf %31, %31 : vector<64x128xf32>
    %cst_21 = arith.constant dense<0.000000e+00> : vector<64xf32>
    %39 = vector.multi_reduction <add>, %38, %cst_21 [1] : vector<64x128xf32> to vector<64xf32>
    %40 = vector.shape_cast %39 : vector<64xf32> to vector<64x1xf32>
    %cst_22 = arith.constant 6.250000e-02 : f32
    %41 = vector.broadcast %cst_22 : f32 to vector<64x1xf32>
    %42 = arith.mulf %40, %41 : vector<64x1xf32>
    %43 = arith.mulf %37, %37 : vector<64x1xf32>
    %44 = arith.subf %42, %43 : vector<64x1xf32>
    %cst_23 = arith.constant 0.000000e+00 : f32
    %45 = vector.broadcast %cst_23 : f32 to vector<64x1xf32>
    %46 = arith.maximumf %44, %45 : vector<64x1xf32>
    %47 = vector.broadcast %37 : vector<64x1xf32> to vector<64x128xf32>
    %48 = arith.subf %31, %47 : vector<64x128xf32>
    %cst_24 = arith.constant 9.99999974E-6 : f32
    %49 = vector.broadcast %cst_24 : f32 to vector<64x1xf32>
    %50 = arith.addf %46, %49 : vector<64x1xf32>
    %51 = math.rsqrt %50 : vector<64x1xf32>
    %52 = vector.broadcast %51 : vector<64x1xf32> to vector<64x128xf32>
    %53 = arith.mulf %48, %52 : vector<64x128xf32>
    %54 = vector.broadcast %32 : vector<1x128xf32> to vector<64x128xf32>
    %55 = arith.mulf %53, %54 : vector<64x128xf32>
    %56 = vector.broadcast %33 : vector<1x128xf32> to vector<64x128xf32>
    %57 = arith.addf %55, %56 : vector<64x128xf32>
    %58 = arith.truncf %57 : vector<64x128xf32> to vector<64x128xbf16>
    %c0_25 = arith.constant 0 : index
    %c0_26 = arith.constant 0 : index
    %59 = vector.load %arg8[%c0_25, %c0_26] : memref<128x128xbf16, #tpu.memory_space<vmem>>, vector<128x128xbf16>
    %cst_27 = arith.constant dense<0.000000e+00> : vector<64x128xf32>
    %60 = tpu.matmul %58, %59, %cst_27 {dimension_numbers = #tpu.dot_dimension_numbers<[1], [0], [0], [1], [0, 0, 1, 1], [], []>} : vector<64x128xbf16>, vector<128x128xbf16>, vector<64x128xf32> -> vector<64x128xf32>
    %c0_28 = arith.constant 0 : index
    %c0_29 = arith.constant 0 : index
    %61 = vector.load %arg9[%c0_28, %c0_29] : memref<1x128xf32, #tpu.memory_space<vmem>>, vector<1x128xf32>
    %62 = vector.broadcast %61 : vector<1x128xf32> to vector<64x128xf32>
    %63 = arith.addf %60, %62 : vector<64x128xf32>
    %64 = arith.mulf %63, %63 : vector<64x128xf32>
    %65 = arith.mulf %63, %64 : vector<64x128xf32>
    %cst_30 = arith.constant 4.471500e-02 : f32
    %66 = vector.broadcast %cst_30 : f32 to vector<64x128xf32>
    %67 = arith.mulf %66, %65 : vector<64x128xf32>
    %68 = arith.addf %63, %67 : vector<64x128xf32>
    %cst_31 = arith.constant 0.797884583 : f32
    %69 = vector.broadcast %cst_31 : f32 to vector<64x128xf32>
    %70 = arith.mulf %69, %68 : vector<64x128xf32>
    %71 = math.tanh %70 : vector<64x128xf32>
    %cst_32 = arith.constant 1.000000e+00 : f32
    %72 = vector.broadcast %cst_32 : f32 to vector<64x128xf32>
    %73 = arith.addf %72, %71 : vector<64x128xf32>
    %cst_33 = arith.constant 5.000000e-01 : f32
    %74 = vector.broadcast %cst_33 : f32 to vector<64x128xf32>
    %75 = arith.mulf %74, %73 : vector<64x128xf32>
    %76 = arith.mulf %63, %75 : vector<64x128xf32>
    %77 = arith.truncf %76 : vector<64x128xf32> to vector<64x128xbf16>
    %c0_34 = arith.constant 0 : index
    %c0_35 = arith.constant 0 : index
    %78 = vector.load %arg10[%c0_34, %c0_35] : memref<128x128xbf16, #tpu.memory_space<vmem>>, vector<128x128xbf16>
    %cst_36 = arith.constant dense<0.000000e+00> : vector<64x128xf32>
    %79 = tpu.matmul %77, %78, %cst_36 {dimension_numbers = #tpu.dot_dimension_numbers<[1], [0], [0], [1], [0, 0, 1, 1], [], []>} : vector<64x128xbf16>, vector<128x128xbf16>, vector<64x128xf32> -> vector<64x128xf32>
    %c0_37 = arith.constant 0 : index
    %c0_38 = arith.constant 0 : index
    %80 = vector.load %arg11[%c0_37, %c0_38] : memref<1x128xf32, #tpu.memory_space<vmem>>, vector<1x128xf32>
    %81 = vector.broadcast %80 : vector<1x128xf32> to vector<64x128xf32>
    %82 = arith.addf %79, %81 : vector<64x128xf32>
    %83 = arith.addf %31, %82 : vector<64x128xf32>
    %c0_39 = arith.constant 0 : index
    %c0_40 = arith.constant 0 : index
    %84 = vector.load %arg12[%c0_39, %c0_40] : memref<1x128xf32, #tpu.memory_space<vmem>>, vector<1x128xf32>
    %c0_41 = arith.constant 0 : index
    %c0_42 = arith.constant 0 : index
    %85 = vector.load %arg13[%c0_41, %c0_42] : memref<1x128xf32, #tpu.memory_space<vmem>>, vector<1x128xf32>
    %cst_43 = arith.constant dense<0.000000e+00> : vector<64xf32>
    %86 = vector.multi_reduction <add>, %83, %cst_43 [1] : vector<64x128xf32> to vector<64xf32>
    %87 = vector.shape_cast %86 : vector<64xf32> to vector<64x1xf32>
    %cst_44 = arith.constant 6.250000e-02 : f32
    %88 = vector.broadcast %cst_44 : f32 to vector<64x1xf32>
    %89 = arith.mulf %87, %88 : vector<64x1xf32>
    %90 = arith.mulf %83, %83 : vector<64x128xf32>
    %cst_45 = arith.constant dense<0.000000e+00> : vector<64xf32>
    %91 = vector.multi_reduction <add>, %90, %cst_45 [1] : vector<64x128xf32> to vector<64xf32>
    %92 = vector.shape_cast %91 : vector<64xf32> to vector<64x1xf32>
    %cst_46 = arith.constant 6.250000e-02 : f32
    %93 = vector.broadcast %cst_46 : f32 to vector<64x1xf32>
    %94 = arith.mulf %92, %93 : vector<64x1xf32>
    %95 = arith.mulf %89, %89 : vector<64x1xf32>
    %96 = arith.subf %94, %95 : vector<64x1xf32>
    %cst_47 = arith.constant 0.000000e+00 : f32
    %97 = vector.broadcast %cst_47 : f32 to vector<64x1xf32>
    %98 = arith.maximumf %96, %97 : vector<64x1xf32>
    %99 = vector.broadcast %89 : vector<64x1xf32> to vector<64x128xf32>
    %100 = arith.subf %83, %99 : vector<64x128xf32>
    %cst_48 = arith.constant 9.99999974E-6 : f32
    %101 = vector.broadcast %cst_48 : f32 to vector<64x1xf32>
    %102 = arith.addf %98, %101 : vector<64x1xf32>
    %103 = math.rsqrt %102 : vector<64x1xf32>
    %104 = vector.broadcast %103 : vector<64x1xf32> to vector<64x128xf32>
    %105 = arith.mulf %100, %104 : vector<64x128xf32>
    %106 = vector.broadcast %84 : vector<1x128xf32> to vector<64x128xf32>
    %107 = arith.mulf %105, %106 : vector<64x128xf32>
    %108 = vector.broadcast %85 : vector<1x128xf32> to vector<64x128xf32>
    %109 = arith.addf %107, %108 : vector<64x128xf32>
    %110 = arith.truncf %109 : vector<64x128xf32> to vector<64x128xbf16>
    %c0_49 = arith.constant 0 : index
    %c0_50 = arith.constant 0 : index
    %111 = vector.load %arg14[%c0_49, %c0_50] : memref<64x128xbf16, #tpu.memory_space<vmem>>, vector<64x128xbf16>
    tpu.vector_store %arg14[%c0_49, %c0_50], %110 {strides = array<i32>} : memref<64x128xbf16, #tpu.memory_space<vmem>>, vector<64x128xbf16>,
    return
  }
  func.func @transform_0(%arg0: i32) -> (i32, i32) {
    %c0_i32 = arith.constant 0 : i32
    %c0_i32_0 = arith.constant 0 : i32
    return %arg0, %c0_i32 : i32, i32
  }
  func.func @transform_1(%arg0: i32) -> (i32, i32) {
    %c0_i32 = arith.constant 0 : i32
    %c0_i32_0 = arith.constant 0 : i32
    %c0_i32_1 = arith.constant 0 : i32
    return %c0_i32, %c0_i32_0 : i32, i32
  }
  func.func @transform_2(%arg0: i32) -> (i32, i32) {
    %c0_i32 = arith.constant 0 : i32
    %c0_i32_0 = arith.constant 0 : i32
    %c0_i32_1 = arith.constant 0 : i32
    return %c0_i32, %c0_i32_0 : i32, i32
  }
  func.func @transform_3(%arg0: i32) -> (i32, i32) {
    %c0_i32 = arith.constant 0 : i32
    %c0_i32_0 = arith.constant 0 : i32
    %c0_i32_1 = arith.constant 0 : i32
    return %c0_i32, %c0_i32_0 : i32, i32
  }
  func.func @transform_4(%arg0: i32) -> (i32, i32) {
    %c0_i32 = arith.constant 0 : i32
    %c0_i32_0 = arith.constant 0 : i32
    %c0_i32_1 = arith.constant 0 : i32
    return %c0_i32, %c0_i32_0 : i32, i32
  }
  func.func @transform_5(%arg0: i32) -> (i32, i32) {
    %c0_i32 = arith.constant 0 : i32
    %c0_i32_0 = arith.constant 0 : i32
    %c0_i32_1 = arith.constant 0 : i32
    return %c0_i32, %c0_i32_0 : i32, i32
  }
  func.func @transform_6(%arg0: i32) -> (i32, i32) {
    %c0_i32 = arith.constant 0 : i32
    %c0_i32_0 = arith.constant 0 : i32
    %c0_i32_1 = arith.constant 0 : i32
    return %c0_i32, %c0_i32_0 : i32, i32
  }
  func.func @transform_7(%arg0: i32) -> (i32, i32) {
    %c0_i32 = arith.constant 0 : i32
    %c0_i32_0 = arith.constant 0 : i32
    %c0_i32_1 = arith.constant 0 : i32
    return %c0_i32, %c0_i32_0 : i32, i32
  }
  func.func @transform_8(%arg0: i32) -> (i32, i32) {
    %c0_i32 = arith.constant 0 : i32
    %c0_i32_0 = arith.constant 0 : i32
    %c0_i32_1 = arith.constant 0 : i32
    return %c0_i32, %c0_i32_0 : i32, i32
  }
  func.func @transform_9(%arg0: i32) -> (i32, i32) {
    %c0_i32 = arith.constant 0 : i32
    %c0_i32_0 = arith.constant 0 : i32
    %c0_i32_1 = arith.constant 0 : i32
    return %c0_i32, %c0_i32_0 : i32, i32
  }
  func.func @transform_10(%arg0: i32) -> (i32, i32) {
    %c0_i32 = arith.constant 0 : i32
    %c0_i32_0 = arith.constant 0 : i32
    %c0_i32_1 = arith.constant 0 : i32
    return %c0_i32, %c0_i32_0 : i32, i32
  }
  func.func @transform_11(%arg0: i32) -> (i32, i32) {
    %c0_i32 = arith.constant 0 : i32
    %c0_i32_0 = arith.constant 0 : i32
    %c0_i32_1 = arith.constant 0 : i32
    return %c0_i32, %c0_i32_0 : i32, i32
  }
  func.func @transform_12(%arg0: i32) -> (i32, i32) {
    %c0_i32 = arith.constant 0 : i32
    %c0_i32_0 = arith.constant 0 : i32
    %c0_i32_1 = arith.constant 0 : i32
    return %c0_i32, %c0_i32_0 : i32, i32
  }
  func.func @transform_13(%arg0: i32) -> (i32, i32) {
    %c0_i32 = arith.constant 0 : i32
    %c0_i32_0 = arith.constant 0 : i32
    return %arg0, %c0_i32 : i32, i32
  }
}

module attributes {stable_mosaic.version = 11 : i64} {
  func.func @kernel(%arg0: i32, %arg1: memref<16x512xbf16, #tpu.memory_space<vmem>>, %arg2: memref<512x128xbf16, #tpu.memory_space<vmem>>, %arg3: memref<1x128xf32, #tpu.memory_space<vmem>>, %arg4: memref<1x128xf32, #tpu.memory_space<vmem>>, %arg5: memref<1x128xf32, #tpu.memory_space<vmem>>, %arg6: memref<1x128xf32, #tpu.memory_space<vmem>>, %arg7: memref<1x128xf32, #tpu.memory_space<vmem>>, %arg8: memref<128x128xbf16, #tpu.memory_space<vmem>>, %arg9: memref<1x128xf32, #tpu.memory_space<vmem>>, %arg10: memref<128x128xbf16, #tpu.memory_space<vmem>>, %arg11: memref<1x128xf32, #tpu.memory_space<vmem>>, %arg12: memref<1x128xf32, #tpu.memory_space<vmem>>, %arg13: memref<1x128xf32, #tpu.memory_space<vmem>>, %arg14: memref<16x128xbf16, #tpu.memory_space<vmem>>) attributes {dimension_semantics = [#tpu.dimension_semantics<parallel>], iteration_bounds = array<i64: 2>, scalar_prefetch = 0 : i64, scratch_operands = 0 : i64, tpu.core_type = #tpu.core_type<tc>, window_params = [{transform_indices = @transform_0, window_bounds = array<i64: 16, 512>}, {pipeline_mode = #tpu.pipeline_mode<synchronous>, transform_indices = @transform_1, window_bounds = array<i64: 512, 128>}, {pipeline_mode = #tpu.pipeline_mode<synchronous>, transform_indices = @transform_2, window_bounds = array<i64: 1, 128>}, {pipeline_mode = #tpu.pipeline_mode<synchronous>, transform_indices = @transform_3, window_bounds = array<i64: 1, 128>}, {pipeline_mode = #tpu.pipeline_mode<synchronous>, transform_indices = @transform_4, window_bounds = array<i64: 1, 128>}, {pipeline_mode = #tpu.pipeline_mode<synchronous>, transform_indices = @transform_5, window_bounds = array<i64: 1, 128>}, {pipeline_mode = #tpu.pipeline_mode<synchronous>, transform_indices = @transform_6, window_bounds = array<i64: 1, 128>}, {pipeline_mode = #tpu.pipeline_mode<synchronous>, transform_indices = @transform_7, window_bounds = array<i64: 128, 128>}, {pipeline_mode = #tpu.pipeline_mode<synchronous>, transform_indices = @transform_8, window_bounds = array<i64: 1, 128>}, {pipeline_mode = #tpu.pipeline_mode<synchronous>, transform_indices = @transform_9, window_bounds = array<i64: 128, 128>}, {pipeline_mode = #tpu.pipeline_mode<synchronous>, transform_indices = @transform_10, window_bounds = array<i64: 1, 128>}, {pipeline_mode = #tpu.pipeline_mode<synchronous>, transform_indices = @transform_11, window_bounds = array<i64: 1, 128>}, {pipeline_mode = #tpu.pipeline_mode<synchronous>, transform_indices = @transform_12, window_bounds = array<i64: 1, 128>}, {transform_indices = @transform_13, window_bounds = array<i64: 16, 128>}]} {
    %c0 = arith.constant 0 : index
    %c0_0 = arith.constant 0 : index
    %0 = vector.load %arg1[%c0, %c0_0] : memref<16x512xbf16, #tpu.memory_space<vmem>>, vector<16x512xbf16>
    %c0_1 = arith.constant 0 : index
    %c0_2 = arith.constant 0 : index
    %1 = vector.load %arg2[%c0_1, %c0_2] : memref<512x128xbf16, #tpu.memory_space<vmem>>, vector<512x128xbf16>
    %cst = arith.constant dense<0.000000e+00> : vector<16x128xf32>
    %2 = tpu.matmul %0, %1, %cst {dimension_numbers = #tpu.dot_dimension_numbers<[1], [0], [0], [1], [0, 0, 1, 1], [], []>} : vector<16x512xbf16>, vector<512x128xbf16>, vector<16x128xf32> -> vector<16x128xf32>
    %c0_3 = arith.constant 0 : index
    %c0_4 = arith.constant 0 : index
    %3 = vector.load %arg3[%c0_3, %c0_4] : memref<1x128xf32, #tpu.memory_space<vmem>>, vector<1x128xf32>
    %4 = vector.broadcast %3 : vector<1x128xf32> to vector<16x128xf32>
    %5 = arith.addf %2, %4 : vector<16x128xf32>
    %c0_5 = arith.constant 0 : index
    %c0_6 = arith.constant 0 : index
    %6 = vector.load %arg4[%c0_5, %c0_6] : memref<1x128xf32, #tpu.memory_space<vmem>>, vector<1x128xf32>
    %c0_7 = arith.constant 0 : index
    %c0_8 = arith.constant 0 : index
    %7 = vector.load %arg5[%c0_7, %c0_8] : memref<1x128xf32, #tpu.memory_space<vmem>>, vector<1x128xf32>
    %cst_9 = arith.constant dense<0.000000e+00> : vector<16xf32>
    %8 = vector.multi_reduction <add>, %5, %cst_9 [1] : vector<16x128xf32> to vector<16xf32>
    %9 = vector.shape_cast %8 : vector<16xf32> to vector<16x1xf32>
    %cst_10 = arith.constant 3.125000e-02 : f32
    %10 = vector.broadcast %cst_10 : f32 to vector<16x1xf32>
    %11 = arith.mulf %9, %10 : vector<16x1xf32>
    %12 = arith.mulf %5, %5 : vector<16x128xf32>
    %cst_11 = arith.constant dense<0.000000e+00> : vector<16xf32>
    %13 = vector.multi_reduction <add>, %12, %cst_11 [1] : vector<16x128xf32> to vector<16xf32>
    %14 = vector.shape_cast %13 : vector<16xf32> to vector<16x1xf32>
    %cst_12 = arith.constant 3.125000e-02 : f32
    %15 = vector.broadcast %cst_12 : f32 to vector<16x1xf32>
    %16 = arith.mulf %14, %15 : vector<16x1xf32>
    %17 = arith.mulf %11, %11 : vector<16x1xf32>
    %18 = arith.subf %16, %17 : vector<16x1xf32>
    %cst_13 = arith.constant 0.000000e+00 : f32
    %19 = vector.broadcast %cst_13 : f32 to vector<16x1xf32>
    %20 = arith.maximumf %18, %19 : vector<16x1xf32>
    %21 = vector.broadcast %11 : vector<16x1xf32> to vector<16x128xf32>
    %22 = arith.subf %5, %21 : vector<16x128xf32>
    %cst_14 = arith.constant 9.99999974E-6 : f32
    %23 = vector.broadcast %cst_14 : f32 to vector<16x1xf32>
    %24 = arith.addf %20, %23 : vector<16x1xf32>
    %25 = math.rsqrt %24 : vector<16x1xf32>
    %26 = vector.broadcast %25 : vector<16x1xf32> to vector<16x128xf32>
    %27 = arith.mulf %22, %26 : vector<16x128xf32>
    %28 = vector.broadcast %6 : vector<1x128xf32> to vector<16x128xf32>
    %29 = arith.mulf %27, %28 : vector<16x128xf32>
    %30 = vector.broadcast %7 : vector<1x128xf32> to vector<16x128xf32>
    %31 = arith.addf %29, %30 : vector<16x128xf32>
    %c0_15 = arith.constant 0 : index
    %c0_16 = arith.constant 0 : index
    %32 = vector.load %arg6[%c0_15, %c0_16] : memref<1x128xf32, #tpu.memory_space<vmem>>, vector<1x128xf32>
    %c0_17 = arith.constant 0 : index
    %c0_18 = arith.constant 0 : index
    %33 = vector.load %arg7[%c0_17, %c0_18] : memref<1x128xf32, #tpu.memory_space<vmem>>, vector<1x128xf32>
    %cst_19 = arith.constant dense<0.000000e+00> : vector<16xf32>
    %34 = vector.multi_reduction <add>, %31, %cst_19 [1] : vector<16x128xf32> to vector<16xf32>
    %35 = vector.shape_cast %34 : vector<16xf32> to vector<16x1xf32>
    %cst_20 = arith.constant 3.125000e-02 : f32
    %36 = vector.broadcast %cst_20 : f32 to vector<16x1xf32>
    %37 = arith.mulf %35, %36 : vector<16x1xf32>
    %38 = arith.mulf %31, %31 : vector<16x128xf32>
    %cst_21 = arith.constant dense<0.000000e+00> : vector<16xf32>
    %39 = vector.multi_reduction <add>, %38, %cst_21 [1] : vector<16x128xf32> to vector<16xf32>
    %40 = vector.shape_cast %39 : vector<16xf32> to vector<16x1xf32>
    %cst_22 = arith.constant 3.125000e-02 : f32
    %41 = vector.broadcast %cst_22 : f32 to vector<16x1xf32>
    %42 = arith.mulf %40, %41 : vector<16x1xf32>
    %43 = arith.mulf %37, %37 : vector<16x1xf32>
    %44 = arith.subf %42, %43 : vector<16x1xf32>
    %cst_23 = arith.constant 0.000000e+00 : f32
    %45 = vector.broadcast %cst_23 : f32 to vector<16x1xf32>
    %46 = arith.maximumf %44, %45 : vector<16x1xf32>
    %47 = vector.broadcast %37 : vector<16x1xf32> to vector<16x128xf32>
    %48 = arith.subf %31, %47 : vector<16x128xf32>
    %cst_24 = arith.constant 9.99999974E-6 : f32
    %49 = vector.broadcast %cst_24 : f32 to vector<16x1xf32>
    %50 = arith.addf %46, %49 : vector<16x1xf32>
    %51 = math.rsqrt %50 : vector<16x1xf32>
    %52 = vector.broadcast %51 : vector<16x1xf32> to vector<16x128xf32>
    %53 = arith.mulf %48, %52 : vector<16x128xf32>
    %54 = vector.broadcast %32 : vector<1x128xf32> to vector<16x128xf32>
    %55 = arith.mulf %53, %54 : vector<16x128xf32>
    %56 = vector.broadcast %33 : vector<1x128xf32> to vector<16x128xf32>
    %57 = arith.addf %55, %56 : vector<16x128xf32>
    %58 = arith.truncf %57 : vector<16x128xf32> to vector<16x128xbf16>
    %c0_25 = arith.constant 0 : index
    %c0_26 = arith.constant 0 : index
    %59 = vector.load %arg8[%c0_25, %c0_26] : memref<128x128xbf16, #tpu.memory_space<vmem>>, vector<128x128xbf16>
    %cst_27 = arith.constant dense<0.000000e+00> : vector<16x128xf32>
    %60 = tpu.matmul %58, %59, %cst_27 {dimension_numbers = #tpu.dot_dimension_numbers<[1], [0], [0], [1], [0, 0, 1, 1], [], []>} : vector<16x128xbf16>, vector<128x128xbf16>, vector<16x128xf32> -> vector<16x128xf32>
    %c0_28 = arith.constant 0 : index
    %c0_29 = arith.constant 0 : index
    %61 = vector.load %arg9[%c0_28, %c0_29] : memref<1x128xf32, #tpu.memory_space<vmem>>, vector<1x128xf32>
    %62 = vector.broadcast %61 : vector<1x128xf32> to vector<16x128xf32>
    %63 = arith.addf %60, %62 : vector<16x128xf32>
    %64 = arith.mulf %63, %63 : vector<16x128xf32>
    %65 = arith.mulf %63, %64 : vector<16x128xf32>
    %cst_30 = arith.constant 4.471500e-02 : f32
    %66 = vector.broadcast %cst_30 : f32 to vector<16x128xf32>
    %67 = arith.mulf %66, %65 : vector<16x128xf32>
    %68 = arith.addf %63, %67 : vector<16x128xf32>
    %cst_31 = arith.constant 0.797884583 : f32
    %69 = vector.broadcast %cst_31 : f32 to vector<16x128xf32>
    %70 = arith.mulf %69, %68 : vector<16x128xf32>
    %71 = math.tanh %70 : vector<16x128xf32>
    %cst_32 = arith.constant 1.000000e+00 : f32
    %72 = vector.broadcast %cst_32 : f32 to vector<16x128xf32>
    %73 = arith.addf %72, %71 : vector<16x128xf32>
    %cst_33 = arith.constant 5.000000e-01 : f32
    %74 = vector.broadcast %cst_33 : f32 to vector<16x128xf32>
    %75 = arith.mulf %74, %73 : vector<16x128xf32>
    %76 = arith.mulf %63, %75 : vector<16x128xf32>
    %77 = arith.truncf %76 : vector<16x128xf32> to vector<16x128xbf16>
    %c0_34 = arith.constant 0 : index
    %c0_35 = arith.constant 0 : index
    %78 = vector.load %arg10[%c0_34, %c0_35] : memref<128x128xbf16, #tpu.memory_space<vmem>>, vector<128x128xbf16>
    %cst_36 = arith.constant dense<0.000000e+00> : vector<16x128xf32>
    %79 = tpu.matmul %77, %78, %cst_36 {dimension_numbers = #tpu.dot_dimension_numbers<[1], [0], [0], [1], [0, 0, 1, 1], [], []>} : vector<16x128xbf16>, vector<128x128xbf16>, vector<16x128xf32> -> vector<16x128xf32>
    %c0_37 = arith.constant 0 : index
    %c0_38 = arith.constant 0 : index
    %80 = vector.load %arg11[%c0_37, %c0_38] : memref<1x128xf32, #tpu.memory_space<vmem>>, vector<1x128xf32>
    %81 = vector.broadcast %80 : vector<1x128xf32> to vector<16x128xf32>
    %82 = arith.addf %79, %81 : vector<16x128xf32>
    %83 = arith.addf %31, %82 : vector<16x128xf32>
    %c0_39 = arith.constant 0 : index
    %c0_40 = arith.constant 0 : index
    %84 = vector.load %arg12[%c0_39, %c0_40] : memref<1x128xf32, #tpu.memory_space<vmem>>, vector<1x128xf32>
    %c0_41 = arith.constant 0 : index
    %c0_42 = arith.constant 0 : index
    %85 = vector.load %arg13[%c0_41, %c0_42] : memref<1x128xf32, #tpu.memory_space<vmem>>, vector<1x128xf32>
    %cst_43 = arith.constant dense<0.000000e+00> : vector<16xf32>
    %86 = vector.multi_reduction <add>, %83, %cst_43 [1] : vector<16x128xf32> to vector<16xf32>
    %87 = vector.shape_cast %86 : vector<16xf32> to vector<16x1xf32>
    %cst_44 = arith.constant 3.125000e-02 : f32
    %88 = vector.broadcast %cst_44 : f32 to vector<16x1xf32>
    %89 = arith.mulf %87, %88 : vector<16x1xf32>
    %90 = arith.mulf %83, %83 : vector<16x128xf32>
    %cst_45 = arith.constant dense<0.000000e+00> : vector<16xf32>
    %91 = vector.multi_reduction <add>, %90, %cst_45 [1] : vector<16x128xf32> to vector<16xf32>
    %92 = vector.shape_cast %91 : vector<16xf32> to vector<16x1xf32>
    %cst_46 = arith.constant 3.125000e-02 : f32
    %93 = vector.broadcast %cst_46 : f32 to vector<16x1xf32>
    %94 = arith.mulf %92, %93 : vector<16x1xf32>
    %95 = arith.mulf %89, %89 : vector<16x1xf32>
    %96 = arith.subf %94, %95 : vector<16x1xf32>
    %cst_47 = arith.constant 0.000000e+00 : f32
    %97 = vector.broadcast %cst_47 : f32 to vector<16x1xf32>
    %98 = arith.maximumf %96, %97 : vector<16x1xf32>
    %99 = vector.broadcast %89 : vector<16x1xf32> to vector<16x128xf32>
    %100 = arith.subf %83, %99 : vector<16x128xf32>
    %cst_48 = arith.constant 9.99999974E-6 : f32
    %101 = vector.broadcast %cst_48 : f32 to vector<16x1xf32>
    %102 = arith.addf %98, %101 : vector<16x1xf32>
    %103 = math.rsqrt %102 : vector<16x1xf32>
    %104 = vector.broadcast %103 : vector<16x1xf32> to vector<16x128xf32>
    %105 = arith.mulf %100, %104 : vector<16x128xf32>
    %106 = vector.broadcast %84 : vector<1x128xf32> to vector<16x128xf32>
    %107 = arith.mulf %105, %106 : vector<16x128xf32>
    %108 = vector.broadcast %85 : vector<1x128xf32> to vector<16x128xf32>
    %109 = arith.addf %107, %108 : vector<16x128xf32>
    %110 = arith.truncf %109 : vector<16x128xf32> to vector<16x128xbf16>
    %c0_49 = arith.constant 0 : index
    %c0_50 = arith.constant 0 : index
    %111 = vector.load %arg14[%c0_49, %c0_50] : memref<16x128xbf16, #tpu.memory_space<vmem>>, vector<16x128xbf16>
    tpu.vector_store %arg14[%c0_49, %c0_50], %110 {strides = array<i32>} : memref<16x128xbf16, #tpu.memory_space<vmem>>, vector<16x128xbf16>,
    return
  }
  func.func @transform_0(%arg0: i32) -> (i32, i32) {
    %c0_i32 = arith.constant 0 : i32
    %c0_i32_0 = arith.constant 0 : i32
    return %arg0, %c0_i32 : i32, i32
  }
  func.func @transform_1(%arg0: i32) -> (i32, i32) {
    %c0_i32 = arith.constant 0 : i32
    %c0_i32_0 = arith.constant 0 : i32
    %c0_i32_1 = arith.constant 0 : i32
    return %c0_i32, %c0_i32_0 : i32, i32
  }
  func.func @transform_2(%arg0: i32) -> (i32, i32) {
    %c0_i32 = arith.constant 0 : i32
    %c0_i32_0 = arith.constant 0 : i32
    %c0_i32_1 = arith.constant 0 : i32
    return %c0_i32, %c0_i32_0 : i32, i32
  }
  func.func @transform_3(%arg0: i32) -> (i32, i32) {
    %c0_i32 = arith.constant 0 : i32
    %c0_i32_0 = arith.constant 0 : i32
    %c0_i32_1 = arith.constant 0 : i32
    return %c0_i32, %c0_i32_0 : i32, i32
  }
  func.func @transform_4(%arg0: i32) -> (i32, i32) {
    %c0_i32 = arith.constant 0 : i32
    %c0_i32_0 = arith.constant 0 : i32
    %c0_i32_1 = arith.constant 0 : i32
    return %c0_i32, %c0_i32_0 : i32, i32
  }
  func.func @transform_5(%arg0: i32) -> (i32, i32) {
    %c0_i32 = arith.constant 0 : i32
    %c0_i32_0 = arith.constant 0 : i32
    %c0_i32_1 = arith.constant 0 : i32
    return %c0_i32, %c0_i32_0 : i32, i32
  }
  func.func @transform_6(%arg0: i32) -> (i32, i32) {
    %c0_i32 = arith.constant 0 : i32
    %c0_i32_0 = arith.constant 0 : i32
    %c0_i32_1 = arith.constant 0 : i32
    return %c0_i32, %c0_i32_0 : i32, i32
  }
  func.func @transform_7(%arg0: i32) -> (i32, i32) {
    %c0_i32 = arith.constant 0 : i32
    %c0_i32_0 = arith.constant 0 : i32
    %c0_i32_1 = arith.constant 0 : i32
    return %c0_i32, %c0_i32_0 : i32, i32
  }
  func.func @transform_8(%arg0: i32) -> (i32, i32) {
    %c0_i32 = arith.constant 0 : i32
    %c0_i32_0 = arith.constant 0 : i32
    %c0_i32_1 = arith.constant 0 : i32
    return %c0_i32, %c0_i32_0 : i32, i32
  }
  func.func @transform_9(%arg0: i32) -> (i32, i32) {
    %c0_i32 = arith.constant 0 : i32
    %c0_i32_0 = arith.constant 0 : i32
    %c0_i32_1 = arith.constant 0 : i32
    return %c0_i32, %c0_i32_0 : i32, i32
  }
  func.func @transform_10(%arg0: i32) -> (i32, i32) {
    %c0_i32 = arith.constant 0 : i32
    %c0_i32_0 = arith.constant 0 : i32
    %c0_i32_1 = arith.constant 0 : i32
    return %c0_i32, %c0_i32_0 : i32, i32
  }
  func.func @transform_11(%arg0: i32) -> (i32, i32) {
    %c0_i32 = arith.constant 0 : i32
    %c0_i32_0 = arith.constant 0 : i32
    %c0_i32_1 = arith.constant 0 : i32
    return %c0_i32, %c0_i32_0 : i32, i32
  }
  func.func @transform_12(%arg0: i32) -> (i32, i32) {
    %c0_i32 = arith.constant 0 : i32
    %c0_i32_0 = arith.constant 0 : i32
    %c0_i32_1 = arith.constant 0 : i32
    return %c0_i32, %c0_i32_0 : i32, i32
  }
  func.func @transform_13(%arg0: i32) -> (i32, i32) {
    %c0_i32 = arith.constant 0 : i32
    %c0_i32_0 = arith.constant 0 : i32
    return %arg0, %c0_i32 : i32, i32
  }
}

module attributes {stable_mosaic.version = 11 : i64} {
  func.func @kernel(%arg0: i32, %arg1: memref<8x512xbf16, #tpu.memory_space<vmem>>, %arg2: memref<512x128xbf16, #tpu.memory_space<vmem>>, %arg3: memref<1x128xf32, #tpu.memory_space<vmem>>, %arg4: memref<1x128xf32, #tpu.memory_space<vmem>>, %arg5: memref<1x128xf32, #tpu.memory_space<vmem>>, %arg6: memref<1x128xf32, #tpu.memory_space<vmem>>, %arg7: memref<1x128xf32, #tpu.memory_space<vmem>>, %arg8: memref<128x256xbf16, #tpu.memory_space<vmem>>, %arg9: memref<1x256xf32, #tpu.memory_space<vmem>>, %arg10: memref<256x128xbf16, #tpu.memory_space<vmem>>, %arg11: memref<1x128xf32, #tpu.memory_space<vmem>>, %arg12: memref<1x128xf32, #tpu.memory_space<vmem>>, %arg13: memref<1x128xf32, #tpu.memory_space<vmem>>, %arg14: memref<128x128xf32, #tpu.memory_space<vmem>>, %arg15: memref<2x128xf32, #tpu.memory_space<vmem>>) attributes {dimension_semantics = [#tpu.dimension_semantics<arbitrary>], iteration_bounds = array<i64: 1>, scalar_prefetch = 0 : i64, scratch_operands = 0 : i64, tpu.core_type = #tpu.core_type<tc>, window_params = [{transform_indices = @transform_0, window_bounds = array<i64: 8, 512>}, {pipeline_mode = #tpu.pipeline_mode<synchronous>, transform_indices = @transform_1, window_bounds = array<i64: 512, 128>}, {pipeline_mode = #tpu.pipeline_mode<synchronous>, transform_indices = @transform_2, window_bounds = array<i64: 1, 128>}, {pipeline_mode = #tpu.pipeline_mode<synchronous>, transform_indices = @transform_3, window_bounds = array<i64: 1, 128>}, {pipeline_mode = #tpu.pipeline_mode<synchronous>, transform_indices = @transform_4, window_bounds = array<i64: 1, 128>}, {pipeline_mode = #tpu.pipeline_mode<synchronous>, transform_indices = @transform_5, window_bounds = array<i64: 1, 128>}, {pipeline_mode = #tpu.pipeline_mode<synchronous>, transform_indices = @transform_6, window_bounds = array<i64: 1, 128>}, {pipeline_mode = #tpu.pipeline_mode<synchronous>, transform_indices = @transform_7, window_bounds = array<i64: 128, 256>}, {pipeline_mode = #tpu.pipeline_mode<synchronous>, transform_indices = @transform_8, window_bounds = array<i64: 1, 256>}, {pipeline_mode = #tpu.pipeline_mode<synchronous>, transform_indices = @transform_9, window_bounds = array<i64: 256, 128>}, {pipeline_mode = #tpu.pipeline_mode<synchronous>, transform_indices = @transform_10, window_bounds = array<i64: 1, 128>}, {pipeline_mode = #tpu.pipeline_mode<synchronous>, transform_indices = @transform_11, window_bounds = array<i64: 1, 128>}, {pipeline_mode = #tpu.pipeline_mode<synchronous>, transform_indices = @transform_12, window_bounds = array<i64: 1, 128>}, {pipeline_mode = #tpu.pipeline_mode<synchronous>, transform_indices = @transform_13, window_bounds = array<i64: 128, 128>}, {pipeline_mode = #tpu.pipeline_mode<synchronous>, transform_indices = @transform_14, window_bounds = array<i64: 2, 128>}]} {
    %c0 = arith.constant 0 : index
    %c0_0 = arith.constant 0 : index
    %0 = vector.load %arg1[%c0, %c0_0] : memref<8x512xbf16, #tpu.memory_space<vmem>>, vector<8x512xbf16>
    %c0_1 = arith.constant 0 : index
    %c0_2 = arith.constant 0 : index
    %1 = vector.load %arg2[%c0_1, %c0_2] : memref<512x128xbf16, #tpu.memory_space<vmem>>, vector<512x128xbf16>
    %cst = arith.constant dense<0.000000e+00> : vector<8x128xf32>
    %2 = tpu.matmul %0, %1, %cst {dimension_numbers = #tpu.dot_dimension_numbers<[1], [0], [0], [1], [0, 0, 1, 1], [], []>} : vector<8x512xbf16>, vector<512x128xbf16>, vector<8x128xf32> -> vector<8x128xf32>
    %c0_3 = arith.constant 0 : index
    %c0_4 = arith.constant 0 : index
    %3 = vector.load %arg3[%c0_3, %c0_4] : memref<1x128xf32, #tpu.memory_space<vmem>>, vector<1x128xf32>
    %4 = vector.broadcast %3 : vector<1x128xf32> to vector<8x128xf32>
    %5 = arith.addf %2, %4 : vector<8x128xf32>
    %c0_5 = arith.constant 0 : index
    %c0_6 = arith.constant 0 : index
    %6 = vector.load %arg4[%c0_5, %c0_6] : memref<1x128xf32, #tpu.memory_space<vmem>>, vector<1x128xf32>
    %c0_7 = arith.constant 0 : index
    %c0_8 = arith.constant 0 : index
    %7 = vector.load %arg5[%c0_7, %c0_8] : memref<1x128xf32, #tpu.memory_space<vmem>>, vector<1x128xf32>
    %cst_9 = arith.constant dense<0.000000e+00> : vector<8xf32>
    %8 = vector.multi_reduction <add>, %5, %cst_9 [1] : vector<8x128xf32> to vector<8xf32>
    %9 = vector.shape_cast %8 : vector<8xf32> to vector<8x1xf32>
    %cst_10 = arith.constant 1.562500e-02 : f32
    %10 = vector.broadcast %cst_10 : f32 to vector<8x1xf32>
    %11 = arith.mulf %9, %10 : vector<8x1xf32>
    %12 = arith.mulf %5, %5 : vector<8x128xf32>
    %cst_11 = arith.constant dense<0.000000e+00> : vector<8xf32>
    %13 = vector.multi_reduction <add>, %12, %cst_11 [1] : vector<8x128xf32> to vector<8xf32>
    %14 = vector.shape_cast %13 : vector<8xf32> to vector<8x1xf32>
    %cst_12 = arith.constant 1.562500e-02 : f32
    %15 = vector.broadcast %cst_12 : f32 to vector<8x1xf32>
    %16 = arith.mulf %14, %15 : vector<8x1xf32>
    %17 = arith.mulf %11, %11 : vector<8x1xf32>
    %18 = arith.subf %16, %17 : vector<8x1xf32>
    %cst_13 = arith.constant 0.000000e+00 : f32
    %19 = vector.broadcast %cst_13 : f32 to vector<8x1xf32>
    %20 = arith.maximumf %18, %19 : vector<8x1xf32>
    %21 = vector.broadcast %11 : vector<8x1xf32> to vector<8x128xf32>
    %22 = arith.subf %5, %21 : vector<8x128xf32>
    %cst_14 = arith.constant 9.99999974E-6 : f32
    %23 = vector.broadcast %cst_14 : f32 to vector<8x1xf32>
    %24 = arith.addf %20, %23 : vector<8x1xf32>
    %25 = math.rsqrt %24 : vector<8x1xf32>
    %26 = vector.broadcast %25 : vector<8x1xf32> to vector<8x128xf32>
    %27 = arith.mulf %22, %26 : vector<8x128xf32>
    %28 = vector.broadcast %6 : vector<1x128xf32> to vector<8x128xf32>
    %29 = arith.mulf %27, %28 : vector<8x128xf32>
    %30 = vector.broadcast %7 : vector<1x128xf32> to vector<8x128xf32>
    %31 = arith.addf %29, %30 : vector<8x128xf32>
    %c0_15 = arith.constant 0 : index
    %c0_16 = arith.constant 0 : index
    %32 = vector.load %arg6[%c0_15, %c0_16] : memref<1x128xf32, #tpu.memory_space<vmem>>, vector<1x128xf32>
    %c0_17 = arith.constant 0 : index
    %c0_18 = arith.constant 0 : index
    %33 = vector.load %arg7[%c0_17, %c0_18] : memref<1x128xf32, #tpu.memory_space<vmem>>, vector<1x128xf32>
    %cst_19 = arith.constant dense<0.000000e+00> : vector<8xf32>
    %34 = vector.multi_reduction <add>, %31, %cst_19 [1] : vector<8x128xf32> to vector<8xf32>
    %35 = vector.shape_cast %34 : vector<8xf32> to vector<8x1xf32>
    %cst_20 = arith.constant 1.562500e-02 : f32
    %36 = vector.broadcast %cst_20 : f32 to vector<8x1xf32>
    %37 = arith.mulf %35, %36 : vector<8x1xf32>
    %38 = arith.mulf %31, %31 : vector<8x128xf32>
    %cst_21 = arith.constant dense<0.000000e+00> : vector<8xf32>
    %39 = vector.multi_reduction <add>, %38, %cst_21 [1] : vector<8x128xf32> to vector<8xf32>
    %40 = vector.shape_cast %39 : vector<8xf32> to vector<8x1xf32>
    %cst_22 = arith.constant 1.562500e-02 : f32
    %41 = vector.broadcast %cst_22 : f32 to vector<8x1xf32>
    %42 = arith.mulf %40, %41 : vector<8x1xf32>
    %43 = arith.mulf %37, %37 : vector<8x1xf32>
    %44 = arith.subf %42, %43 : vector<8x1xf32>
    %cst_23 = arith.constant 0.000000e+00 : f32
    %45 = vector.broadcast %cst_23 : f32 to vector<8x1xf32>
    %46 = arith.maximumf %44, %45 : vector<8x1xf32>
    %47 = vector.broadcast %37 : vector<8x1xf32> to vector<8x128xf32>
    %48 = arith.subf %31, %47 : vector<8x128xf32>
    %cst_24 = arith.constant 9.99999974E-6 : f32
    %49 = vector.broadcast %cst_24 : f32 to vector<8x1xf32>
    %50 = arith.addf %46, %49 : vector<8x1xf32>
    %51 = math.rsqrt %50 : vector<8x1xf32>
    %52 = vector.broadcast %51 : vector<8x1xf32> to vector<8x128xf32>
    %53 = arith.mulf %48, %52 : vector<8x128xf32>
    %54 = vector.broadcast %32 : vector<1x128xf32> to vector<8x128xf32>
    %55 = arith.mulf %53, %54 : vector<8x128xf32>
    %56 = vector.broadcast %33 : vector<1x128xf32> to vector<8x128xf32>
    %57 = arith.addf %55, %56 : vector<8x128xf32>
    %58 = arith.truncf %57 : vector<8x128xf32> to vector<8x128xbf16>
    %c0_25 = arith.constant 0 : index
    %c0_26 = arith.constant 0 : index
    %59 = vector.load %arg8[%c0_25, %c0_26] : memref<128x256xbf16, #tpu.memory_space<vmem>>, vector<128x256xbf16>
    %cst_27 = arith.constant dense<0.000000e+00> : vector<8x256xf32>
    %60 = tpu.matmul %58, %59, %cst_27 {dimension_numbers = #tpu.dot_dimension_numbers<[1], [0], [0], [1], [0, 0, 1, 1], [], []>} : vector<8x128xbf16>, vector<128x256xbf16>, vector<8x256xf32> -> vector<8x256xf32>
    %c0_28 = arith.constant 0 : index
    %c0_29 = arith.constant 0 : index
    %61 = vector.load %arg9[%c0_28, %c0_29] : memref<1x256xf32, #tpu.memory_space<vmem>>, vector<1x256xf32>
    %62 = vector.broadcast %61 : vector<1x256xf32> to vector<8x256xf32>
    %63 = arith.addf %60, %62 : vector<8x256xf32>
    %64 = arith.mulf %63, %63 : vector<8x256xf32>
    %65 = arith.mulf %63, %64 : vector<8x256xf32>
    %cst_30 = arith.constant 4.471500e-02 : f32
    %66 = vector.broadcast %cst_30 : f32 to vector<8x256xf32>
    %67 = arith.mulf %66, %65 : vector<8x256xf32>
    %68 = arith.addf %63, %67 : vector<8x256xf32>
    %cst_31 = arith.constant 0.797884583 : f32
    %69 = vector.broadcast %cst_31 : f32 to vector<8x256xf32>
    %70 = arith.mulf %69, %68 : vector<8x256xf32>
    %71 = math.tanh %70 : vector<8x256xf32>
    %cst_32 = arith.constant 1.000000e+00 : f32
    %72 = vector.broadcast %cst_32 : f32 to vector<8x256xf32>
    %73 = arith.addf %72, %71 : vector<8x256xf32>
    %cst_33 = arith.constant 5.000000e-01 : f32
    %74 = vector.broadcast %cst_33 : f32 to vector<8x256xf32>
    %75 = arith.mulf %74, %73 : vector<8x256xf32>
    %76 = arith.mulf %63, %75 : vector<8x256xf32>
    %77 = arith.truncf %76 : vector<8x256xf32> to vector<8x256xbf16>
    %c0_34 = arith.constant 0 : index
    %c0_35 = arith.constant 0 : index
    %78 = vector.load %arg10[%c0_34, %c0_35] : memref<256x128xbf16, #tpu.memory_space<vmem>>, vector<256x128xbf16>
    %cst_36 = arith.constant dense<0.000000e+00> : vector<8x128xf32>
    %79 = tpu.matmul %77, %78, %cst_36 {dimension_numbers = #tpu.dot_dimension_numbers<[1], [0], [0], [1], [0, 0, 1, 1], [], []>} : vector<8x256xbf16>, vector<256x128xbf16>, vector<8x128xf32> -> vector<8x128xf32>
    %c0_37 = arith.constant 0 : index
    %c0_38 = arith.constant 0 : index
    %80 = vector.load %arg11[%c0_37, %c0_38] : memref<1x128xf32, #tpu.memory_space<vmem>>, vector<1x128xf32>
    %81 = vector.broadcast %80 : vector<1x128xf32> to vector<8x128xf32>
    %82 = arith.addf %79, %81 : vector<8x128xf32>
    %83 = arith.addf %31, %82 : vector<8x128xf32>
    %c0_39 = arith.constant 0 : index
    %c0_40 = arith.constant 0 : index
    %84 = vector.load %arg12[%c0_39, %c0_40] : memref<1x128xf32, #tpu.memory_space<vmem>>, vector<1x128xf32>
    %c0_41 = arith.constant 0 : index
    %c0_42 = arith.constant 0 : index
    %85 = vector.load %arg13[%c0_41, %c0_42] : memref<1x128xf32, #tpu.memory_space<vmem>>, vector<1x128xf32>
    %cst_43 = arith.constant dense<0.000000e+00> : vector<8xf32>
    %86 = vector.multi_reduction <add>, %83, %cst_43 [1] : vector<8x128xf32> to vector<8xf32>
    %87 = vector.shape_cast %86 : vector<8xf32> to vector<8x1xf32>
    %cst_44 = arith.constant 1.562500e-02 : f32
    %88 = vector.broadcast %cst_44 : f32 to vector<8x1xf32>
    %89 = arith.mulf %87, %88 : vector<8x1xf32>
    %90 = arith.mulf %83, %83 : vector<8x128xf32>
    %cst_45 = arith.constant dense<0.000000e+00> : vector<8xf32>
    %91 = vector.multi_reduction <add>, %90, %cst_45 [1] : vector<8x128xf32> to vector<8xf32>
    %92 = vector.shape_cast %91 : vector<8xf32> to vector<8x1xf32>
    %cst_46 = arith.constant 1.562500e-02 : f32
    %93 = vector.broadcast %cst_46 : f32 to vector<8x1xf32>
    %94 = arith.mulf %92, %93 : vector<8x1xf32>
    %95 = arith.mulf %89, %89 : vector<8x1xf32>
    %96 = arith.subf %94, %95 : vector<8x1xf32>
    %cst_47 = arith.constant 0.000000e+00 : f32
    %97 = vector.broadcast %cst_47 : f32 to vector<8x1xf32>
    %98 = arith.maximumf %96, %97 : vector<8x1xf32>
    %99 = vector.broadcast %89 : vector<8x1xf32> to vector<8x128xf32>
    %100 = arith.subf %83, %99 : vector<8x128xf32>
    %cst_48 = arith.constant 9.99999974E-6 : f32
    %101 = vector.broadcast %cst_48 : f32 to vector<8x1xf32>
    %102 = arith.addf %98, %101 : vector<8x1xf32>
    %103 = math.rsqrt %102 : vector<8x1xf32>
    %104 = vector.broadcast %103 : vector<8x1xf32> to vector<8x128xf32>
    %105 = arith.mulf %100, %104 : vector<8x128xf32>
    %106 = vector.broadcast %84 : vector<1x128xf32> to vector<8x128xf32>
    %107 = arith.mulf %105, %106 : vector<8x128xf32>
    %108 = vector.broadcast %85 : vector<1x128xf32> to vector<8x128xf32>
    %109 = arith.addf %107, %108 : vector<8x128xf32>
    %110 = tpu.iota {dimensions = array<i32: 0>} : vector<8x1xi32>
    %c0_i32 = arith.constant 0 : i32
    %111 = vector.broadcast %c0_i32 : i32 to vector<8x1xi32>
    %112 = arith.cmpi sge, %110, %111 : vector<8x1xi32>
    %c4_i32 = arith.constant 4 : i32
    %113 = vector.broadcast %c4_i32 : i32 to vector<8x1xi32>
    %114 = arith.cmpi slt, %110, %113 : vector<8x1xi32>
    %115 = arith.andi %112, %114 : vector<8x1xi1>
    %116 = arith.extui %115 : vector<8x1xi1> to vector<8x1xi32>
    %117 = arith.sitofp %116 : vector<8x1xi32> to vector<8x1xf32>
    %118 = vector.broadcast %117 : vector<8x1xf32> to vector<8x128xf32>
    %119 = arith.mulf %109, %118 : vector<8x128xf32>
    %cst_49 = arith.constant dense<0.000000e+00> : vector<128xf32>
    %120 = vector.multi_reduction <add>, %119, %cst_49 [0] : vector<8x128xf32> to vector<128xf32>
    %121 = vector.shape_cast %120 : vector<128xf32> to vector<1x128xf32>
    %cst_50 = arith.constant 2.500000e-01 : f32
    %122 = vector.broadcast %cst_50 : f32 to vector<1x128xf32>
    %123 = arith.mulf %121, %122 : vector<1x128xf32>
    %c0_51 = arith.constant 0 : index
    %c0_52 = arith.constant 0 : index
    %124 = vector.load %arg14[%c0_51, %c0_52] : memref<128x128xf32, #tpu.memory_space<vmem>>, vector<128x128xf32>
    %cst_53 = arith.constant dense<0.000000e+00> : vector<1x128xf32>
    %125 = tpu.matmul %123, %124, %cst_53 {dimension_numbers = #tpu.dot_dimension_numbers<[1], [0], [0], [1], [0, 0, 1, 1], [], []>} : vector<1x128xf32>, vector<128x128xf32>, vector<1x128xf32> -> vector<1x128xf32>
    %c0_54 = arith.constant 0 : index
    %c0_55 = arith.constant 0 : index
    %126 = vector.load %arg15[%c0_54, %c0_55] : memref<2x128xf32, #tpu.memory_space<vmem>>, vector<1x128xf32>
    tpu.vector_store %arg15[%c0_54, %c0_55], %125 {strides = array<i32>} : memref<2x128xf32, #tpu.memory_space<vmem>>, vector<1x128xf32>,
    %c4_i32_56 = arith.constant 4 : i32
    %127 = vector.broadcast %c4_i32_56 : i32 to vector<8x1xi32>
    %128 = arith.cmpi sge, %110, %127 : vector<8x1xi32>
    %c8_i32 = arith.constant 8 : i32
    %129 = vector.broadcast %c8_i32 : i32 to vector<8x1xi32>
    %130 = arith.cmpi slt, %110, %129 : vector<8x1xi32>
    %131 = arith.andi %128, %130 : vector<8x1xi1>
    %132 = arith.extui %131 : vector<8x1xi1> to vector<8x1xi32>
    %133 = arith.sitofp %132 : vector<8x1xi32> to vector<8x1xf32>
    %134 = vector.broadcast %133 : vector<8x1xf32> to vector<8x128xf32>
    %135 = arith.mulf %109, %134 : vector<8x128xf32>
    %cst_57 = arith.constant dense<0.000000e+00> : vector<128xf32>
    %136 = vector.multi_reduction <add>, %135, %cst_57 [0] : vector<8x128xf32> to vector<128xf32>
    %137 = vector.shape_cast %136 : vector<128xf32> to vector<1x128xf32>
    %cst_58 = arith.constant 2.500000e-01 : f32
    %138 = vector.broadcast %cst_58 : f32 to vector<1x128xf32>
    %139 = arith.mulf %137, %138 : vector<1x128xf32>
    %c0_59 = arith.constant 0 : index
    %c0_60 = arith.constant 0 : index
    %140 = vector.load %arg14[%c0_59, %c0_60] : memref<128x128xf32, #tpu.memory_space<vmem>>, vector<128x128xf32>
    %cst_61 = arith.constant dense<0.000000e+00> : vector<1x128xf32>
    %141 = tpu.matmul %139, %140, %cst_61 {dimension_numbers = #tpu.dot_dimension_numbers<[1], [0], [0], [1], [0, 0, 1, 1], [], []>} : vector<1x128xf32>, vector<128x128xf32>, vector<1x128xf32> -> vector<1x128xf32>
    %c1 = arith.constant 1 : index
    %c0_62 = arith.constant 0 : index
    %142 = vector.load %arg15[%c1, %c0_62] : memref<2x128xf32, #tpu.memory_space<vmem>>, vector<1x128xf32>
    tpu.vector_store %arg15[%c1, %c0_62], %141 {strides = array<i32>} : memref<2x128xf32, #tpu.memory_space<vmem>>, vector<1x128xf32>,
    return
  }
  func.func @transform_0(%arg0: i32) -> (i32, i32) {
    %c0_i32 = arith.constant 0 : i32
    %c0_i32_0 = arith.constant 0 : i32
    return %arg0, %c0_i32 : i32, i32
  }
  func.func @transform_1(%arg0: i32) -> (i32, i32) {
    %c0_i32 = arith.constant 0 : i32
    %c0_i32_0 = arith.constant 0 : i32
    %c0_i32_1 = arith.constant 0 : i32
    return %c0_i32, %c0_i32_0 : i32, i32
  }
  func.func @transform_2(%arg0: i32) -> (i32, i32) {
    %c0_i32 = arith.constant 0 : i32
    %c0_i32_0 = arith.constant 0 : i32
    %c0_i32_1 = arith.constant 0 : i32
    return %c0_i32, %c0_i32_0 : i32, i32
  }
  func.func @transform_3(%arg0: i32) -> (i32, i32) {
    %c0_i32 = arith.constant 0 : i32
    %c0_i32_0 = arith.constant 0 : i32
    %c0_i32_1 = arith.constant 0 : i32
    return %c0_i32, %c0_i32_0 : i32, i32
  }
  func.func @transform_4(%arg0: i32) -> (i32, i32) {
    %c0_i32 = arith.constant 0 : i32
    %c0_i32_0 = arith.constant 0 : i32
    %c0_i32_1 = arith.constant 0 : i32
    return %c0_i32, %c0_i32_0 : i32, i32
  }
  func.func @transform_5(%arg0: i32) -> (i32, i32) {
    %c0_i32 = arith.constant 0 : i32
    %c0_i32_0 = arith.constant 0 : i32
    %c0_i32_1 = arith.constant 0 : i32
    return %c0_i32, %c0_i32_0 : i32, i32
  }
  func.func @transform_6(%arg0: i32) -> (i32, i32) {
    %c0_i32 = arith.constant 0 : i32
    %c0_i32_0 = arith.constant 0 : i32
    %c0_i32_1 = arith.constant 0 : i32
    return %c0_i32, %c0_i32_0 : i32, i32
  }
  func.func @transform_7(%arg0: i32) -> (i32, i32) {
    %c0_i32 = arith.constant 0 : i32
    %c0_i32_0 = arith.constant 0 : i32
    %c0_i32_1 = arith.constant 0 : i32
    return %c0_i32, %c0_i32_0 : i32, i32
  }
  func.func @transform_8(%arg0: i32) -> (i32, i32) {
    %c0_i32 = arith.constant 0 : i32
    %c0_i32_0 = arith.constant 0 : i32
    %c0_i32_1 = arith.constant 0 : i32
    return %c0_i32, %c0_i32_0 : i32, i32
  }
  func.func @transform_9(%arg0: i32) -> (i32, i32) {
    %c0_i32 = arith.constant 0 : i32
    %c0_i32_0 = arith.constant 0 : i32
    %c0_i32_1 = arith.constant 0 : i32
    return %c0_i32, %c0_i32_0 : i32, i32
  }
  func.func @transform_10(%arg0: i32) -> (i32, i32) {
    %c0_i32 = arith.constant 0 : i32
    %c0_i32_0 = arith.constant 0 : i32
    %c0_i32_1 = arith.constant 0 : i32
    return %c0_i32, %c0_i32_0 : i32, i32
  }
  func.func @transform_11(%arg0: i32) -> (i32, i32) {
    %c0_i32 = arith.constant 0 : i32
    %c0_i32_0 = arith.constant 0 : i32
    %c0_i32_1 = arith.constant 0 : i32
    return %c0_i32, %c0_i32_0 : i32, i32
  }
  func.func @transform_12(%arg0: i32) -> (i32, i32) {
    %c0_i32 = arith.constant 0 : i32
    %c0_i32_0 = arith.constant 0 : i32
    %c0_i32_1 = arith.constant 0 : i32
    return %c0_i32, %c0_i32_0 : i32, i32
  }
  func.func @transform_13(%arg0: i32) -> (i32, i32) {
    %c0_i32 = arith.constant 0 : i32
    %c0_i32_0 = arith.constant 0 : i32
    %c0_i32_1 = arith.constant 0 : i32
    return %c0_i32, %c0_i32_0 : i32, i32
  }
  func.func @transform_14(%arg0: i32) -> (i32, i32) {
    %c0_i32 = arith.constant 0 : i32
    %c0_i32_0 = arith.constant 0 : i32
    %c0_i32_1 = arith.constant 0 : i32
    return %c0_i32, %c0_i32_0 : i32, i32
  }
}

</mosaic_0001>

<llo_original>
// kernel: transwcd_single_forward.4
$region0: #{transwcd_single_forward.4}
  #allocation0 [shape = 'u32[]', space=smem, size = 0x4, offset = 0x4, fixed_abs, tag = 'smem constant byte address 0x4 - core index']
  #allocation1 [shape = 'u32[72,128]{1,0:T(1,128)}', space=vmem, size = 0x9000, scoped, tag = 'internal scratch']
  %s0 = inlined_call_operand.vmem [shape: bf16[512,48], index: 0, kind: input, shape index: {}]
  %s1 = inlined_call_operand.vmem [shape: bf16[48,128], index: 1, kind: input, shape index: {}]
  %s2 = inlined_call_operand.vmem [shape: f32[1,128], index: 2, kind: input, shape index: {}]
  %s3 = inlined_call_operand.vmem [shape: f32[1,128], index: 3, kind: input, shape index: {}]
  %s4 = inlined_call_operand.vmem [shape: f32[1,128], index: 4, kind: input, shape index: {}]
  %s5 = inlined_call_operand.vmem [shape: f32[1,128], index: 5, kind: input, shape index: {}]
  %s6 = inlined_call_operand.vmem [shape: f32[1,128], index: 6, kind: input, shape index: {}]
  %s7 = inlined_call_operand.vmem [shape: bf16[128,128], index: 7, kind: input, shape index: {}]
  %s8 = inlined_call_operand.vmem [shape: f32[1,128], index: 8, kind: input, shape index: {}]
  %s9 = inlined_call_operand.vmem [shape: bf16[128,128], index: 9, kind: input, shape index: {}]
  %s10 = inlined_call_operand.vmem [shape: f32[1,128], index: 10, kind: input, shape index: {}]
  %s11 = inlined_call_operand.vmem [shape: f32[1,128], index: 11, kind: input, shape index: {}]
  %s12 = inlined_call_operand.vmem [shape: f32[1,128], index: 12, kind: input, shape index: {}]
  %s13 = inlined_call_operand.vmem [shape: bf16[512,128], index: 13, kind: output, shape index: {}]
  %s14 = sld [smem:[#allocation0]]
  $region85: #{transwcd_single_forward.4} parent=0
    _
  %s16 = ssub.s32 1, %s14
  %s17 = scalar_select 0, %s16, %s14
  loop: start=0, step=1, limit=4
  $region2: #{transwcd_single_forward.4} parent=0 // loop_pre_header
    _
  $region3: #{transwcd_single_forward.4} parent=0 // loop_header
    %s19 = sphi 0, %s23
    %p20 = scmp.ge.s32.totalorder %s19, 4
    %s29 = sphi 0, %s31
    %s32 = sphi 0, %s29
    %s33 = sphi 0, %s32
    %s49 = sphi 0, %s33
    %s53 = sphi 0, %s53
    %s55 = sphi 0, %s53
    %s56 = sphi 0, %s55
    %s70 = sphi 0, %s56
    %s74 = sphi 0, %s74
    %s76 = sphi 0, %s74
    %s77 = sphi 0, %s76
    %s91 = sphi 0, %s77
    %s95 = sphi 0, %s95
    %s97 = sphi 0, %s95
    %s98 = sphi 0, %s97
    %s112 = sphi 0, %s98
    %s116 = sphi 0, %s116
    %s118 = sphi 0, %s116
    %s119 = sphi 0, %s118
    %s133 = sphi 0, %s119
    %s137 = sphi 0, %s137
    %s139 = sphi 0, %s137
    %s140 = sphi 0, %s139
    %s154 = sphi 0, %s140
    %s158 = sphi 0, %s158
    %s160 = sphi 0, %s158
    %s161 = sphi 0, %s160
    %s175 = sphi 0, %s161
    %s179 = sphi 0, %s179
    %s181 = sphi 0, %s179
    %s182 = sphi 0, %s181
    %s196 = sphi 0, %s182
    %s200 = sphi 0, %s200
    %s202 = sphi 0, %s200
    %s203 = sphi 0, %s202
    %s217 = sphi 0, %s203
    %s221 = sphi 0, %s221
    %s223 = sphi 0, %s221
    %s224 = sphi 0, %s223
    %s238 = sphi 0, %s224
    %s242 = sphi 0, %s242
    %s244 = sphi 0, %s242
    %s245 = sphi 0, %s244
    %s259 = sphi 0, %s245
    %s263 = sphi 0, %s263
    %s265 = sphi 0, %s263
    %s266 = sphi 0, %s265
    %s280 = sphi 0, %s266
    %s284 = sphi 0, %s284
    %s286 = sphi 0, %s284
    %s287 = sphi 0, %s286
    %s301 = sphi 0, %s287
    %s307 = sphi 0, %s309
    %s310 = sphi 0, %s307
    %s311 = sphi 0, %s310
    %s327 = sphi 0, %s311
  $region4: #{transwcd_single_forward.4} parent=0 // loop_header_branch
    %22 = sbr.rel (%p20) target = $region8
  $region5: #{transwcd_single_forward.4} parent=0 // loop_body
    %s24 = ssub.s32 %s19, 1
    %s25 = ssub.s32 %s19, 2
    %s26 = sadd.s32 %s19, 1
    %s27 = ssub.s32 %s19, %s26
    %p28 = scmp.eq.s32.totalorder %s27, 0
    %s30 = sadd.s32 %s29, 1
    %s31 = scalar_select %p28, %s29, %s30
    %p34 = pneg %p28
    %p35 = scmp.eq.s32.totalorder %s19, 1
    %p36 = por %p34, %p35
    %p37 = scmp.ne.s32.totalorder %s29, %s32
    %p38 = scmp.eq.s32.totalorder %s19, 0
    %p39 = por %p37, %p38
    %p40 = scmp.ne.s32.totalorder %s29, %s32
    %p41 = scmp.eq.s32.totalorder %s24, 1
    %p42 = por %p40, %p41
    %p43 = scmp.ne.s32.totalorder %s32, %s33
    %p44 = scmp.eq.s32.totalorder %s24, 0
    %p45 = por %p43, %p44
    %p46 = scmp.ne.s32.totalorder %s32, %s33
    %p47 = scmp.eq.s32.totalorder %s25, 1
    %p48 = por %p46, %p47
    %p50 = scmp.ne.s32.totalorder %s33, %s49
    %p51 = scmp.eq.s32.totalorder %s25, 0
    %p52 = por %p50, %p51
    %s54 = sadd.s32 %s53, 1
    %p57 = scmp.eq.s32.totalorder %s19, 1
    %p58 = scmp.ne.s32.totalorder %s53, %s55
    %p59 = scmp.eq.s32.totalorder %s19, 0
    %p60 = por %p58, %p59
    %p61 = scmp.ne.s32.totalorder %s53, %s55
    %p62 = scmp.eq.s32.totalorder %s24, 1
    %p63 = por %p61, %p62
    %p64 = scmp.ne.s32.totalorder %s55, %s56
    %p65 = scmp.eq.s32.totalorder %s24, 0
    %p66 = por %p64, %p65
    %p67 = scmp.ne.s32.totalorder %s55, %s56
    %p68 = scmp.eq.s32.totalorder %s25, 1
    %p69 = por %p67, %p68
    %p71 = scmp.ne.s32.totalorder %s56, %s70
    %p72 = scmp.eq.s32.totalorder %s25, 0
    %p73 = por %p71, %p72
    %s75 = sadd.s32 %s74, 1
    %p78 = scmp.eq.s32.totalorder %s19, 1
    %p79 = scmp.ne.s32.totalorder %s74, %s76
    %p80 = scmp.eq.s32.totalorder %s19, 0
    %p81 = por %p79, %p80
    %p82 = scmp.ne.s32.totalorder %s74, %s76
    %p83 = scmp.eq.s32.totalorder %s24, 1
    %p84 = por %p82, %p83
    %p85 = scmp.ne.s32.totalorder %s76, %s77
    %p86 = scmp.eq.s32.totalorder %s24, 0
    %p87 = por %p85, %p86
    %p88 = scmp.ne.s32.totalorder %s76, %s77
    %p89 = scmp.eq.s32.totalorder %s25, 1
    %p90 = por %p88, %p89
    %p92 = scmp.ne.s32.totalorder %s77, %s91
    %p93 = scmp.eq.s32.totalorder %s25, 0
    %p94 = por %p92, %p93
    %s96 = sadd.s32 %s95, 1
    %p99 = scmp.eq.s32.totalorder %s19, 1
    %p100 = scmp.ne.s32.totalorder %s95, %s97
    %p101 = scmp.eq.s32.totalorder %s19, 0
    %p102 = por %p100, %p101
    %p103 = scmp.ne.s32.totalorder %s95, %s97
    %p104 = scmp.eq.s32.totalorder %s24, 1
    %p105 = por %p103, %p104
    %p106 = scmp.ne.s32.totalorder %s97, %s98
    %p107 = scmp.eq.s32.totalorder %s24, 0
    %p108 = por %p106, %p107
    %p109 = scmp.ne.s32.totalorder %s97, %s98
    %p110 = scmp.eq.s32.totalorder %s25, 1
    %p111 = por %p109, %p110
    %p113 = scmp.ne.s32.totalorder %s98, %s112
    %p114 = scmp.eq.s32.totalorder %s25, 0
    %p115 = por %p113, %p114
    %s117 = sadd.s32 %s116, 1
    %p120 = scmp.eq.s32.totalorder %s19, 1
    %p121 = scmp.ne.s32.totalorder %s116, %s118
    %p122 = scmp.eq.s32.totalorder %s19, 0
    %p123 = por %p121, %p122
    %p124 = scmp.ne.s32.totalorder %s116, %s118
    %p125 = scmp.eq.s32.totalorder %s24, 1
    %p126 = por %p124, %p125
    %p127 = scmp.ne.s32.totalorder %s118, %s119
    %p128 = scmp.eq.s32.totalorder %s24, 0
    %p129 = por %p127, %p128
    %p130 = scmp.ne.s32.totalorder %s118, %s119
    %p131 = scmp.eq.s32.totalorder %s25, 1
    %p132 = por %p130, %p131
    %p134 = scmp.ne.s32.totalorder %s119, %s133
    %p135 = scmp.eq.s32.totalorder %s25, 0
    %p136 = por %p134, %p135
    %s138 = sadd.s32 %s137, 1
    %p141 = scmp.eq.s32.totalorder %s19, 1
    %p142 = scmp.ne.s32.totalorder %s137, %s139
    %p143 = scmp.eq.s32.totalorder %s19, 0
    %p144 = por %p142, %p143
    %p145 = scmp.ne.s32.totalorder %s137, %s139
    %p146 = scmp.eq.s32.totalorder %s24, 1
    %p147 = por %p145, %p146
    %p148 = scmp.ne.s32.totalorder %s139, %s140
    %p149 = scmp.eq.s32.totalorder %s24, 0
    %p150 = por %p148, %p149
    %p151 = scmp.ne.s32.totalorder %s139, %s140
    %p152 = scmp.eq.s32.totalorder %s25, 1
    %p153 = por %p151, %p152
    %p155 = scmp.ne.s32.totalorder %s140, %s154
    %p156 = scmp.eq.s32.totalorder %s25, 0
    %p157 = por %p155, %p156
    %s159 = sadd.s32 %s158, 1
    %p162 = scmp.eq.s32.totalorder %s19, 1
    %p163 = scmp.ne.s32.totalorder %s158, %s160
    %p164 = scmp.eq.s32.totalorder %s19, 0
    %p165 = por %p163, %p164
    %p166 = scmp.ne.s32.totalorder %s158, %s160
    %p167 = scmp.eq.s32.totalorder %s24, 1
    %p168 = por %p166, %p167
    %p169 = scmp.ne.s32.totalorder %s160, %s161
    %p170 = scmp.eq.s32.totalorder %s24, 0
    %p171 = por %p169, %p170
    %p172 = scmp.ne.s32.totalorder %s160, %s161
    %p173 = scmp.eq.s32.totalorder %s25, 1
    %p174 = por %p172, %p173
    %p176 = scmp.ne.s32.totalorder %s161, %s175
    %p177 = scmp.eq.s32.totalorder %s25, 0
    %p178 = por %p176, %p177
    %s180 = sadd.s32 %s179, 1
    %p183 = scmp.eq.s32.totalorder %s19, 1
    %p184 = scmp.ne.s32.totalorder %s179, %s181
    %p185 = scmp.eq.s32.totalorder %s19, 0
    %p186 = por %p184, %p185
    %p187 = scmp.ne.s32.totalorder %s179, %s181
    %p188 = scmp.eq.s32.totalorder %s24, 1
    %p189 = por %p187, %p188
    %p190 = scmp.ne.s32.totalorder %s181, %s182
    %p191 = scmp.eq.s32.totalorder %s24, 0
    %p192 = por %p190, %p191
    %p193 = scmp.ne.s32.totalorder %s181, %s182
    %p194 = scmp.eq.s32.totalorder %s25, 1
    %p195 = por %p193, %p194
    %p197 = scmp.ne.s32.totalorder %s182, %s196
    %p198 = scmp.eq.s32.totalorder %s25, 0
    %p199 = por %p197, %p198
    %s201 = sadd.s32 %s200, 1
    %p204 = scmp.eq.s32.totalorder %s19, 1
    %p205 = scmp.ne.s32.totalorder %s200, %s202
    %p206 = scmp.eq.s32.totalorder %s19, 0
    %p207 = por %p205, %p206
    %p208 = scmp.ne.s32.totalorder %s200, %s202
    %p209 = scmp.eq.s32.totalorder %s24, 1
    %p210 = por %p208, %p209
    %p211 = scmp.ne.s32.totalorder %s202, %s203
    %p212 = scmp.eq.s32.totalorder %s24, 0
    %p213 = por %p211, %p212
    %p214 = scmp.ne.s32.totalorder %s202, %s203
    %p215 = scmp.eq.s32.totalorder %s25, 1
    %p216 = por %p214, %p215
    %p218 = scmp.ne.s32.totalorder %s203, %s217
    %p219 = scmp.eq.s32.totalorder %s25, 0
    %p220 = por %p218, %p219
    %s222 = sadd.s32 %s221, 1
    %p225 = scmp.eq.s32.totalorder %s19, 1
    %p226 = scmp.ne.s32.totalorder %s221, %s223
    %p227 = scmp.eq.s32.totalorder %s19, 0
    %p228 = por %p226, %p227
    %p229 = scmp.ne.s32.totalorder %s221, %s223
    %p230 = scmp.eq.s32.totalorder %s24, 1
    %p231 = por %p229, %p230
    %p232 = scmp.ne.s32.totalorder %s223, %s224
    %p233 = scmp.eq.s32.totalorder %s24, 0
    %p234 = por %p232, %p233
    %p235 = scmp.ne.s32.totalorder %s223, %s224
    %p236 = scmp.eq.s32.totalorder %s25, 1
    %p237 = por %p235, %p236
    %p239 = scmp.ne.s32.totalorder %s224, %s238
    %p240 = scmp.eq.s32.totalorder %s25, 0
    %p241 = por %p239, %p240
    %s243 = sadd.s32 %s242, 1
    %p246 = scmp.eq.s32.totalorder %s19, 1
    %p247 = scmp.ne.s32.totalorder %s242, %s244
    %p248 = scmp.eq.s32.totalorder %s19, 0
    %p249 = por %p247, %p248
    %p250 = scmp.ne.s32.totalorder %s242, %s244
    %p251 = scmp.eq.s32.totalorder %s24, 1
    %p252 = por %p250, %p251
    %p253 = scmp.ne.s32.totalorder %s244, %s245
    %p254 = scmp.eq.s32.totalorder %s24, 0
    %p255 = por %p253, %p254
    %p256 = scmp.ne.s32.totalorder %s244, %s245
    %p257 = scmp.eq.s32.totalorder %s25, 1
    %p258 = por %p256, %p257
    %p260 = scmp.ne.s32.totalorder %s245, %s259
    %p261 = scmp.eq.s32.totalorder %s25, 0
    %p262 = por %p260, %p261
    %s264 = sadd.s32 %s263, 1
    %p267 = scmp.eq.s32.totalorder %s19, 1
    %p268 = scmp.ne.s32.totalorder %s263, %s265
    %p269 = scmp.eq.s32.totalorder %s19, 0
    %p270 = por %p268, %p269
    %p271 = scmp.ne.s32.totalorder %s263, %s265
    %p272 = scmp.eq.s32.totalorder %s24, 1
    %p273 = por %p271, %p272
    %p274 = scmp.ne.s32.totalorder %s265, %s266
    %p275 = scmp.eq.s32.totalorder %s24, 0
    %p276 = por %p274, %p275
    %p277 = scmp.ne.s32.totalorder %s265, %s266
    %p278 = scmp.eq.s32.totalorder %s25, 1
    %p279 = por %p277, %p278
    %p281 = scmp.ne.s32.totalorder %s266, %s280
    %p282 = scmp.eq.s32.totalorder %s25, 0
    %p283 = por %p281, %p282
    %s285 = sadd.s32 %s284, 1
    %p288 = scmp.eq.s32.totalorder %s19, 1
    %p289 = scmp.ne.s32.totalorder %s284, %s286
    %p290 = scmp.eq.s32.totalorder %s19, 0
    %p291 = por %p289, %p290
    %p292 = scmp.ne.s32.totalorder %s284, %s286
    %p293 = scmp.eq.s32.totalorder %s24, 1
    %p294 = por %p292, %p293
    %p295 = scmp.ne.s32.totalorder %s286, %s287
    %p296 = scmp.eq.s32.totalorder %s24, 0
    %p297 = por %p295, %p296
    %p298 = scmp.ne.s32.totalorder %s286, %s287
    %p299 = scmp.eq.s32.totalorder %s25, 1
    %p300 = por %p298, %p299
    %p302 = scmp.ne.s32.totalorder %s287, %s301
    %p303 = scmp.eq.s32.totalorder %s25, 0
    %p304 = por %p302, %p303
    %s305 = ssub.s32 %s19, %s26
    %p306 = scmp.eq.s32.totalorder %s305, 0
    %s308 = sadd.s32 %s307, 1
    %s309 = scalar_select %p306, %s307, %s308
    %p312 = pneg %p306
    %p313 = scmp.eq.s32.totalorder %s19, 1
    %p314 = por %p312, %p313
    %p315 = scmp.ne.s32.totalorder %s307, %s310
    %p316 = scmp.eq.s32.totalorder %s19, 0
    %p317 = por %p315, %p316
    %p318 = scmp.ne.s32.totalorder %s307, %s310
    %p319 = scmp.eq.s32.totalorder %s24, 1
    %p320 = por %p318, %p319
    %p321 = scmp.ne.s32.totalorder %s310, %s311
    %p322 = scmp.eq.s32.totalorder %s24, 0
    %p323 = por %p321, %p322
    %p324 = scmp.ne.s32.totalorder %s310, %s311
    %p325 = scmp.eq.s32.totalorder %s25, 1
    %p326 = por %p324, %p325
    %p328 = scmp.ne.s32.totalorder %s311, %s327
    %p329 = scmp.eq.s32.totalorder %s25, 0
    %p330 = por %p328, %p329
    %p331 = scmp.le.s32.totalorder 1, %s19
    %p332 = scmp.lt.s32.totalorder %s19, 3
    %p333 = pnand %p331, %p332
    %p334 = pneg %p333
    // Predicated region
    $region9: #{transwcd_single_forward.4} parent=5 // pred_check
      _
    $region10: #{transwcd_single_forward.4} parent=5 // pred_check_branch
      %336 = sbr.rel (%p333) target = $region12
    $region11: #{transwcd_single_forward.4} parent=5 // pred_region
      %s337 = ssub.s32 %s19, 1
      // Predicated region
      $region13: #{transwcd_single_forward.4} parent=11 // pred_check
        %p338 = pneg %p66
      $region14: #{transwcd_single_forward.4} parent=11 // pred_check_branch
        %340 = sbr.rel (%p338) target = $region16
      $region15: #{transwcd_single_forward.4} parent=11 // pred_region
        _
      $region16: #{transwcd_single_forward.4} parent=11 // pred_fallthru
        _
      // Predicated region
      $region17: #{transwcd_single_forward.4} parent=11 // pred_check
        %p341 = pneg %p87
      $region18: #{transwcd_single_forward.4} parent=11 // pred_check_branch
        %343 = sbr.rel (%p341) target = $region20
      $region19: #{transwcd_single_forward.4} parent=11 // pred_region
        _
      $region20: #{transwcd_single_forward.4} parent=11 // pred_fallthru
        _
      // Predicated region
      $region21: #{transwcd_single_forward.4} parent=11 // pred_check
        %p344 = pneg %p108
      $region22: #{transwcd_single_forward.4} parent=11 // pred_check_branch
        %346 = sbr.rel (%p344) target = $region24
      $region23: #{transwcd_single_forward.4} parent=11 // pred_region
        _
      $region24: #{transwcd_single_forward.4} parent=11 // pred_fallthru
        _
      // Predicated region
      $region25: #{transwcd_single_forward.4} parent=11 // pred_check
        %p347 = pneg %p129
      $region26: #{transwcd_single_forward.4} parent=11 // pred_check_branch
        %349 = sbr.rel (%p347) target = $region28
      $region27: #{transwcd_single_forward.4} parent=11 // pred_region
        _
      $region28: #{transwcd_single_forward.4} parent=11 // pred_fallthru
        _
      // Predicated region
      $region29: #{transwcd_single_forward.4} parent=11 // pred_check
        %p350 = pneg %p150
      $region30: #{transwcd_single_forward.4} parent=11 // pred_check_branch
        %352 = sbr.rel (%p350) target = $region32
      $region31: #{transwcd_single_forward.4} parent=11 // pred_region
        _
      $region32: #{transwcd_single_forward.4} parent=11 // pred_fallthru
        _
      // Predicated region
      $region33: #{transwcd_single_forward.4} parent=11 // pred_check
        %p353 = pneg %p171
      $region34: #{transwcd_single_forward.4} parent=11 // pred_check_branch
        %355 = sbr.rel (%p353) target = $region36
      $region35: #{transwcd_single_forward.4} parent=11 // pred_region
        _
      $region36: #{transwcd_single_forward.4} parent=11 // pred_fallthru
        _
      // Predicated region
      $region37: #{transwcd_single_forward.4} parent=11 // pred_check
        %p356 = pneg %p192
      $region38: #{transwcd_single_forward.4} parent=11 // pred_check_branch
        %358 = sbr.rel (%p356) target = $region40
      $region39: #{transwcd_single_forward.4} parent=11 // pred_region
        _
      $region40: #{transwcd_single_forward.4} parent=11 // pred_fallthru
        _
      // Predicated region
      $region41: #{transwcd_single_forward.4} parent=11 // pred_check
        %p359 = pneg %p213
      $region42: #{transwcd_single_forward.4} parent=11 // pred_check_branch
        %361 = sbr.rel (%p359) target = $region44
      $region43: #{transwcd_single_forward.4} parent=11 // pred_region
        _
      $region44: #{transwcd_single_forward.4} parent=11 // pred_fallthru
        _
      // Predicated region
      $region45: #{transwcd_single_forward.4} parent=11 // pred_check
        %p362 = pneg %p234
      $region46: #{transwcd_single_forward.4} parent=11 // pred_check_branch
        %364 = sbr.rel (%p362) target = $region48
      $region47: #{transwcd_single_forward.4} parent=11 // pred_region
        _
      $region48: #{transwcd_single_forward.4} parent=11 // pred_fallthru
        _
      // Predicated region
      $region49: #{transwcd_single_forward.4} parent=11 // pred_check
        %p365 = pneg %p255
      $region50: #{transwcd_single_forward.4} parent=11 // pred_check_branch
        %367 = sbr.rel (%p365) target = $region52
      $region51: #{transwcd_single_forward.4} parent=11 // pred_region
        _
      $region52: #{transwcd_single_forward.4} parent=11 // pred_fallthru
        _
      // Predicated region
      $region53: #{transwcd_single_forward.4} parent=11 // pred_check
        %p368 = pneg %p276
      $region54: #{transwcd_single_forward.4} parent=11 // pred_check_branch
        %370 = sbr.rel (%p368) target = $region56
      $region55: #{transwcd_single_forward.4} parent=11 // pred_region
        _
      $region56: #{transwcd_single_forward.4} parent=11 // pred_fallthru
        _
      // Predicated region
      $region57: #{transwcd_single_forward.4} parent=11 // pred_check
        %p371 = pneg %p297
      $region58: #{transwcd_single_forward.4} parent=11 // pred_check_branch
        %373 = sbr.rel (%p371) target = $region60
      $region59: #{transwcd_single_forward.4} parent=11 // pred_region
        _
      $region60: #{transwcd_single_forward.4} parent=11 // pred_fallthru
        _
    $region12: #{transwcd_single_forward.4} parent=5 // pred_fallthru
      _
    %p374 = scmp.lt.s32.totalorder %s19, 2
    // Predicated region
    $region61: #{transwcd_single_forward.4} parent=5 // pred_check
      %p375 = pneg %p374
    $region62: #{transwcd_single_forward.4} parent=5 // pred_check_branch
      %377 = sbr.rel (%p375) target = $region64
    $region63: #{transwcd_single_forward.4} parent=5 // pred_region
      // Predicated region
      $region65: #{transwcd_single_forward.4} parent=63 // pred_check
        %p378 = pneg %p39
      $region66: #{transwcd_single_forward.4} parent=63 // pred_check_branch
        %380 = sbr.rel (%p378) target = $region68
      $region67: #{transwcd_single_forward.4} parent=63 // pred_region
        %s381 = smul.u32 32, %s19
        %p382 = scmp.lt.s32.totalorder %s381, 63
        %s383 = scalar_select %p382, %s381, 63
        %s384 = smul.addr %s383, 4
        %s385 = scalar_lea.vmem %s0, %s384
        %s386 = smul.u32 32, %s19
      $region68: #{transwcd_single_forward.4} parent=63 // pred_fallthru
        _
    $region64: #{transwcd_single_forward.4} parent=5 // pred_fallthru
      _
    %p387 = scmp.le.s32.totalorder 1, %s19
    %p388 = scmp.lt.s32.totalorder %s19, 3
    %p389 = pnand %p387, %p388
    %p390 = pneg %p389
    // Predicated region
    $region69: #{transwcd_single_forward.4} parent=5 // pred_check
      _
    $region70: #{transwcd_single_forward.4} parent=5 // pred_check_branch
      %392 = sbr.rel (%p389) target = $region72
    $region71: #{transwcd_single_forward.4} parent=5 // pred_region
      %s393 = ssub.s32 %s19, 1
      %s394 = smul.u32 32, %s24
      %p395 = scmp.lt.s32.totalorder %s394, 63
      %s396 = scalar_select %p395, %s394, 63
      %s397 = smul.addr %s396, 4
      %s398 = scalar_lea.vmem %s0, %s397
      %p399 = pneg %p45
      %p400 = pneg %p42
      %p401 = pneg %p66
      %p402 = pneg %p63
      %p403 = pneg %p87
      %p404 = pneg %p84
      %p405 = pneg %p108
      %p406 = pneg %p105
      %p407 = pneg %p129
      %p408 = pneg %p126
      %p409 = pneg %p150
      %p410 = pneg %p147
      %p411 = pneg %p171
      %p412 = pneg %p168
      %p413 = pneg %p192
      %p414 = pneg %p189
      %p415 = pneg %p213
      %p416 = pneg %p210
      %p417 = pneg %p234
      %p418 = pneg %p231
      %p419 = pneg %p255
      %p420 = pneg %p252
      %p421 = pneg %p276
      %p422 = pneg %p273
      %p423 = pneg %p297
      %p424 = pneg %p294
      %p425 = pneg %p323
      %p426 = pneg %p320
      %s427 = smul.u32 32, %s24
      %p428 = scmp.lt.s32.totalorder %s427, 63
      %s429 = scalar_select %p428, %s427, 63
      %s430 = smul.addr %s429, 4
      %s431 = scalar_lea.vmem %s13, %s430
      %s432 = smul.u32 32, %s24
      %p433 = scmp.lt.s32.totalorder %s432, 63
      %s434 = scalar_select %p433, %s432, 63
      %s435 = smul.addr %s434, 4
      %s436 = scalar_lea.vmem %s0, %s435
      %s437 = smul.u32 32, %s24
      %s438 = smul.u32 32, %s24
      %p439 = scmp.lt.s32.totalorder %s438, 63
      %s440 = scalar_select %p439, %s438, 63
      %s441 = smul.addr %s440, 4
      %s442 = scalar_lea.vmem %s13, %s441
      %s443 = smul.u32 32, %s24
      %v445 = vld [vmem:[%s436] sm:$0xf]
      %v446 = vld [vmem:[%s436 + $0x4] sm:$0xf]
      %v447 = vld [vmem:[%s436 + $0x8] sm:$0xf]
      %v448 = vld [vmem:[%s436 + $0xc] sm:$0xf]
      %v449 = vld [vmem:[%s436 + $0x10] sm:$0xf]
      %v450 = vld [vmem:[%s436 + $0x14] sm:$0xf]
      %v451 = vld [vmem:[%s436 + $0x18] sm:$0xf]
      %v452 = vld [vmem:[%s436 + $0x1c] sm:$0xf]
      %v453 = vld [vmem:[%s436 + $0x20] sm:$0xf]
      %v454 = vld [vmem:[%s436 + $0x24] sm:$0xf]
      %v455 = vld [vmem:[%s436 + $0x28] sm:$0xf]
      %v456 = vld [vmem:[%s436 + $0x2c] sm:$0xf]
      %v457 = vld [vmem:[%s436 + $0x30] sm:$0xf]
      %v458 = vld [vmem:[%s436 + $0x34] sm:$0xf]
      %v459 = vld [vmem:[%s436 + $0x38] sm:$0xf]
      %v460 = vld [vmem:[%s436 + $0x3c] sm:$0xf]
      %v461 = vld [vmem:[%s436 + $0x40] sm:$0xf]
      %v462 = vld [vmem:[%s436 + $0x44] sm:$0xf]
      %v463 = vld [vmem:[%s436 + $0x48] sm:$0xf]
      %v464 = vld [vmem:[%s436 + $0x4c] sm:$0xf]
      %v465 = vld [vmem:[%s436 + $0x50] sm:$0xf]
      %v466 = vld [vmem:[%s436 + $0x54] sm:$0xf]
      %v467 = vld [vmem:[%s436 + $0x58] sm:$0xf]
      %v468 = vld [vmem:[%s436 + $0x5c] sm:$0xf]
      %v469 = vld [vmem:[%s436 + $0x60] sm:$0xf]
      %v470 = vld [vmem:[%s436 + $0x64] sm:$0xf]
      %v471 = vld [vmem:[%s436 + $0x68] sm:$0xf]
      %v472 = vld [vmem:[%s436 + $0x6c] sm:$0xf]
      %v473 = vld [vmem:[%s436 + $0x70] sm:$0xf]
      %v474 = vld [vmem:[%s436 + $0x74] sm:$0xf]
      %v475 = vld [vmem:[%s436 + $0x78] sm:$0xf]
      %v476 = vld [vmem:[%s436 + $0x7c] sm:$0xf]
      %v477 = vld [vmem:[%s1] sm:$0xf]
      %v478 = vld [vmem:[%s1 + $0x4] sm:$0xf]
      %v479 = vld [vmem:[%s1 + $0x8] sm:$0xf]
      %v480 = vld [vmem:[%s1 + $0xc] sm:$0xf]
      %v481 = vld [vmem:[%s1 + $0x10] sm:$0xf]
      %v482 = vld [vmem:[%s1 + $0x14] sm:$0xf]
      %v483 = vld [vmem:[%s2] sm:$0x1]
      %v485 = vperm.slane %v483, 0
      %v519 = vunpack.c.l.b16 %v445
      %v520 = vunpack.c.l.b16 %v446
      %v521 = vunpack.c.l.b16 %v447
      %v522 = vunpack.c.l.b16 %v448
      %v523 = vunpack.c.l.b16 %v449
      %v524 = vunpack.c.l.b16 %v450
      %v525 = vunpack.c.l.b16 %v451
      %v526 = vunpack.c.l.b16 %v452
      %v527 = vunpack.c.l.b16 %v453
      %v528 = vunpack.c.l.b16 %v454
      %v529 = vunpack.c.l.b16 %v455
      %v530 = vunpack.c.l.b16 %v456
      %v531 = vunpack.c.l.b16 %v457
      %v532 = vunpack.c.l.b16 %v458
      %v533 = vunpack.c.l.b16 %v459
      %v534 = vunpack.c.l.b16 %v460
      %v535 = vunpack.c.l.b16 %v461
      %v536 = vunpack.c.l.b16 %v462
      %v537 = vunpack.c.l.b16 %v463
      %v538 = vunpack.c.l.b16 %v464
      %v539 = vunpack.c.l.b16 %v465
      %v540 = vunpack.c.l.b16 %v466
      %v541 = vunpack.c.l.b16 %v467
      %v542 = vunpack.c.l.b16 %v468
      %v543 = vunpack.c.l.b16 %v469
      %v544 = vunpack.c.l.b16 %v470
      %v545 = vunpack.c.l.b16 %v471
      %v546 = vunpack.c.l.b16 %v472
      %v547 = vunpack.c.l.b16 %v473
      %v548 = vunpack.c.l.b16 %v474
      %v549 = vunpack.c.l.b16 %v475
      %v550 = vunpack.c.l.b16 %v476
      %v551 = vpack.c.b16 %v520, %v519
      %v552 = vpack.c.b16 %v522, %v521
      %v553 = vpack.c.b16 %v524, %v523
      %v554 = vpack.c.b16 %v526, %v525
      %v555 = vpack.c.b16 %v528, %v527
      %v556 = vpack.c.b16 %v530, %v529
      %v557 = vpack.c.b16 %v532, %v531
      %v558 = vpack.c.b16 %v534, %v533
      %v559 = vpack.c.b16 %v536, %v535
      %v560 = vpack.c.b16 %v538, %v537
      %v561 = vpack.c.b16 %v540, %v539
      %v562 = vpack.c.b16 %v542, %v541
      %v563 = vpack.c.b16 %v544, %v543
      %v564 = vpack.c.b16 %v546, %v545
      %v565 = vpack.c.b16 %v548, %v547
      %v566 = vpack.c.b16 %v550, %v549
      %v573 = vunpack.c.l.b16 %v477
      %v574 = vunpack.c.l.b16 %v478
      %v575 = vunpack.c.l.b16 %v479
      %v576 = vunpack.c.l.b16 %v480
      %v577 = vunpack.c.l.b16 %v481
      %v578 = vunpack.c.l.b16 %v482
      %v579 = vpack.c.b16 %v574, %v573
      %v580 = vpack.c.b16 %v576, %v575
      %v581 = vpack.c.b16 %v578, %v577
      %vm585 = vcmask 392192
      %v587 = vsel %vm585, %v551, 0
      %v590 = vsel %vm585, %v552, 0
      %v593 = vsel %vm585, %v553, 0
      %v596 = vsel %vm585, %v554, 0
      %v599 = vsel %vm585, %v555, 0
      %v602 = vsel %vm585, %v556, 0
      %v605 = vsel %vm585, %v557, 0
      %v608 = vsel %vm585, %v558, 0
      %v611 = vsel %vm585, %v559, 0
      %v614 = vsel %vm585, %v560, 0
      %v617 = vsel %vm585, %v561, 0
      %v620 = vsel %vm585, %v562, 0
      %v623 = vsel %vm585, %v563, 0
      %v626 = vsel %vm585, %v564, 0
      %v629 = vsel %vm585, %v565, 0
      %v632 = vsel %vm585, %v566, 0
      %634 = vmatpush.bf16.msra.mxu0 0
      %635 = vmatpush.bf16.msra.mxu0 0
      %636 = vmatpush.bf16.msra.mxu0 0
      %637 = vmatpush.bf16.msra.mxu0 0
      %638 = vmatpush.bf16.msra.mxu0 0
      %639 = vmatpush.bf16.msra.mxu0 %v581
      %640 = vmatpush.bf16.msra.mxu0 %v580
      %641 = vmatpush.bf16.msra.mxu0 %v579
      %642 = vmatmul.bf16.gmra.mxu0 %v587
      %v643 = vpop.f32.mrf.mxu0
      %v644 = vadd.f32 %v485, %v643
      %v645 = vpop.f32.mrf.mxu0
      %v646 = vadd.f32 %v485, %v645
      %647 = vmatmul.bf16.gmra.mxu0 %v590
      %v648 = vpop.f32.mrf.mxu0
      %v649 = vadd.f32 %v485, %v648
      %v650 = vpop.f32.mrf.mxu0
      %v651 = vadd.f32 %v485, %v650
      %652 = vmatmul.bf16.gmra.mxu0 %v593
      %v653 = vpop.f32.mrf.mxu0
      %v654 = vadd.f32 %v485, %v653
      %v655 = vpop.f32.mrf.mxu0
      %v656 = vadd.f32 %v485, %v655
      %657 = vmatmul.bf16.gmra.mxu0 %v596
      %v658 = vpop.f32.mrf.mxu0
      %v659 = vadd.f32 %v485, %v658
      %v660 = vpop.f32.mrf.mxu0
      %v661 = vadd.f32 %v485, %v660
      %662 = vmatmul.bf16.gmra.mxu0 %v599
      %v663 = vpop.f32.mrf.mxu0
      %v664 = vadd.f32 %v485, %v663
      %v665 = vpop.f32.mrf.mxu0
      %v666 = vadd.f32 %v485, %v665
      %667 = vmatmul.bf16.gmra.mxu0 %v602
      %v668 = vpop.f32.mrf.mxu0
      %v669 = vadd.f32 %v485, %v668
      %v670 = vpop.f32.mrf.mxu0
      %v671 = vadd.f32 %v485, %v670
      %672 = vmatmul.bf16.gmra.mxu0 %v605
      %v673 = vpop.f32.mrf.mxu0
      %v674 = vadd.f32 %v485, %v673
      %v675 = vpop.f32.mrf.mxu0
      %v676 = vadd.f32 %v485, %v675
      %677 = vmatmul.bf16.gmra.mxu0 %v608
      %v678 = vpop.f32.mrf.mxu0
      %v679 = vadd.f32 %v485, %v678
      %v680 = vpop.f32.mrf.mxu0
      %v681 = vadd.f32 %v485, %v680
      %682 = vmatmul.bf16.gmra.mxu0 %v611
      %v683 = vpop.f32.mrf.mxu0
      %v684 = vadd.f32 %v485, %v683
      %v685 = vpop.f32.mrf.mxu0
      %v686 = vadd.f32 %v485, %v685
      %687 = vmatmul.bf16.gmra.mxu0 %v614
      %v688 = vpop.f32.mrf.mxu0
      %v689 = vadd.f32 %v485, %v688
      %v690 = vpop.f32.mrf.mxu0
      %v691 = vadd.f32 %v485, %v690
      %692 = vmatmul.bf16.gmra.mxu0 %v617
      %v693 = vpop.f32.mrf.mxu0
      %v694 = vadd.f32 %v485, %v693
      %v695 = vpop.f32.mrf.mxu0
      %v696 = vadd.f32 %v485, %v695
      %697 = vmatmul.bf16.gmra.mxu0 %v620
      %v698 = vpop.f32.mrf.mxu0
      %v699 = vadd.f32 %v485, %v698
      %v700 = vpop.f32.mrf.mxu0
      %v701 = vadd.f32 %v485, %v700
      %702 = vmatmul.bf16.gmra.mxu0 %v623
      %v703 = vpop.f32.mrf.mxu0
      %v704 = vadd.f32 %v485, %v703
      %v705 = vpop.f32.mrf.mxu0
      %v706 = vadd.f32 %v485, %v705
      %707 = vmatmul.bf16.gmra.mxu0 %v626
      %v708 = vpop.f32.mrf.mxu0
      %v709 = vadd.f32 %v485, %v708
      %v710 = vpop.f32.mrf.mxu0
      %v711 = vadd.f32 %v485, %v710
      %712 = vmatmul.bf16.gmra.mxu0 %v629
      %v713 = vpop.f32.mrf.mxu0
      %v714 = vadd.f32 %v485, %v713
      %v715 = vpop.f32.mrf.mxu0
      %v716 = vadd.f32 %v485, %v715
      %717 = vmatmul.bf16.gmra.mxu0 %v632
      %v718 = vpop.f32.mrf.mxu0
      %v719 = vadd.f32 %v485, %v718
      %v720 = vpop.f32.mrf.mxu0
      %v721 = vadd.f32 %v485, %v720
      %722 = vdwg.mxu0
      %v723 = vld [vmem:[%s3] sm:$0x1]
      %v724 = vld [vmem:[%s4] sm:$0x1]
      %725 = vadd.xlane.f32.xlu0 %v644
      %v726 = vpop.xlane.xlu0 %725
      %727 = vadd.xlane.f32.xlu0 %v646
      %v728 = vpop.xlane.xlu0 %727
      %729 = vadd.xlane.f32.xlu0 %v649
      %v730 = vpop.xlane.xlu0 %729
      %731 = vadd.xlane.f32.xlu0 %v651
      %v732 = vpop.xlane.xlu0 %731
      %733 = vadd.xlane.f32.xlu0 %v654
      %v734 = vpop.xlane.xlu0 %733
      %735 = vadd.xlane.f32.xlu0 %v656
      %v736 = vpop.xlane.xlu0 %735
      %737 = vadd.xlane.f32.xlu0 %v659
      %v738 = vpop.xlane.xlu0 %737
      %739 = vadd.xlane.f32.xlu0 %v661
      %v740 = vpop.xlane.xlu0 %739
      %741 = vadd.xlane.f32.xlu0 %v664
      %v742 = vpop.xlane.xlu0 %741
      %743 = vadd.xlane.f32.xlu0 %v666
      %v744 = vpop.xlane.xlu0 %743
      %745 = vadd.xlane.f32.xlu0 %v669
      %v746 = vpop.xlane.xlu0 %745
      %747 = vadd.xlane.f32.xlu0 %v671
      %v748 = vpop.xlane.xlu0 %747
      %749 = vadd.xlane.f32.xlu0 %v674
      %v750 = vpop.xlane.xlu0 %749
      %751 = vadd.xlane.f32.xlu0 %v676
      %v752 = vpop.xlane.xlu0 %751
      %753 = vadd.xlane.f32.xlu0 %v679
      %v754 = vpop.xlane.xlu0 %753
      %755 = vadd.xlane.f32.xlu0 %v681
      %v756 = vpop.xlane.xlu0 %755
      %757 = vadd.xlane.f32.xlu0 %v684
      %v758 = vpop.xlane.xlu0 %757
      %759 = vadd.xlane.f32.xlu0 %v686
      %v760 = vpop.xlane.xlu0 %759
      %761 = vadd.xlane.f32.xlu0 %v689
      %v762 = vpop.xlane.xlu0 %761
      %763 = vadd.xlane.f32.xlu0 %v691
      %v764 = vpop.xlane.xlu0 %763
      %765 = vadd.xlane.f32.xlu0 %v694
      %v766 = vpop.xlane.xlu0 %765
      %767 = vadd.xlane.f32.xlu0 %v696
      %v768 = vpop.xlane.xlu0 %767
      %769 = vadd.xlane.f32.xlu0 %v699
      %v770 = vpop.xlane.xlu0 %769
      %771 = vadd.xlane.f32.xlu0 %v701
      %v772 = vpop.xlane.xlu0 %771
      %773 = vadd.xlane.f32.xlu0 %v704
      %v774 = vpop.xlane.xlu0 %773
      %775 = vadd.xlane.f32.xlu0 %v706
      %v776 = vpop.xlane.xlu0 %775
      %777 = vadd.xlane.f32.xlu0 %v709
      %v778 = vpop.xlane.xlu0 %777
      %779 = vadd.xlane.f32.xlu0 %v711
      %v780 = vpop.xlane.xlu0 %779
      %781 = vadd.xlane.f32.xlu0 %v714
      %v782 = vpop.xlane.xlu0 %781
      %783 = vadd.xlane.f32.xlu0 %v716
      %v784 = vpop.xlane.xlu0 %783
      %785 = vadd.xlane.f32.xlu0 %v719
      %v786 = vpop.xlane.xlu0 %785
      %787 = vadd.xlane.f32.xlu0 %v721
      %v788 = vpop.xlane.xlu0 %787
      %v789 = vmul.f32 %v726, 0.125
      %v790 = vmul.f32 %v728, 0.125
      %v791 = vmul.f32 %v730, 0.125
      %v792 = vmul.f32 %v732, 0.125
      %v793 = vmul.f32 %v734, 0.125
      %v794 = vmul.f32 %v736, 0.125
      %v795 = vmul.f32 %v738, 0.125
      %v796 = vmul.f32 %v740, 0.125
      %v797 = vmul.f32 %v742, 0.125
      %v798 = vmul.f32 %v744, 0.125
      %v799 = vmul.f32 %v746, 0.125
      %v800 = vmul.f32 %v748, 0.125
      %v801 = vmul.f32 %v750, 0.125
      %v802 = vmul.f32 %v752, 0.125
      %v803 = vmul.f32 %v754, 0.125
      %v804 = vmul.f32 %v756, 0.125
      %v805 = vmul.f32 %v758, 0.125
      %v806 = vmul.f32 %v760, 0.125
      %v807 = vmul.f32 %v762, 0.125
      %v808 = vmul.f32 %v764, 0.125
      %v809 = vmul.f32 %v766, 0.125
      %v810 = vmul.f32 %v768, 0.125
      %v811 = vmul.f32 %v770, 0.125
      %v812 = vmul.f32 %v772, 0.125
      %v813 = vmul.f32 %v774, 0.125
      %v814 = vmul.f32 %v776, 0.125
      %v815 = vmul.f32 %v778, 0.125
      %v816 = vmul.f32 %v780, 0.125
      %v817 = vmul.f32 %v782, 0.125
      %v818 = vmul.f32 %v784, 0.125
      %v819 = vmul.f32 %v786, 0.125
      %v820 = vmul.f32 %v788, 0.125
      %v821 = vmul.f32 %v644, %v644
      %v822 = vmul.f32 %v646, %v646
      %v823 = vmul.f32 %v649, %v649
      %v824 = vmul.f32 %v651, %v651
      %v825 = vmul.f32 %v654, %v654
      %v826 = vmul.f32 %v656, %v656
      %v827 = vmul.f32 %v659, %v659
      %v828 = vmul.f32 %v661, %v661
      %v829 = vmul.f32 %v664, %v664
      %v830 = vmul.f32 %v666, %v666
      %v831 = vmul.f32 %v669, %v669
      %v832 = vmul.f32 %v671, %v671
      %v833 = vmul.f32 %v674, %v674
      %v834 = vmul.f32 %v676, %v676
      %v835 = vmul.f32 %v679, %v679
      %v836 = vmul.f32 %v681, %v681
      %v837 = vmul.f32 %v684, %v684
      %v838 = vmul.f32 %v686, %v686
      %v839 = vmul.f32 %v689, %v689
      %v840 = vmul.f32 %v691, %v691
      %v841 = vmul.f32 %v694, %v694
      %v842 = vmul.f32 %v696, %v696
      %v843 = vmul.f32 %v699, %v699
      %v844 = vmul.f32 %v701, %v701
      %v845 = vmul.f32 %v704, %v704
      %v846 = vmul.f32 %v706, %v706
      %v847 = vmul.f32 %v709, %v709
      %v848 = vmul.f32 %v711, %v711
      %v849 = vmul.f32 %v714, %v714
      %v850 = vmul.f32 %v716, %v716
      %v851 = vmul.f32 %v719, %v719
      %v852 = vmul.f32 %v721, %v721
      %853 = vadd.xlane.f32.xlu0 %v821
      %v854 = vpop.xlane.xlu0 %853
      %855 = vadd.xlane.f32.xlu0 %v822
      %v856 = vpop.xlane.xlu0 %855
      %857 = vadd.xlane.f32.xlu0 %v823
      %v858 = vpop.xlane.xlu0 %857
      %859 = vadd.xlane.f32.xlu0 %v824
      %v860 = vpop.xlane.xlu0 %859
      %861 = vadd.xlane.f32.xlu0 %v825
      %v862 = vpop.xlane.xlu0 %861
      %863 = vadd.xlane.f32.xlu0 %v826
      %v864 = vpop.xlane.xlu0 %863
      %865 = vadd.xlane.f32.xlu0 %v827
      %v866 = vpop.xlane.xlu0 %865
      %867 = vadd.xlane.f32.xlu0 %v828
      %v868 = vpop.xlane.xlu0 %867
      %869 = vadd.xlane.f32.xlu0 %v829
      %v870 = vpop.xlane.xlu0 %869
      %871 = vadd.xlane.f32.xlu0 %v830
      %v872 = vpop.xlane.xlu0 %871
      %873 = vadd.xlane.f32.xlu0 %v831
      %v874 = vpop.xlane.xlu0 %873
      %875 = vadd.xlane.f32.xlu0 %v832
      %v876 = vpop.xlane.xlu0 %875
      %877 = vadd.xlane.f32.xlu0 %v833
      %v878 = vpop.xlane.xlu0 %877
      %879 = vadd.xlane.f32.xlu0 %v834
      %v880 = vpop.xlane.xlu0 %879
      %881 = vadd.xlane.f32.xlu0 %v835
      %v882 = vpop.xlane.xlu0 %881
      %883 = vadd.xlane.f32.xlu0 %v836
      %v884 = vpop.xlane.xlu0 %883
      %885 = vadd.xlane.f32.xlu0 %v837
      %v886 = vpop.xlane.xlu0 %885
      %887 = vadd.xlane.f32.xlu0 %v838
      %v888 = vpop.xlane.xlu0 %887
      %889 = vadd.xlane.f32.xlu0 %v839
      %v890 = vpop.xlane.xlu0 %889
      %891 = vadd.xlane.f32.xlu0 %v840
      %v892 = vpop.xlane.xlu0 %891
      %893 = vadd.xlane.f32.xlu0 %v841
      %v894 = vpop.xlane.xlu0 %893
      %895 = vadd.xlane.f32.xlu0 %v842
      %v896 = vpop.xlane.xlu0 %895
      %897 = vadd.xlane.f32.xlu0 %v843
      %v898 = vpop.xlane.xlu0 %897
      %899 = vadd.xlane.f32.xlu0 %v844
      %v900 = vpop.xlane.xlu0 %899
      %901 = vadd.xlane.f32.xlu0 %v845
      %v902 = vpop.xlane.xlu0 %901
      %903 = vadd.xlane.f32.xlu0 %v846
      %v904 = vpop.xlane.xlu0 %903
      %905 = vadd.xlane.f32.xlu0 %v847
      %v906 = vpop.xlane.xlu0 %905
      %907 = vadd.xlane.f32.xlu0 %v848
      %v908 = vpop.xlane.xlu0 %907
      %909 = vadd.xlane.f32.xlu0 %v849
      %v910 = vpop.xlane.xlu0 %909
      %911 = vadd.xlane.f32.xlu0 %v850
      %v912 = vpop.xlane.xlu0 %911
      %913 = vadd.xlane.f32.xlu0 %v851
      %v914 = vpop.xlane.xlu0 %913
      %915 = vadd.xlane.f32.xlu0 %v852
      %v916 = vpop.xlane.xlu0 %915
      %v917 = vmul.f32 %v854, 0.125
      %v918 = vmul.f32 %v856, 0.125
      %v919 = vmul.f32 %v858, 0.125
      %v920 = vmul.f32 %v860, 0.125
      %v921 = vmul.f32 %v862, 0.125
      %v922 = vmul.f32 %v864, 0.125
      %v923 = vmul.f32 %v866, 0.125
      %v924 = vmul.f32 %v868, 0.125
      %v925 = vmul.f32 %v870, 0.125
      %v926 = vmul.f32 %v872, 0.125
      %v927 = vmul.f32 %v874, 0.125
      %v928 = vmul.f32 %v876, 0.125
      %v929 = vmul.f32 %v878, 0.125
      %v930 = vmul.f32 %v880, 0.125
      %v931 = vmul.f32 %v882, 0.125
      %v932 = vmul.f32 %v884, 0.125
      %v933 = vmul.f32 %v886, 0.125
      %v934 = vmul.f32 %v888, 0.125
      %v935 = vmul.f32 %v890, 0.125
      %v936 = vmul.f32 %v892, 0.125
      %v937 = vmul.f32 %v894, 0.125
      %v938 = vmul.f32 %v896, 0.125
      %v939 = vmul.f32 %v898, 0.125
      %v940 = vmul.f32 %v900, 0.125
      %v941 = vmul.f32 %v902, 0.125
      %v942 = vmul.f32 %v904, 0.125
      %v943 = vmul.f32 %v906, 0.125
      %v944 = vmul.f32 %v908, 0.125
      %v945 = vmul.f32 %v910, 0.125
      %v946 = vmul.f32 %v912, 0.125
      %v947 = vmul.f32 %v914, 0.125
      %v948 = vmul.f32 %v916, 0.125
      %v949 = vmul.f32 %v789, %v789
      %v950 = vmul.f32 %v790, %v790
      %v951 = vmul.f32 %v791, %v791
      %v952 = vmul.f32 %v792, %v792
      %v953 = vmul.f32 %v793, %v793
      %v954 = vmul.f32 %v794, %v794
      %v955 = vmul.f32 %v795, %v795
      %v956 = vmul.f32 %v796, %v796
      %v957 = vmul.f32 %v797, %v797
      %v958 = vmul.f32 %v798, %v798
      %v959 = vmul.f32 %v799, %v799
      %v960 = vmul.f32 %v800, %v800
      %v961 = vmul.f32 %v801, %v801
      %v962 = vmul.f32 %v802, %v802
      %v963 = vmul.f32 %v803, %v803
      %v964 = vmul.f32 %v804, %v804
      %v965 = vmul.f32 %v805, %v805
      %v966 = vmul.f32 %v806, %v806
      %v967 = vmul.f32 %v807, %v807
      %v968 = vmul.f32 %v808, %v808
      %v969 = vmul.f32 %v809, %v809
      %v970 = vmul.f32 %v810, %v810
      %v971 = vmul.f32 %v811, %v811
      %v972 = vmul.f32 %v812, %v812
      %v973 = vmul.f32 %v813, %v813
      %v974 = vmul.f32 %v814, %v814
      %v975 = vmul.f32 %v815, %v815
      %v976 = vmul.f32 %v816, %v816
      %v977 = vmul.f32 %v817, %v817
      %v978 = vmul.f32 %v818, %v818
      %v979 = vmul.f32 %v819, %v819
      %v980 = vmul.f32 %v820, %v820
      %v981 = vsub.f32 %v917, %v949
      %v982 = vsub.f32 %v918, %v950
      %v983 = vsub.f32 %v919, %v951
      %v984 = vsub.f32 %v920, %v952
      %v985 = vsub.f32 %v921, %v953
      %v986 = vsub.f32 %v922, %v954
      %v987 = vsub.f32 %v923, %v955
      %v988 = vsub.f32 %v924, %v956
      %v989 = vsub.f32 %v925, %v957
      %v990 = vsub.f32 %v926, %v958
      %v991 = vsub.f32 %v927, %v959
      %v992 = vsub.f32 %v928, %v960
      %v993 = vsub.f32 %v929, %v961
      %v994 = vsub.f32 %v930, %v962
      %v995 = vsub.f32 %v931, %v963
      %v996 = vsub.f32 %v932, %v964
      %v997 = vsub.f32 %v933, %v965
      %v998 = vsub.f32 %v934, %v966
      %v999 = vsub.f32 %v935, %v967
      %v1000 = vsub.f32 %v936, %v968
      %v1001 = vsub.f32 %v937, %v969
      %v1002 = vsub.f32 %v938, %v970
      %v1003 = vsub.f32 %v939, %v971
      %v1004 = vsub.f32 %v940, %v972
      %v1005 = vsub.f32 %v941, %v973
      %v1006 = vsub.f32 %v942, %v974
      %v1007 = vsub.f32 %v943, %v975
      %v1008 = vsub.f32 %v944, %v976
      %v1009 = vsub.f32 %v945, %v977
      %v1010 = vsub.f32 %v946, %v978
      %v1011 = vsub.f32 %v947, %v979
      %v1012 = vsub.f32 %v948, %v980
      %v1013 = vmax.f32 %v981, 0.0
      %v1014 = vmax.f32 %v982, 0.0
      %v1015 = vmax.f32 %v983, 0.0
      %v1016 = vmax.f32 %v984, 0.0
      %v1017 = vmax.f32 %v985, 0.0
      %v1018 = vmax.f32 %v986, 0.0
      %v1019 = vmax.f32 %v987, 0.0
      %v1020 = vmax.f32 %v988, 0.0
      %v1021 = vmax.f32 %v989, 0.0
      %v1022 = vmax.f32 %v990, 0.0
      %v1023 = vmax.f32 %v991, 0.0
      %v1024 = vmax.f32 %v992, 0.0
      %v1025 = vmax.f32 %v993, 0.0
      %v1026 = vmax.f32 %v994, 0.0
      %v1027 = vmax.f32 %v995, 0.0
      %v1028 = vmax.f32 %v996, 0.0
      %v1029 = vmax.f32 %v997, 0.0
      %v1030 = vmax.f32 %v998, 0.0
      %v1031 = vmax.f32 %v999, 0.0
      %v1032 = vmax.f32 %v1000, 0.0
      %v1033 = vmax.f32 %v1001, 0.0
      %v1034 = vmax.f32 %v1002, 0.0
      %v1035 = vmax.f32 %v1003, 0.0
      %v1036 = vmax.f32 %v1004, 0.0
      %v1037 = vmax.f32 %v1005, 0.0
      %v1038 = vmax.f32 %v1006, 0.0
      %v1039 = vmax.f32 %v1007, 0.0
      %v1040 = vmax.f32 %v1008, 0.0
      %v1041 = vmax.f32 %v1009, 0.0
      %v1042 = vmax.f32 %v1010, 0.0
      %v1043 = vmax.f32 %v1011, 0.0
      %v1044 = vmax.f32 %v1012, 0.0
      %v1045 = vsub.f32 %v644, %v789
      %v1046 = vsub.f32 %v646, %v790
      %v1047 = vsub.f32 %v649, %v791
      %v1048 = vsub.f32 %v651, %v792
      %v1049 = vsub.f32 %v654, %v793
      %v1050 = vsub.f32 %v656, %v794
      %v1051 = vsub.f32 %v659, %v795
      %v1052 = vsub.f32 %v661, %v796
      %v1053 = vsub.f32 %v664, %v797
      %v1054 = vsub.f32 %v666, %v798
      %v1055 = vsub.f32 %v669, %v799
      %v1056 = vsub.f32 %v671, %v800
      %v1057 = vsub.f32 %v674, %v801
      %v1058 = vsub.f32 %v676, %v802
      %v1059 = vsub.f32 %v679, %v803
      %v1060 = vsub.f32 %v681, %v804
      %v1061 = vsub.f32 %v684, %v805
      %v1062 = vsub.f32 %v686, %v806
      %v1063 = vsub.f32 %v689, %v807
      %v1064 = vsub.f32 %v691, %v808
      %v1065 = vsub.f32 %v694, %v809
      %v1066 = vsub.f32 %v696, %v810
      %v1067 = vsub.f32 %v699, %v811
      %v1068 = vsub.f32 %v701, %v812
      %v1069 = vsub.f32 %v704, %v813
      %v1070 = vsub.f32 %v706, %v814
      %v1071 = vsub.f32 %v709, %v815
      %v1072 = vsub.f32 %v711, %v816
      %v1073 = vsub.f32 %v714, %v817
      %v1074 = vsub.f32 %v716, %v818
      %v1075 = vsub.f32 %v719, %v819
      %v1076 = vsub.f32 %v721, %v820
      %v1077 = vadd.f32 %v1013, 1e-05
      %v1078 = vadd.f32 %v1014, 1e-05
      %v1079 = vadd.f32 %v1015, 1e-05
      %v1080 = vadd.f32 %v1016, 1e-05
      %v1081 = vadd.f32 %v1017, 1e-05
      %v1082 = vadd.f32 %v1018, 1e-05
      %v1083 = vadd.f32 %v1019, 1e-05
      %v1084 = vadd.f32 %v1020, 1e-05
      %v1085 = vadd.f32 %v1021, 1e-05
      %v1086 = vadd.f32 %v1022, 1e-05
      %v1087 = vadd.f32 %v1023, 1e-05
      %v1088 = vadd.f32 %v1024, 1e-05
      %v1089 = vadd.f32 %v1025, 1e-05
      %v1090 = vadd.f32 %v1026, 1e-05
      %v1091 = vadd.f32 %v1027, 1e-05
      %v1092 = vadd.f32 %v1028, 1e-05
      %v1093 = vadd.f32 %v1029, 1e-05
      %v1094 = vadd.f32 %v1030, 1e-05
      %v1095 = vadd.f32 %v1031, 1e-05
      %v1096 = vadd.f32 %v1032, 1e-05
      %v1097 = vadd.f32 %v1033, 1e-05
      %v1098 = vadd.f32 %v1034, 1e-05
      %v1099 = vadd.f32 %v1035, 1e-05
      %v1100 = vadd.f32 %v1036, 1e-05
      %v1101 = vadd.f32 %v1037, 1e-05
      %v1102 = vadd.f32 %v1038, 1e-05
      %v1103 = vadd.f32 %v1039, 1e-05
      %v1104 = vadd.f32 %v1040, 1e-05
      %v1105 = vadd.f32 %v1041, 1e-05
      %v1106 = vadd.f32 %v1042, 1e-05
      %v1107 = vadd.f32 %v1043, 1e-05
      %v1108 = vadd.f32 %v1044, 1e-05
      %v1109 = vrsqrt.pop %v1077
      %v1110 = vmul.f32 %v1109, %v1077
      %v1111 = vmul.f32 %v1110, %v1109
      %v1112 = vmul.f32 0.5, %v1111
      %v1113 = vsub.f32 1.5, %v1112
      %v1114 = vmul.f32 %v1109, %v1113
      %vm1115 = vweird.f32 %v1077
      %vm1116 = vweird.f32 %v1109
      %vm1117 = vmor %vm1115, %vm1116
      %v1118 = vsel %vm1117, %v1109, %v1114
      %v1119 = vrsqrt.pop %v1078
      %v1120 = vmul.f32 %v1119, %v1078
      %v1121 = vmul.f32 %v1120, %v1119
      %v1122 = vmul.f32 0.5, %v1121
      %v1123 = vsub.f32 1.5, %v1122
      %v1124 = vmul.f32 %v1119, %v1123
      %vm1125 = vweird.f32 %v1078
      %vm1126 = vweird.f32 %v1119
      %vm1127 = vmor %vm1125, %vm1126
      %v1128 = vsel %vm1127, %v1119, %v1124
      %v1129 = vrsqrt.pop %v1079
      %v1130 = vmul.f32 %v1129, %v1079
      %v1131 = vmul.f32 %v1130, %v1129
      %v1132 = vmul.f32 0.5, %v1131
      %v1133 = vsub.f32 1.5, %v1132
      %v1134 = vmul.f32 %v1129, %v1133
      %vm1135 = vweird.f32 %v1079
      %vm1136 = vweird.f32 %v1129
      %vm1137 = vmor %vm1135, %vm1136
      %v1138 = vsel %vm1137, %v1129, %v1134
      %v1139 = vrsqrt.pop %v1080
      %v1140 = vmul.f32 %v1139, %v1080
      %v1141 = vmul.f32 %v1140, %v1139
      %v1142 = vmul.f32 0.5, %v1141
      %v1143 = vsub.f32 1.5, %v1142
      %v1144 = vmul.f32 %v1139, %v1143
      %vm1145 = vweird.f32 %v1080
      %vm1146 = vweird.f32 %v1139
      %vm1147 = vmor %vm1145, %vm1146
      %v1148 = vsel %vm1147, %v1139, %v1144
      %v1149 = vrsqrt.pop %v1081
      %v1150 = vmul.f32 %v1149, %v1081
      %v1151 = vmul.f32 %v1150, %v1149
      %v1152 = vmul.f32 0.5, %v1151
      %v1153 = vsub.f32 1.5, %v1152
      %v1154 = vmul.f32 %v1149, %v1153
      %vm1155 = vweird.f32 %v1081
      %vm1156 = vweird.f32 %v1149
      %vm1157 = vmor %vm1155, %vm1156
      %v1158 = vsel %vm1157, %v1149, %v1154
      %v1159 = vrsqrt.pop %v1082
      %v1160 = vmul.f32 %v1159, %v1082
      %v1161 = vmul.f32 %v1160, %v1159
      %v1162 = vmul.f32 0.5, %v1161
      %v1163 = vsub.f32 1.5, %v1162
      %v1164 = vmul.f32 %v1159, %v1163
      %vm1165 = vweird.f32 %v1082
      %vm1166 = vweird.f32 %v1159
      %vm1167 = vmor %vm1165, %vm1166
      %v1168 = vsel %vm1167, %v1159, %v1164
      %v1169 = vrsqrt.pop %v1083
      %v1170 = vmul.f32 %v1169, %v1083
      %v1171 = vmul.f32 %v1170, %v1169
      %v1172 = vmul.f32 0.5, %v1171
      %v1173 = vsub.f32 1.5, %v1172
      %v1174 = vmul.f32 %v1169, %v1173
      %vm1175 = vweird.f32 %v1083
      %vm1176 = vweird.f32 %v1169
      %vm1177 = vmor %vm1175, %vm1176
      %v1178 = vsel %vm1177, %v1169, %v1174
      %v1179 = vrsqrt.pop %v1084
      %v1180 = vmul.f32 %v1179, %v1084
      %v1181 = vmul.f32 %v1180, %v1179
      %v1182 = vmul.f32 0.5, %v1181
      %v1183 = vsub.f32 1.5, %v1182
      %v1184 = vmul.f32 %v1179, %v1183
      %vm1185 = vweird.f32 %v1084
      %vm1186 = vweird.f32 %v1179
      %vm1187 = vmor %vm1185, %vm1186
      %v1188 = vsel %vm1187, %v1179, %v1184
      %v1189 = vrsqrt.pop %v1085
      %v1190 = vmul.f32 %v1189, %v1085
      %v1191 = vmul.f32 %v1190, %v1189
      %v1192 = vmul.f32 0.5, %v1191
      %v1193 = vsub.f32 1.5, %v1192
      %v1194 = vmul.f32 %v1189, %v1193
      %vm1195 = vweird.f32 %v1085
      %vm1196 = vweird.f32 %v1189
      %vm1197 = vmor %vm1195, %vm1196
      %v1198 = vsel %vm1197, %v1189, %v1194
      %v1199 = vrsqrt.pop %v1086
      %v1200 = vmul.f32 %v1199, %v1086
      %v1201 = vmul.f32 %v1200, %v1199
      %v1202 = vmul.f32 0.5, %v1201
      %v1203 = vsub.f32 1.5, %v1202
      %v1204 = vmul.f32 %v1199, %v1203
      %vm1205 = vweird.f32 %v1086
      %vm1206 = vweird.f32 %v1199
      %vm1207 = vmor %vm1205, %vm1206
      %v1208 = vsel %vm1207, %v1199, %v1204
      %v1209 = vrsqrt.pop %v1087
      %v1210 = vmul.f32 %v1209, %v1087
      %v1211 = vmul.f32 %v1210, %v1209
      %v1212 = vmul.f32 0.5, %v1211
      %v1213 = vsub.f32 1.5, %v1212
      %v1214 = vmul.f32 %v1209, %v1213
      %vm1215 = vweird.f32 %v1087
      %vm1216 = vweird.f32 %v1209
      %vm1217 = vmor %vm1215, %vm1216
      %v1218 = vsel %vm1217, %v1209, %v1214
      %v1219 = vrsqrt.pop %v1088
      %v1220 = vmul.f32 %v1219, %v1088
      %v1221 = vmul.f32 %v1220, %v1219
      %v1222 = vmul.f32 0.5, %v1221
      %v1223 = vsub.f32 1.5, %v1222
      %v1224 = vmul.f32 %v1219, %v1223
      %vm1225 = vweird.f32 %v1088
      %vm1226 = vweird.f32 %v1219
      %vm1227 = vmor %vm1225, %vm1226
      %v1228 = vsel %vm1227, %v1219, %v1224
      %v1229 = vrsqrt.pop %v1089
      %v1230 = vmul.f32 %v1229, %v1089
      %v1231 = vmul.f32 %v1230, %v1229
      %v1232 = vmul.f32 0.5, %v1231
      %v1233 = vsub.f32 1.5, %v1232
      %v1234 = vmul.f32 %v1229, %v1233
      %vm1235 = vweird.f32 %v1089
      %vm1236 = vweird.f32 %v1229
      %vm1237 = vmor %vm1235, %vm1236
      %v1238 = vsel %vm1237, %v1229, %v1234
      %v1239 = vrsqrt.pop %v1090
      %v1240 = vmul.f32 %v1239, %v1090
      %v1241 = vmul.f32 %v1240, %v1239
      %v1242 = vmul.f32 0.5, %v1241
      %v1243 = vsub.f32 1.5, %v1242
      %v1244 = vmul.f32 %v1239, %v1243
      %vm1245 = vweird.f32 %v1090
      %vm1246 = vweird.f32 %v1239
      %vm1247 = vmor %vm1245, %vm1246
      %v1248 = vsel %vm1247, %v1239, %v1244
      %v1249 = vrsqrt.pop %v1091
      %v1250 = vmul.f32 %v1249, %v1091
      %v1251 = vmul.f32 %v1250, %v1249
      %v1252 = vmul.f32 0.5, %v1251
      %v1253 = vsub.f32 1.5, %v1252
      %v1254 = vmul.f32 %v1249, %v1253
      %vm1255 = vweird.f32 %v1091
      %vm1256 = vweird.f32 %v1249
      %vm1257 = vmor %vm1255, %vm1256
      %v1258 = vsel %vm1257, %v1249, %v1254
      %v1259 = vrsqrt.pop %v1092
      %v1260 = vmul.f32 %v1259, %v1092
      %v1261 = vmul.f32 %v1260, %v1259
      %v1262 = vmul.f32 0.5, %v1261
      %v1263 = vsub.f32 1.5, %v1262
      %v1264 = vmul.f32 %v1259, %v1263
      %vm1265 = vweird.f32 %v1092
      %vm1266 = vweird.f32 %v1259
      %vm1267 = vmor %vm1265, %vm1266
      %v1268 = vsel %vm1267, %v1259, %v1264
      %v1269 = vrsqrt.pop %v1093
      %v1270 = vmul.f32 %v1269, %v1093
      %v1271 = vmul.f32 %v1270, %v1269
      %v1272 = vmul.f32 0.5, %v1271
      %v1273 = vsub.f32 1.5, %v1272
      %v1274 = vmul.f32 %v1269, %v1273
      %vm1275 = vweird.f32 %v1093
      %vm1276 = vweird.f32 %v1269
      %vm1277 = vmor %vm1275, %vm1276
      %v1278 = vsel %vm1277, %v1269, %v1274
      %v1279 = vrsqrt.pop %v1094
      %v1280 = vmul.f32 %v1279, %v1094
      %v1281 = vmul.f32 %v1280, %v1279
      %v1282 = vmul.f32 0.5, %v1281
      %v1283 = vsub.f32 1.5, %v1282
      %v1284 = vmul.f32 %v1279, %v1283
      %vm1285 = vweird.f32 %v1094
      %vm1286 = vweird.f32 %v1279
      %vm1287 = vmor %vm1285, %vm1286
      %v1288 = vsel %vm1287, %v1279, %v1284
      %v1289 = vrsqrt.pop %v1095
      %v1290 = vmul.f32 %v1289, %v1095
      %v1291 = vmul.f32 %v1290, %v1289
      %v1292 = vmul.f32 0.5, %v1291
      %v1293 = vsub.f32 1.5, %v1292
      %v1294 = vmul.f32 %v1289, %v1293
      %vm1295 = vweird.f32 %v1095
      %vm1296 = vweird.f32 %v1289
      %vm1297 = vmor %vm1295, %vm1296
      %v1298 = vsel %vm1297, %v1289, %v1294
      %v1299 = vrsqrt.pop %v1096
      %v1300 = vmul.f32 %v1299, %v1096
      %v1301 = vmul.f32 %v1300, %v1299
      %v1302 = vmul.f32 0.5, %v1301
      %v1303 = vsub.f32 1.5, %v1302
      %v1304 = vmul.f32 %v1299, %v1303
      %vm1305 = vweird.f32 %v1096
      %vm1306 = vweird.f32 %v1299
      %vm1307 = vmor %vm1305, %vm1306
      %v1308 = vsel %vm1307, %v1299, %v1304
      %v1309 = vrsqrt.pop %v1097
      %v1310 = vmul.f32 %v1309, %v1097
      %v1311 = vmul.f32 %v1310, %v1309
      %v1312 = vmul.f32 0.5, %v1311
      %v1313 = vsub.f32 1.5, %v1312
      %v1314 = vmul.f32 %v1309, %v1313
      %vm1315 = vweird.f32 %v1097
      %vm1316 = vweird.f32 %v1309
      %vm1317 = vmor %vm1315, %vm1316
      %v1318 = vsel %vm1317, %v1309, %v1314
      %v1319 = vrsqrt.pop %v1098
      %v1320 = vmul.f32 %v1319, %v1098
      %v1321 = vmul.f32 %v1320, %v1319
      %v1322 = vmul.f32 0.5, %v1321
      %v1323 = vsub.f32 1.5, %v1322
      %v1324 = vmul.f32 %v1319, %v1323
      %vm1325 = vweird.f32 %v1098
      %vm1326 = vweird.f32 %v1319
      %vm1327 = vmor %vm1325, %vm1326
      %v1328 = vsel %vm1327, %v1319, %v1324
      %v1329 = vrsqrt.pop %v1099
      %v1330 = vmul.f32 %v1329, %v1099
      %v1331 = vmul.f32 %v1330, %v1329
      %v1332 = vmul.f32 0.5, %v1331
      %v1333 = vsub.f32 1.5, %v1332
      %v1334 = vmul.f32 %v1329, %v1333
      %vm1335 = vweird.f32 %v1099
      %vm1336 = vweird.f32 %v1329
      %vm1337 = vmor %vm1335, %vm1336
      %v1338 = vsel %vm1337, %v1329, %v1334
      %v1339 = vrsqrt.pop %v1100
      %v1340 = vmul.f32 %v1339, %v1100
      %v1341 = vmul.f32 %v1340, %v1339
      %v1342 = vmul.f32 0.5, %v1341
      %v1343 = vsub.f32 1.5, %v1342
      %v1344 = vmul.f32 %v1339, %v1343
      %vm1345 = vweird.f32 %v1100
      %vm1346 = vweird.f32 %v1339
      %vm1347 = vmor %vm1345, %vm1346
      %v1348 = vsel %vm1347, %v1339, %v1344
      %v1349 = vrsqrt.pop %v1101
      %v1350 = vmul.f32 %v1349, %v1101
      %v1351 = vmul.f32 %v1350, %v1349
      %v1352 = vmul.f32 0.5, %v1351
      %v1353 = vsub.f32 1.5, %v1352
      %v1354 = vmul.f32 %v1349, %v1353
      %vm1355 = vweird.f32 %v1101
      %vm1356 = vweird.f32 %v1349
      %vm1357 = vmor %vm1355, %vm1356
      %v1358 = vsel %vm1357, %v1349, %v1354
      %v1359 = vrsqrt.pop %v1102
      %v1360 = vmul.f32 %v1359, %v1102
      %v1361 = vmul.f32 %v1360, %v1359
      %v1362 = vmul.f32 0.5, %v1361
      %v1363 = vsub.f32 1.5, %v1362
      %v1364 = vmul.f32 %v1359, %v1363
      %vm1365 = vweird.f32 %v1102
      %vm1366 = vweird.f32 %v1359
      %vm1367 = vmor %vm1365, %vm1366
      %v1368 = vsel %vm1367, %v1359, %v1364
      %v1369 = vrsqrt.pop %v1103
      %v1370 = vmul.f32 %v1369, %v1103
      %v1371 = vmul.f32 %v1370, %v1369
      %v1372 = vmul.f32 0.5, %v1371
      %v1373 = vsub.f32 1.5, %v1372
      %v1374 = vmul.f32 %v1369, %v1373
      %vm1375 = vweird.f32 %v1103
      %vm1376 = vweird.f32 %v1369
      %vm1377 = vmor %vm1375, %vm1376
      %v1378 = vsel %vm1377, %v1369, %v1374
      %v1379 = vrsqrt.pop %v1104
      %v1380 = vmul.f32 %v1379, %v1104
      %v1381 = vmul.f32 %v1380, %v1379
      %v1382 = vmul.f32 0.5, %v1381
      %v1383 = vsub.f32 1.5, %v1382
      %v1384 = vmul.f32 %v1379, %v1383
      %vm1385 = vweird.f32 %v1104
      %vm1386 = vweird.f32 %v1379
      %vm1387 = vmor %vm1385, %vm1386
      %v1388 = vsel %vm1387, %v1379, %v1384
      %v1389 = vrsqrt.pop %v1105
      %v1390 = vmul.f32 %v1389, %v1105
      %v1391 = vmul.f32 %v1390, %v1389
      %v1392 = vmul.f32 0.5, %v1391
      %v1393 = vsub.f32 1.5, %v1392
      %v1394 = vmul.f32 %v1389, %v1393
      %vm1395 = vweird.f32 %v1105
      %vm1396 = vweird.f32 %v1389
      %vm1397 = vmor %vm1395, %vm1396
      %v1398 = vsel %vm1397, %v1389, %v1394
      %v1399 = vrsqrt.pop %v1106
      %v1400 = vmul.f32 %v1399, %v1106
      %v1401 = vmul.f32 %v1400, %v1399
      %v1402 = vmul.f32 0.5, %v1401
      %v1403 = vsub.f32 1.5, %v1402
      %v1404 = vmul.f32 %v1399, %v1403
      %vm1405 = vweird.f32 %v1106
      %vm1406 = vweird.f32 %v1399
      %vm1407 = vmor %vm1405, %vm1406
      %v1408 = vsel %vm1407, %v1399, %v1404
      %v1409 = vrsqrt.pop %v1107
      %v1410 = vmul.f32 %v1409, %v1107
      %v1411 = vmul.f32 %v1410, %v1409
      %v1412 = vmul.f32 0.5, %v1411
      %v1413 = vsub.f32 1.5, %v1412
      %v1414 = vmul.f32 %v1409, %v1413
      %vm1415 = vweird.f32 %v1107
      %vm1416 = vweird.f32 %v1409
      %vm1417 = vmor %vm1415, %vm1416
      %v1418 = vsel %vm1417, %v1409, %v1414
      %v1419 = vrsqrt.pop %v1108
      %v1420 = vmul.f32 %v1419, %v1108
      %v1421 = vmul.f32 %v1420, %v1419
      %v1422 = vmul.f32 0.5, %v1421
      %v1423 = vsub.f32 1.5, %v1422
      %v1424 = vmul.f32 %v1419, %v1423
      %vm1425 = vweird.f32 %v1108
      %vm1426 = vweird.f32 %v1419
      %vm1427 = vmor %vm1425, %vm1426
      %v1428 = vsel %vm1427, %v1419, %v1424
      %v1429 = vmul.f32 %v1045, %v1118
      %v1430 = vmul.f32 %v1046, %v1128
      %v1431 = vmul.f32 %v1047, %v1138
      %v1432 = vmul.f32 %v1048, %v1148
      %v1433 = vmul.f32 %v1049, %v1158
      %v1434 = vmul.f32 %v1050, %v1168
      %v1435 = vmul.f32 %v1051, %v1178
      %v1436 = vmul.f32 %v1052, %v1188
      %v1437 = vmul.f32 %v1053, %v1198
      %v1438 = vmul.f32 %v1054, %v1208
      %v1439 = vmul.f32 %v1055, %v1218
      %v1440 = vmul.f32 %v1056, %v1228
      %v1441 = vmul.f32 %v1057, %v1238
      %v1442 = vmul.f32 %v1058, %v1248
      %v1443 = vmul.f32 %v1059, %v1258
      %v1444 = vmul.f32 %v1060, %v1268
      %v1445 = vmul.f32 %v1061, %v1278
      %v1446 = vmul.f32 %v1062, %v1288
      %v1447 = vmul.f32 %v1063, %v1298
      %v1448 = vmul.f32 %v1064, %v1308
      %v1449 = vmul.f32 %v1065, %v1318
      %v1450 = vmul.f32 %v1066, %v1328
      %v1451 = vmul.f32 %v1067, %v1338
      %v1452 = vmul.f32 %v1068, %v1348
      %v1453 = vmul.f32 %v1069, %v1358
      %v1454 = vmul.f32 %v1070, %v1368
      %v1455 = vmul.f32 %v1071, %v1378
      %v1456 = vmul.f32 %v1072, %v1388
      %v1457 = vmul.f32 %v1073, %v1398
      %v1458 = vmul.f32 %v1074, %v1408
      %v1459 = vmul.f32 %v1075, %v1418
      %v1460 = vmul.f32 %v1076, %v1428
      %v1462 = vperm.slane %v723, 0
      %v1464 = vmul.f32 %v1429, %v1462
      %v1465 = vmul.f32 %v1430, %v1462
      %v1466 = vmul.f32 %v1431, %v1462
      %v1467 = vmul.f32 %v1432, %v1462
      %v1468 = vmul.f32 %v1433, %v1462
      %v1469 = vmul.f32 %v1434, %v1462
      %v1470 = vmul.f32 %v1435, %v1462
      %v1471 = vmul.f32 %v1436, %v1462
      %v1472 = vmul.f32 %v1437, %v1462
      %v1473 = vmul.f32 %v1438, %v1462
      %v1474 = vmul.f32 %v1439, %v1462
      %v1475 = vmul.f32 %v1440, %v1462
      %v1476 = vmul.f32 %v1441, %v1462
      %v1477 = vmul.f32 %v1442, %v1462
      %v1478 = vmul.f32 %v1443, %v1462
      %v1479 = vmul.f32 %v1444, %v1462
      %v1480 = vmul.f32 %v1445, %v1462
      %v1481 = vmul.f32 %v1446, %v1462
      %v1482 = vmul.f32 %v1447, %v1462
      %v1483 = vmul.f32 %v1448, %v1462
      %v1484 = vmul.f32 %v1449, %v1462
      %v1485 = vmul.f32 %v1450, %v1462
      %v1486 = vmul.f32 %v1451, %v1462
      %v1487 = vmul.f32 %v1452, %v1462
      %v1488 = vmul.f32 %v1453, %v1462
      %v1489 = vmul.f32 %v1454, %v1462
      %v1490 = vmul.f32 %v1455, %v1462
      %v1491 = vmul.f32 %v1456, %v1462
      %v1492 = vmul.f32 %v1457, %v1462
      %v1493 = vmul.f32 %v1458, %v1462
      %v1494 = vmul.f32 %v1459, %v1462
      %v1495 = vmul.f32 %v1460, %v1462
      %v1497 = vperm.slane %v724, 0
      %v1499 = vadd.f32 %v1464, %v1497
      %v1500 = vadd.f32 %v1465, %v1497
      %v1501 = vadd.f32 %v1466, %v1497
      %v1502 = vadd.f32 %v1467, %v1497
      %v1503 = vadd.f32 %v1468, %v1497
      %v1504 = vadd.f32 %v1469, %v1497
      %v1505 = vadd.f32 %v1470, %v1497
      %v1506 = vadd.f32 %v1471, %v1497
      %v1507 = vadd.f32 %v1472, %v1497
      %v1508 = vadd.f32 %v1473, %v1497
      %v1509 = vadd.f32 %v1474, %v1497
      %v1510 = vadd.f32 %v1475, %v1497
      %v1511 = vadd.f32 %v1476, %v1497
      %v1512 = vadd.f32 %v1477, %v1497
      %v1513 = vadd.f32 %v1478, %v1497
      %v1514 = vadd.f32 %v1479, %v1497
      %v1515 = vadd.f32 %v1480, %v1497
      %v1516 = vadd.f32 %v1481, %v1497
      %v1517 = vadd.f32 %v1482, %v1497
      %v1518 = vadd.f32 %v1483, %v1497
      %v1519 = vadd.f32 %v1484, %v1497
      %v1520 = vadd.f32 %v1485, %v1497
      %v1521 = vadd.f32 %v1486, %v1497
      %v1522 = vadd.f32 %v1487, %v1497
      %v1523 = vadd.f32 %v1488, %v1497
      %v1524 = vadd.f32 %v1489, %v1497
      %v1525 = vadd.f32 %v1490, %v1497
      %v1526 = vadd.f32 %v1491, %v1497
      %v1527 = vadd.f32 %v1492, %v1497
      %v1528 = vadd.f32 %v1493, %v1497
      %v1529 = vadd.f32 %v1494, %v1497
      %v1530 = vadd.f32 %v1495, %v1497
      %v1531 = vld [vmem:[%s5] sm:$0x1]
      %v1532 = vld [vmem:[%s6] sm:$0x1]
      %1533 = vadd.xlane.f32.xlu0 %v1499
      %v1534 = vpop.xlane.xlu0 %1533
      %1535 = vadd.xlane.f32.xlu0 %v1500
      %v1536 = vpop.xlane.xlu0 %1535
      %1537 = vadd.xlane.f32.xlu0 %v1501
      %v1538 = vpop.xlane.xlu0 %1537
      %1539 = vadd.xlane.f32.xlu0 %v1502
      %v1540 = vpop.xlane.xlu0 %1539
      %1541 = vadd.xlane.f32.xlu0 %v1503
      %v1542 = vpop.xlane.xlu0 %1541
      %1543 = vadd.xlane.f32.xlu0 %v1504
      %v1544 = vpop.xlane.xlu0 %1543
      %1545 = vadd.xlane.f32.xlu0 %v1505
      %v1546 = vpop.xlane.xlu0 %1545
      %1547 = vadd.xlane.f32.xlu0 %v1506
      %v1548 = vpop.xlane.xlu0 %1547
      %1549 = vadd.xlane.f32.xlu0 %v1507
      %v1550 = vpop.xlane.xlu0 %1549
      %1551 = vadd.xlane.f32.xlu0 %v1508
      %v1552 = vpop.xlane.xlu0 %1551
      %1553 = vadd.xlane.f32.xlu0 %v1509
      %v1554 = vpop.xlane.xlu0 %1553
      %1555 = vadd.xlane.f32.xlu0 %v1510
      %v1556 = vpop.xlane.xlu0 %1555
      %1557 = vadd.xlane.f32.xlu0 %v1511
      %v1558 = vpop.xlane.xlu0 %1557
      %1559 = vadd.xlane.f32.xlu0 %v1512
      %v1560 = vpop.xlane.xlu0 %1559
      %1561 = vadd.xlane.f32.xlu0 %v1513
      %v1562 = vpop.xlane.xlu0 %1561
      %1563 = vadd.xlane.f32.xlu0 %v1514
      %v1564 = vpop.xlane.xlu0 %1563
      %1565 = vadd.xlane.f32.xlu0 %v1515
      %v1566 = vpop.xlane.xlu0 %1565
      %1567 = vadd.xlane.f32.xlu0 %v1516
      %v1568 = vpop.xlane.xlu0 %1567
      %1569 = vadd.xlane.f32.xlu0 %v1517
      %v1570 = vpop.xlane.xlu0 %1569
      %1571 = vadd.xlane.f32.xlu0 %v1518
      %v1572 = vpop.xlane.xlu0 %1571
      %1573 = vadd.xlane.f32.xlu0 %v1519
      %v1574 = vpop.xlane.xlu0 %1573
      %1575 = vadd.xlane.f32.xlu0 %v1520
      %v1576 = vpop.xlane.xlu0 %1575
      %1577 = vadd.xlane.f32.xlu0 %v1521
      %v1578 = vpop.xlane.xlu0 %1577
      %1579 = vadd.xlane.f32.xlu0 %v1522
      %v1580 = vpop.xlane.xlu0 %1579
      %1581 = vadd.xlane.f32.xlu0 %v1523
      %v1582 = vpop.xlane.xlu0 %1581
      %1583 = vadd.xlane.f32.xlu0 %v1524
      %v1584 = vpop.xlane.xlu0 %1583
      %1585 = vadd.xlane.f32.xlu0 %v1525
      %v1586 = vpop.xlane.xlu0 %1585
      %1587 = vadd.xlane.f32.xlu0 %v1526
      %v1588 = vpop.xlane.xlu0 %1587
      %1589 = vadd.xlane.f32.xlu0 %v1527
      %v1590 = vpop.xlane.xlu0 %1589
      %1591 = vadd.xlane.f32.xlu0 %v1528
      %v1592 = vpop.xlane.xlu0 %1591
      %1593 = vadd.xlane.f32.xlu0 %v1529
      %v1594 = vpop.xlane.xlu0 %1593
      %1595 = vadd.xlane.f32.xlu0 %v1530
      %v1596 = vpop.xlane.xlu0 %1595
      %v1597 = vmul.f32 %v1534, 0.125
      %v1598 = vmul.f32 %v1536, 0.125
      %v1599 = vmul.f32 %v1538, 0.125
      %v1600 = vmul.f32 %v1540, 0.125
      %v1601 = vmul.f32 %v1542, 0.125
      %v1602 = vmul.f32 %v1544, 0.125
      %v1603 = vmul.f32 %v1546, 0.125
      %v1604 = vmul.f32 %v1548, 0.125
      %v1605 = vmul.f32 %v1550, 0.125
      %v1606 = vmul.f32 %v1552, 0.125
      %v1607 = vmul.f32 %v1554, 0.125
      %v1608 = vmul.f32 %v1556, 0.125
      %v1609 = vmul.f32 %v1558, 0.125
      %v1610 = vmul.f32 %v1560, 0.125
      %v1611 = vmul.f32 %v1562, 0.125
      %v1612 = vmul.f32 %v1564, 0.125
      %v1613 = vmul.f32 %v1566, 0.125
      %v1614 = vmul.f32 %v1568, 0.125
      %v1615 = vmul.f32 %v1570, 0.125
      %v1616 = vmul.f32 %v1572, 0.125
      %v1617 = vmul.f32 %v1574, 0.125
      %v1618 = vmul.f32 %v1576, 0.125
      %v1619 = vmul.f32 %v1578, 0.125
      %v1620 = vmul.f32 %v1580, 0.125
      %v1621 = vmul.f32 %v1582, 0.125
      %v1622 = vmul.f32 %v1584, 0.125
      %v1623 = vmul.f32 %v1586, 0.125
      %v1624 = vmul.f32 %v1588, 0.125
      %v1625 = vmul.f32 %v1590, 0.125
      %v1626 = vmul.f32 %v1592, 0.125
      %v1627 = vmul.f32 %v1594, 0.125
      %v1628 = vmul.f32 %v1596, 0.125
      %v1629 = vmul.f32 %v1499, %v1499
      %v1630 = vmul.f32 %v1500, %v1500
      %v1631 = vmul.f32 %v1501, %v1501
      %v1632 = vmul.f32 %v1502, %v1502
      %v1633 = vmul.f32 %v1503, %v1503
      %v1634 = vmul.f32 %v1504, %v1504
      %v1635 = vmul.f32 %v1505, %v1505
      %v1636 = vmul.f32 %v1506, %v1506
      %v1637 = vmul.f32 %v1507, %v1507
      %v1638 = vmul.f32 %v1508, %v1508
      %v1639 = vmul.f32 %v1509, %v1509
      %v1640 = vmul.f32 %v1510, %v1510
      %v1641 = vmul.f32 %v1511, %v1511
      %v1642 = vmul.f32 %v1512, %v1512
      %v1643 = vmul.f32 %v1513, %v1513
      %v1644 = vmul.f32 %v1514, %v1514
      %v1645 = vmul.f32 %v1515, %v1515
      %v1646 = vmul.f32 %v1516, %v1516
      %v1647 = vmul.f32 %v1517, %v1517
      %v1648 = vmul.f32 %v1518, %v1518
      %v1649 = vmul.f32 %v1519, %v1519
      %v1650 = vmul.f32 %v1520, %v1520
      %v1651 = vmul.f32 %v1521, %v1521
      %v1652 = vmul.f32 %v1522, %v1522
      %v1653 = vmul.f32 %v1523, %v1523
      %v1654 = vmul.f32 %v1524, %v1524
      %v1655 = vmul.f32 %v1525, %v1525
      %v1656 = vmul.f32 %v1526, %v1526
      %v1657 = vmul.f32 %v1527, %v1527
      %v1658 = vmul.f32 %v1528, %v1528
      %v1659 = vmul.f32 %v1529, %v1529
      %v1660 = vmul.f32 %v1530, %v1530
      %1661 = vadd.xlane.f32.xlu0 %v1629
      %v1662 = vpop.xlane.xlu0 %1661
      %1663 = vadd.xlane.f32.xlu0 %v1630
      %v1664 = vpop.xlane.xlu0 %1663
      %1665 = vadd.xlane.f32.xlu0 %v1631
      %v1666 = vpop.xlane.xlu0 %1665
      %1667 = vadd.xlane.f32.xlu0 %v1632
      %v1668 = vpop.xlane.xlu0 %1667
      %1669 = vadd.xlane.f32.xlu0 %v1633
      %v1670 = vpop.xlane.xlu0 %1669
      %1671 = vadd.xlane.f32.xlu0 %v1634
      %v1672 = vpop.xlane.xlu0 %1671
      %1673 = vadd.xlane.f32.xlu0 %v1635
      %v1674 = vpop.xlane.xlu0 %1673
      %1675 = vadd.xlane.f32.xlu0 %v1636
      %v1676 = vpop.xlane.xlu0 %1675
      %1677 = vadd.xlane.f32.xlu0 %v1637
      %v1678 = vpop.xlane.xlu0 %1677
      %1679 = vadd.xlane.f32.xlu0 %v1638
      %v1680 = vpop.xlane.xlu0 %1679
      %1681 = vadd.xlane.f32.xlu0 %v1639
      %v1682 = vpop.xlane.xlu0 %1681
      %1683 = vadd.xlane.f32.xlu0 %v1640
      %v1684 = vpop.xlane.xlu0 %1683
      %1685 = vadd.xlane.f32.xlu0 %v1641
      %v1686 = vpop.xlane.xlu0 %1685
      %1687 = vadd.xlane.f32.xlu0 %v1642
      %v1688 = vpop.xlane.xlu0 %1687
      %1689 = vadd.xlane.f32.xlu0 %v1643
      %v1690 = vpop.xlane.xlu0 %1689
      %1691 = vadd.xlane.f32.xlu0 %v1644
      %v1692 = vpop.xlane.xlu0 %1691
      %1693 = vadd.xlane.f32.xlu0 %v1645
      %v1694 = vpop.xlane.xlu0 %1693
      %1695 = vadd.xlane.f32.xlu0 %v1646
      %v1696 = vpop.xlane.xlu0 %1695
      %1697 = vadd.xlane.f32.xlu0 %v1647
      %v1698 = vpop.xlane.xlu0 %1697
      %1699 = vadd.xlane.f32.xlu0 %v1648
      %v1700 = vpop.xlane.xlu0 %1699
      %1701 = vadd.xlane.f32.xlu0 %v1649
      %v1702 = vpop.xlane.xlu0 %1701
      %1703 = vadd.xlane.f32.xlu0 %v1650
      %v1704 = vpop.xlane.xlu0 %1703
      %1705 = vadd.xlane.f32.xlu0 %v1651
      %v1706 = vpop.xlane.xlu0 %1705
      %1707 = vadd.xlane.f32.xlu0 %v1652
      %v1708 = vpop.xlane.xlu0 %1707
      %1709 = vadd.xlane.f32.xlu0 %v1653
      %v1710 = vpop.xlane.xlu0 %1709
      %1711 = vadd.xlane.f32.xlu0 %v1654
      %v1712 = vpop.xlane.xlu0 %1711
      %1713 = vadd.xlane.f32.xlu0 %v1655
      %v1714 = vpop.xlane.xlu0 %1713
      %1715 = vadd.xlane.f32.xlu0 %v1656
      %v1716 = vpop.xlane.xlu0 %1715
      %1717 = vadd.xlane.f32.xlu0 %v1657
      %v1718 = vpop.xlane.xlu0 %1717
      %1719 = vadd.xlane.f32.xlu0 %v1658
      %v1720 = vpop.xlane.xlu0 %1719
      %1721 = vadd.xlane.f32.xlu0 %v1659
      %v1722 = vpop.xlane.xlu0 %1721
      %1723 = vadd.xlane.f32.xlu0 %v1660
      %v1724 = vpop.xlane.xlu0 %1723
      %v1725 = vmul.f32 %v1662, 0.125
      %v1726 = vmul.f32 %v1664, 0.125
      %v1727 = vmul.f32 %v1666, 0.125
      %v1728 = vmul.f32 %v1668, 0.125
      %v1729 = vmul.f32 %v1670, 0.125
      %v1730 = vmul.f32 %v1672, 0.125
      %v1731 = vmul.f32 %v1674, 0.125
      %v1732 = vmul.f32 %v1676, 0.125
      %v1733 = vmul.f32 %v1678, 0.125
      %v1734 = vmul.f32 %v1680, 0.125
      %v1735 = vmul.f32 %v1682, 0.125
      %v1736 = vmul.f32 %v1684, 0.125
      %v1737 = vmul.f32 %v1686, 0.125
      %v1738 = vmul.f32 %v1688, 0.125
      %v1739 = vmul.f32 %v1690, 0.125
      %v1740 = vmul.f32 %v1692, 0.125
      %v1741 = vmul.f32 %v1694, 0.125
      %v1742 = vmul.f32 %v1696, 0.125
      %v1743 = vmul.f32 %v1698, 0.125
      %v1744 = vmul.f32 %v1700, 0.125
      %v1745 = vmul.f32 %v1702, 0.125
      %v1746 = vmul.f32 %v1704, 0.125
      %v1747 = vmul.f32 %v1706, 0.125
      %v1748 = vmul.f32 %v1708, 0.125
      %v1749 = vmul.f32 %v1710, 0.125
      %v1750 = vmul.f32 %v1712, 0.125
      %v1751 = vmul.f32 %v1714, 0.125
      %v1752 = vmul.f32 %v1716, 0.125
      %v1753 = vmul.f32 %v1718, 0.125
      %v1754 = vmul.f32 %v1720, 0.125
      %v1755 = vmul.f32 %v1722, 0.125
      %v1756 = vmul.f32 %v1724, 0.125
      %v1757 = vmul.f32 %v1597, %v1597
      %v1758 = vmul.f32 %v1598, %v1598
      %v1759 = vmul.f32 %v1599, %v1599
      %v1760 = vmul.f32 %v1600, %v1600
      %v1761 = vmul.f32 %v1601, %v1601
      %v1762 = vmul.f32 %v1602, %v1602
      %v1763 = vmul.f32 %v1603, %v1603
      %v1764 = vmul.f32 %v1604, %v1604
      %v1765 = vmul.f32 %v1605, %v1605
      %v1766 = vmul.f32 %v1606, %v1606
      %v1767 = vmul.f32 %v1607, %v1607
      %v1768 = vmul.f32 %v1608, %v1608
      %v1769 = vmul.f32 %v1609, %v1609
      %v1770 = vmul.f32 %v1610, %v1610
      %v1771 = vmul.f32 %v1611, %v1611
      %v1772 = vmul.f32 %v1612, %v1612
      %v1773 = vmul.f32 %v1613, %v1613
      %v1774 = vmul.f32 %v1614, %v1614
      %v1775 = vmul.f32 %v1615, %v1615
      %v1776 = vmul.f32 %v1616, %v1616
      %v1777 = vmul.f32 %v1617, %v1617
      %v1778 = vmul.f32 %v1618, %v1618
      %v1779 = vmul.f32 %v1619, %v1619
      %v1780 = vmul.f32 %v1620, %v1620
      %v1781 = vmul.f32 %v1621, %v1621
      %v1782 = vmul.f32 %v1622, %v1622
      %v1783 = vmul.f32 %v1623, %v1623
      %v1784 = vmul.f32 %v1624, %v1624
      %v1785 = vmul.f32 %v1625, %v1625
      %v1786 = vmul.f32 %v1626, %v1626
      %v1787 = vmul.f32 %v1627, %v1627
      %v1788 = vmul.f32 %v1628, %v1628
      %v1789 = vsub.f32 %v1725, %v1757
      %v1790 = vsub.f32 %v1726, %v1758
      %v1791 = vsub.f32 %v1727, %v1759
      %v1792 = vsub.f32 %v1728, %v1760
      %v1793 = vsub.f32 %v1729, %v1761
      %v1794 = vsub.f32 %v1730, %v1762
      %v1795 = vsub.f32 %v1731, %v1763
      %v1796 = vsub.f32 %v1732, %v1764
      %v1797 = vsub.f32 %v1733, %v1765
      %v1798 = vsub.f32 %v1734, %v1766
      %v1799 = vsub.f32 %v1735, %v1767
      %v1800 = vsub.f32 %v1736, %v1768
      %v1801 = vsub.f32 %v1737, %v1769
      %v1802 = vsub.f32 %v1738, %v1770
      %v1803 = vsub.f32 %v1739, %v1771
      %v1804 = vsub.f32 %v1740, %v1772
      %v1805 = vsub.f32 %v1741, %v1773
      %v1806 = vsub.f32 %v1742, %v1774
      %v1807 = vsub.f32 %v1743, %v1775
      %v1808 = vsub.f32 %v1744, %v1776
      %v1809 = vsub.f32 %v1745, %v1777
      %v1810 = vsub.f32 %v1746, %v1778
      %v1811 = vsub.f32 %v1747, %v1779
      %v1812 = vsub.f32 %v1748, %v1780
      %v1813 = vsub.f32 %v1749, %v1781
      %v1814 = vsub.f32 %v1750, %v1782
      %v1815 = vsub.f32 %v1751, %v1783
      %v1816 = vsub.f32 %v1752, %v1784
      %v1817 = vsub.f32 %v1753, %v1785
      %v1818 = vsub.f32 %v1754, %v1786
      %v1819 = vsub.f32 %v1755, %v1787
      %v1820 = vsub.f32 %v1756, %v1788
      %v1821 = vmax.f32 %v1789, 0.0
      %v1822 = vmax.f32 %v1790, 0.0
      %v1823 = vmax.f32 %v1791, 0.0
      %v1824 = vmax.f32 %v1792, 0.0
      %v1825 = vmax.f32 %v1793, 0.0
      %v1826 = vmax.f32 %v1794, 0.0
      %v1827 = vmax.f32 %v1795, 0.0
      %v1828 = vmax.f32 %v1796, 0.0
      %v1829 = vmax.f32 %v1797, 0.0
      %v1830 = vmax.f32 %v1798, 0.0
      %v1831 = vmax.f32 %v1799, 0.0
      %v1832 = vmax.f32 %v1800, 0.0
      %v1833 = vmax.f32 %v1801, 0.0
      %v1834 = vmax.f32 %v1802, 0.0
      %v1835 = vmax.f32 %v1803, 0.0
      %v1836 = vmax.f32 %v1804, 0.0
      %v1837 = vmax.f32 %v1805, 0.0
      %v1838 = vmax.f32 %v1806, 0.0
      %v1839 = vmax.f32 %v1807, 0.0
      %v1840 = vmax.f32 %v1808, 0.0
      %v1841 = vmax.f32 %v1809, 0.0
      %v1842 = vmax.f32 %v1810, 0.0
      %v1843 = vmax.f32 %v1811, 0.0
      %v1844 = vmax.f32 %v1812, 0.0
      %v1845 = vmax.f32 %v1813, 0.0
      %v1846 = vmax.f32 %v1814, 0.0
      %v1847 = vmax.f32 %v1815, 0.0
      %v1848 = vmax.f32 %v1816, 0.0
      %v1849 = vmax.f32 %v1817, 0.0
      %v1850 = vmax.f32 %v1818, 0.0
      %v1851 = vmax.f32 %v1819, 0.0
      %v1852 = vmax.f32 %v1820, 0.0
      %v1853 = vsub.f32 %v1499, %v1597
      %v1854 = vsub.f32 %v1500, %v1598
      %v1855 = vsub.f32 %v1501, %v1599
      %v1856 = vsub.f32 %v1502, %v1600
      %v1857 = vsub.f32 %v1503, %v1601
      %v1858 = vsub.f32 %v1504, %v1602
      %v1859 = vsub.f32 %v1505, %v1603
      %v1860 = vsub.f32 %v1506, %v1604
      %v1861 = vsub.f32 %v1507, %v1605
      %v1862 = vsub.f32 %v1508, %v1606
      %v1863 = vsub.f32 %v1509, %v1607
      %v1864 = vsub.f32 %v1510, %v1608
      %v1865 = vsub.f32 %v1511, %v1609
      %v1866 = vsub.f32 %v1512, %v1610
      %v1867 = vsub.f32 %v1513, %v1611
      %v1868 = vsub.f32 %v1514, %v1612
      %v1869 = vsub.f32 %v1515, %v1613
      %v1870 = vsub.f32 %v1516, %v1614
      %v1871 = vsub.f32 %v1517, %v1615
      %v1872 = vsub.f32 %v1518, %v1616
      %v1873 = vsub.f32 %v1519, %v1617
      %v1874 = vsub.f32 %v1520, %v1618
      %v1875 = vsub.f32 %v1521, %v1619
      %v1876 = vsub.f32 %v1522, %v1620
      %v1877 = vsub.f32 %v1523, %v1621
      %v1878 = vsub.f32 %v1524, %v1622
      %v1879 = vsub.f32 %v1525, %v1623
      %v1880 = vsub.f32 %v1526, %v1624
      %v1881 = vsub.f32 %v1527, %v1625
      %v1882 = vsub.f32 %v1528, %v1626
      %v1883 = vsub.f32 %v1529, %v1627
      %v1884 = vsub.f32 %v1530, %v1628
      %v1885 = vadd.f32 %v1821, 1e-05
      %v1886 = vadd.f32 %v1822, 1e-05
      %v1887 = vadd.f32 %v1823, 1e-05
      %v1888 = vadd.f32 %v1824, 1e-05
      %v1889 = vadd.f32 %v1825, 1e-05
      %v1890 = vadd.f32 %v1826, 1e-05
      %v1891 = vadd.f32 %v1827, 1e-05
      %v1892 = vadd.f32 %v1828, 1e-05
      %v1893 = vadd.f32 %v1829, 1e-05
      %v1894 = vadd.f32 %v1830, 1e-05
      %v1895 = vadd.f32 %v1831, 1e-05
      %v1896 = vadd.f32 %v1832, 1e-05
      %v1897 = vadd.f32 %v1833, 1e-05
      %v1898 = vadd.f32 %v1834, 1e-05
      %v1899 = vadd.f32 %v1835, 1e-05
      %v1900 = vadd.f32 %v1836, 1e-05
      %v1901 = vadd.f32 %v1837, 1e-05
      %v1902 = vadd.f32 %v1838, 1e-05
      %v1903 = vadd.f32 %v1839, 1e-05
      %v1904 = vadd.f32 %v1840, 1e-05
      %v1905 = vadd.f32 %v1841, 1e-05
      %v1906 = vadd.f32 %v1842, 1e-05
      %v1907 = vadd.f32 %v1843, 1e-05
      %v1908 = vadd.f32 %v1844, 1e-05
      %v1909 = vadd.f32 %v1845, 1e-05
      %v1910 = vadd.f32 %v1846, 1e-05
      %v1911 = vadd.f32 %v1847, 1e-05
      %v1912 = vadd.f32 %v1848, 1e-05
      %v1913 = vadd.f32 %v1849, 1e-05
      %v1914 = vadd.f32 %v1850, 1e-05
      %v1915 = vadd.f32 %v1851, 1e-05
      %v1916 = vadd.f32 %v1852, 1e-05
      %v1917 = vrsqrt.pop %v1885
      %v1918 = vmul.f32 %v1917, %v1885
      %v1919 = vmul.f32 %v1918, %v1917
      %v1920 = vmul.f32 0.5, %v1919
      %v1921 = vsub.f32 1.5, %v1920
      %v1922 = vmul.f32 %v1917, %v1921
      %vm1923 = vweird.f32 %v1885
      %vm1924 = vweird.f32 %v1917
      %vm1925 = vmor %vm1923, %vm1924
      %v1926 = vsel %vm1925, %v1917, %v1922
      %v1927 = vrsqrt.pop %v1886
      %v1928 = vmul.f32 %v1927, %v1886
      %v1929 = vmul.f32 %v1928, %v1927
      %v1930 = vmul.f32 0.5, %v1929
      %v1931 = vsub.f32 1.5, %v1930
      %v1932 = vmul.f32 %v1927, %v1931
      %vm1933 = vweird.f32 %v1886
      %vm1934 = vweird.f32 %v1927
      %vm1935 = vmor %vm1933, %vm1934
      %v1936 = vsel %vm1935, %v1927, %v1932
      %v1937 = vrsqrt.pop %v1887
      %v1938 = vmul.f32 %v1937, %v1887
      %v1939 = vmul.f32 %v1938, %v1937
      %v1940 = vmul.f32 0.5, %v1939
      %v1941 = vsub.f32 1.5, %v1940
      %v1942 = vmul.f32 %v1937, %v1941
      %vm1943 = vweird.f32 %v1887
      %vm1944 = vweird.f32 %v1937
      %vm1945 = vmor %vm1943, %vm1944
      %v1946 = vsel %vm1945, %v1937, %v1942
      %v1947 = vrsqrt.pop %v1888
      %v1948 = vmul.f32 %v1947, %v1888
      %v1949 = vmul.f32 %v1948, %v1947
      %v1950 = vmul.f32 0.5, %v1949
      %v1951 = vsub.f32 1.5, %v1950
      %v1952 = vmul.f32 %v1947, %v1951
      %vm1953 = vweird.f32 %v1888
      %vm1954 = vweird.f32 %v1947
      %vm1955 = vmor %vm1953, %vm1954
      %v1956 = vsel %vm1955, %v1947, %v1952
      %v1957 = vrsqrt.pop %v1889
      %v1958 = vmul.f32 %v1957, %v1889
      %v1959 = vmul.f32 %v1958, %v1957
      %v1960 = vmul.f32 0.5, %v1959
      %v1961 = vsub.f32 1.5, %v1960
      %v1962 = vmul.f32 %v1957, %v1961
      %vm1963 = vweird.f32 %v1889
      %vm1964 = vweird.f32 %v1957
      %vm1965 = vmor %vm1963, %vm1964
      %v1966 = vsel %vm1965, %v1957, %v1962
      %v1967 = vrsqrt.pop %v1890
      %v1968 = vmul.f32 %v1967, %v1890
      %v1969 = vmul.f32 %v1968, %v1967
      %v1970 = vmul.f32 0.5, %v1969
      %v1971 = vsub.f32 1.5, %v1970
      %v1972 = vmul.f32 %v1967, %v1971
      %vm1973 = vweird.f32 %v1890
      %vm1974 = vweird.f32 %v1967
      %vm1975 = vmor %vm1973, %vm1974
      %v1976 = vsel %vm1975, %v1967, %v1972
      %v1977 = vrsqrt.pop %v1891
      %v1978 = vmul.f32 %v1977, %v1891
      %v1979 = vmul.f32 %v1978, %v1977
      %v1980 = vmul.f32 0.5, %v1979
      %v1981 = vsub.f32 1.5, %v1980
      %v1982 = vmul.f32 %v1977, %v1981
      %vm1983 = vweird.f32 %v1891
      %vm1984 = vweird.f32 %v1977
      %vm1985 = vmor %vm1983, %vm1984
      %v1986 = vsel %vm1985, %v1977, %v1982
      %v1987 = vrsqrt.pop %v1892
      %v1988 = vmul.f32 %v1987, %v1892
      %v1989 = vmul.f32 %v1988, %v1987
      %v1990 = vmul.f32 0.5, %v1989
      %v1991 = vsub.f32 1.5, %v1990
      %v1992 = vmul.f32 %v1987, %v1991
      %vm1993 = vweird.f32 %v1892
      %vm1994 = vweird.f32 %v1987
      %vm1995 = vmor %vm1993, %vm1994
      %v1996 = vsel %vm1995, %v1987, %v1992
      %v1997 = vrsqrt.pop %v1893
      %v1998 = vmul.f32 %v1997, %v1893
      %v1999 = vmul.f32 %v1998, %v1997
      %v2000 = vmul.f32 0.5, %v1999
      %v2001 = vsub.f32 1.5, %v2000
      %v2002 = vmul.f32 %v1997, %v2001
      %vm2003 = vweird.f32 %v1893
      %vm2004 = vweird.f32 %v1997
      %vm2005 = vmor %vm2003, %vm2004
      %v2006 = vsel %vm2005, %v1997, %v2002
      %v2007 = vrsqrt.pop %v1894
      %v2008 = vmul.f32 %v2007, %v1894
      %v2009 = vmul.f32 %v2008, %v2007
      %v2010 = vmul.f32 0.5, %v2009
      %v2011 = vsub.f32 1.5, %v2010
      %v2012 = vmul.f32 %v2007, %v2011
      %vm2013 = vweird.f32 %v1894
      %vm2014 = vweird.f32 %v2007
      %vm2015 = vmor %vm2013, %vm2014
      %v2016 = vsel %vm2015, %v2007, %v2012
      %v2017 = vrsqrt.pop %v1895
      %v2018 = vmul.f32 %v2017, %v1895
      %v2019 = vmul.f32 %v2018, %v2017
      %v2020 = vmul.f32 0.5, %v2019
      %v2021 = vsub.f32 1.5, %v2020
      %v2022 = vmul.f32 %v2017, %v2021
      %vm2023 = vweird.f32 %v1895
      %vm2024 = vweird.f32 %v2017
      %vm2025 = vmor %vm2023, %vm2024
      %v2026 = vsel %vm2025, %v2017, %v2022
      %v2027 = vrsqrt.pop %v1896
      %v2028 = vmul.f32 %v2027, %v1896
      %v2029 = vmul.f32 %v2028, %v2027
      %v2030 = vmul.f32 0.5, %v2029
      %v2031 = vsub.f32 1.5, %v2030
      %v2032 = vmul.f32 %v2027, %v2031
      %vm2033 = vweird.f32 %v1896
      %vm2034 = vweird.f32 %v2027
      %vm2035 = vmor %vm2033, %vm2034
      %v2036 = vsel %vm2035, %v2027, %v2032
      %v2037 = vrsqrt.pop %v1897
      %v2038 = vmul.f32 %v2037, %v1897
      %v2039 = vmul.f32 %v2038, %v2037
      %v2040 = vmul.f32 0.5, %v2039
      %v2041 = vsub.f32 1.5, %v2040
      %v2042 = vmul.f32 %v2037, %v2041
      %vm2043 = vweird.f32 %v1897
      %vm2044 = vweird.f32 %v2037
      %vm2045 = vmor %vm2043, %vm2044
      %v2046 = vsel %vm2045, %v2037, %v2042
      %v2047 = vrsqrt.pop %v1898
      %v2048 = vmul.f32 %v2047, %v1898
      %v2049 = vmul.f32 %v2048, %v2047
      %v2050 = vmul.f32 0.5, %v2049
      %v2051 = vsub.f32 1.5, %v2050
      %v2052 = vmul.f32 %v2047, %v2051
      %vm2053 = vweird.f32 %v1898
      %vm2054 = vweird.f32 %v2047
      %vm2055 = vmor %vm2053, %vm2054
      %v2056 = vsel %vm2055, %v2047, %v2052
      %v2057 = vrsqrt.pop %v1899
      %v2058 = vmul.f32 %v2057, %v1899
      %v2059 = vmul.f32 %v2058, %v2057
      %v2060 = vmul.f32 0.5, %v2059
      %v2061 = vsub.f32 1.5, %v2060
      %v2062 = vmul.f32 %v2057, %v2061
      %vm2063 = vweird.f32 %v1899
      %vm2064 = vweird.f32 %v2057
      %vm2065 = vmor %vm2063, %vm2064
      %v2066 = vsel %vm2065, %v2057, %v2062
      %v2067 = vrsqrt.pop %v1900
      %v2068 = vmul.f32 %v2067, %v1900
      %v2069 = vmul.f32 %v2068, %v2067
      %v2070 = vmul.f32 0.5, %v2069
      %v2071 = vsub.f32 1.5, %v2070
      %v2072 = vmul.f32 %v2067, %v2071
      %vm2073 = vweird.f32 %v1900
      %vm2074 = vweird.f32 %v2067
      %vm2075 = vmor %vm2073, %vm2074
      %v2076 = vsel %vm2075, %v2067, %v2072
      %v2077 = vrsqrt.pop %v1901
      %v2078 = vmul.f32 %v2077, %v1901
      %v2079 = vmul.f32 %v2078, %v2077
      %v2080 = vmul.f32 0.5, %v2079
      %v2081 = vsub.f32 1.5, %v2080
      %v2082 = vmul.f32 %v2077, %v2081
      %vm2083 = vweird.f32 %v1901
      %vm2084 = vweird.f32 %v2077
      %vm2085 = vmor %vm2083, %vm2084
      %v2086 = vsel %vm2085, %v2077, %v2082
      %v2087 = vrsqrt.pop %v1902
      %v2088 = vmul.f32 %v2087, %v1902
      %v2089 = vmul.f32 %v2088, %v2087
      %v2090 = vmul.f32 0.5, %v2089
      %v2091 = vsub.f32 1.5, %v2090
      %v2092 = vmul.f32 %v2087, %v2091
      %vm2093 = vweird.f32 %v1902
      %vm2094 = vweird.f32 %v2087
      %vm2095 = vmor %vm2093, %vm2094
      %v2096 = vsel %vm2095, %v2087, %v2092
      %v2097 = vrsqrt.pop %v1903
      %v2098 = vmul.f32 %v2097, %v1903
      %v2099 = vmul.f32 %v2098, %v2097
      %v2100 = vmul.f32 0.5, %v2099
      %v2101 = vsub.f32 1.5, %v2100
      %v2102 = vmul.f32 %v2097, %v2101
      %vm2103 = vweird.f32 %v1903
      %vm2104 = vweird.f32 %v2097
      %vm2105 = vmor %vm2103, %vm2104
      %v2106 = vsel %vm2105, %v2097, %v2102
      %v2107 = vrsqrt.pop %v1904
      %v2108 = vmul.f32 %v2107, %v1904
      %v2109 = vmul.f32 %v2108, %v2107
      %v2110 = vmul.f32 0.5, %v2109
      %v2111 = vsub.f32 1.5, %v2110
      %v2112 = vmul.f32 %v2107, %v2111
      %vm2113 = vweird.f32 %v1904
      %vm2114 = vweird.f32 %v2107
      %vm2115 = vmor %vm2113, %vm2114
      %v2116 = vsel %vm2115, %v2107, %v2112
      %v2117 = vrsqrt.pop %v1905
      %v2118 = vmul.f32 %v2117, %v1905
      %v2119 = vmul.f32 %v2118, %v2117
      %v2120 = vmul.f32 0.5, %v2119
      %v2121 = vsub.f32 1.5, %v2120
      %v2122 = vmul.f32 %v2117, %v2121
      %vm2123 = vweird.f32 %v1905
      %vm2124 = vweird.f32 %v2117
      %vm2125 = vmor %vm2123, %vm2124
      %v2126 = vsel %vm2125, %v2117, %v2122
      %v2127 = vrsqrt.pop %v1906
      %v2128 = vmul.f32 %v2127, %v1906
      %v2129 = vmul.f32 %v2128, %v2127
      %v2130 = vmul.f32 0.5, %v2129
      %v2131 = vsub.f32 1.5, %v2130
      %v2132 = vmul.f32 %v2127, %v2131
      %vm2133 = vweird.f32 %v1906
      %vm2134 = vweird.f32 %v2127
      %vm2135 = vmor %vm2133, %vm2134
      %v2136 = vsel %vm2135, %v2127, %v2132
      %v2137 = vrsqrt.pop %v1907
      %v2138 = vmul.f32 %v2137, %v1907
      %v2139 = vmul.f32 %v2138, %v2137
      %v2140 = vmul.f32 0.5, %v2139
      %v2141 = vsub.f32 1.5, %v2140
      %v2142 = vmul.f32 %v2137, %v2141
      %vm2143 = vweird.f32 %v1907
      %vm2144 = vweird.f32 %v2137
      %vm2145 = vmor %vm2143, %vm2144
      %v2146 = vsel %vm2145, %v2137, %v2142
      %v2147 = vrsqrt.pop %v1908
      %v2148 = vmul.f32 %v2147, %v1908
      %v2149 = vmul.f32 %v2148, %v2147
      %v2150 = vmul.f32 0.5, %v2149
      %v2151 = vsub.f32 1.5, %v2150
      %v2152 = vmul.f32 %v2147, %v2151
      %vm2153 = vweird.f32 %v1908
      %vm2154 = vweird.f32 %v2147
      %vm2155 = vmor %vm2153, %vm2154
      %v2156 = vsel %vm2155, %v2147, %v2152
      %v2157 = vrsqrt.pop %v1909
      %v2158 = vmul.f32 %v2157, %v1909
      %v2159 = vmul.f32 %v2158, %v2157
      %v2160 = vmul.f32 0.5, %v2159
      %v2161 = vsub.f32 1.5, %v2160
      %v2162 = vmul.f32 %v2157, %v2161
      %vm2163 = vweird.f32 %v1909
      %vm2164 = vweird.f32 %v2157
      %vm2165 = vmor %vm2163, %vm2164
      %v2166 = vsel %vm2165, %v2157, %v2162
      %v2167 = vrsqrt.pop %v1910
      %v2168 = vmul.f32 %v2167, %v1910
      %v2169 = vmul.f32 %v2168, %v2167
      %v2170 = vmul.f32 0.5, %v2169
      %v2171 = vsub.f32 1.5, %v2170
      %v2172 = vmul.f32 %v2167, %v2171
      %vm2173 = vweird.f32 %v1910
      %vm2174 = vweird.f32 %v2167
      %vm2175 = vmor %vm2173, %vm2174
      %v2176 = vsel %vm2175, %v2167, %v2172
      %v2177 = vrsqrt.pop %v1911
      %v2178 = vmul.f32 %v2177, %v1911
      %v2179 = vmul.f32 %v2178, %v2177
      %v2180 = vmul.f32 0.5, %v2179
      %v2181 = vsub.f32 1.5, %v2180
      %v2182 = vmul.f32 %v2177, %v2181
      %vm2183 = vweird.f32 %v1911
      %vm2184 = vweird.f32 %v2177
      %vm2185 = vmor %vm2183, %vm2184
      %v2186 = vsel %vm2185, %v2177, %v2182
      %v2187 = vrsqrt.pop %v1912
      %v2188 = vmul.f32 %v2187, %v1912
      %v2189 = vmul.f32 %v2188, %v2187
      %v2190 = vmul.f32 0.5, %v2189
      %v2191 = vsub.f32 1.5, %v2190
      %v2192 = vmul.f32 %v2187, %v2191
      %vm2193 = vweird.f32 %v1912
      %vm2194 = vweird.f32 %v2187
      %vm2195 = vmor %vm2193, %vm2194
      %v2196 = vsel %vm2195, %v2187, %v2192
      %v2197 = vrsqrt.pop %v1913
      %v2198 = vmul.f32 %v2197, %v1913
      %v2199 = vmul.f32 %v2198, %v2197
      %v2200 = vmul.f32 0.5, %v2199
      %v2201 = vsub.f32 1.5, %v2200
      %v2202 = vmul.f32 %v2197, %v2201
      %vm2203 = vweird.f32 %v1913
      %vm2204 = vweird.f32 %v2197
      %vm2205 = vmor %vm2203, %vm2204
      %v2206 = vsel %vm2205, %v2197, %v2202
      %v2207 = vrsqrt.pop %v1914
      %v2208 = vmul.f32 %v2207, %v1914
      %v2209 = vmul.f32 %v2208, %v2207
      %v2210 = vmul.f32 0.5, %v2209
      %v2211 = vsub.f32 1.5, %v2210
      %v2212 = vmul.f32 %v2207, %v2211
      %vm2213 = vweird.f32 %v1914
      %vm2214 = vweird.f32 %v2207
      %vm2215 = vmor %vm2213, %vm2214
      %v2216 = vsel %vm2215, %v2207, %v2212
      %v2217 = vrsqrt.pop %v1915
      %v2218 = vmul.f32 %v2217, %v1915
      %v2219 = vmul.f32 %v2218, %v2217
      %v2220 = vmul.f32 0.5, %v2219
      %v2221 = vsub.f32 1.5, %v2220
      %v2222 = vmul.f32 %v2217, %v2221
      %vm2223 = vweird.f32 %v1915
      %vm2224 = vweird.f32 %v2217
      %vm2225 = vmor %vm2223, %vm2224
      %v2226 = vsel %vm2225, %v2217, %v2222
      %v2227 = vrsqrt.pop %v1916
      %v2228 = vmul.f32 %v2227, %v1916
      %v2229 = vmul.f32 %v2228, %v2227
      %v2230 = vmul.f32 0.5, %v2229
      %v2231 = vsub.f32 1.5, %v2230
      %v2232 = vmul.f32 %v2227, %v2231
      %vm2233 = vweird.f32 %v1916
      %vm2234 = vweird.f32 %v2227
      %vm2235 = vmor %vm2233, %vm2234
      %v2236 = vsel %vm2235, %v2227, %v2232
      %v2237 = vmul.f32 %v1853, %v1926
      %v2238 = vmul.f32 %v1854, %v1936
      %v2239 = vmul.f32 %v1855, %v1946
      %v2240 = vmul.f32 %v1856, %v1956
      %v2241 = vmul.f32 %v1857, %v1966
      %v2242 = vmul.f32 %v1858, %v1976
      %v2243 = vmul.f32 %v1859, %v1986
      %v2244 = vmul.f32 %v1860, %v1996
      %v2245 = vmul.f32 %v1861, %v2006
      %v2246 = vmul.f32 %v1862, %v2016
      %v2247 = vmul.f32 %v1863, %v2026
      %v2248 = vmul.f32 %v1864, %v2036
      %v2249 = vmul.f32 %v1865, %v2046
      %v2250 = vmul.f32 %v1866, %v2056
      %v2251 = vmul.f32 %v1867, %v2066
      %v2252 = vmul.f32 %v1868, %v2076
      %v2253 = vmul.f32 %v1869, %v2086
      %v2254 = vmul.f32 %v1870, %v2096
      %v2255 = vmul.f32 %v1871, %v2106
      %v2256 = vmul.f32 %v1872, %v2116
      %v2257 = vmul.f32 %v1873, %v2126
      %v2258 = vmul.f32 %v1874, %v2136
      %v2259 = vmul.f32 %v1875, %v2146
      %v2260 = vmul.f32 %v1876, %v2156
      %v2261 = vmul.f32 %v1877, %v2166
      %v2262 = vmul.f32 %v1878, %v2176
      %v2263 = vmul.f32 %v1879, %v2186
      %v2264 = vmul.f32 %v1880, %v2196
      %v2265 = vmul.f32 %v1881, %v2206
      %v2266 = vmul.f32 %v1882, %v2216
      %v2267 = vmul.f32 %v1883, %v2226
      %v2268 = vmul.f32 %v1884, %v2236
      %v2270 = vperm.slane %v1531, 0
      %v2272 = vmul.f32 %v2237, %v2270
      %v2273 = vmul.f32 %v2238, %v2270
      %v2274 = vmul.f32 %v2239, %v2270
      %v2275 = vmul.f32 %v2240, %v2270
      %v2276 = vmul.f32 %v2241, %v2270
      %v2277 = vmul.f32 %v2242, %v2270
      %v2278 = vmul.f32 %v2243, %v2270
      %v2279 = vmul.f32 %v2244, %v2270
      %v2280 = vmul.f32 %v2245, %v2270
      %v2281 = vmul.f32 %v2246, %v2270
      %v2282 = vmul.f32 %v2247, %v2270
      %v2283 = vmul.f32 %v2248, %v2270
      %v2284 = vmul.f32 %v2249, %v2270
      %v2285 = vmul.f32 %v2250, %v2270
      %v2286 = vmul.f32 %v2251, %v2270
      %v2287 = vmul.f32 %v2252, %v2270
      %v2288 = vmul.f32 %v2253, %v2270
      %v2289 = vmul.f32 %v2254, %v2270
      %v2290 = vmul.f32 %v2255, %v2270
      %v2291 = vmul.f32 %v2256, %v2270
      %v2292 = vmul.f32 %v2257, %v2270
      %v2293 = vmul.f32 %v2258, %v2270
      %v2294 = vmul.f32 %v2259, %v2270
      %v2295 = vmul.f32 %v2260, %v2270
      %v2296 = vmul.f32 %v2261, %v2270
      %v2297 = vmul.f32 %v2262, %v2270
      %v2298 = vmul.f32 %v2263, %v2270
      %v2299 = vmul.f32 %v2264, %v2270
      %v2300 = vmul.f32 %v2265, %v2270
      %v2301 = vmul.f32 %v2266, %v2270
      %v2302 = vmul.f32 %v2267, %v2270
      %v2303 = vmul.f32 %v2268, %v2270
      %v2305 = vperm.slane %v1532, 0
      %v2307 = vadd.f32 %v2272, %v2305
      %v2308 = vadd.f32 %v2273, %v2305
      %v2309 = vadd.f32 %v2274, %v2305
      %v2310 = vadd.f32 %v2275, %v2305
      %v2311 = vadd.f32 %v2276, %v2305
      %v2312 = vadd.f32 %v2277, %v2305
      %v2313 = vadd.f32 %v2278, %v2305
      %v2314 = vadd.f32 %v2279, %v2305
      %v2315 = vadd.f32 %v2280, %v2305
      %v2316 = vadd.f32 %v2281, %v2305
      %v2317 = vadd.f32 %v2282, %v2305
      %v2318 = vadd.f32 %v2283, %v2305
      %v2319 = vadd.f32 %v2284, %v2305
      %v2320 = vadd.f32 %v2285, %v2305
      %v2321 = vadd.f32 %v2286, %v2305
      %v2322 = vadd.f32 %v2287, %v2305
      %v2323 = vadd.f32 %v2288, %v2305
      %v2324 = vadd.f32 %v2289, %v2305
      %v2325 = vadd.f32 %v2290, %v2305
      %v2326 = vadd.f32 %v2291, %v2305
      %v2327 = vadd.f32 %v2292, %v2305
      %v2328 = vadd.f32 %v2293, %v2305
      %v2329 = vadd.f32 %v2294, %v2305
      %v2330 = vadd.f32 %v2295, %v2305
      %v2331 = vadd.f32 %v2296, %v2305
      %v2332 = vadd.f32 %v2297, %v2305
      %v2333 = vadd.f32 %v2298, %v2305
      %v2334 = vadd.f32 %v2299, %v2305
      %v2335 = vadd.f32 %v2300, %v2305
      %v2336 = vadd.f32 %v2301, %v2305
      %v2337 = vadd.f32 %v2302, %v2305
      %v2338 = vadd.f32 %v2303, %v2305
      %v2339 = vpack.c.bf16 %v2308, %v2307
      %v2340 = vpack.c.bf16 %v2310, %v2309
      %v2341 = vpack.c.bf16 %v2312, %v2311
      %v2342 = vpack.c.bf16 %v2314, %v2313
      %v2343 = vpack.c.bf16 %v2316, %v2315
      %v2344 = vpack.c.bf16 %v2318, %v2317
      %v2345 = vpack.c.bf16 %v2320, %v2319
      %v2346 = vpack.c.bf16 %v2322, %v2321
      %v2347 = vpack.c.bf16 %v2324, %v2323
      %v2348 = vpack.c.bf16 %v2326, %v2325
      %v2349 = vpack.c.bf16 %v2328, %v2327
      %v2350 = vpack.c.bf16 %v2330, %v2329
      %v2351 = vpack.c.bf16 %v2332, %v2331
      %v2352 = vpack.c.bf16 %v2334, %v2333
      %v2353 = vpack.c.bf16 %v2336, %v2335
      %v2354 = vpack.c.bf16 %v2338, %v2337
      %v2355 = vld [vmem:[%s7] sm:$0xf]
      %v2356 = vld [vmem:[%s7 + $0x4] sm:$0xf]
      %v2357 = vld [vmem:[%s7 + $0x8] sm:$0xf]
      %v2358 = vld [vmem:[%s7 + $0xc] sm:$0xf]
      %v2359 = vld [vmem:[%s7 + $0x10] sm:$0xf]
      %v2360 = vld [vmem:[%s7 + $0x14] sm:$0xf]
      %v2361 = vld [vmem:[%s7 + $0x18] sm:$0xf]
      %v2362 = vld [vmem:[%s7 + $0x1c] sm:$0xf]
      %v2363 = vld [vmem:[%s7 + $0x20] sm:$0xf]
      %v2364 = vld [vmem:[%s7 + $0x24] sm:$0xf]
      %v2365 = vld [vmem:[%s7 + $0x28] sm:$0xf]
      %v2366 = vld [vmem:[%s7 + $0x2c] sm:$0xf]
      %v2367 = vld [vmem:[%s7 + $0x30] sm:$0xf]
      %v2368 = vld [vmem:[%s7 + $0x34] sm:$0xf]
      %v2369 = vld [vmem:[%s7 + $0x38] sm:$0xf]
      %v2370 = vld [vmem:[%s7 + $0x3c] sm:$0xf]
      %v2371 = vld [vmem:[%s8] sm:$0x1]
      %v2373 = vperm.slane %v2371, 0
      %v2391 = vunpack.c.l.b16 %v2355
      %v2392 = vunpack.c.l.b16 %v2356
      %v2393 = vunpack.c.l.b16 %v2357
      %v2394 = vunpack.c.l.b16 %v2358
      %v2395 = vunpack.c.l.b16 %v2359
      %v2396 = vunpack.c.l.b16 %v2360
      %v2397 = vunpack.c.l.b16 %v2361
      %v2398 = vunpack.c.l.b16 %v2362
      %v2399 = vunpack.c.l.b16 %v2363
      %v2400 = vunpack.c.l.b16 %v2364
      %v2401 = vunpack.c.l.b16 %v2365
      %v2402 = vunpack.c.l.b16 %v2366
      %v2403 = vunpack.c.l.b16 %v2367
      %v2404 = vunpack.c.l.b16 %v2368
      %v2405 = vunpack.c.l.b16 %v2369
      %v2406 = vunpack.c.l.b16 %v2370
      %v2407 = vpack.c.b16 %v2392, %v2391
      %v2408 = vpack.c.b16 %v2394, %v2393
      %v2409 = vpack.c.b16 %v2396, %v2395
      %v2410 = vpack.c.b16 %v2398, %v2397
      %v2411 = vpack.c.b16 %v2400, %v2399
      %v2412 = vpack.c.b16 %v2402, %v2401
      %v2413 = vpack.c.b16 %v2404, %v2403
      %v2414 = vpack.c.b16 %v2406, %v2405
      %2423 = vmatpush.bf16.msra.mxu0 %v2414
      %2424 = vmatpush.bf16.msra.mxu0 %v2413
      %2425 = vmatpush.bf16.msra.mxu0 %v2412
      %2426 = vmatpush.bf16.msra.mxu0 %v2411
      %2427 = vmatpush.bf16.msra.mxu0 %v2410
      %2428 = vmatpush.bf16.msra.mxu0 %v2409
      %2429 = vmatpush.bf16.msra.mxu0 %v2408
      %2430 = vmatpush.bf16.msra.mxu0 %v2407
      %2431 = vmatmul.bf16.gmra.mxu0 %v2339
      %v2432 = vpop.f32.mrf.mxu0
      %v2433 = vadd.f32 %v2373, %v2432
      %v2434 = vpop.f32.mrf.mxu0
      %v2435 = vadd.f32 %v2373, %v2434
      %2436 = vmatmul.bf16.gmra.mxu0 %v2340
      %v2437 = vpop.f32.mrf.mxu0
      %v2438 = vadd.f32 %v2373, %v2437
      %v2439 = vpop.f32.mrf.mxu0
      %v2440 = vadd.f32 %v2373, %v2439
      %2441 = vmatmul.bf16.gmra.mxu0 %v2341
      %v2442 = vpop.f32.mrf.mxu0
      %v2443 = vadd.f32 %v2373, %v2442
      %v2444 = vpop.f32.mrf.mxu0
      %v2445 = vadd.f32 %v2373, %v2444
      %2446 = vmatmul.bf16.gmra.mxu0 %v2342
      %v2447 = vpop.f32.mrf.mxu0
      %v2448 = vadd.f32 %v2373, %v2447
      %v2449 = vpop.f32.mrf.mxu0
      %v2450 = vadd.f32 %v2373, %v2449
      %2451 = vmatmul.bf16.gmra.mxu0 %v2343
      %v2452 = vpop.f32.mrf.mxu0
      %v2453 = vadd.f32 %v2373, %v2452
      %v2454 = vpop.f32.mrf.mxu0
      %v2455 = vadd.f32 %v2373, %v2454
      %2456 = vmatmul.bf16.gmra.mxu0 %v2344
      %v2457 = vpop.f32.mrf.mxu0
      %v2458 = vadd.f32 %v2373, %v2457
      %v2459 = vpop.f32.mrf.mxu0
      %v2460 = vadd.f32 %v2373, %v2459
      %2461 = vmatmul.bf16.gmra.mxu0 %v2345
      %v2462 = vpop.f32.mrf.mxu0
      %v2463 = vadd.f32 %v2373, %v2462
      %v2464 = vpop.f32.mrf.mxu0
      %v2465 = vadd.f32 %v2373, %v2464
      %2466 = vmatmul.bf16.gmra.mxu0 %v2346
      %v2467 = vpop.f32.mrf.mxu0
      %v2468 = vadd.f32 %v2373, %v2467
      %v2469 = vpop.f32.mrf.mxu0
      %v2470 = vadd.f32 %v2373, %v2469
      %2471 = vmatmul.bf16.gmra.mxu0 %v2347
      %v2472 = vpop.f32.mrf.mxu0
      %v2473 = vadd.f32 %v2373, %v2472
      %v2474 = vpop.f32.mrf.mxu0
      %v2475 = vadd.f32 %v2373, %v2474
      %2476 = vmatmul.bf16.gmra.mxu0 %v2348
      %v2477 = vpop.f32.mrf.mxu0
      %v2478 = vadd.f32 %v2373, %v2477
      %v2479 = vpop.f32.mrf.mxu0
      %v2480 = vadd.f32 %v2373, %v2479
      %2481 = vmatmul.bf16.gmra.mxu0 %v2349
      %v2482 = vpop.f32.mrf.mxu0
      %v2483 = vadd.f32 %v2373, %v2482
      %v2484 = vpop.f32.mrf.mxu0
      %v2485 = vadd.f32 %v2373, %v2484
      %2486 = vmatmul.bf16.gmra.mxu0 %v2350
      %v2487 = vpop.f32.mrf.mxu0
      %v2488 = vadd.f32 %v2373, %v2487
      %v2489 = vpop.f32.mrf.mxu0
      %v2490 = vadd.f32 %v2373, %v2489
      %2491 = vmatmul.bf16.gmra.mxu0 %v2351
      %v2492 = vpop.f32.mrf.mxu0
      %v2493 = vadd.f32 %v2373, %v2492
      %v2494 = vpop.f32.mrf.mxu0
      %v2495 = vadd.f32 %v2373, %v2494
      %2496 = vmatmul.bf16.gmra.mxu0 %v2352
      %v2497 = vpop.f32.mrf.mxu0
      %v2498 = vadd.f32 %v2373, %v2497
      %v2499 = vpop.f32.mrf.mxu0
      %v2500 = vadd.f32 %v2373, %v2499
      %2501 = vmatmul.bf16.gmra.mxu0 %v2353
      %v2502 = vpop.f32.mrf.mxu0
      %v2503 = vadd.f32 %v2373, %v2502
      %v2504 = vpop.f32.mrf.mxu0
      %v2505 = vadd.f32 %v2373, %v2504
      %2506 = vmatmul.bf16.gmra.mxu0 %v2354
      %v2507 = vpop.f32.mrf.mxu0
      %v2508 = vadd.f32 %v2373, %v2507
      %v2509 = vpop.f32.mrf.mxu0
      %v2510 = vadd.f32 %v2373, %v2509
      %2511 = vdwg.mxu0
      %v2512 = vmul.f32 %v2433, %v2433
      %v2513 = vmul.f32 %v2435, %v2435
      %v2514 = vmul.f32 %v2438, %v2438
      %v2515 = vmul.f32 %v2440, %v2440
      %v2516 = vmul.f32 %v2443, %v2443
      %v2517 = vmul.f32 %v2445, %v2445
      %v2518 = vmul.f32 %v2448, %v2448
      %v2519 = vmul.f32 %v2450, %v2450
      %v2520 = vmul.f32 %v2453, %v2453
      %v2521 = vmul.f32 %v2455, %v2455
      %v2522 = vmul.f32 %v2458, %v2458
      %v2523 = vmul.f32 %v2460, %v2460
      %v2524 = vmul.f32 %v2463, %v2463
      %v2525 = vmul.f32 %v2465, %v2465
      %v2526 = vmul.f32 %v2468, %v2468
      %v2527 = vmul.f32 %v2470, %v2470
      %v2528 = vmul.f32 %v2473, %v2473
      %v2529 = vmul.f32 %v2475, %v2475
      %v2530 = vmul.f32 %v2478, %v2478
      %v2531 = vmul.f32 %v2480, %v2480
      %v2532 = vmul.f32 %v2483, %v2483
      %v2533 = vmul.f32 %v2485, %v2485
      %v2534 = vmul.f32 %v2488, %v2488
      %v2535 = vmul.f32 %v2490, %v2490
      %v2536 = vmul.f32 %v2493, %v2493
      %v2537 = vmul.f32 %v2495, %v2495
      %v2538 = vmul.f32 %v2498, %v2498
      %v2539 = vmul.f32 %v2500, %v2500
      %v2540 = vmul.f32 %v2503, %v2503
      %v2541 = vmul.f32 %v2505, %v2505
      %v2542 = vmul.f32 %v2508, %v2508
      %v2543 = vmul.f32 %v2510, %v2510
      %v2544 = vmul.f32 %v2433, %v2512
      %v2545 = vmul.f32 %v2435, %v2513
      %v2546 = vmul.f32 %v2438, %v2514
      %v2547 = vmul.f32 %v2440, %v2515
      %v2548 = vmul.f32 %v2443, %v2516
      %v2549 = vmul.f32 %v2445, %v2517
      %v2550 = vmul.f32 %v2448, %v2518
      %v2551 = vmul.f32 %v2450, %v2519
      %v2552 = vmul.f32 %v2453, %v2520
      %v2553 = vmul.f32 %v2455, %v2521
      %v2554 = vmul.f32 %v2458, %v2522
      %v2555 = vmul.f32 %v2460, %v2523
      %v2556 = vmul.f32 %v2463, %v2524
      %v2557 = vmul.f32 %v2465, %v2525
      %v2558 = vmul.f32 %v2468, %v2526
      %v2559 = vmul.f32 %v2470, %v2527
      %v2560 = vmul.f32 %v2473, %v2528
      %v2561 = vmul.f32 %v2475, %v2529
      %v2562 = vmul.f32 %v2478, %v2530
      %v2563 = vmul.f32 %v2480, %v2531
      %v2564 = vmul.f32 %v2483, %v2532
      %v2565 = vmul.f32 %v2485, %v2533
      %v2566 = vmul.f32 %v2488, %v2534
      %v2567 = vmul.f32 %v2490, %v2535
      %v2568 = vmul.f32 %v2493, %v2536
      %v2569 = vmul.f32 %v2495, %v2537
      %v2570 = vmul.f32 %v2498, %v2538
      %v2571 = vmul.f32 %v2500, %v2539
      %v2572 = vmul.f32 %v2503, %v2540
      %v2573 = vmul.f32 %v2505, %v2541
      %v2574 = vmul.f32 %v2508, %v2542
      %v2575 = vmul.f32 %v2510, %v2543
      %v2576 = vmul.f32 %v2544, 0.044715
      %v2577 = vmul.f32 %v2545, 0.044715
      %v2578 = vmul.f32 %v2546, 0.044715
      %v2579 = vmul.f32 %v2547, 0.044715
      %v2580 = vmul.f32 %v2548, 0.044715
      %v2581 = vmul.f32 %v2549, 0.044715
      %v2582 = vmul.f32 %v2550, 0.044715
      %v2583 = vmul.f32 %v2551, 0.044715
      %v2584 = vmul.f32 %v2552, 0.044715
      %v2585 = vmul.f32 %v2553, 0.044715
      %v2586 = vmul.f32 %v2554, 0.044715
      %v2587 = vmul.f32 %v2555, 0.044715
      %v2588 = vmul.f32 %v2556, 0.044715
      %v2589 = vmul.f32 %v2557, 0.044715
      %v2590 = vmul.f32 %v2558, 0.044715
      %v2591 = vmul.f32 %v2559, 0.044715
      %v2592 = vmul.f32 %v2560, 0.044715
      %v2593 = vmul.f32 %v2561, 0.044715
      %v2594 = vmul.f32 %v2562, 0.044715
      %v2595 = vmul.f32 %v2563, 0.044715
      %v2596 = vmul.f32 %v2564, 0.044715
      %v2597 = vmul.f32 %v2565, 0.044715
      %v2598 = vmul.f32 %v2566, 0.044715
      %v2599 = vmul.f32 %v2567, 0.044715
      %v2600 = vmul.f32 %v2568, 0.044715
      %v2601 = vmul.f32 %v2569, 0.044715
      %v2602 = vmul.f32 %v2570, 0.044715
      %v2603 = vmul.f32 %v2571, 0.044715
      %v2604 = vmul.f32 %v2572, 0.044715
      %v2605 = vmul.f32 %v2573, 0.044715
      %v2606 = vmul.f32 %v2574, 0.044715
      %v2607 = vmul.f32 %v2575, 0.044715
      %v2608 = vadd.f32 %v2433, %v2576
      %v2609 = vadd.f32 %v2435, %v2577
      %v2610 = vadd.f32 %v2438, %v2578
      %v2611 = vadd.f32 %v2440, %v2579
      %v2612 = vadd.f32 %v2443, %v2580
      %v2613 = vadd.f32 %v2445, %v2581
      %v2614 = vadd.f32 %v2448, %v2582
      %v2615 = vadd.f32 %v2450, %v2583
      %v2616 = vadd.f32 %v2453, %v2584
      %v2617 = vadd.f32 %v2455, %v2585
      %v2618 = vadd.f32 %v2458, %v2586
      %v2619 = vadd.f32 %v2460, %v2587
      %v2620 = vadd.f32 %v2463, %v2588
      %v2621 = vadd.f32 %v2465, %v2589
      %v2622 = vadd.f32 %v2468, %v2590
      %v2623 = vadd.f32 %v2470, %v2591
      %v2624 = vadd.f32 %v2473, %v2592
      %v2625 = vadd.f32 %v2475, %v2593
      %v2626 = vadd.f32 %v2478, %v2594
      %v2627 = vadd.f32 %v2480, %v2595
      %v2628 = vadd.f32 %v2483, %v2596
      %v2629 = vadd.f32 %v2485, %v2597
      %v2630 = vadd.f32 %v2488, %v2598
      %v2631 = vadd.f32 %v2490, %v2599
      %v2632 = vadd.f32 %v2493, %v2600
      %v2633 = vadd.f32 %v2495, %v2601
      %v2634 = vadd.f32 %v2498, %v2602
      %v2635 = vadd.f32 %v2500, %v2603
      %v2636 = vadd.f32 %v2503, %v2604
      %v2637 = vadd.f32 %v2505, %v2605
      %v2638 = vadd.f32 %v2508, %v2606
      %v2639 = vadd.f32 %v2510, %v2607
      %v2640 = vmul.f32 %v2608, 0.7978846
      %v2641 = vmul.f32 %v2609, 0.7978846
      %v2642 = vmul.f32 %v2610, 0.7978846
      %v2643 = vmul.f32 %v2611, 0.7978846
      %v2644 = vmul.f32 %v2612, 0.7978846
      %v2645 = vmul.f32 %v2613, 0.7978846
      %v2646 = vmul.f32 %v2614, 0.7978846
      %v2647 = vmul.f32 %v2615, 0.7978846
      %v2648 = vmul.f32 %v2616, 0.7978846
      %v2649 = vmul.f32 %v2617, 0.7978846
      %v2650 = vmul.f32 %v2618, 0.7978846
      %v2651 = vmul.f32 %v2619, 0.7978846
      %v2652 = vmul.f32 %v2620, 0.7978846
      %v2653 = vmul.f32 %v2621, 0.7978846
      %v2654 = vmul.f32 %v2622, 0.7978846
      %v2655 = vmul.f32 %v2623, 0.7978846
      %v2656 = vmul.f32 %v2624, 0.7978846
      %v2657 = vmul.f32 %v2625, 0.7978846
      %v2658 = vmul.f32 %v2626, 0.7978846
      %v2659 = vmul.f32 %v2627, 0.7978846
      %v2660 = vmul.f32 %v2628, 0.7978846
      %v2661 = vmul.f32 %v2629, 0.7978846
      %v2662 = vmul.f32 %v2630, 0.7978846
      %v2663 = vmul.f32 %v2631, 0.7978846
      %v2664 = vmul.f32 %v2632, 0.7978846
      %v2665 = vmul.f32 %v2633, 0.7978846
      %v2666 = vmul.f32 %v2634, 0.7978846
      %v2667 = vmul.f32 %v2635, 0.7978846
      %v2668 = vmul.f32 %v2636, 0.7978846
      %v2669 = vmul.f32 %v2637, 0.7978846
      %v2670 = vmul.f32 %v2638, 0.7978846
      %v2671 = vmul.f32 %v2639, 0.7978846
      %v2672 = vtanh.pop %v2640
      %v2673 = vtanh.pop %v2641
      %v2674 = vtanh.pop %v2642
      %v2675 = vtanh.pop %v2643
      %v2676 = vtanh.pop %v2644
      %v2677 = vtanh.pop %v2645
      %v2678 = vtanh.pop %v2646
      %v2679 = vtanh.pop %v2647
      %v2680 = vtanh.pop %v2648
      %v2681 = vtanh.pop %v2649
      %v2682 = vtanh.pop %v2650
      %v2683 = vtanh.pop %v2651
      %v2684 = vtanh.pop %v2652
      %v2685 = vtanh.pop %v2653
      %v2686 = vtanh.pop %v2654
      %v2687 = vtanh.pop %v2655
      %v2688 = vtanh.pop %v2656
      %v2689 = vtanh.pop %v2657
      %v2690 = vtanh.pop %v2658
      %v2691 = vtanh.pop %v2659
      %v2692 = vtanh.pop %v2660
      %v2693 = vtanh.pop %v2661
      %v2694 = vtanh.pop %v2662
      %v2695 = vtanh.pop %v2663
      %v2696 = vtanh.pop %v2664
      %v2697 = vtanh.pop %v2665
      %v2698 = vtanh.pop %v2666
      %v2699 = vtanh.pop %v2667
      %v2700 = vtanh.pop %v2668
      %v2701 = vtanh.pop %v2669
      %v2702 = vtanh.pop %v2670
      %v2703 = vtanh.pop %v2671
      %v2704 = vadd.f32 %v2672, 1.0
      %v2705 = vadd.f32 %v2673, 1.0
      %v2706 = vadd.f32 %v2674, 1.0
      %v2707 = vadd.f32 %v2675, 1.0
      %v2708 = vadd.f32 %v2676, 1.0
      %v2709 = vadd.f32 %v2677, 1.0
      %v2710 = vadd.f32 %v2678, 1.0
      %v2711 = vadd.f32 %v2679, 1.0
      %v2712 = vadd.f32 %v2680, 1.0
      %v2713 = vadd.f32 %v2681, 1.0
      %v2714 = vadd.f32 %v2682, 1.0
      %v2715 = vadd.f32 %v2683, 1.0
      %v2716 = vadd.f32 %v2684, 1.0
      %v2717 = vadd.f32 %v2685, 1.0
      %v2718 = vadd.f32 %v2686, 1.0
      %v2719 = vadd.f32 %v2687, 1.0
      %v2720 = vadd.f32 %v2688, 1.0
      %v2721 = vadd.f32 %v2689, 1.0
      %v2722 = vadd.f32 %v2690, 1.0
      %v2723 = vadd.f32 %v2691, 1.0
      %v2724 = vadd.f32 %v2692, 1.0
      %v2725 = vadd.f32 %v2693, 1.0
      %v2726 = vadd.f32 %v2694, 1.0
      %v2727 = vadd.f32 %v2695, 1.0
      %v2728 = vadd.f32 %v2696, 1.0
      %v2729 = vadd.f32 %v2697, 1.0
      %v2730 = vadd.f32 %v2698, 1.0
      %v2731 = vadd.f32 %v2699, 1.0
      %v2732 = vadd.f32 %v2700, 1.0
      %v2733 = vadd.f32 %v2701, 1.0
      %v2734 = vadd.f32 %v2702, 1.0
      %v2735 = vadd.f32 %v2703, 1.0
      %v2736 = vmul.f32 %v2704, 0.5
      %v2737 = vmul.f32 %v2705, 0.5
      %v2738 = vmul.f32 %v2706, 0.5
      %v2739 = vmul.f32 %v2707, 0.5
      %v2740 = vmul.f32 %v2708, 0.5
      %v2741 = vmul.f32 %v2709, 0.5
      %v2742 = vmul.f32 %v2710, 0.5
      %v2743 = vmul.f32 %v2711, 0.5
      %v2744 = vmul.f32 %v2712, 0.5
      %v2745 = vmul.f32 %v2713, 0.5
      %v2746 = vmul.f32 %v2714, 0.5
      %v2747 = vmul.f32 %v2715, 0.5
      %v2748 = vmul.f32 %v2716, 0.5
      %v2749 = vmul.f32 %v2717, 0.5
      %v2750 = vmul.f32 %v2718, 0.5
      %v2751 = vmul.f32 %v2719, 0.5
      %v2752 = vmul.f32 %v2720, 0.5
      %v2753 = vmul.f32 %v2721, 0.5
      %v2754 = vmul.f32 %v2722, 0.5
      %v2755 = vmul.f32 %v2723, 0.5
      %v2756 = vmul.f32 %v2724, 0.5
      %v2757 = vmul.f32 %v2725, 0.5
      %v2758 = vmul.f32 %v2726, 0.5
      %v2759 = vmul.f32 %v2727, 0.5
      %v2760 = vmul.f32 %v2728, 0.5
      %v2761 = vmul.f32 %v2729, 0.5
      %v2762 = vmul.f32 %v2730, 0.5
      %v2763 = vmul.f32 %v2731, 0.5
      %v2764 = vmul.f32 %v2732, 0.5
      %v2765 = vmul.f32 %v2733, 0.5
      %v2766 = vmul.f32 %v2734, 0.5
      %v2767 = vmul.f32 %v2735, 0.5
      %v2768 = vmul.f32 %v2433, %v2736
      %v2769 = vmul.f32 %v2435, %v2737
      %v2770 = vmul.f32 %v2438, %v2738
      %v2771 = vmul.f32 %v2440, %v2739
      %v2772 = vmul.f32 %v2443, %v2740
      %v2773 = vmul.f32 %v2445, %v2741
      %v2774 = vmul.f32 %v2448, %v2742
      %v2775 = vmul.f32 %v2450, %v2743
      %v2776 = vmul.f32 %v2453, %v2744
      %v2777 = vmul.f32 %v2455, %v2745
      %v2778 = vmul.f32 %v2458, %v2746
      %v2779 = vmul.f32 %v2460, %v2747
      %v2780 = vmul.f32 %v2463, %v2748
      %v2781 = vmul.f32 %v2465, %v2749
      %v2782 = vmul.f32 %v2468, %v2750
      %v2783 = vmul.f32 %v2470, %v2751
      %v2784 = vmul.f32 %v2473, %v2752
      %v2785 = vmul.f32 %v2475, %v2753
      %v2786 = vmul.f32 %v2478, %v2754
      %v2787 = vmul.f32 %v2480, %v2755
      %v2788 = vmul.f32 %v2483, %v2756
      %v2789 = vmul.f32 %v2485, %v2757
      %v2790 = vmul.f32 %v2488, %v2758
      %v2791 = vmul.f32 %v2490, %v2759
      %v2792 = vmul.f32 %v2493, %v2760
      %v2793 = vmul.f32 %v2495, %v2761
      %v2794 = vmul.f32 %v2498, %v2762
      %v2795 = vmul.f32 %v2500, %v2763
      %v2796 = vmul.f32 %v2503, %v2764
      %v2797 = vmul.f32 %v2505, %v2765
      %v2798 = vmul.f32 %v2508, %v2766
      %v2799 = vmul.f32 %v2510, %v2767
      %v2800 = vpack.c.bf16 %v2769, %v2768
      %v2801 = vpack.c.bf16 %v2771, %v2770
      %v2802 = vpack.c.bf16 %v2773, %v2772
      %v2803 = vpack.c.bf16 %v2775, %v2774
      %v2804 = vpack.c.bf16 %v2777, %v2776
      %v2805 = vpack.c.bf16 %v2779, %v2778
      %v2806 = vpack.c.bf16 %v2781, %v2780
      %v2807 = vpack.c.bf16 %v2783, %v2782
      %v2808 = vpack.c.bf16 %v2785, %v2784
      %v2809 = vpack.c.bf16 %v2787, %v2786
      %v2810 = vpack.c.bf16 %v2789, %v2788
      %v2811 = vpack.c.bf16 %v2791, %v2790
      %v2812 = vpack.c.bf16 %v2793, %v2792
      %v2813 = vpack.c.bf16 %v2795, %v2794
      %v2814 = vpack.c.bf16 %v2797, %v2796
      %v2815 = vpack.c.bf16 %v2799, %v2798
      %v2816 = vld [vmem:[%s9] sm:$0xf]
      %v2817 = vld [vmem:[%s9 + $0x4] sm:$0xf]
      %v2818 = vld [vmem:[%s9 + $0x8] sm:$0xf]
      %v2819 = vld [vmem:[%s9 + $0xc] sm:$0xf]
      %v2820 = vld [vmem:[%s9 + $0x10] sm:$0xf]
      %v2821 = vld [vmem:[%s9 + $0x14] sm:$0xf]
      %v2822 = vld [vmem:[%s9 + $0x18] sm:$0xf]
      %v2823 = vld [vmem:[%s9 + $0x1c] sm:$0xf]
      %v2824 = vld [vmem:[%s9 + $0x20] sm:$0xf]
      %v2825 = vld [vmem:[%s9 + $0x24] sm:$0xf]
      %v2826 = vld [vmem:[%s9 + $0x28] sm:$0xf]
      %v2827 = vld [vmem:[%s9 + $0x2c] sm:$0xf]
      %v2828 = vld [vmem:[%s9 + $0x30] sm:$0xf]
      %v2829 = vld [vmem:[%s9 + $0x34] sm:$0xf]
      %v2830 = vld [vmem:[%s9 + $0x38] sm:$0xf]
      %v2831 = vld [vmem:[%s9 + $0x3c] sm:$0xf]
      %v2832 = vld [vmem:[%s10] sm:$0x1]
      %v2834 = vperm.slane %v2832, 0
      %v2852 = vunpack.c.l.b16 %v2816
      %v2853 = vunpack.c.l.b16 %v2817
      %v2854 = vunpack.c.l.b16 %v2818
      %v2855 = vunpack.c.l.b16 %v2819
      %v2856 = vunpack.c.l.b16 %v2820
      %v2857 = vunpack.c.l.b16 %v2821
      %v2858 = vunpack.c.l.b16 %v2822
      %v2859 = vunpack.c.l.b16 %v2823
      %v2860 = vunpack.c.l.b16 %v2824
      %v2861 = vunpack.c.l.b16 %v2825
      %v2862 = vunpack.c.l.b16 %v2826
      %v2863 = vunpack.c.l.b16 %v2827
      %v2864 = vunpack.c.l.b16 %v2828
      %v2865 = vunpack.c.l.b16 %v2829
      %v2866 = vunpack.c.l.b16 %v2830
      %v2867 = vunpack.c.l.b16 %v2831
      %v2868 = vpack.c.b16 %v2853, %v2852
      %v2869 = vpack.c.b16 %v2855, %v2854
      %v2870 = vpack.c.b16 %v2857, %v2856
      %v2871 = vpack.c.b16 %v2859, %v2858
      %v2872 = vpack.c.b16 %v2861, %v2860
      %v2873 = vpack.c.b16 %v2863, %v2862
      %v2874 = vpack.c.b16 %v2865, %v2864
      %v2875 = vpack.c.b16 %v2867, %v2866
      %2884 = vmatpush.bf16.msra.mxu0 %v2875
      %2885 = vmatpush.bf16.msra.mxu0 %v2874
      %2886 = vmatpush.bf16.msra.mxu0 %v2873
      %2887 = vmatpush.bf16.msra.mxu0 %v2872
      %2888 = vmatpush.bf16.msra.mxu0 %v2871
      %2889 = vmatpush.bf16.msra.mxu0 %v2870
      %2890 = vmatpush.bf16.msra.mxu0 %v2869
      %2891 = vmatpush.bf16.msra.mxu0 %v2868
      %2892 = vmatmul.bf16.gmra.mxu0 %v2800
      %v2893 = vpop.f32.mrf.mxu0
      %v2894 = vadd.f32 %v2834, %v2893
      %v2895 = vpop.f32.mrf.mxu0
      %v2896 = vadd.f32 %v2834, %v2895
      %2897 = vmatmul.bf16.gmra.mxu0 %v2801
      %v2898 = vpop.f32.mrf.mxu0
      %v2899 = vadd.f32 %v2834, %v2898
      %v2900 = vpop.f32.mrf.mxu0
      %v2901 = vadd.f32 %v2834, %v2900
      %2902 = vmatmul.bf16.gmra.mxu0 %v2802
      %v2903 = vpop.f32.mrf.mxu0
      %v2904 = vadd.f32 %v2834, %v2903
      %v2905 = vpop.f32.mrf.mxu0
      %v2906 = vadd.f32 %v2834, %v2905
      %2907 = vmatmul.bf16.gmra.mxu0 %v2803
      %v2908 = vpop.f32.mrf.mxu0
      %v2909 = vadd.f32 %v2834, %v2908
      %v2910 = vpop.f32.mrf.mxu0
      %v2911 = vadd.f32 %v2834, %v2910
      %2912 = vmatmul.bf16.gmra.mxu0 %v2804
      %v2913 = vpop.f32.mrf.mxu0
      %v2914 = vadd.f32 %v2834, %v2913
      %v2915 = vpop.f32.mrf.mxu0
      %v2916 = vadd.f32 %v2834, %v2915
      %2917 = vmatmul.bf16.gmra.mxu0 %v2805
      %v2918 = vpop.f32.mrf.mxu0
      %v2919 = vadd.f32 %v2834, %v2918
      %v2920 = vpop.f32.mrf.mxu0
      %v2921 = vadd.f32 %v2834, %v2920
      %2922 = vmatmul.bf16.gmra.mxu0 %v2806
      %v2923 = vpop.f32.mrf.mxu0
      %v2924 = vadd.f32 %v2834, %v2923
      %v2925 = vpop.f32.mrf.mxu0
      %v2926 = vadd.f32 %v2834, %v2925
      %2927 = vmatmul.bf16.gmra.mxu0 %v2807
      %v2928 = vpop.f32.mrf.mxu0
      %v2929 = vadd.f32 %v2834, %v2928
      %v2930 = vpop.f32.mrf.mxu0
      %v2931 = vadd.f32 %v2834, %v2930
      %2932 = vmatmul.bf16.gmra.mxu0 %v2808
      %v2933 = vpop.f32.mrf.mxu0
      %v2934 = vadd.f32 %v2834, %v2933
      %v2935 = vpop.f32.mrf.mxu0
      %v2936 = vadd.f32 %v2834, %v2935
      %2937 = vmatmul.bf16.gmra.mxu0 %v2809
      %v2938 = vpop.f32.mrf.mxu0
      %v2939 = vadd.f32 %v2834, %v2938
      %v2940 = vpop.f32.mrf.mxu0
      %v2941 = vadd.f32 %v2834, %v2940
      %2942 = vmatmul.bf16.gmra.mxu0 %v2810
      %v2943 = vpop.f32.mrf.mxu0
      %v2944 = vadd.f32 %v2834, %v2943
      %v2945 = vpop.f32.mrf.mxu0
      %v2946 = vadd.f32 %v2834, %v2945
      %2947 = vmatmul.bf16.gmra.mxu0 %v2811
      %v2948 = vpop.f32.mrf.mxu0
      %v2949 = vadd.f32 %v2834, %v2948
      %v2950 = vpop.f32.mrf.mxu0
      %v2951 = vadd.f32 %v2834, %v2950
      %2952 = vmatmul.bf16.gmra.mxu0 %v2812
      %v2953 = vpop.f32.mrf.mxu0
      %v2954 = vadd.f32 %v2834, %v2953
      %v2955 = vpop.f32.mrf.mxu0
      %v2956 = vadd.f32 %v2834, %v2955
      %2957 = vmatmul.bf16.gmra.mxu0 %v2813
      %v2958 = vpop.f32.mrf.mxu0
      %v2959 = vadd.f32 %v2834, %v2958
      %v2960 = vpop.f32.mrf.mxu0
      %v2961 = vadd.f32 %v2834, %v2960
      %2962 = vmatmul.bf16.gmra.mxu0 %v2814
      %v2963 = vpop.f32.mrf.mxu0
      %v2964 = vadd.f32 %v2834, %v2963
      %v2965 = vpop.f32.mrf.mxu0
      %v2966 = vadd.f32 %v2834, %v2965
      %2967 = vmatmul.bf16.gmra.mxu0 %v2815
      %v2968 = vpop.f32.mrf.mxu0
      %v2969 = vadd.f32 %v2834, %v2968
      %v2970 = vpop.f32.mrf.mxu0
      %v2971 = vadd.f32 %v2834, %v2970
      %2972 = vdwg.mxu0
      %v2973 = vadd.f32 %v1499, %v2894
      %v2974 = vadd.f32 %v1500, %v2896
      %v2975 = vadd.f32 %v1501, %v2899
      %v2976 = vadd.f32 %v1502, %v2901
      %v2977 = vadd.f32 %v1503, %v2904
      %v2978 = vadd.f32 %v1504, %v2906
      %v2979 = vadd.f32 %v1505, %v2909
      %v2980 = vadd.f32 %v1506, %v2911
      %v2981 = vadd.f32 %v1507, %v2914
      %v2982 = vadd.f32 %v1508, %v2916
      %v2983 = vadd.f32 %v1509, %v2919
      %v2984 = vadd.f32 %v1510, %v2921
      %v2985 = vadd.f32 %v1511, %v2924
      %v2986 = vadd.f32 %v1512, %v2926
      %v2987 = vadd.f32 %v1513, %v2929
      %v2988 = vadd.f32 %v1514, %v2931
      %v2989 = vadd.f32 %v1515, %v2934
      %v2990 = vadd.f32 %v1516, %v2936
      %v2991 = vadd.f32 %v1517, %v2939
      %v2992 = vadd.f32 %v1518, %v2941
      %v2993 = vadd.f32 %v1519, %v2944
      %v2994 = vadd.f32 %v1520, %v2946
      %v2995 = vadd.f32 %v1521, %v2949
      %v2996 = vadd.f32 %v1522, %v2951
      %v2997 = vadd.f32 %v1523, %v2954
      %v2998 = vadd.f32 %v1524, %v2956
      %v2999 = vadd.f32 %v1525, %v2959
      %v3000 = vadd.f32 %v1526, %v2961
      %v3001 = vadd.f32 %v1527, %v2964
      %v3002 = vadd.f32 %v1528, %v2966
      %v3003 = vadd.f32 %v1529, %v2969
      %v3004 = vadd.f32 %v1530, %v2971
      %v3005 = vld [vmem:[%s11] sm:$0x1]
      %v3006 = vld [vmem:[%s12] sm:$0x1]
      %3007 = vadd.xlane.f32.xlu0 %v2973
      %v3008 = vpop.xlane.xlu0 %3007
      %3009 = vadd.xlane.f32.xlu0 %v2974
      %v3010 = vpop.xlane.xlu0 %3009
      %3011 = vadd.xlane.f32.xlu0 %v2975
      %v3012 = vpop.xlane.xlu0 %3011
      %3013 = vadd.xlane.f32.xlu0 %v2976
      %v3014 = vpop.xlane.xlu0 %3013
      %3015 = vadd.xlane.f32.xlu0 %v2977
      %v3016 = vpop.xlane.xlu0 %3015
      %3017 = vadd.xlane.f32.xlu0 %v2978
      %v3018 = vpop.xlane.xlu0 %3017
      %3019 = vadd.xlane.f32.xlu0 %v2979
      %v3020 = vpop.xlane.xlu0 %3019
      %3021 = vadd.xlane.f32.xlu0 %v2980
      %v3022 = vpop.xlane.xlu0 %3021
      %3023 = vadd.xlane.f32.xlu0 %v2981
      %v3024 = vpop.xlane.xlu0 %3023
      %3025 = vadd.xlane.f32.xlu0 %v2982
      %v3026 = vpop.xlane.xlu0 %3025
      %3027 = vadd.xlane.f32.xlu0 %v2983
      %v3028 = vpop.xlane.xlu0 %3027
      %3029 = vadd.xlane.f32.xlu0 %v2984
      %v3030 = vpop.xlane.xlu0 %3029
      %3031 = vadd.xlane.f32.xlu0 %v2985
      %v3032 = vpop.xlane.xlu0 %3031
      %3033 = vadd.xlane.f32.xlu0 %v2986
      %v3034 = vpop.xlane.xlu0 %3033
      %3035 = vadd.xlane.f32.xlu0 %v2987
      %v3036 = vpop.xlane.xlu0 %3035
      %3037 = vadd.xlane.f32.xlu0 %v2988
      %v3038 = vpop.xlane.xlu0 %3037
      %3039 = vadd.xlane.f32.xlu0 %v2989
      %v3040 = vpop.xlane.xlu0 %3039
      %3041 = vadd.xlane.f32.xlu0 %v2990
      %v3042 = vpop.xlane.xlu0 %3041
      %3043 = vadd.xlane.f32.xlu0 %v2991
      %v3044 = vpop.xlane.xlu0 %3043
      %3045 = vadd.xlane.f32.xlu0 %v2992
      %v3046 = vpop.xlane.xlu0 %3045
      %3047 = vadd.xlane.f32.xlu0 %v2993
      %v3048 = vpop.xlane.xlu0 %3047
      %3049 = vadd.xlane.f32.xlu0 %v2994
      %v3050 = vpop.xlane.xlu0 %3049
      %3051 = vadd.xlane.f32.xlu0 %v2995
      %v3052 = vpop.xlane.xlu0 %3051
      %3053 = vadd.xlane.f32.xlu0 %v2996
      %v3054 = vpop.xlane.xlu0 %3053
      %3055 = vadd.xlane.f32.xlu0 %v2997
      %v3056 = vpop.xlane.xlu0 %3055
      %3057 = vadd.xlane.f32.xlu0 %v2998
      %v3058 = vpop.xlane.xlu0 %3057
      %3059 = vadd.xlane.f32.xlu0 %v2999
      %v3060 = vpop.xlane.xlu0 %3059
      %3061 = vadd.xlane.f32.xlu0 %v3000
      %v3062 = vpop.xlane.xlu0 %3061
      %3063 = vadd.xlane.f32.xlu0 %v3001
      %v3064 = vpop.xlane.xlu0 %3063
      %3065 = vadd.xlane.f32.xlu0 %v3002
      %v3066 = vpop.xlane.xlu0 %3065
      %3067 = vadd.xlane.f32.xlu0 %v3003
      %v3068 = vpop.xlane.xlu0 %3067
      %3069 = vadd.xlane.f32.xlu0 %v3004
      %v3070 = vpop.xlane.xlu0 %3069
      %v3071 = vmul.f32 %v3008, 0.125
      %v3072 = vmul.f32 %v3010, 0.125
      %v3073 = vmul.f32 %v3012, 0.125
      %v3074 = vmul.f32 %v3014, 0.125
      %v3075 = vmul.f32 %v3016, 0.125
      %v3076 = vmul.f32 %v3018, 0.125
      %v3077 = vmul.f32 %v3020, 0.125
      %v3078 = vmul.f32 %v3022, 0.125
      %v3079 = vmul.f32 %v3024, 0.125
      %v3080 = vmul.f32 %v3026, 0.125
      %v3081 = vmul.f32 %v3028, 0.125
      %v3082 = vmul.f32 %v3030, 0.125
      %v3083 = vmul.f32 %v3032, 0.125
      %v3084 = vmul.f32 %v3034, 0.125
      %v3085 = vmul.f32 %v3036, 0.125
      %v3086 = vmul.f32 %v3038, 0.125
      %v3087 = vmul.f32 %v3040, 0.125
      %v3088 = vmul.f32 %v3042, 0.125
      %v3089 = vmul.f32 %v3044, 0.125
      %v3090 = vmul.f32 %v3046, 0.125
      %v3091 = vmul.f32 %v3048, 0.125
      %v3092 = vmul.f32 %v3050, 0.125
      %v3093 = vmul.f32 %v3052, 0.125
      %v3094 = vmul.f32 %v3054, 0.125
      %v3095 = vmul.f32 %v3056, 0.125
      %v3096 = vmul.f32 %v3058, 0.125
      %v3097 = vmul.f32 %v3060, 0.125
      %v3098 = vmul.f32 %v3062, 0.125
      %v3099 = vmul.f32 %v3064, 0.125
      %v3100 = vmul.f32 %v3066, 0.125
      %v3101 = vmul.f32 %v3068, 0.125
      %v3102 = vmul.f32 %v3070, 0.125
      %v3103 = vmul.f32 %v2973, %v2973
      %v3104 = vmul.f32 %v2974, %v2974
      %v3105 = vmul.f32 %v2975, %v2975
      %v3106 = vmul.f32 %v2976, %v2976
      %v3107 = vmul.f32 %v2977, %v2977
      %v3108 = vmul.f32 %v2978, %v2978
      %v3109 = vmul.f32 %v2979, %v2979
      %v3110 = vmul.f32 %v2980, %v2980
      %v3111 = vmul.f32 %v2981, %v2981
      %v3112 = vmul.f32 %v2982, %v2982
      %v3113 = vmul.f32 %v2983, %v2983
      %v3114 = vmul.f32 %v2984, %v2984
      %v3115 = vmul.f32 %v2985, %v2985
      %v3116 = vmul.f32 %v2986, %v2986
      %v3117 = vmul.f32 %v2987, %v2987
      %v3118 = vmul.f32 %v2988, %v2988
      %v3119 = vmul.f32 %v2989, %v2989
      %v3120 = vmul.f32 %v2990, %v2990
      %v3121 = vmul.f32 %v2991, %v2991
      %v3122 = vmul.f32 %v2992, %v2992
      %v3123 = vmul.f32 %v2993, %v2993
      %v3124 = vmul.f32 %v2994, %v2994
      %v3125 = vmul.f32 %v2995, %v2995
      %v3126 = vmul.f32 %v2996, %v2996
      %v3127 = vmul.f32 %v2997, %v2997
      %v3128 = vmul.f32 %v2998, %v2998
      %v3129 = vmul.f32 %v2999, %v2999
      %v3130 = vmul.f32 %v3000, %v3000
      %v3131 = vmul.f32 %v3001, %v3001
      %v3132 = vmul.f32 %v3002, %v3002
      %v3133 = vmul.f32 %v3003, %v3003
      %v3134 = vmul.f32 %v3004, %v3004
      %3135 = vadd.xlane.f32.xlu0 %v3103
      %v3136 = vpop.xlane.xlu0 %3135
      %3137 = vadd.xlane.f32.xlu0 %v3104
      %v3138 = vpop.xlane.xlu0 %3137
      %3139 = vadd.xlane.f32.xlu0 %v3105
      %v3140 = vpop.xlane.xlu0 %3139
      %3141 = vadd.xlane.f32.xlu0 %v3106
      %v3142 = vpop.xlane.xlu0 %3141
      %3143 = vadd.xlane.f32.xlu0 %v3107
      %v3144 = vpop.xlane.xlu0 %3143
      %3145 = vadd.xlane.f32.xlu0 %v3108
      %v3146 = vpop.xlane.xlu0 %3145
      %3147 = vadd.xlane.f32.xlu0 %v3109
      %v3148 = vpop.xlane.xlu0 %3147
      %3149 = vadd.xlane.f32.xlu0 %v3110
      %v3150 = vpop.xlane.xlu0 %3149
      %3151 = vadd.xlane.f32.xlu0 %v3111
      %v3152 = vpop.xlane.xlu0 %3151
      %3153 = vadd.xlane.f32.xlu0 %v3112
      %v3154 = vpop.xlane.xlu0 %3153
      %3155 = vadd.xlane.f32.xlu0 %v3113
      %v3156 = vpop.xlane.xlu0 %3155
      %3157 = vadd.xlane.f32.xlu0 %v3114
      %v3158 = vpop.xlane.xlu0 %3157
      %3159 = vadd.xlane.f32.xlu0 %v3115
      %v3160 = vpop.xlane.xlu0 %3159
      %3161 = vadd.xlane.f32.xlu0 %v3116
      %v3162 = vpop.xlane.xlu0 %3161
      %3163 = vadd.xlane.f32.xlu0 %v3117
      %v3164 = vpop.xlane.xlu0 %3163
      %3165 = vadd.xlane.f32.xlu0 %v3118
      %v3166 = vpop.xlane.xlu0 %3165
      %3167 = vadd.xlane.f32.xlu0 %v3119
      %v3168 = vpop.xlane.xlu0 %3167
      %3169 = vadd.xlane.f32.xlu0 %v3120
      %v3170 = vpop.xlane.xlu0 %3169
      %3171 = vadd.xlane.f32.xlu0 %v3121
      %v3172 = vpop.xlane.xlu0 %3171
      %3173 = vadd.xlane.f32.xlu0 %v3122
      %v3174 = vpop.xlane.xlu0 %3173
      %3175 = vadd.xlane.f32.xlu0 %v3123
      %v3176 = vpop.xlane.xlu0 %3175
      %3177 = vadd.xlane.f32.xlu0 %v3124
      %v3178 = vpop.xlane.xlu0 %3177
      %3179 = vadd.xlane.f32.xlu0 %v3125
      %v3180 = vpop.xlane.xlu0 %3179
      %3181 = vadd.xlane.f32.xlu0 %v3126
      %v3182 = vpop.xlane.xlu0 %3181
      %3183 = vadd.xlane.f32.xlu0 %v3127
      %v3184 = vpop.xlane.xlu0 %3183
      %3185 = vadd.xlane.f32.xlu0 %v3128
      %v3186 = vpop.xlane.xlu0 %3185
      %3187 = vadd.xlane.f32.xlu0 %v3129
      %v3188 = vpop.xlane.xlu0 %3187
      %3189 = vadd.xlane.f32.xlu0 %v3130
      %v3190 = vpop.xlane.xlu0 %3189
      %3191 = vadd.xlane.f32.xlu0 %v3131
      %v3192 = vpop.xlane.xlu0 %3191
      %3193 = vadd.xlane.f32.xlu0 %v3132
      %v3194 = vpop.xlane.xlu0 %3193
      %3195 = vadd.xlane.f32.xlu0 %v3133
      %v3196 = vpop.xlane.xlu0 %3195
      %3197 = vadd.xlane.f32.xlu0 %v3134
      %v3198 = vpop.xlane.xlu0 %3197
      %v3199 = vmul.f32 %v3136, 0.125
      %v3200 = vmul.f32 %v3138, 0.125
      %v3201 = vmul.f32 %v3140, 0.125
      %v3202 = vmul.f32 %v3142, 0.125
      %v3203 = vmul.f32 %v3144, 0.125
      %v3204 = vmul.f32 %v3146, 0.125
      %v3205 = vmul.f32 %v3148, 0.125
      %v3206 = vmul.f32 %v3150, 0.125
      %v3207 = vmul.f32 %v3152, 0.125
      %v3208 = vmul.f32 %v3154, 0.125
      %v3209 = vmul.f32 %v3156, 0.125
      %v3210 = vmul.f32 %v3158, 0.125
      %v3211 = vmul.f32 %v3160, 0.125
      %v3212 = vmul.f32 %v3162, 0.125
      %v3213 = vmul.f32 %v3164, 0.125
      %v3214 = vmul.f32 %v3166, 0.125
      %v3215 = vmul.f32 %v3168, 0.125
      %v3216 = vmul.f32 %v3170, 0.125
      %v3217 = vmul.f32 %v3172, 0.125
      %v3218 = vmul.f32 %v3174, 0.125
      %v3219 = vmul.f32 %v3176, 0.125
      %v3220 = vmul.f32 %v3178, 0.125
      %v3221 = vmul.f32 %v3180, 0.125
      %v3222 = vmul.f32 %v3182, 0.125
      %v3223 = vmul.f32 %v3184, 0.125
      %v3224 = vmul.f32 %v3186, 0.125
      %v3225 = vmul.f32 %v3188, 0.125
      %v3226 = vmul.f32 %v3190, 0.125
      %v3227 = vmul.f32 %v3192, 0.125
      %v3228 = vmul.f32 %v3194, 0.125
      %v3229 = vmul.f32 %v3196, 0.125
      %v3230 = vmul.f32 %v3198, 0.125
      %v3231 = vmul.f32 %v3071, %v3071
      %v3232 = vmul.f32 %v3072, %v3072
      %v3233 = vmul.f32 %v3073, %v3073
      %v3234 = vmul.f32 %v3074, %v3074
      %v3235 = vmul.f32 %v3075, %v3075
      %v3236 = vmul.f32 %v3076, %v3076
      %v3237 = vmul.f32 %v3077, %v3077
      %v3238 = vmul.f32 %v3078, %v3078
      %v3239 = vmul.f32 %v3079, %v3079
      %v3240 = vmul.f32 %v3080, %v3080
      %v3241 = vmul.f32 %v3081, %v3081
      %v3242 = vmul.f32 %v3082, %v3082
      %v3243 = vmul.f32 %v3083, %v3083
      %v3244 = vmul.f32 %v3084, %v3084
      %v3245 = vmul.f32 %v3085, %v3085
      %v3246 = vmul.f32 %v3086, %v3086
      %v3247 = vmul.f32 %v3087, %v3087
      %v3248 = vmul.f32 %v3088, %v3088
      %v3249 = vmul.f32 %v3089, %v3089
      %v3250 = vmul.f32 %v3090, %v3090
      %v3251 = vmul.f32 %v3091, %v3091
      %v3252 = vmul.f32 %v3092, %v3092
      %v3253 = vmul.f32 %v3093, %v3093
      %v3254 = vmul.f32 %v3094, %v3094
      %v3255 = vmul.f32 %v3095, %v3095
      %v3256 = vmul.f32 %v3096, %v3096
      %v3257 = vmul.f32 %v3097, %v3097
      %v3258 = vmul.f32 %v3098, %v3098
      %v3259 = vmul.f32 %v3099, %v3099
      %v3260 = vmul.f32 %v3100, %v3100
      %v3261 = vmul.f32 %v3101, %v3101
      %v3262 = vmul.f32 %v3102, %v3102
      %v3263 = vsub.f32 %v3199, %v3231
      %v3264 = vsub.f32 %v3200, %v3232
      %v3265 = vsub.f32 %v3201, %v3233
      %v3266 = vsub.f32 %v3202, %v3234
      %v3267 = vsub.f32 %v3203, %v3235
      %v3268 = vsub.f32 %v3204, %v3236
      %v3269 = vsub.f32 %v3205, %v3237
      %v3270 = vsub.f32 %v3206, %v3238
      %v3271 = vsub.f32 %v3207, %v3239
      %v3272 = vsub.f32 %v3208, %v3240
      %v3273 = vsub.f32 %v3209, %v3241
      %v3274 = vsub.f32 %v3210, %v3242
      %v3275 = vsub.f32 %v3211, %v3243
      %v3276 = vsub.f32 %v3212, %v3244
      %v3277 = vsub.f32 %v3213, %v3245
      %v3278 = vsub.f32 %v3214, %v3246
      %v3279 = vsub.f32 %v3215, %v3247
      %v3280 = vsub.f32 %v3216, %v3248
      %v3281 = vsub.f32 %v3217, %v3249
      %v3282 = vsub.f32 %v3218, %v3250
      %v3283 = vsub.f32 %v3219, %v3251
      %v3284 = vsub.f32 %v3220, %v3252
      %v3285 = vsub.f32 %v3221, %v3253
      %v3286 = vsub.f32 %v3222, %v3254
      %v3287 = vsub.f32 %v3223, %v3255
      %v3288 = vsub.f32 %v3224, %v3256
      %v3289 = vsub.f32 %v3225, %v3257
      %v3290 = vsub.f32 %v3226, %v3258
      %v3291 = vsub.f32 %v3227, %v3259
      %v3292 = vsub.f32 %v3228, %v3260
      %v3293 = vsub.f32 %v3229, %v3261
      %v3294 = vsub.f32 %v3230, %v3262
      %v3295 = vmax.f32 %v3263, 0.0
      %v3296 = vmax.f32 %v3264, 0.0
      %v3297 = vmax.f32 %v3265, 0.0
      %v3298 = vmax.f32 %v3266, 0.0
      %v3299 = vmax.f32 %v3267, 0.0
      %v3300 = vmax.f32 %v3268, 0.0
      %v3301 = vmax.f32 %v3269, 0.0
      %v3302 = vmax.f32 %v3270, 0.0
      %v3303 = vmax.f32 %v3271, 0.0
      %v3304 = vmax.f32 %v3272, 0.0
      %v3305 = vmax.f32 %v3273, 0.0
      %v3306 = vmax.f32 %v3274, 0.0
      %v3307 = vmax.f32 %v3275, 0.0
      %v3308 = vmax.f32 %v3276, 0.0
      %v3309 = vmax.f32 %v3277, 0.0
      %v3310 = vmax.f32 %v3278, 0.0
      %v3311 = vmax.f32 %v3279, 0.0
      %v3312 = vmax.f32 %v3280, 0.0
      %v3313 = vmax.f32 %v3281, 0.0
      %v3314 = vmax.f32 %v3282, 0.0
      %v3315 = vmax.f32 %v3283, 0.0
      %v3316 = vmax.f32 %v3284, 0.0
      %v3317 = vmax.f32 %v3285, 0.0
      %v3318 = vmax.f32 %v3286, 0.0
      %v3319 = vmax.f32 %v3287, 0.0
      %v3320 = vmax.f32 %v3288, 0.0
      %v3321 = vmax.f32 %v3289, 0.0
      %v3322 = vmax.f32 %v3290, 0.0
      %v3323 = vmax.f32 %v3291, 0.0
      %v3324 = vmax.f32 %v3292, 0.0
      %v3325 = vmax.f32 %v3293, 0.0
      %v3326 = vmax.f32 %v3294, 0.0
      %v3327 = vsub.f32 %v2973, %v3071
      %v3328 = vsub.f32 %v2974, %v3072
      %v3329 = vsub.f32 %v2975, %v3073
      %v3330 = vsub.f32 %v2976, %v3074
      %v3331 = vsub.f32 %v2977, %v3075
      %v3332 = vsub.f32 %v2978, %v3076
      %v3333 = vsub.f32 %v2979, %v3077
      %v3334 = vsub.f32 %v2980, %v3078
      %v3335 = vsub.f32 %v2981, %v3079
      %v3336 = vsub.f32 %v2982, %v3080
      %v3337 = vsub.f32 %v2983, %v3081
      %v3338 = vsub.f32 %v2984, %v3082
      %v3339 = vsub.f32 %v2985, %v3083
      %v3340 = vsub.f32 %v2986, %v3084
      %v3341 = vsub.f32 %v2987, %v3085
      %v3342 = vsub.f32 %v2988, %v3086
      %v3343 = vsub.f32 %v2989, %v3087
      %v3344 = vsub.f32 %v2990, %v3088
      %v3345 = vsub.f32 %v2991, %v3089
      %v3346 = vsub.f32 %v2992, %v3090
      %v3347 = vsub.f32 %v2993, %v3091
      %v3348 = vsub.f32 %v2994, %v3092
      %v3349 = vsub.f32 %v2995, %v3093
      %v3350 = vsub.f32 %v2996, %v3094
      %v3351 = vsub.f32 %v2997, %v3095
      %v3352 = vsub.f32 %v2998, %v3096
      %v3353 = vsub.f32 %v2999, %v3097
      %v3354 = vsub.f32 %v3000, %v3098
      %v3355 = vsub.f32 %v3001, %v3099
      %v3356 = vsub.f32 %v3002, %v3100
      %v3357 = vsub.f32 %v3003, %v3101
      %v3358 = vsub.f32 %v3004, %v3102
      %v3359 = vadd.f32 %v3295, 1e-05
      %v3360 = vadd.f32 %v3296, 1e-05
      %v3361 = vadd.f32 %v3297, 1e-05
      %v3362 = vadd.f32 %v3298, 1e-05
      %v3363 = vadd.f32 %v3299, 1e-05
      %v3364 = vadd.f32 %v3300, 1e-05
      %v3365 = vadd.f32 %v3301, 1e-05
      %v3366 = vadd.f32 %v3302, 1e-05
      %v3367 = vadd.f32 %v3303, 1e-05
      %v3368 = vadd.f32 %v3304, 1e-05
      %v3369 = vadd.f32 %v3305, 1e-05
      %v3370 = vadd.f32 %v3306, 1e-05
      %v3371 = vadd.f32 %v3307, 1e-05
      %v3372 = vadd.f32 %v3308, 1e-05
      %v3373 = vadd.f32 %v3309, 1e-05
      %v3374 = vadd.f32 %v3310, 1e-05
      %v3375 = vadd.f32 %v3311, 1e-05
      %v3376 = vadd.f32 %v3312, 1e-05
      %v3377 = vadd.f32 %v3313, 1e-05
      %v3378 = vadd.f32 %v3314, 1e-05
      %v3379 = vadd.f32 %v3315, 1e-05
      %v3380 = vadd.f32 %v3316, 1e-05
      %v3381 = vadd.f32 %v3317, 1e-05
      %v3382 = vadd.f32 %v3318, 1e-05
      %v3383 = vadd.f32 %v3319, 1e-05
      %v3384 = vadd.f32 %v3320, 1e-05
      %v3385 = vadd.f32 %v3321, 1e-05
      %v3386 = vadd.f32 %v3322, 1e-05
      %v3387 = vadd.f32 %v3323, 1e-05
      %v3388 = vadd.f32 %v3324, 1e-05
      %v3389 = vadd.f32 %v3325, 1e-05
      %v3390 = vadd.f32 %v3326, 1e-05
      %v3391 = vrsqrt.pop %v3359
      %v3392 = vmul.f32 %v3391, %v3359
      %v3393 = vmul.f32 %v3392, %v3391
      %v3394 = vmul.f32 0.5, %v3393
      %v3395 = vsub.f32 1.5, %v3394
      %v3396 = vmul.f32 %v3391, %v3395
      %vm3397 = vweird.f32 %v3359
      %vm3398 = vweird.f32 %v3391
      %vm3399 = vmor %vm3397, %vm3398
      %v3400 = vsel %vm3399, %v3391, %v3396
      %v3401 = vrsqrt.pop %v3360
      %v3402 = vmul.f32 %v3401, %v3360
      %v3403 = vmul.f32 %v3402, %v3401
      %v3404 = vmul.f32 0.5, %v3403
      %v3405 = vsub.f32 1.5, %v3404
      %v3406 = vmul.f32 %v3401, %v3405
      %vm3407 = vweird.f32 %v3360
      %vm3408 = vweird.f32 %v3401
      %vm3409 = vmor %vm3407, %vm3408
      %v3410 = vsel %vm3409, %v3401, %v3406
      %v3411 = vrsqrt.pop %v3361
      %v3412 = vmul.f32 %v3411, %v3361
      %v3413 = vmul.f32 %v3412, %v3411
      %v3414 = vmul.f32 0.5, %v3413
      %v3415 = vsub.f32 1.5, %v3414
      %v3416 = vmul.f32 %v3411, %v3415
      %vm3417 = vweird.f32 %v3361
      %vm3418 = vweird.f32 %v3411
      %vm3419 = vmor %vm3417, %vm3418
      %v3420 = vsel %vm3419, %v3411, %v3416
      %v3421 = vrsqrt.pop %v3362
      %v3422 = vmul.f32 %v3421, %v3362
      %v3423 = vmul.f32 %v3422, %v3421
      %v3424 = vmul.f32 0.5, %v3423
      %v3425 = vsub.f32 1.5, %v3424
      %v3426 = vmul.f32 %v3421, %v3425
      %vm3427 = vweird.f32 %v3362
      %vm3428 = vweird.f32 %v3421
      %vm3429 = vmor %vm3427, %vm3428
      %v3430 = vsel %vm3429, %v3421, %v3426
      %v3431 = vrsqrt.pop %v3363
      %v3432 = vmul.f32 %v3431, %v3363
      %v3433 = vmul.f32 %v3432, %v3431
      %v3434 = vmul.f32 0.5, %v3433
      %v3435 = vsub.f32 1.5, %v3434
      %v3436 = vmul.f32 %v3431, %v3435
      %vm3437 = vweird.f32 %v3363
      %vm3438 = vweird.f32 %v3431
      %vm3439 = vmor %vm3437, %vm3438
      %v3440 = vsel %vm3439, %v3431, %v3436
      %v3441 = vrsqrt.pop %v3364
      %v3442 = vmul.f32 %v3441, %v3364
      %v3443 = vmul.f32 %v3442, %v3441
      %v3444 = vmul.f32 0.5, %v3443
      %v3445 = vsub.f32 1.5, %v3444
      %v3446 = vmul.f32 %v3441, %v3445
      %vm3447 = vweird.f32 %v3364
      %vm3448 = vweird.f32 %v3441
      %vm3449 = vmor %vm3447, %vm3448
      %v3450 = vsel %vm3449, %v3441, %v3446
      %v3451 = vrsqrt.pop %v3365
      %v3452 = vmul.f32 %v3451, %v3365
      %v3453 = vmul.f32 %v3452, %v3451
      %v3454 = vmul.f32 0.5, %v3453
      %v3455 = vsub.f32 1.5, %v3454
      %v3456 = vmul.f32 %v3451, %v3455
      %vm3457 = vweird.f32 %v3365
      %vm3458 = vweird.f32 %v3451
      %vm3459 = vmor %vm3457, %vm3458
      %v3460 = vsel %vm3459, %v3451, %v3456
      %v3461 = vrsqrt.pop %v3366
      %v3462 = vmul.f32 %v3461, %v3366
      %v3463 = vmul.f32 %v3462, %v3461
      %v3464 = vmul.f32 0.5, %v3463
      %v3465 = vsub.f32 1.5, %v3464
      %v3466 = vmul.f32 %v3461, %v3465
      %vm3467 = vweird.f32 %v3366
      %vm3468 = vweird.f32 %v3461
      %vm3469 = vmor %vm3467, %vm3468
      %v3470 = vsel %vm3469, %v3461, %v3466
      %v3471 = vrsqrt.pop %v3367
      %v3472 = vmul.f32 %v3471, %v3367
      %v3473 = vmul.f32 %v3472, %v3471
      %v3474 = vmul.f32 0.5, %v3473
      %v3475 = vsub.f32 1.5, %v3474
      %v3476 = vmul.f32 %v3471, %v3475
      %vm3477 = vweird.f32 %v3367
      %vm3478 = vweird.f32 %v3471
      %vm3479 = vmor %vm3477, %vm3478
      %v3480 = vsel %vm3479, %v3471, %v3476
      %v3481 = vrsqrt.pop %v3368
      %v3482 = vmul.f32 %v3481, %v3368
      %v3483 = vmul.f32 %v3482, %v3481
      %v3484 = vmul.f32 0.5, %v3483
      %v3485 = vsub.f32 1.5, %v3484
      %v3486 = vmul.f32 %v3481, %v3485
      %vm3487 = vweird.f32 %v3368
      %vm3488 = vweird.f32 %v3481
      %vm3489 = vmor %vm3487, %vm3488
      %v3490 = vsel %vm3489, %v3481, %v3486
      %v3491 = vrsqrt.pop %v3369
      %v3492 = vmul.f32 %v3491, %v3369
      %v3493 = vmul.f32 %v3492, %v3491
      %v3494 = vmul.f32 0.5, %v3493
      %v3495 = vsub.f32 1.5, %v3494
      %v3496 = vmul.f32 %v3491, %v3495
      %vm3497 = vweird.f32 %v3369
      %vm3498 = vweird.f32 %v3491
      %vm3499 = vmor %vm3497, %vm3498
      %v3500 = vsel %vm3499, %v3491, %v3496
      %v3501 = vrsqrt.pop %v3370
      %v3502 = vmul.f32 %v3501, %v3370
      %v3503 = vmul.f32 %v3502, %v3501
      %v3504 = vmul.f32 0.5, %v3503
      %v3505 = vsub.f32 1.5, %v3504
      %v3506 = vmul.f32 %v3501, %v3505
      %vm3507 = vweird.f32 %v3370
      %vm3508 = vweird.f32 %v3501
      %vm3509 = vmor %vm3507, %vm3508
      %v3510 = vsel %vm3509, %v3501, %v3506
      %v3511 = vrsqrt.pop %v3371
      %v3512 = vmul.f32 %v3511, %v3371
      %v3513 = vmul.f32 %v3512, %v3511
      %v3514 = vmul.f32 0.5, %v3513
      %v3515 = vsub.f32 1.5, %v3514
      %v3516 = vmul.f32 %v3511, %v3515
      %vm3517 = vweird.f32 %v3371
      %vm3518 = vweird.f32 %v3511
      %vm3519 = vmor %vm3517, %vm3518
      %v3520 = vsel %vm3519, %v3511, %v3516
      %v3521 = vrsqrt.pop %v3372
      %v3522 = vmul.f32 %v3521, %v3372
      %v3523 = vmul.f32 %v3522, %v3521
      %v3524 = vmul.f32 0.5, %v3523
      %v3525 = vsub.f32 1.5, %v3524
      %v3526 = vmul.f32 %v3521, %v3525
      %vm3527 = vweird.f32 %v3372
      %vm3528 = vweird.f32 %v3521
      %vm3529 = vmor %vm3527, %vm3528
      %v3530 = vsel %vm3529, %v3521, %v3526
      %v3531 = vrsqrt.pop %v3373
      %v3532 = vmul.f32 %v3531, %v3373
      %v3533 = vmul.f32 %v3532, %v3531
      %v3534 = vmul.f32 0.5, %v3533
      %v3535 = vsub.f32 1.5, %v3534
      %v3536 = vmul.f32 %v3531, %v3535
      %vm3537 = vweird.f32 %v3373
      %vm3538 = vweird.f32 %v3531
      %vm3539 = vmor %vm3537, %vm3538
      %v3540 = vsel %vm3539, %v3531, %v3536
      %v3541 = vrsqrt.pop %v3374
      %v3542 = vmul.f32 %v3541, %v3374
      %v3543 = vmul.f32 %v3542, %v3541
      %v3544 = vmul.f32 0.5, %v3543
      %v3545 = vsub.f32 1.5, %v3544
      %v3546 = vmul.f32 %v3541, %v3545
      %vm3547 = vweird.f32 %v3374
      %vm3548 = vweird.f32 %v3541
      %vm3549 = vmor %vm3547, %vm3548
      %v3550 = vsel %vm3549, %v3541, %v3546
      %v3551 = vrsqrt.pop %v3375
      %v3552 = vmul.f32 %v3551, %v3375
      %v3553 = vmul.f32 %v3552, %v3551
      %v3554 = vmul.f32 0.5, %v3553
      %v3555 = vsub.f32 1.5, %v3554
      %v3556 = vmul.f32 %v3551, %v3555
      %vm3557 = vweird.f32 %v3375
      %vm3558 = vweird.f32 %v3551
      %vm3559 = vmor %vm3557, %vm3558
      %v3560 = vsel %vm3559, %v3551, %v3556
      %v3561 = vrsqrt.pop %v3376
      %v3562 = vmul.f32 %v3561, %v3376
      %v3563 = vmul.f32 %v3562, %v3561
      %v3564 = vmul.f32 0.5, %v3563
      %v3565 = vsub.f32 1.5, %v3564
      %v3566 = vmul.f32 %v3561, %v3565
      %vm3567 = vweird.f32 %v3376
      %vm3568 = vweird.f32 %v3561
      %vm3569 = vmor %vm3567, %vm3568
      %v3570 = vsel %vm3569, %v3561, %v3566
      %v3571 = vrsqrt.pop %v3377
      %v3572 = vmul.f32 %v3571, %v3377
      %v3573 = vmul.f32 %v3572, %v3571
      %v3574 = vmul.f32 0.5, %v3573
      %v3575 = vsub.f32 1.5, %v3574
      %v3576 = vmul.f32 %v3571, %v3575
      %vm3577 = vweird.f32 %v3377
      %vm3578 = vweird.f32 %v3571
      %vm3579 = vmor %vm3577, %vm3578
      %v3580 = vsel %vm3579, %v3571, %v3576
      %v3581 = vrsqrt.pop %v3378
      %v3582 = vmul.f32 %v3581, %v3378
      %v3583 = vmul.f32 %v3582, %v3581
      %v3584 = vmul.f32 0.5, %v3583
      %v3585 = vsub.f32 1.5, %v3584
      %v3586 = vmul.f32 %v3581, %v3585
      %vm3587 = vweird.f32 %v3378
      %vm3588 = vweird.f32 %v3581
      %vm3589 = vmor %vm3587, %vm3588
      %v3590 = vsel %vm3589, %v3581, %v3586
      %v3591 = vrsqrt.pop %v3379
      %v3592 = vmul.f32 %v3591, %v3379
      %v3593 = vmul.f32 %v3592, %v3591
      %v3594 = vmul.f32 0.5, %v3593
      %v3595 = vsub.f32 1.5, %v3594
      %v3596 = vmul.f32 %v3591, %v3595
      %vm3597 = vweird.f32 %v3379
      %vm3598 = vweird.f32 %v3591
      %vm3599 = vmor %vm3597, %vm3598
      %v3600 = vsel %vm3599, %v3591, %v3596
      %v3601 = vrsqrt.pop %v3380
      %v3602 = vmul.f32 %v3601, %v3380
      %v3603 = vmul.f32 %v3602, %v3601
      %v3604 = vmul.f32 0.5, %v3603
      %v3605 = vsub.f32 1.5, %v3604
      %v3606 = vmul.f32 %v3601, %v3605
      %vm3607 = vweird.f32 %v3380
      %vm3608 = vweird.f32 %v3601
      %vm3609 = vmor %vm3607, %vm3608
      %v3610 = vsel %vm3609, %v3601, %v3606
      %v3611 = vrsqrt.pop %v3381
      %v3612 = vmul.f32 %v3611, %v3381
      %v3613 = vmul.f32 %v3612, %v3611
      %v3614 = vmul.f32 0.5, %v3613
      %v3615 = vsub.f32 1.5, %v3614
      %v3616 = vmul.f32 %v3611, %v3615
      %vm3617 = vweird.f32 %v3381
      %vm3618 = vweird.f32 %v3611
      %vm3619 = vmor %vm3617, %vm3618
      %v3620 = vsel %vm3619, %v3611, %v3616
      %v3621 = vrsqrt.pop %v3382
      %v3622 = vmul.f32 %v3621, %v3382
      %v3623 = vmul.f32 %v3622, %v3621
      %v3624 = vmul.f32 0.5, %v3623
      %v3625 = vsub.f32 1.5, %v3624
      %v3626 = vmul.f32 %v3621, %v3625
      %vm3627 = vweird.f32 %v3382
      %vm3628 = vweird.f32 %v3621
      %vm3629 = vmor %vm3627, %vm3628
      %v3630 = vsel %vm3629, %v3621, %v3626
      %v3631 = vrsqrt.pop %v3383
      %v3632 = vmul.f32 %v3631, %v3383
      %v3633 = vmul.f32 %v3632, %v3631
      %v3634 = vmul.f32 0.5, %v3633
      %v3635 = vsub.f32 1.5, %v3634
      %v3636 = vmul.f32 %v3631, %v3635
      %vm3637 = vweird.f32 %v3383
      %vm3638 = vweird.f32 %v3631
      %vm3639 = vmor %vm3637, %vm3638
      %v3640 = vsel %vm3639, %v3631, %v3636
      %v3641 = vrsqrt.pop %v3384
      %v3642 = vmul.f32 %v3641, %v3384
      %v3643 = vmul.f32 %v3642, %v3641
      %v3644 = vmul.f32 0.5, %v3643
      %v3645 = vsub.f32 1.5, %v3644
      %v3646 = vmul.f32 %v3641, %v3645
      %vm3647 = vweird.f32 %v3384
      %vm3648 = vweird.f32 %v3641
      %vm3649 = vmor %vm3647, %vm3648
      %v3650 = vsel %vm3649, %v3641, %v3646
      %v3651 = vrsqrt.pop %v3385
      %v3652 = vmul.f32 %v3651, %v3385
      %v3653 = vmul.f32 %v3652, %v3651
      %v3654 = vmul.f32 0.5, %v3653
      %v3655 = vsub.f32 1.5, %v3654
      %v3656 = vmul.f32 %v3651, %v3655
      %vm3657 = vweird.f32 %v3385
      %vm3658 = vweird.f32 %v3651
      %vm3659 = vmor %vm3657, %vm3658
      %v3660 = vsel %vm3659, %v3651, %v3656
      %v3661 = vrsqrt.pop %v3386
      %v3662 = vmul.f32 %v3661, %v3386
      %v3663 = vmul.f32 %v3662, %v3661
      %v3664 = vmul.f32 0.5, %v3663
      %v3665 = vsub.f32 1.5, %v3664
      %v3666 = vmul.f32 %v3661, %v3665
      %vm3667 = vweird.f32 %v3386
      %vm3668 = vweird.f32 %v3661
      %vm3669 = vmor %vm3667, %vm3668
      %v3670 = vsel %vm3669, %v3661, %v3666
      %v3671 = vrsqrt.pop %v3387
      %v3672 = vmul.f32 %v3671, %v3387
      %v3673 = vmul.f32 %v3672, %v3671
      %v3674 = vmul.f32 0.5, %v3673
      %v3675 = vsub.f32 1.5, %v3674
      %v3676 = vmul.f32 %v3671, %v3675
      %vm3677 = vweird.f32 %v3387
      %vm3678 = vweird.f32 %v3671
      %vm3679 = vmor %vm3677, %vm3678
      %v3680 = vsel %vm3679, %v3671, %v3676
      %v3681 = vrsqrt.pop %v3388
      %v3682 = vmul.f32 %v3681, %v3388
      %v3683 = vmul.f32 %v3682, %v3681
      %v3684 = vmul.f32 0.5, %v3683
      %v3685 = vsub.f32 1.5, %v3684
      %v3686 = vmul.f32 %v3681, %v3685
      %vm3687 = vweird.f32 %v3388
      %vm3688 = vweird.f32 %v3681
      %vm3689 = vmor %vm3687, %vm3688
      %v3690 = vsel %vm3689, %v3681, %v3686
      %v3691 = vrsqrt.pop %v3389
      %v3692 = vmul.f32 %v3691, %v3389
      %v3693 = vmul.f32 %v3692, %v3691
      %v3694 = vmul.f32 0.5, %v3693
      %v3695 = vsub.f32 1.5, %v3694
      %v3696 = vmul.f32 %v3691, %v3695
      %vm3697 = vweird.f32 %v3389
      %vm3698 = vweird.f32 %v3691
      %vm3699 = vmor %vm3697, %vm3698
      %v3700 = vsel %vm3699, %v3691, %v3696
      %v3701 = vrsqrt.pop %v3390
      %v3702 = vmul.f32 %v3701, %v3390
      %v3703 = vmul.f32 %v3702, %v3701
      %v3704 = vmul.f32 0.5, %v3703
      %v3705 = vsub.f32 1.5, %v3704
      %v3706 = vmul.f32 %v3701, %v3705
      %vm3707 = vweird.f32 %v3390
      %vm3708 = vweird.f32 %v3701
      %vm3709 = vmor %vm3707, %vm3708
      %v3710 = vsel %vm3709, %v3701, %v3706
      %v3711 = vmul.f32 %v3327, %v3400
      %v3712 = vmul.f32 %v3328, %v3410
      %v3713 = vmul.f32 %v3329, %v3420
      %v3714 = vmul.f32 %v3330, %v3430
      %v3715 = vmul.f32 %v3331, %v3440
      %v3716 = vmul.f32 %v3332, %v3450
      %v3717 = vmul.f32 %v3333, %v3460
      %v3718 = vmul.f32 %v3334, %v3470
      %v3719 = vmul.f32 %v3335, %v3480
      %v3720 = vmul.f32 %v3336, %v3490
      %v3721 = vmul.f32 %v3337, %v3500
      %v3722 = vmul.f32 %v3338, %v3510
      %v3723 = vmul.f32 %v3339, %v3520
      %v3724 = vmul.f32 %v3340, %v3530
      %v3725 = vmul.f32 %v3341, %v3540
      %v3726 = vmul.f32 %v3342, %v3550
      %v3727 = vmul.f32 %v3343, %v3560
      %v3728 = vmul.f32 %v3344, %v3570
      %v3729 = vmul.f32 %v3345, %v3580
      %v3730 = vmul.f32 %v3346, %v3590
      %v3731 = vmul.f32 %v3347, %v3600
      %v3732 = vmul.f32 %v3348, %v3610
      %v3733 = vmul.f32 %v3349, %v3620
      %v3734 = vmul.f32 %v3350, %v3630
      %v3735 = vmul.f32 %v3351, %v3640
      %v3736 = vmul.f32 %v3352, %v3650
      %v3737 = vmul.f32 %v3353, %v3660
      %v3738 = vmul.f32 %v3354, %v3670
      %v3739 = vmul.f32 %v3355, %v3680
      %v3740 = vmul.f32 %v3356, %v3690
      %v3741 = vmul.f32 %v3357, %v3700
      %v3742 = vmul.f32 %v3358, %v3710
      %v3744 = vperm.slane %v3005, 0
      %v3746 = vmul.f32 %v3711, %v3744
      %v3747 = vmul.f32 %v3712, %v3744
      %v3748 = vmul.f32 %v3713, %v3744
      %v3749 = vmul.f32 %v3714, %v3744
      %v3750 = vmul.f32 %v3715, %v3744
      %v3751 = vmul.f32 %v3716, %v3744
      %v3752 = vmul.f32 %v3717, %v3744
      %v3753 = vmul.f32 %v3718, %v3744
      %v3754 = vmul.f32 %v3719, %v3744
      %v3755 = vmul.f32 %v3720, %v3744
      %v3756 = vmul.f32 %v3721, %v3744
      %v3757 = vmul.f32 %v3722, %v3744
      %v3758 = vmul.f32 %v3723, %v3744
      %v3759 = vmul.f32 %v3724, %v3744
      %v3760 = vmul.f32 %v3725, %v3744
      %v3761 = vmul.f32 %v3726, %v3744
      %v3762 = vmul.f32 %v3727, %v3744
      %v3763 = vmul.f32 %v3728, %v3744
      %v3764 = vmul.f32 %v3729, %v3744
      %v3765 = vmul.f32 %v3730, %v3744
      %v3766 = vmul.f32 %v3731, %v3744
      %v3767 = vmul.f32 %v3732, %v3744
      %v3768 = vmul.f32 %v3733, %v3744
      %v3769 = vmul.f32 %v3734, %v3744
      %v3770 = vmul.f32 %v3735, %v3744
      %v3771 = vmul.f32 %v3736, %v3744
      %v3772 = vmul.f32 %v3737, %v3744
      %v3773 = vmul.f32 %v3738, %v3744
      %v3774 = vmul.f32 %v3739, %v3744
      %v3775 = vmul.f32 %v3740, %v3744
      %v3776 = vmul.f32 %v3741, %v3744
      %v3777 = vmul.f32 %v3742, %v3744
      %v3779 = vperm.slane %v3006, 0
      %v3781 = vadd.f32 %v3746, %v3779
      %v3782 = vadd.f32 %v3747, %v3779
      %v3783 = vadd.f32 %v3748, %v3779
      %v3784 = vadd.f32 %v3749, %v3779
      %v3785 = vadd.f32 %v3750, %v3779
      %v3786 = vadd.f32 %v3751, %v3779
      %v3787 = vadd.f32 %v3752, %v3779
      %v3788 = vadd.f32 %v3753, %v3779
      %v3789 = vadd.f32 %v3754, %v3779
      %v3790 = vadd.f32 %v3755, %v3779
      %v3791 = vadd.f32 %v3756, %v3779
      %v3792 = vadd.f32 %v3757, %v3779
      %v3793 = vadd.f32 %v3758, %v3779
      %v3794 = vadd.f32 %v3759, %v3779
      %v3795 = vadd.f32 %v3760, %v3779
      %v3796 = vadd.f32 %v3761, %v3779
      %v3797 = vadd.f32 %v3762, %v3779
      %v3798 = vadd.f32 %v3763, %v3779
      %v3799 = vadd.f32 %v3764, %v3779
      %v3800 = vadd.f32 %v3765, %v3779
      %v3801 = vadd.f32 %v3766, %v3779
      %v3802 = vadd.f32 %v3767, %v3779
      %v3803 = vadd.f32 %v3768, %v3779
      %v3804 = vadd.f32 %v3769, %v3779
      %v3805 = vadd.f32 %v3770, %v3779
      %v3806 = vadd.f32 %v3771, %v3779
      %v3807 = vadd.f32 %v3772, %v3779
      %v3808 = vadd.f32 %v3773, %v3779
      %v3809 = vadd.f32 %v3774, %v3779
      %v3810 = vadd.f32 %v3775, %v3779
      %v3811 = vadd.f32 %v3776, %v3779
      %v3812 = vadd.f32 %v3777, %v3779
      %v3813 = vpack.c.bf16 %v3781, %v3781
      %v3814 = vpack.c.bf16 %v3782, %v3782
      %v3815 = vpack.c.bf16 %v3783, %v3783
      %v3816 = vpack.c.bf16 %v3784, %v3784
      %v3817 = vpack.c.bf16 %v3785, %v3785
      %v3818 = vpack.c.bf16 %v3786, %v3786
      %v3819 = vpack.c.bf16 %v3787, %v3787
      %v3820 = vpack.c.bf16 %v3788, %v3788
      %v3821 = vpack.c.bf16 %v3789, %v3789
      %v3822 = vpack.c.bf16 %v3790, %v3790
      %v3823 = vpack.c.bf16 %v3791, %v3791
      %v3824 = vpack.c.bf16 %v3792, %v3792
      %v3825 = vpack.c.bf16 %v3793, %v3793
      %v3826 = vpack.c.bf16 %v3794, %v3794
      %v3827 = vpack.c.bf16 %v3795, %v3795
      %v3828 = vpack.c.bf16 %v3796, %v3796
      %v3829 = vpack.c.bf16 %v3797, %v3797
      %v3830 = vpack.c.bf16 %v3798, %v3798
      %v3831 = vpack.c.bf16 %v3799, %v3799
      %v3832 = vpack.c.bf16 %v3800, %v3800
      %v3833 = vpack.c.bf16 %v3801, %v3801
      %v3834 = vpack.c.bf16 %v3802, %v3802
      %v3835 = vpack.c.bf16 %v3803, %v3803
      %v3836 = vpack.c.bf16 %v3804, %v3804
      %v3837 = vpack.c.bf16 %v3805, %v3805
      %v3838 = vpack.c.bf16 %v3806, %v3806
      %v3839 = vpack.c.bf16 %v3807, %v3807
      %v3840 = vpack.c.bf16 %v3808, %v3808
      %v3841 = vpack.c.bf16 %v3809, %v3809
      %v3842 = vpack.c.bf16 %v3810, %v3810
      %v3843 = vpack.c.bf16 %v3811, %v3811
      %v3844 = vpack.c.bf16 %v3812, %v3812
      %3845 = vst [vmem:[%s442] sm:$0xf] %v3813
      %3846 = vst [vmem:[%s442 + $0x4] sm:$0xf] %v3814
      %3847 = vst [vmem:[%s442 + $0x8] sm:$0xf] %v3815
      %3848 = vst [vmem:[%s442 + $0xc] sm:$0xf] %v3816
      %3849 = vst [vmem:[%s442 + $0x10] sm:$0xf] %v3817
      %3850 = vst [vmem:[%s442 + $0x14] sm:$0xf] %v3818
      %3851 = vst [vmem:[%s442 + $0x18] sm:$0xf] %v3819
      %3852 = vst [vmem:[%s442 + $0x1c] sm:$0xf] %v3820
      %3853 = vst [vmem:[%s442 + $0x20] sm:$0xf] %v3821
      %3854 = vst [vmem:[%s442 + $0x24] sm:$0xf] %v3822
      %3855 = vst [vmem:[%s442 + $0x28] sm:$0xf] %v3823
      %3856 = vst [vmem:[%s442 + $0x2c] sm:$0xf] %v3824
      %3857 = vst [vmem:[%s442 + $0x30] sm:$0xf] %v3825
      %3858 = vst [vmem:[%s442 + $0x34] sm:$0xf] %v3826
      %3859 = vst [vmem:[%s442 + $0x38] sm:$0xf] %v3827
      %3860 = vst [vmem:[%s442 + $0x3c] sm:$0xf] %v3828
      %3861 = vst [vmem:[%s442 + $0x40] sm:$0xf] %v3829
      %3862 = vst [vmem:[%s442 + $0x44] sm:$0xf] %v3830
      %3863 = vst [vmem:[%s442 + $0x48] sm:$0xf] %v3831
      %3864 = vst [vmem:[%s442 + $0x4c] sm:$0xf] %v3832
      %3865 = vst [vmem:[%s442 + $0x50] sm:$0xf] %v3833
      %3866 = vst [vmem:[%s442 + $0x54] sm:$0xf] %v3834
      %3867 = vst [vmem:[%s442 + $0x58] sm:$0xf] %v3835
      %3868 = vst [vmem:[%s442 + $0x5c] sm:$0xf] %v3836
      %3869 = vst [vmem:[%s442 + $0x60] sm:$0xf] %v3837
      %3870 = vst [vmem:[%s442 + $0x64] sm:$0xf] %v3838
      %3871 = vst [vmem:[%s442 + $0x68] sm:$0xf] %v3839
      %3872 = vst [vmem:[%s442 + $0x6c] sm:$0xf] %v3840
      %3873 = vst [vmem:[%s442 + $0x70] sm:$0xf] %v3841
      %3874 = vst [vmem:[%s442 + $0x74] sm:$0xf] %v3842
      %3875 = vst [vmem:[%s442 + $0x78] sm:$0xf] %v3843
      %3876 = vst [vmem:[%s442 + $0x7c] sm:$0xf] %v3844
      %s3877 = smul.u32 32, %s24
      %p3878 = scmp.lt.s32.totalorder %s3877, 63
      %s3879 = scalar_select %p3878, %s3877, 63
      %s3880 = smul.addr %s3879, 4
      %s3881 = scalar_lea.vmem %s13, %s3880
      // Predicated region
      $region73: #{transwcd_single_forward.4} parent=71 // pred_check
        %p3882 = pneg %p320
      $region74: #{transwcd_single_forward.4} parent=71 // pred_check_branch
        %3884 = sbr.rel (%p3882) target = $region76
      $region75: #{transwcd_single_forward.4} parent=71 // pred_region
        %s3885 = smul.u32 32, %s24
      $region76: #{transwcd_single_forward.4} parent=71 // pred_fallthru
        _
    $region72: #{transwcd_single_forward.4} parent=5 // pred_fallthru
      _
    %p3886 = scmp.le.s32.totalorder 2, %s19
    // Predicated region
    $region77: #{transwcd_single_forward.4} parent=5 // pred_check
      %p3887 = pneg %p3886
    $region78: #{transwcd_single_forward.4} parent=5 // pred_check_branch
      %3889 = sbr.rel (%p3887) target = $region80
    $region79: #{transwcd_single_forward.4} parent=5 // pred_region
      %s3890 = ssub.s32 %s19, 2
      // Predicated region
      $region81: #{transwcd_single_forward.4} parent=79 // pred_check
        %p3891 = pneg %p326
      $region82: #{transwcd_single_forward.4} parent=79 // pred_check_branch
        %3893 = sbr.rel (%p3891) target = $region84
      $region83: #{transwcd_single_forward.4} parent=79 // pred_region
        %s3894 = smul.u32 32, %s25
        %p3895 = scmp.lt.s32.totalorder %s3894, 63
        %s3896 = scalar_select %p3895, %s3894, 63
        %s3897 = smul.addr %s3896, 4
        %s3898 = scalar_lea.vmem %s13, %s3897
      $region84: #{transwcd_single_forward.4} parent=79 // pred_fallthru
        _
    $region80: #{transwcd_single_forward.4} parent=5 // pred_fallthru
      _
  $region6: #{transwcd_single_forward.4} parent=0 // loop_footer
    %s23 = sadd.s32 1, %s19
  $region7: #{transwcd_single_forward.4} parent=0 // loop_footer_branch
    %18 = sbr.rel target = $region3
  $region8: #{transwcd_single_forward.4} parent=0 // loop_exit
    _

// kernel: transwcd_single_forward.5
$region0: #{transwcd_single_forward.5}
  #allocation0 [shape = 'u32[]', space=smem, size = 0x4, offset = 0x4, fixed_abs, tag = 'smem constant byte address 0x4 - core index']
  #allocation1 [shape = 'u32[72,128]{1,0:T(1,128)}', space=vmem, size = 0x9000, scoped, tag = 'internal scratch']
  %s0 = inlined_call_operand.vmem [shape: bf16[128,512], index: 0, kind: input, shape index: {}]
  %s1 = inlined_call_operand.vmem [shape: bf16[512,128], index: 1, kind: input, shape index: {}]
  %s2 = inlined_call_operand.vmem [shape: f32[1,128], index: 2, kind: input, shape index: {}]
  %s3 = inlined_call_operand.vmem [shape: f32[1,128], index: 3, kind: input, shape index: {}]
  %s4 = inlined_call_operand.vmem [shape: f32[1,128], index: 4, kind: input, shape index: {}]
  %s5 = inlined_call_operand.vmem [shape: f32[1,128], index: 5, kind: input, shape index: {}]
  %s6 = inlined_call_operand.vmem [shape: f32[1,128], index: 6, kind: input, shape index: {}]
  %s7 = inlined_call_operand.vmem [shape: bf16[128,128], index: 7, kind: input, shape index: {}]
  %s8 = inlined_call_operand.vmem [shape: f32[1,128], index: 8, kind: input, shape index: {}]
  %s9 = inlined_call_operand.vmem [shape: bf16[128,128], index: 9, kind: input, shape index: {}]
  %s10 = inlined_call_operand.vmem [shape: f32[1,128], index: 10, kind: input, shape index: {}]
  %s11 = inlined_call_operand.vmem [shape: f32[1,128], index: 11, kind: input, shape index: {}]
  %s12 = inlined_call_operand.vmem [shape: f32[1,128], index: 12, kind: input, shape index: {}]
  %s13 = inlined_call_operand.vmem [shape: bf16[128,128], index: 13, kind: output, shape index: {}]
  %s14 = sld [smem:[#allocation0]]
  $region85: #{transwcd_single_forward.5} parent=0
    _
  %s16 = ssub.s32 1, %s14
  %s17 = scalar_select 0, %s16, %s14
  loop: start=0, step=1, limit=4
  $region2: #{transwcd_single_forward.5} parent=0 // loop_pre_header
    _
  $region3: #{transwcd_single_forward.5} parent=0 // loop_header
    %s19 = sphi 0, %s23
    %p20 = scmp.ge.s32.totalorder %s19, 4
    %s29 = sphi 0, %s31
    %s32 = sphi 0, %s29
    %s33 = sphi 0, %s32
    %s49 = sphi 0, %s33
    %s53 = sphi 0, %s53
    %s55 = sphi 0, %s53
    %s56 = sphi 0, %s55
    %s70 = sphi 0, %s56
    %s74 = sphi 0, %s74
    %s76 = sphi 0, %s74
    %s77 = sphi 0, %s76
    %s91 = sphi 0, %s77
    %s95 = sphi 0, %s95
    %s97 = sphi 0, %s95
    %s98 = sphi 0, %s97
    %s112 = sphi 0, %s98
    %s116 = sphi 0, %s116
    %s118 = sphi 0, %s116
    %s119 = sphi 0, %s118
    %s133 = sphi 0, %s119
    %s137 = sphi 0, %s137
    %s139 = sphi 0, %s137
    %s140 = sphi 0, %s139
    %s154 = sphi 0, %s140
    %s158 = sphi 0, %s158
    %s160 = sphi 0, %s158
    %s161 = sphi 0, %s160
    %s175 = sphi 0, %s161
    %s179 = sphi 0, %s179
    %s181 = sphi 0, %s179
    %s182 = sphi 0, %s181
    %s196 = sphi 0, %s182
    %s200 = sphi 0, %s200
    %s202 = sphi 0, %s200
    %s203 = sphi 0, %s202
    %s217 = sphi 0, %s203
    %s221 = sphi 0, %s221
    %s223 = sphi 0, %s221
    %s224 = sphi 0, %s223
    %s238 = sphi 0, %s224
    %s242 = sphi 0, %s242
    %s244 = sphi 0, %s242
    %s245 = sphi 0, %s244
    %s259 = sphi 0, %s245
    %s263 = sphi 0, %s263
    %s265 = sphi 0, %s263
    %s266 = sphi 0, %s265
    %s280 = sphi 0, %s266
    %s284 = sphi 0, %s284
    %s286 = sphi 0, %s284
    %s287 = sphi 0, %s286
    %s301 = sphi 0, %s287
    %s307 = sphi 0, %s309
    %s310 = sphi 0, %s307
    %s311 = sphi 0, %s310
    %s327 = sphi 0, %s311
  $region4: #{transwcd_single_forward.5} parent=0 // loop_header_branch
    %22 = sbr.rel (%p20) target = $region8
  $region5: #{transwcd_single_forward.5} parent=0 // loop_body
    %s24 = ssub.s32 %s19, 1
    %s25 = ssub.s32 %s19, 2
    %s26 = sadd.s32 %s19, 1
    %s27 = ssub.s32 %s19, %s26
    %p28 = scmp.eq.s32.totalorder %s27, 0
    %s30 = sadd.s32 %s29, 1
    %s31 = scalar_select %p28, %s29, %s30
    %p34 = pneg %p28
    %p35 = scmp.eq.s32.totalorder %s19, 1
    %p36 = por %p34, %p35
    %p37 = scmp.ne.s32.totalorder %s29, %s32
    %p38 = scmp.eq.s32.totalorder %s19, 0
    %p39 = por %p37, %p38
    %p40 = scmp.ne.s32.totalorder %s29, %s32
    %p41 = scmp.eq.s32.totalorder %s24, 1
    %p42 = por %p40, %p41
    %p43 = scmp.ne.s32.totalorder %s32, %s33
    %p44 = scmp.eq.s32.totalorder %s24, 0
    %p45 = por %p43, %p44
    %p46 = scmp.ne.s32.totalorder %s32, %s33
    %p47 = scmp.eq.s32.totalorder %s25, 1
    %p48 = por %p46, %p47
    %p50 = scmp.ne.s32.totalorder %s33, %s49
    %p51 = scmp.eq.s32.totalorder %s25, 0
    %p52 = por %p50, %p51
    %s54 = sadd.s32 %s53, 1
    %p57 = scmp.eq.s32.totalorder %s19, 1
    %p58 = scmp.ne.s32.totalorder %s53, %s55
    %p59 = scmp.eq.s32.totalorder %s19, 0
    %p60 = por %p58, %p59
    %p61 = scmp.ne.s32.totalorder %s53, %s55
    %p62 = scmp.eq.s32.totalorder %s24, 1
    %p63 = por %p61, %p62
    %p64 = scmp.ne.s32.totalorder %s55, %s56
    %p65 = scmp.eq.s32.totalorder %s24, 0
    %p66 = por %p64, %p65
    %p67 = scmp.ne.s32.totalorder %s55, %s56
    %p68 = scmp.eq.s32.totalorder %s25, 1
    %p69 = por %p67, %p68
    %p71 = scmp.ne.s32.totalorder %s56, %s70
    %p72 = scmp.eq.s32.totalorder %s25, 0
    %p73 = por %p71, %p72
    %s75 = sadd.s32 %s74, 1
    %p78 = scmp.eq.s32.totalorder %s19, 1
    %p79 = scmp.ne.s32.totalorder %s74, %s76
    %p80 = scmp.eq.s32.totalorder %s19, 0
    %p81 = por %p79, %p80
    %p82 = scmp.ne.s32.totalorder %s74, %s76
    %p83 = scmp.eq.s32.totalorder %s24, 1
    %p84 = por %p82, %p83
    %p85 = scmp.ne.s32.totalorder %s76, %s77
    %p86 = scmp.eq.s32.totalorder %s24, 0
    %p87 = por %p85, %p86
    %p88 = scmp.ne.s32.totalorder %s76, %s77
    %p89 = scmp.eq.s32.totalorder %s25, 1
    %p90 = por %p88, %p89
    %p92 = scmp.ne.s32.totalorder %s77, %s91
    %p93 = scmp.eq.s32.totalorder %s25, 0
    %p94 = por %p92, %p93
    %s96 = sadd.s32 %s95, 1
    %p99 = scmp.eq.s32.totalorder %s19, 1
    %p100 = scmp.ne.s32.totalorder %s95, %s97
    %p101 = scmp.eq.s32.totalorder %s19, 0
    %p102 = por %p100, %p101
    %p103 = scmp.ne.s32.totalorder %s95, %s97
    %p104 = scmp.eq.s32.totalorder %s24, 1
    %p105 = por %p103, %p104
    %p106 = scmp.ne.s32.totalorder %s97, %s98
    %p107 = scmp.eq.s32.totalorder %s24, 0
    %p108 = por %p106, %p107
    %p109 = scmp.ne.s32.totalorder %s97, %s98
    %p110 = scmp.eq.s32.totalorder %s25, 1
    %p111 = por %p109, %p110
    %p113 = scmp.ne.s32.totalorder %s98, %s112
    %p114 = scmp.eq.s32.totalorder %s25, 0
    %p115 = por %p113, %p114
    %s117 = sadd.s32 %s116, 1
    %p120 = scmp.eq.s32.totalorder %s19, 1
    %p121 = scmp.ne.s32.totalorder %s116, %s118
    %p122 = scmp.eq.s32.totalorder %s19, 0
    %p123 = por %p121, %p122
    %p124 = scmp.ne.s32.totalorder %s116, %s118
    %p125 = scmp.eq.s32.totalorder %s24, 1
    %p126 = por %p124, %p125
    %p127 = scmp.ne.s32.totalorder %s118, %s119
    %p128 = scmp.eq.s32.totalorder %s24, 0
    %p129 = por %p127, %p128
    %p130 = scmp.ne.s32.totalorder %s118, %s119
    %p131 = scmp.eq.s32.totalorder %s25, 1
    %p132 = por %p130, %p131
    %p134 = scmp.ne.s32.totalorder %s119, %s133
    %p135 = scmp.eq.s32.totalorder %s25, 0
    %p136 = por %p134, %p135
    %s138 = sadd.s32 %s137, 1
    %p141 = scmp.eq.s32.totalorder %s19, 1
    %p142 = scmp.ne.s32.totalorder %s137, %s139
    %p143 = scmp.eq.s32.totalorder %s19, 0
    %p144 = por %p142, %p143
    %p145 = scmp.ne.s32.totalorder %s137, %s139
    %p146 = scmp.eq.s32.totalorder %s24, 1
    %p147 = por %p145, %p146
    %p148 = scmp.ne.s32.totalorder %s139, %s140
    %p149 = scmp.eq.s32.totalorder %s24, 0
    %p150 = por %p148, %p149
    %p151 = scmp.ne.s32.totalorder %s139, %s140
    %p152 = scmp.eq.s32.totalorder %s25, 1
    %p153 = por %p151, %p152
    %p155 = scmp.ne.s32.totalorder %s140, %s154
    %p156 = scmp.eq.s32.totalorder %s25, 0
    %p157 = por %p155, %p156
    %s159 = sadd.s32 %s158, 1
    %p162 = scmp.eq.s32.totalorder %s19, 1
    %p163 = scmp.ne.s32.totalorder %s158, %s160
    %p164 = scmp.eq.s32.totalorder %s19, 0
    %p165 = por %p163, %p164
    %p166 = scmp.ne.s32.totalorder %s158, %s160
    %p167 = scmp.eq.s32.totalorder %s24, 1
    %p168 = por %p166, %p167
    %p169 = scmp.ne.s32.totalorder %s160, %s161
    %p170 = scmp.eq.s32.totalorder %s24, 0
    %p171 = por %p169, %p170
    %p172 = scmp.ne.s32.totalorder %s160, %s161
    %p173 = scmp.eq.s32.totalorder %s25, 1
    %p174 = por %p172, %p173
    %p176 = scmp.ne.s32.totalorder %s161, %s175
    %p177 = scmp.eq.s32.totalorder %s25, 0
    %p178 = por %p176, %p177
    %s180 = sadd.s32 %s179, 1
    %p183 = scmp.eq.s32.totalorder %s19, 1
    %p184 = scmp.ne.s32.totalorder %s179, %s181
    %p185 = scmp.eq.s32.totalorder %s19, 0
    %p186 = por %p184, %p185
    %p187 = scmp.ne.s32.totalorder %s179, %s181
    %p188 = scmp.eq.s32.totalorder %s24, 1
    %p189 = por %p187, %p188
    %p190 = scmp.ne.s32.totalorder %s181, %s182
    %p191 = scmp.eq.s32.totalorder %s24, 0
    %p192 = por %p190, %p191
    %p193 = scmp.ne.s32.totalorder %s181, %s182
    %p194 = scmp.eq.s32.totalorder %s25, 1
    %p195 = por %p193, %p194
    %p197 = scmp.ne.s32.totalorder %s182, %s196
    %p198 = scmp.eq.s32.totalorder %s25, 0
    %p199 = por %p197, %p198
    %s201 = sadd.s32 %s200, 1
    %p204 = scmp.eq.s32.totalorder %s19, 1
    %p205 = scmp.ne.s32.totalorder %s200, %s202
    %p206 = scmp.eq.s32.totalorder %s19, 0
    %p207 = por %p205, %p206
    %p208 = scmp.ne.s32.totalorder %s200, %s202
    %p209 = scmp.eq.s32.totalorder %s24, 1
    %p210 = por %p208, %p209
    %p211 = scmp.ne.s32.totalorder %s202, %s203
    %p212 = scmp.eq.s32.totalorder %s24, 0
    %p213 = por %p211, %p212
    %p214 = scmp.ne.s32.totalorder %s202, %s203
    %p215 = scmp.eq.s32.totalorder %s25, 1
    %p216 = por %p214, %p215
    %p218 = scmp.ne.s32.totalorder %s203, %s217
    %p219 = scmp.eq.s32.totalorder %s25, 0
    %p220 = por %p218, %p219
    %s222 = sadd.s32 %s221, 1
    %p225 = scmp.eq.s32.totalorder %s19, 1
    %p226 = scmp.ne.s32.totalorder %s221, %s223
    %p227 = scmp.eq.s32.totalorder %s19, 0
    %p228 = por %p226, %p227
    %p229 = scmp.ne.s32.totalorder %s221, %s223
    %p230 = scmp.eq.s32.totalorder %s24, 1
    %p231 = por %p229, %p230
    %p232 = scmp.ne.s32.totalorder %s223, %s224
    %p233 = scmp.eq.s32.totalorder %s24, 0
    %p234 = por %p232, %p233
    %p235 = scmp.ne.s32.totalorder %s223, %s224
    %p236 = scmp.eq.s32.totalorder %s25, 1
    %p237 = por %p235, %p236
    %p239 = scmp.ne.s32.totalorder %s224, %s238
    %p240 = scmp.eq.s32.totalorder %s25, 0
    %p241 = por %p239, %p240
    %s243 = sadd.s32 %s242, 1
    %p246 = scmp.eq.s32.totalorder %s19, 1
    %p247 = scmp.ne.s32.totalorder %s242, %s244
    %p248 = scmp.eq.s32.totalorder %s19, 0
    %p249 = por %p247, %p248
    %p250 = scmp.ne.s32.totalorder %s242, %s244
    %p251 = scmp.eq.s32.totalorder %s24, 1
    %p252 = por %p250, %p251
    %p253 = scmp.ne.s32.totalorder %s244, %s245
    %p254 = scmp.eq.s32.totalorder %s24, 0
    %p255 = por %p253, %p254
    %p256 = scmp.ne.s32.totalorder %s244, %s245
    %p257 = scmp.eq.s32.totalorder %s25, 1
    %p258 = por %p256, %p257
    %p260 = scmp.ne.s32.totalorder %s245, %s259
    %p261 = scmp.eq.s32.totalorder %s25, 0
    %p262 = por %p260, %p261
    %s264 = sadd.s32 %s263, 1
    %p267 = scmp.eq.s32.totalorder %s19, 1
    %p268 = scmp.ne.s32.totalorder %s263, %s265
    %p269 = scmp.eq.s32.totalorder %s19, 0
    %p270 = por %p268, %p269
    %p271 = scmp.ne.s32.totalorder %s263, %s265
    %p272 = scmp.eq.s32.totalorder %s24, 1
    %p273 = por %p271, %p272
    %p274 = scmp.ne.s32.totalorder %s265, %s266
    %p275 = scmp.eq.s32.totalorder %s24, 0
    %p276 = por %p274, %p275
    %p277 = scmp.ne.s32.totalorder %s265, %s266
    %p278 = scmp.eq.s32.totalorder %s25, 1
    %p279 = por %p277, %p278
    %p281 = scmp.ne.s32.totalorder %s266, %s280
    %p282 = scmp.eq.s32.totalorder %s25, 0
    %p283 = por %p281, %p282
    %s285 = sadd.s32 %s284, 1
    %p288 = scmp.eq.s32.totalorder %s19, 1
    %p289 = scmp.ne.s32.totalorder %s284, %s286
    %p290 = scmp.eq.s32.totalorder %s19, 0
    %p291 = por %p289, %p290
    %p292 = scmp.ne.s32.totalorder %s284, %s286
    %p293 = scmp.eq.s32.totalorder %s24, 1
    %p294 = por %p292, %p293
    %p295 = scmp.ne.s32.totalorder %s286, %s287
    %p296 = scmp.eq.s32.totalorder %s24, 0
    %p297 = por %p295, %p296
    %p298 = scmp.ne.s32.totalorder %s286, %s287
    %p299 = scmp.eq.s32.totalorder %s25, 1
    %p300 = por %p298, %p299
    %p302 = scmp.ne.s32.totalorder %s287, %s301
    %p303 = scmp.eq.s32.totalorder %s25, 0
    %p304 = por %p302, %p303
    %s305 = ssub.s32 %s19, %s26
    %p306 = scmp.eq.s32.totalorder %s305, 0
    %s308 = sadd.s32 %s307, 1
    %s309 = scalar_select %p306, %s307, %s308
    %p312 = pneg %p306
    %p313 = scmp.eq.s32.totalorder %s19, 1
    %p314 = por %p312, %p313
    %p315 = scmp.ne.s32.totalorder %s307, %s310
    %p316 = scmp.eq.s32.totalorder %s19, 0
    %p317 = por %p315, %p316
    %p318 = scmp.ne.s32.totalorder %s307, %s310
    %p319 = scmp.eq.s32.totalorder %s24, 1
    %p320 = por %p318, %p319
    %p321 = scmp.ne.s32.totalorder %s310, %s311
    %p322 = scmp.eq.s32.totalorder %s24, 0
    %p323 = por %p321, %p322
    %p324 = scmp.ne.s32.totalorder %s310, %s311
    %p325 = scmp.eq.s32.totalorder %s25, 1
    %p326 = por %p324, %p325
    %p328 = scmp.ne.s32.totalorder %s311, %s327
    %p329 = scmp.eq.s32.totalorder %s25, 0
    %p330 = por %p328, %p329
    %p331 = scmp.le.s32.totalorder 1, %s19
    %p332 = scmp.lt.s32.totalorder %s19, 3
    %p333 = pnand %p331, %p332
    %p334 = pneg %p333
    // Predicated region
    $region9: #{transwcd_single_forward.5} parent=5 // pred_check
      _
    $region10: #{transwcd_single_forward.5} parent=5 // pred_check_branch
      %336 = sbr.rel (%p333) target = $region12
    $region11: #{transwcd_single_forward.5} parent=5 // pred_region
      %s337 = ssub.s32 %s19, 1
      // Predicated region
      $region13: #{transwcd_single_forward.5} parent=11 // pred_check
        %p338 = pneg %p66
      $region14: #{transwcd_single_forward.5} parent=11 // pred_check_branch
        %340 = sbr.rel (%p338) target = $region16
      $region15: #{transwcd_single_forward.5} parent=11 // pred_region
        _
      $region16: #{transwcd_single_forward.5} parent=11 // pred_fallthru
        _
      // Predicated region
      $region17: #{transwcd_single_forward.5} parent=11 // pred_check
        %p341 = pneg %p87
      $region18: #{transwcd_single_forward.5} parent=11 // pred_check_branch
        %343 = sbr.rel (%p341) target = $region20
      $region19: #{transwcd_single_forward.5} parent=11 // pred_region
        _
      $region20: #{transwcd_single_forward.5} parent=11 // pred_fallthru
        _
      // Predicated region
      $region21: #{transwcd_single_forward.5} parent=11 // pred_check
        %p344 = pneg %p108
      $region22: #{transwcd_single_forward.5} parent=11 // pred_check_branch
        %346 = sbr.rel (%p344) target = $region24
      $region23: #{transwcd_single_forward.5} parent=11 // pred_region
        _
      $region24: #{transwcd_single_forward.5} parent=11 // pred_fallthru
        _
      // Predicated region
      $region25: #{transwcd_single_forward.5} parent=11 // pred_check
        %p347 = pneg %p129
      $region26: #{transwcd_single_forward.5} parent=11 // pred_check_branch
        %349 = sbr.rel (%p347) target = $region28
      $region27: #{transwcd_single_forward.5} parent=11 // pred_region
        _
      $region28: #{transwcd_single_forward.5} parent=11 // pred_fallthru
        _
      // Predicated region
      $region29: #{transwcd_single_forward.5} parent=11 // pred_check
        %p350 = pneg %p150
      $region30: #{transwcd_single_forward.5} parent=11 // pred_check_branch
        %352 = sbr.rel (%p350) target = $region32
      $region31: #{transwcd_single_forward.5} parent=11 // pred_region
        _
      $region32: #{transwcd_single_forward.5} parent=11 // pred_fallthru
        _
      // Predicated region
      $region33: #{transwcd_single_forward.5} parent=11 // pred_check
        %p353 = pneg %p171
      $region34: #{transwcd_single_forward.5} parent=11 // pred_check_branch
        %355 = sbr.rel (%p353) target = $region36
      $region35: #{transwcd_single_forward.5} parent=11 // pred_region
        _
      $region36: #{transwcd_single_forward.5} parent=11 // pred_fallthru
        _
      // Predicated region
      $region37: #{transwcd_single_forward.5} parent=11 // pred_check
        %p356 = pneg %p192
      $region38: #{transwcd_single_forward.5} parent=11 // pred_check_branch
        %358 = sbr.rel (%p356) target = $region40
      $region39: #{transwcd_single_forward.5} parent=11 // pred_region
        _
      $region40: #{transwcd_single_forward.5} parent=11 // pred_fallthru
        _
      // Predicated region
      $region41: #{transwcd_single_forward.5} parent=11 // pred_check
        %p359 = pneg %p213
      $region42: #{transwcd_single_forward.5} parent=11 // pred_check_branch
        %361 = sbr.rel (%p359) target = $region44
      $region43: #{transwcd_single_forward.5} parent=11 // pred_region
        _
      $region44: #{transwcd_single_forward.5} parent=11 // pred_fallthru
        _
      // Predicated region
      $region45: #{transwcd_single_forward.5} parent=11 // pred_check
        %p362 = pneg %p234
      $region46: #{transwcd_single_forward.5} parent=11 // pred_check_branch
        %364 = sbr.rel (%p362) target = $region48
      $region47: #{transwcd_single_forward.5} parent=11 // pred_region
        _
      $region48: #{transwcd_single_forward.5} parent=11 // pred_fallthru
        _
      // Predicated region
      $region49: #{transwcd_single_forward.5} parent=11 // pred_check
        %p365 = pneg %p255
      $region50: #{transwcd_single_forward.5} parent=11 // pred_check_branch
        %367 = sbr.rel (%p365) target = $region52
      $region51: #{transwcd_single_forward.5} parent=11 // pred_region
        _
      $region52: #{transwcd_single_forward.5} parent=11 // pred_fallthru
        _
      // Predicated region
      $region53: #{transwcd_single_forward.5} parent=11 // pred_check
        %p368 = pneg %p276
      $region54: #{transwcd_single_forward.5} parent=11 // pred_check_branch
        %370 = sbr.rel (%p368) target = $region56
      $region55: #{transwcd_single_forward.5} parent=11 // pred_region
        _
      $region56: #{transwcd_single_forward.5} parent=11 // pred_fallthru
        _
      // Predicated region
      $region57: #{transwcd_single_forward.5} parent=11 // pred_check
        %p371 = pneg %p297
      $region58: #{transwcd_single_forward.5} parent=11 // pred_check_branch
        %373 = sbr.rel (%p371) target = $region60
      $region59: #{transwcd_single_forward.5} parent=11 // pred_region
        _
      $region60: #{transwcd_single_forward.5} parent=11 // pred_fallthru
        _
    $region12: #{transwcd_single_forward.5} parent=5 // pred_fallthru
      _
    %p374 = scmp.lt.s32.totalorder %s19, 2
    // Predicated region
    $region61: #{transwcd_single_forward.5} parent=5 // pred_check
      %p375 = pneg %p374
    $region62: #{transwcd_single_forward.5} parent=5 // pred_check_branch
      %377 = sbr.rel (%p375) target = $region64
    $region63: #{transwcd_single_forward.5} parent=5 // pred_region
      // Predicated region
      $region65: #{transwcd_single_forward.5} parent=63 // pred_check
        %p378 = pneg %p39
      $region66: #{transwcd_single_forward.5} parent=63 // pred_check_branch
        %380 = sbr.rel (%p378) target = $region68
      $region67: #{transwcd_single_forward.5} parent=63 // pred_region
        %s381 = smul.u32 8, %s19
        %p382 = scmp.lt.s32.totalorder %s381, 15
        %s383 = scalar_select %p382, %s381, 15
        %s384 = smul.addr %s383, 4
        %s385 = smul.addr %s384, 4
        %s386 = scalar_lea.vmem %s0, %s385
        %s387 = smul.u32 8, %s19
      $region68: #{transwcd_single_forward.5} parent=63 // pred_fallthru
        _
    $region64: #{transwcd_single_forward.5} parent=5 // pred_fallthru
      _
    %p388 = scmp.le.s32.totalorder 1, %s19
    %p389 = scmp.lt.s32.totalorder %s19, 3
    %p390 = pnand %p388, %p389
    %p391 = pneg %p390
    // Predicated region
    $region69: #{transwcd_single_forward.5} parent=5 // pred_check
      _
    $region70: #{transwcd_single_forward.5} parent=5 // pred_check_branch
      %393 = sbr.rel (%p390) target = $region72
    $region71: #{transwcd_single_forward.5} parent=5 // pred_region
      %s394 = ssub.s32 %s19, 1
      %s395 = smul.u32 8, %s24
      %p396 = scmp.lt.s32.totalorder %s395, 15
      %s397 = scalar_select %p396, %s395, 15
      %s398 = smul.addr %s397, 4
      %s399 = smul.addr %s398, 4
      %s400 = scalar_lea.vmem %s0, %s399
      %p401 = pneg %p45
      %p402 = pneg %p42
      %p403 = pneg %p66
      %p404 = pneg %p63
      %p405 = pneg %p87
      %p406 = pneg %p84
      %p407 = pneg %p108
      %p408 = pneg %p105
      %p409 = pneg %p129
      %p410 = pneg %p126
      %p411 = pneg %p150
      %p412 = pneg %p147
      %p413 = pneg %p171
      %p414 = pneg %p168
      %p415 = pneg %p192
      %p416 = pneg %p189
      %p417 = pneg %p213
      %p418 = pneg %p210
      %p419 = pneg %p234
      %p420 = pneg %p231
      %p421 = pneg %p255
      %p422 = pneg %p252
      %p423 = pneg %p276
      %p424 = pneg %p273
      %p425 = pneg %p297
      %p426 = pneg %p294
      %p427 = pneg %p323
      %p428 = pneg %p320
      %s429 = smul.u32 8, %s24
      %p430 = scmp.lt.s32.totalorder %s429, 15
      %s431 = scalar_select %p430, %s429, 15
      %s432 = smul.addr %s431, 4
      %s433 = scalar_lea.vmem %s13, %s432
      %s434 = smul.u32 8, %s24
      %p435 = scmp.lt.s32.totalorder %s434, 15
      %s436 = scalar_select %p435, %s434, 15
      %s437 = smul.addr %s436, 4
      %s438 = smul.addr %s437, 4
      %s439 = scalar_lea.vmem %s0, %s438
      %s440 = smul.u32 8, %s24
      %s441 = smul.u32 8, %s24
      %p442 = scmp.lt.s32.totalorder %s441, 15
      %s443 = scalar_select %p442, %s441, 15
      %s444 = smul.addr %s443, 4
      %s445 = scalar_lea.vmem %s13, %s444
      %s446 = smul.u32 8, %s24
      %v447 = vld [vmem:[%s439] sm:$0xff]
      %v448 = vld [vmem:[%s439 + $0x8] sm:$0xff]
      %v449 = vld [vmem:[%s439 + $0x10] sm:$0xff]
      %v450 = vld [vmem:[%s439 + $0x18] sm:$0xff]
      %v451 = vld [vmem:[%s439 + $0x20] sm:$0xff]
      %v452 = vld [vmem:[%s439 + $0x28] sm:$0xff]
      %v453 = vld [vmem:[%s439 + $0x30] sm:$0xff]
      %v454 = vld [vmem:[%s439 + $0x38] sm:$0xff]
      %v455 = vld [vmem:[%s439 + $0x40] sm:$0xff]
      %v456 = vld [vmem:[%s439 + $0x48] sm:$0xff]
      %v457 = vld [vmem:[%s439 + $0x50] sm:$0xff]
      %v458 = vld [vmem:[%s439 + $0x58] sm:$0xff]
      %v459 = vld [vmem:[%s439 + $0x60] sm:$0xff]
      %v460 = vld [vmem:[%s439 + $0x68] sm:$0xff]
      %v461 = vld [vmem:[%s439 + $0x70] sm:$0xff]
      %v462 = vld [vmem:[%s439 + $0x78] sm:$0xff]
      %v463 = vld [vmem:[%s1] sm:$0xf]
      %v464 = vld [vmem:[%s1 + $0x4] sm:$0xf]
      %v465 = vld [vmem:[%s1 + $0x8] sm:$0xf]
      %v466 = vld [vmem:[%s1 + $0xc] sm:$0xf]
      %v467 = vld [vmem:[%s1 + $0x10] sm:$0xf]
      %v468 = vld [vmem:[%s1 + $0x14] sm:$0xf]
      %v469 = vld [vmem:[%s1 + $0x18] sm:$0xf]
      %v470 = vld [vmem:[%s1 + $0x1c] sm:$0xf]
      %v471 = vld [vmem:[%s1 + $0x20] sm:$0xf]
      %v472 = vld [vmem:[%s1 + $0x24] sm:$0xf]
      %v473 = vld [vmem:[%s1 + $0x28] sm:$0xf]
      %v474 = vld [vmem:[%s1 + $0x2c] sm:$0xf]
      %v475 = vld [vmem:[%s1 + $0x30] sm:$0xf]
      %v476 = vld [vmem:[%s1 + $0x34] sm:$0xf]
      %v477 = vld [vmem:[%s1 + $0x38] sm:$0xf]
      %v478 = vld [vmem:[%s1 + $0x3c] sm:$0xf]
      %v479 = vld [vmem:[%s1 + $0x40] sm:$0xf]
      %v480 = vld [vmem:[%s1 + $0x44] sm:$0xf]
      %v481 = vld [vmem:[%s1 + $0x48] sm:$0xf]
      %v482 = vld [vmem:[%s1 + $0x4c] sm:$0xf]
      %v483 = vld [vmem:[%s1 + $0x50] sm:$0xf]
      %v484 = vld [vmem:[%s1 + $0x54] sm:$0xf]
      %v485 = vld [vmem:[%s1 + $0x58] sm:$0xf]
      %v486 = vld [vmem:[%s1 + $0x5c] sm:$0xf]
      %v487 = vld [vmem:[%s1 + $0x60] sm:$0xf]
      %v488 = vld [vmem:[%s1 + $0x64] sm:$0xf]
      %v489 = vld [vmem:[%s1 + $0x68] sm:$0xf]
      %v490 = vld [vmem:[%s1 + $0x6c] sm:$0xf]
      %v491 = vld [vmem:[%s1 + $0x70] sm:$0xf]
      %v492 = vld [vmem:[%s1 + $0x74] sm:$0xf]
      %v493 = vld [vmem:[%s1 + $0x78] sm:$0xf]
      %v494 = vld [vmem:[%s1 + $0x7c] sm:$0xf]
      %v495 = vld [vmem:[%s1 + $0x80] sm:$0xf]
      %v496 = vld [vmem:[%s1 + $0x84] sm:$0xf]
      %v497 = vld [vmem:[%s1 + $0x88] sm:$0xf]
      %v498 = vld [vmem:[%s1 + $0x8c] sm:$0xf]
      %v499 = vld [vmem:[%s1 + $0x90] sm:$0xf]
      %v500 = vld [vmem:[%s1 + $0x94] sm:$0xf]
      %v501 = vld [vmem:[%s1 + $0x98] sm:$0xf]
      %v502 = vld [vmem:[%s1 + $0x9c] sm:$0xf]
      %v503 = vld [vmem:[%s1 + $0xa0] sm:$0xf]
      %v504 = vld [vmem:[%s1 + $0xa4] sm:$0xf]
      %v505 = vld [vmem:[%s1 + $0xa8] sm:$0xf]
      %v506 = vld [vmem:[%s1 + $0xac] sm:$0xf]
      %v507 = vld [vmem:[%s1 + $0xb0] sm:$0xf]
      %v508 = vld [vmem:[%s1 + $0xb4] sm:$0xf]
      %v509 = vld [vmem:[%s1 + $0xb8] sm:$0xf]
      %v510 = vld [vmem:[%s1 + $0xbc] sm:$0xf]
      %v511 = vld [vmem:[%s1 + $0xc0] sm:$0xf]
      %v512 = vld [vmem:[%s1 + $0xc4] sm:$0xf]
      %v513 = vld [vmem:[%s1 + $0xc8] sm:$0xf]
      %v514 = vld [vmem:[%s1 + $0xcc] sm:$0xf]
      %v515 = vld [vmem:[%s1 + $0xd0] sm:$0xf]
      %v516 = vld [vmem:[%s1 + $0xd4] sm:$0xf]
      %v517 = vld [vmem:[%s1 + $0xd8] sm:$0xf]
      %v518 = vld [vmem:[%s1 + $0xdc] sm:$0xf]
      %v519 = vld [vmem:[%s1 + $0xe0] sm:$0xf]
      %v520 = vld [vmem:[%s1 + $0xe4] sm:$0xf]
      %v521 = vld [vmem:[%s1 + $0xe8] sm:$0xf]
      %v522 = vld [vmem:[%s1 + $0xec] sm:$0xf]
      %v523 = vld [vmem:[%s1 + $0xf0] sm:$0xf]
      %v524 = vld [vmem:[%s1 + $0xf4] sm:$0xf]
      %v525 = vld [vmem:[%s1 + $0xf8] sm:$0xf]
      %v526 = vld [vmem:[%s1 + $0xfc] sm:$0xf]
      %v527 = vld [vmem:[%s2] sm:$0x1]
      %v529 = vperm.slane %v527, 0
      %v547 = vunpack.c.l.b16 %v447
      %v548 = vunpack.c.h.b16 %v447
      %v549 = vunpack.c.l.b16 %v448
      %v550 = vunpack.c.h.b16 %v448
      %v551 = vunpack.c.l.b16 %v449
      %v552 = vunpack.c.h.b16 %v449
      %v553 = vunpack.c.l.b16 %v450
      %v554 = vunpack.c.h.b16 %v450
      %v555 = vunpack.c.l.b16 %v451
      %v556 = vunpack.c.h.b16 %v451
      %v557 = vunpack.c.l.b16 %v452
      %v558 = vunpack.c.h.b16 %v452
      %v559 = vunpack.c.l.b16 %v453
      %v560 = vunpack.c.h.b16 %v453
      %v561 = vunpack.c.l.b16 %v454
      %v562 = vunpack.c.h.b16 %v454
      %v563 = vunpack.c.l.b16 %v455
      %v564 = vunpack.c.h.b16 %v455
      %v565 = vunpack.c.l.b16 %v456
      %v566 = vunpack.c.h.b16 %v456
      %v567 = vunpack.c.l.b16 %v457
      %v568 = vunpack.c.h.b16 %v457
      %v569 = vunpack.c.l.b16 %v458
      %v570 = vunpack.c.h.b16 %v458
      %v571 = vunpack.c.l.b16 %v459
      %v572 = vunpack.c.h.b16 %v459
      %v573 = vunpack.c.l.b16 %v460
      %v574 = vunpack.c.h.b16 %v460
      %v575 = vunpack.c.l.b16 %v461
      %v576 = vunpack.c.h.b16 %v461
      %v577 = vunpack.c.l.b16 %v462
      %v578 = vunpack.c.h.b16 %v462
      %v579 = vpack.c.b16 %v551, %v547
      %v580 = vpack.c.b16 %v552, %v548
      %v581 = vpack.c.b16 %v553, %v549
      %v582 = vpack.c.b16 %v554, %v550
      %v583 = vpack.c.b16 %v559, %v555
      %v584 = vpack.c.b16 %v560, %v556
      %v585 = vpack.c.b16 %v561, %v557
      %v586 = vpack.c.b16 %v562, %v558
      %v587 = vpack.c.b16 %v567, %v563
      %v588 = vpack.c.b16 %v568, %v564
      %v589 = vpack.c.b16 %v569, %v565
      %v590 = vpack.c.b16 %v570, %v566
      %v591 = vpack.c.b16 %v575, %v571
      %v592 = vpack.c.b16 %v576, %v572
      %v593 = vpack.c.b16 %v577, %v573
      %v594 = vpack.c.b16 %v578, %v574
      %v675 = vunpack.c.l.b16 %v463
      %v676 = vunpack.c.l.b16 %v464
      %v677 = vunpack.c.l.b16 %v465
      %v678 = vunpack.c.l.b16 %v466
      %v679 = vunpack.c.l.b16 %v467
      %v680 = vunpack.c.l.b16 %v468
      %v681 = vunpack.c.l.b16 %v469
      %v682 = vunpack.c.l.b16 %v470
      %v683 = vunpack.c.l.b16 %v471
      %v684 = vunpack.c.l.b16 %v472
      %v685 = vunpack.c.l.b16 %v473
      %v686 = vunpack.c.l.b16 %v474
      %v687 = vunpack.c.l.b16 %v475
      %v688 = vunpack.c.l.b16 %v476
      %v689 = vunpack.c.l.b16 %v477
      %v690 = vunpack.c.l.b16 %v478
      %v691 = vunpack.c.l.b16 %v479
      %v692 = vunpack.c.l.b16 %v480
      %v693 = vunpack.c.l.b16 %v481
      %v694 = vunpack.c.l.b16 %v482
      %v695 = vunpack.c.l.b16 %v483
      %v696 = vunpack.c.l.b16 %v484
      %v697 = vunpack.c.l.b16 %v485
      %v698 = vunpack.c.l.b16 %v486
      %v699 = vunpack.c.l.b16 %v487
      %v700 = vunpack.c.l.b16 %v488
      %v701 = vunpack.c.l.b16 %v489
      %v702 = vunpack.c.l.b16 %v490
      %v703 = vunpack.c.l.b16 %v491
      %v704 = vunpack.c.l.b16 %v492
      %v705 = vunpack.c.l.b16 %v493
      %v706 = vunpack.c.l.b16 %v494
      %v707 = vunpack.c.l.b16 %v495
      %v708 = vunpack.c.l.b16 %v496
      %v709 = vunpack.c.l.b16 %v497
      %v710 = vunpack.c.l.b16 %v498
      %v711 = vunpack.c.l.b16 %v499
      %v712 = vunpack.c.l.b16 %v500
      %v713 = vunpack.c.l.b16 %v501
      %v714 = vunpack.c.l.b16 %v502
      %v715 = vunpack.c.l.b16 %v503
      %v716 = vunpack.c.l.b16 %v504
      %v717 = vunpack.c.l.b16 %v505
      %v718 = vunpack.c.l.b16 %v506
      %v719 = vunpack.c.l.b16 %v507
      %v720 = vunpack.c.l.b16 %v508
      %v721 = vunpack.c.l.b16 %v509
      %v722 = vunpack.c.l.b16 %v510
      %v723 = vunpack.c.l.b16 %v511
      %v724 = vunpack.c.l.b16 %v512
      %v725 = vunpack.c.l.b16 %v513
      %v726 = vunpack.c.l.b16 %v514
      %v727 = vunpack.c.l.b16 %v515
      %v728 = vunpack.c.l.b16 %v516
      %v729 = vunpack.c.l.b16 %v517
      %v730 = vunpack.c.l.b16 %v518
      %v731 = vunpack.c.l.b16 %v519
      %v732 = vunpack.c.l.b16 %v520
      %v733 = vunpack.c.l.b16 %v521
      %v734 = vunpack.c.l.b16 %v522
      %v735 = vunpack.c.l.b16 %v523
      %v736 = vunpack.c.l.b16 %v524
      %v737 = vunpack.c.l.b16 %v525
      %v738 = vunpack.c.l.b16 %v526
      %v739 = vpack.c.b16 %v676, %v675
      %v740 = vpack.c.b16 %v678, %v677
      %v741 = vpack.c.b16 %v680, %v679
      %v742 = vpack.c.b16 %v682, %v681
      %v743 = vpack.c.b16 %v684, %v683
      %v744 = vpack.c.b16 %v686, %v685
      %v745 = vpack.c.b16 %v688, %v687
      %v746 = vpack.c.b16 %v690, %v689
      %v747 = vpack.c.b16 %v692, %v691
      %v748 = vpack.c.b16 %v694, %v693
      %v749 = vpack.c.b16 %v696, %v695
      %v750 = vpack.c.b16 %v698, %v697
      %v751 = vpack.c.b16 %v700, %v699
      %v752 = vpack.c.b16 %v702, %v701
      %v753 = vpack.c.b16 %v704, %v703
      %v754 = vpack.c.b16 %v706, %v705
      %v755 = vpack.c.b16 %v708, %v707
      %v756 = vpack.c.b16 %v710, %v709
      %v757 = vpack.c.b16 %v712, %v711
      %v758 = vpack.c.b16 %v714, %v713
      %v759 = vpack.c.b16 %v716, %v715
      %v760 = vpack.c.b16 %v718, %v717
      %v761 = vpack.c.b16 %v720, %v719
      %v762 = vpack.c.b16 %v722, %v721
      %v763 = vpack.c.b16 %v724, %v723
      %v764 = vpack.c.b16 %v726, %v725
      %v765 = vpack.c.b16 %v728, %v727
      %v766 = vpack.c.b16 %v730, %v729
      %v767 = vpack.c.b16 %v732, %v731
      %v768 = vpack.c.b16 %v734, %v733
      %v769 = vpack.c.b16 %v736, %v735
      %v770 = vpack.c.b16 %v738, %v737
      %803 = vmatpush.bf16.msra.mxu0 %v746
      %804 = vmatpush.bf16.msra.mxu0 %v745
      %805 = vmatpush.bf16.msra.mxu0 %v744
      %806 = vmatpush.bf16.msra.mxu0 %v743
      %807 = vmatpush.bf16.msra.mxu0 %v742
      %808 = vmatpush.bf16.msra.mxu0 %v741
      %809 = vmatpush.bf16.msra.mxu0 %v740
      %810 = vmatpush.bf16.msra.mxu0 %v739
      %811 = vmatmul.bf16.gmra.mxu0 %v579
      %v812 = vpop.f32.mrf.mxu0
      %v813 = vadd.f32 %v529, %v812
      %v814 = vpop.f32.mrf.mxu0
      %v815 = vadd.f32 %v529, %v814
      %816 = vmatmul.bf16.gmra.mxu0 %v583
      %v817 = vpop.f32.mrf.mxu0
      %v818 = vadd.f32 %v529, %v817
      %v819 = vpop.f32.mrf.mxu0
      %v820 = vadd.f32 %v529, %v819
      %821 = vmatmul.bf16.gmra.mxu0 %v587
      %v822 = vpop.f32.mrf.mxu0
      %v823 = vadd.f32 %v529, %v822
      %v824 = vpop.f32.mrf.mxu0
      %v825 = vadd.f32 %v529, %v824
      %826 = vmatmul.bf16.gmra.mxu0 %v591
      %v827 = vpop.f32.mrf.mxu0
      %v828 = vadd.f32 %v529, %v827
      %v829 = vpop.f32.mrf.mxu0
      %v830 = vadd.f32 %v529, %v829
      %831 = vdwg.mxu0
      %832 = vmatpush.bf16.msra.mxu0 %v754
      %833 = vmatpush.bf16.msra.mxu0 %v753
      %834 = vmatpush.bf16.msra.mxu0 %v752
      %835 = vmatpush.bf16.msra.mxu0 %v751
      %836 = vmatpush.bf16.msra.mxu0 %v750
      %837 = vmatpush.bf16.msra.mxu0 %v749
      %838 = vmatpush.bf16.msra.mxu0 %v748
      %839 = vmatpush.bf16.msra.mxu0 %v747
      %840 = vmatmul.bf16.gmra.mxu0 %v580
      %v841 = vpop.f32.mrf.mxu0
      %v842 = vadd.f32 %v813, %v841
      %v843 = vpop.f32.mrf.mxu0
      %v844 = vadd.f32 %v815, %v843
      %845 = vmatmul.bf16.gmra.mxu0 %v584
      %v846 = vpop.f32.mrf.mxu0
      %v847 = vadd.f32 %v818, %v846
      %v848 = vpop.f32.mrf.mxu0
      %v849 = vadd.f32 %v820, %v848
      %850 = vmatmul.bf16.gmra.mxu0 %v588
      %v851 = vpop.f32.mrf.mxu0
      %v852 = vadd.f32 %v823, %v851
      %v853 = vpop.f32.mrf.mxu0
      %v854 = vadd.f32 %v825, %v853
      %855 = vmatmul.bf16.gmra.mxu0 %v592
      %v856 = vpop.f32.mrf.mxu0
      %v857 = vadd.f32 %v828, %v856
      %v858 = vpop.f32.mrf.mxu0
      %v859 = vadd.f32 %v830, %v858
      %860 = vdwg.mxu0
      %861 = vmatpush.bf16.msra.mxu0 %v762
      %862 = vmatpush.bf16.msra.mxu0 %v761
      %863 = vmatpush.bf16.msra.mxu0 %v760
      %864 = vmatpush.bf16.msra.mxu0 %v759
      %865 = vmatpush.bf16.msra.mxu0 %v758
      %866 = vmatpush.bf16.msra.mxu0 %v757
      %867 = vmatpush.bf16.msra.mxu0 %v756
      %868 = vmatpush.bf16.msra.mxu0 %v755
      %869 = vmatmul.bf16.gmra.mxu0 %v581
      %v870 = vpop.f32.mrf.mxu0
      %v871 = vadd.f32 %v842, %v870
      %v872 = vpop.f32.mrf.mxu0
      %v873 = vadd.f32 %v844, %v872
      %874 = vmatmul.bf16.gmra.mxu0 %v585
      %v875 = vpop.f32.mrf.mxu0
      %v876 = vadd.f32 %v847, %v875
      %v877 = vpop.f32.mrf.mxu0
      %v878 = vadd.f32 %v849, %v877
      %879 = vmatmul.bf16.gmra.mxu0 %v589
      %v880 = vpop.f32.mrf.mxu0
      %v881 = vadd.f32 %v852, %v880
      %v882 = vpop.f32.mrf.mxu0
      %v883 = vadd.f32 %v854, %v882
      %884 = vmatmul.bf16.gmra.mxu0 %v593
      %v885 = vpop.f32.mrf.mxu0
      %v886 = vadd.f32 %v857, %v885
      %v887 = vpop.f32.mrf.mxu0
      %v888 = vadd.f32 %v859, %v887
      %889 = vdwg.mxu0
      %890 = vmatpush.bf16.msra.mxu0 %v770
      %891 = vmatpush.bf16.msra.mxu0 %v769
      %892 = vmatpush.bf16.msra.mxu0 %v768
      %893 = vmatpush.bf16.msra.mxu0 %v767
      %894 = vmatpush.bf16.msra.mxu0 %v766
      %895 = vmatpush.bf16.msra.mxu0 %v765
      %896 = vmatpush.bf16.msra.mxu0 %v764
      %897 = vmatpush.bf16.msra.mxu0 %v763
      %898 = vmatmul.bf16.gmra.mxu0 %v582
      %v899 = vpop.f32.mrf.mxu0
      %v900 = vadd.f32 %v871, %v899
      %v901 = vpop.f32.mrf.mxu0
      %v902 = vadd.f32 %v873, %v901
      %903 = vmatmul.bf16.gmra.mxu0 %v586
      %v904 = vpop.f32.mrf.mxu0
      %v905 = vadd.f32 %v876, %v904
      %v906 = vpop.f32.mrf.mxu0
      %v907 = vadd.f32 %v878, %v906
      %908 = vmatmul.bf16.gmra.mxu0 %v590
      %v909 = vpop.f32.mrf.mxu0
      %v910 = vadd.f32 %v881, %v909
      %v911 = vpop.f32.mrf.mxu0
      %v912 = vadd.f32 %v883, %v911
      %913 = vmatmul.bf16.gmra.mxu0 %v594
      %v914 = vpop.f32.mrf.mxu0
      %v915 = vadd.f32 %v886, %v914
      %v916 = vpop.f32.mrf.mxu0
      %v917 = vadd.f32 %v888, %v916
      %918 = vdwg.mxu0
      %v919 = vld [vmem:[%s3] sm:$0x1]
      %v920 = vld [vmem:[%s4] sm:$0x1]
      %921 = vadd.xlane.f32.xlu0 %v900
      %v922 = vpop.xlane.xlu0 %921
      %923 = vadd.xlane.f32.xlu0 %v902
      %v924 = vpop.xlane.xlu0 %923
      %925 = vadd.xlane.f32.xlu0 %v905
      %v926 = vpop.xlane.xlu0 %925
      %927 = vadd.xlane.f32.xlu0 %v907
      %v928 = vpop.xlane.xlu0 %927
      %929 = vadd.xlane.f32.xlu0 %v910
      %v930 = vpop.xlane.xlu0 %929
      %931 = vadd.xlane.f32.xlu0 %v912
      %v932 = vpop.xlane.xlu0 %931
      %933 = vadd.xlane.f32.xlu0 %v915
      %v934 = vpop.xlane.xlu0 %933
      %935 = vadd.xlane.f32.xlu0 %v917
      %v936 = vpop.xlane.xlu0 %935
      %v937 = vmul.f32 %v922, 0.0625
      %v938 = vmul.f32 %v924, 0.0625
      %v939 = vmul.f32 %v926, 0.0625
      %v940 = vmul.f32 %v928, 0.0625
      %v941 = vmul.f32 %v930, 0.0625
      %v942 = vmul.f32 %v932, 0.0625
      %v943 = vmul.f32 %v934, 0.0625
      %v944 = vmul.f32 %v936, 0.0625
      %v945 = vmul.f32 %v900, %v900
      %v946 = vmul.f32 %v902, %v902
      %v947 = vmul.f32 %v905, %v905
      %v948 = vmul.f32 %v907, %v907
      %v949 = vmul.f32 %v910, %v910
      %v950 = vmul.f32 %v912, %v912
      %v951 = vmul.f32 %v915, %v915
      %v952 = vmul.f32 %v917, %v917
      %953 = vadd.xlane.f32.xlu0 %v945
      %v954 = vpop.xlane.xlu0 %953
      %955 = vadd.xlane.f32.xlu0 %v946
      %v956 = vpop.xlane.xlu0 %955
      %957 = vadd.xlane.f32.xlu0 %v947
      %v958 = vpop.xlane.xlu0 %957
      %959 = vadd.xlane.f32.xlu0 %v948
      %v960 = vpop.xlane.xlu0 %959
      %961 = vadd.xlane.f32.xlu0 %v949
      %v962 = vpop.xlane.xlu0 %961
      %963 = vadd.xlane.f32.xlu0 %v950
      %v964 = vpop.xlane.xlu0 %963
      %965 = vadd.xlane.f32.xlu0 %v951
      %v966 = vpop.xlane.xlu0 %965
      %967 = vadd.xlane.f32.xlu0 %v952
      %v968 = vpop.xlane.xlu0 %967
      %v969 = vmul.f32 %v954, 0.0625
      %v970 = vmul.f32 %v956, 0.0625
      %v971 = vmul.f32 %v958, 0.0625
      %v972 = vmul.f32 %v960, 0.0625
      %v973 = vmul.f32 %v962, 0.0625
      %v974 = vmul.f32 %v964, 0.0625
      %v975 = vmul.f32 %v966, 0.0625
      %v976 = vmul.f32 %v968, 0.0625
      %v977 = vmul.f32 %v937, %v937
      %v978 = vmul.f32 %v938, %v938
      %v979 = vmul.f32 %v939, %v939
      %v980 = vmul.f32 %v940, %v940
      %v981 = vmul.f32 %v941, %v941
      %v982 = vmul.f32 %v942, %v942
      %v983 = vmul.f32 %v943, %v943
      %v984 = vmul.f32 %v944, %v944
      %v985 = vsub.f32 %v969, %v977
      %v986 = vsub.f32 %v970, %v978
      %v987 = vsub.f32 %v971, %v979
      %v988 = vsub.f32 %v972, %v980
      %v989 = vsub.f32 %v973, %v981
      %v990 = vsub.f32 %v974, %v982
      %v991 = vsub.f32 %v975, %v983
      %v992 = vsub.f32 %v976, %v984
      %v993 = vmax.f32 %v985, 0.0
      %v994 = vmax.f32 %v986, 0.0
      %v995 = vmax.f32 %v987, 0.0
      %v996 = vmax.f32 %v988, 0.0
      %v997 = vmax.f32 %v989, 0.0
      %v998 = vmax.f32 %v990, 0.0
      %v999 = vmax.f32 %v991, 0.0
      %v1000 = vmax.f32 %v992, 0.0
      %v1001 = vsub.f32 %v900, %v937
      %v1002 = vsub.f32 %v902, %v938
      %v1003 = vsub.f32 %v905, %v939
      %v1004 = vsub.f32 %v907, %v940
      %v1005 = vsub.f32 %v910, %v941
      %v1006 = vsub.f32 %v912, %v942
      %v1007 = vsub.f32 %v915, %v943
      %v1008 = vsub.f32 %v917, %v944
      %v1009 = vadd.f32 %v993, 1e-05
      %v1010 = vadd.f32 %v994, 1e-05
      %v1011 = vadd.f32 %v995, 1e-05
      %v1012 = vadd.f32 %v996, 1e-05
      %v1013 = vadd.f32 %v997, 1e-05
      %v1014 = vadd.f32 %v998, 1e-05
      %v1015 = vadd.f32 %v999, 1e-05
      %v1016 = vadd.f32 %v1000, 1e-05
      %v1017 = vrsqrt.pop %v1009
      %v1018 = vmul.f32 %v1017, %v1009
      %v1019 = vmul.f32 %v1018, %v1017
      %v1020 = vmul.f32 0.5, %v1019
      %v1021 = vsub.f32 1.5, %v1020
      %v1022 = vmul.f32 %v1017, %v1021
      %vm1023 = vweird.f32 %v1009
      %vm1024 = vweird.f32 %v1017
      %vm1025 = vmor %vm1023, %vm1024
      %v1026 = vsel %vm1025, %v1017, %v1022
      %v1027 = vrsqrt.pop %v1010
      %v1028 = vmul.f32 %v1027, %v1010
      %v1029 = vmul.f32 %v1028, %v1027
      %v1030 = vmul.f32 0.5, %v1029
      %v1031 = vsub.f32 1.5, %v1030
      %v1032 = vmul.f32 %v1027, %v1031
      %vm1033 = vweird.f32 %v1010
      %vm1034 = vweird.f32 %v1027
      %vm1035 = vmor %vm1033, %vm1034
      %v1036 = vsel %vm1035, %v1027, %v1032
      %v1037 = vrsqrt.pop %v1011
      %v1038 = vmul.f32 %v1037, %v1011
      %v1039 = vmul.f32 %v1038, %v1037
      %v1040 = vmul.f32 0.5, %v1039
      %v1041 = vsub.f32 1.5, %v1040
      %v1042 = vmul.f32 %v1037, %v1041
      %vm1043 = vweird.f32 %v1011
      %vm1044 = vweird.f32 %v1037
      %vm1045 = vmor %vm1043, %vm1044
      %v1046 = vsel %vm1045, %v1037, %v1042
      %v1047 = vrsqrt.pop %v1012
      %v1048 = vmul.f32 %v1047, %v1012
      %v1049 = vmul.f32 %v1048, %v1047
      %v1050 = vmul.f32 0.5, %v1049
      %v1051 = vsub.f32 1.5, %v1050
      %v1052 = vmul.f32 %v1047, %v1051
      %vm1053 = vweird.f32 %v1012
      %vm1054 = vweird.f32 %v1047
      %vm1055 = vmor %vm1053, %vm1054
      %v1056 = vsel %vm1055, %v1047, %v1052
      %v1057 = vrsqrt.pop %v1013
      %v1058 = vmul.f32 %v1057, %v1013
      %v1059 = vmul.f32 %v1058, %v1057
      %v1060 = vmul.f32 0.5, %v1059
      %v1061 = vsub.f32 1.5, %v1060
      %v1062 = vmul.f32 %v1057, %v1061
      %vm1063 = vweird.f32 %v1013
      %vm1064 = vweird.f32 %v1057
      %vm1065 = vmor %vm1063, %vm1064
      %v1066 = vsel %vm1065, %v1057, %v1062
      %v1067 = vrsqrt.pop %v1014
      %v1068 = vmul.f32 %v1067, %v1014
      %v1069 = vmul.f32 %v1068, %v1067
      %v1070 = vmul.f32 0.5, %v1069
      %v1071 = vsub.f32 1.5, %v1070
      %v1072 = vmul.f32 %v1067, %v1071
      %vm1073 = vweird.f32 %v1014
      %vm1074 = vweird.f32 %v1067
      %vm1075 = vmor %vm1073, %vm1074
      %v1076 = vsel %vm1075, %v1067, %v1072
      %v1077 = vrsqrt.pop %v1015
      %v1078 = vmul.f32 %v1077, %v1015
      %v1079 = vmul.f32 %v1078, %v1077
      %v1080 = vmul.f32 0.5, %v1079
      %v1081 = vsub.f32 1.5, %v1080
      %v1082 = vmul.f32 %v1077, %v1081
      %vm1083 = vweird.f32 %v1015
      %vm1084 = vweird.f32 %v1077
      %vm1085 = vmor %vm1083, %vm1084
      %v1086 = vsel %vm1085, %v1077, %v1082
      %v1087 = vrsqrt.pop %v1016
      %v1088 = vmul.f32 %v1087, %v1016
      %v1089 = vmul.f32 %v1088, %v1087
      %v1090 = vmul.f32 0.5, %v1089
      %v1091 = vsub.f32 1.5, %v1090
      %v1092 = vmul.f32 %v1087, %v1091
      %vm1093 = vweird.f32 %v1016
      %vm1094 = vweird.f32 %v1087
      %vm1095 = vmor %vm1093, %vm1094
      %v1096 = vsel %vm1095, %v1087, %v1092
      %v1097 = vmul.f32 %v1001, %v1026
      %v1098 = vmul.f32 %v1002, %v1036
      %v1099 = vmul.f32 %v1003, %v1046
      %v1100 = vmul.f32 %v1004, %v1056
      %v1101 = vmul.f32 %v1005, %v1066
      %v1102 = vmul.f32 %v1006, %v1076
      %v1103 = vmul.f32 %v1007, %v1086
      %v1104 = vmul.f32 %v1008, %v1096
      %v1106 = vperm.slane %v919, 0
      %v1108 = vmul.f32 %v1097, %v1106
      %v1109 = vmul.f32 %v1098, %v1106
      %v1110 = vmul.f32 %v1099, %v1106
      %v1111 = vmul.f32 %v1100, %v1106
      %v1112 = vmul.f32 %v1101, %v1106
      %v1113 = vmul.f32 %v1102, %v1106
      %v1114 = vmul.f32 %v1103, %v1106
      %v1115 = vmul.f32 %v1104, %v1106
      %v1117 = vperm.slane %v920, 0
      %v1119 = vadd.f32 %v1108, %v1117
      %v1120 = vadd.f32 %v1109, %v1117
      %v1121 = vadd.f32 %v1110, %v1117
      %v1122 = vadd.f32 %v1111, %v1117
      %v1123 = vadd.f32 %v1112, %v1117
      %v1124 = vadd.f32 %v1113, %v1117
      %v1125 = vadd.f32 %v1114, %v1117
      %v1126 = vadd.f32 %v1115, %v1117
      %v1127 = vld [vmem:[%s5] sm:$0x1]
      %v1128 = vld [vmem:[%s6] sm:$0x1]
      %1129 = vadd.xlane.f32.xlu0 %v1119
      %v1130 = vpop.xlane.xlu0 %1129
      %1131 = vadd.xlane.f32.xlu0 %v1120
      %v1132 = vpop.xlane.xlu0 %1131
      %1133 = vadd.xlane.f32.xlu0 %v1121
      %v1134 = vpop.xlane.xlu0 %1133
      %1135 = vadd.xlane.f32.xlu0 %v1122
      %v1136 = vpop.xlane.xlu0 %1135
      %1137 = vadd.xlane.f32.xlu0 %v1123
      %v1138 = vpop.xlane.xlu0 %1137
      %1139 = vadd.xlane.f32.xlu0 %v1124
      %v1140 = vpop.xlane.xlu0 %1139
      %1141 = vadd.xlane.f32.xlu0 %v1125
      %v1142 = vpop.xlane.xlu0 %1141
      %1143 = vadd.xlane.f32.xlu0 %v1126
      %v1144 = vpop.xlane.xlu0 %1143
      %v1145 = vmul.f32 %v1130, 0.0625
      %v1146 = vmul.f32 %v1132, 0.0625
      %v1147 = vmul.f32 %v1134, 0.0625
      %v1148 = vmul.f32 %v1136, 0.0625
      %v1149 = vmul.f32 %v1138, 0.0625
      %v1150 = vmul.f32 %v1140, 0.0625
      %v1151 = vmul.f32 %v1142, 0.0625
      %v1152 = vmul.f32 %v1144, 0.0625
      %v1153 = vmul.f32 %v1119, %v1119
      %v1154 = vmul.f32 %v1120, %v1120
      %v1155 = vmul.f32 %v1121, %v1121
      %v1156 = vmul.f32 %v1122, %v1122
      %v1157 = vmul.f32 %v1123, %v1123
      %v1158 = vmul.f32 %v1124, %v1124
      %v1159 = vmul.f32 %v1125, %v1125
      %v1160 = vmul.f32 %v1126, %v1126
      %1161 = vadd.xlane.f32.xlu0 %v1153
      %v1162 = vpop.xlane.xlu0 %1161
      %1163 = vadd.xlane.f32.xlu0 %v1154
      %v1164 = vpop.xlane.xlu0 %1163
      %1165 = vadd.xlane.f32.xlu0 %v1155
      %v1166 = vpop.xlane.xlu0 %1165
      %1167 = vadd.xlane.f32.xlu0 %v1156
      %v1168 = vpop.xlane.xlu0 %1167
      %1169 = vadd.xlane.f32.xlu0 %v1157
      %v1170 = vpop.xlane.xlu0 %1169
      %1171 = vadd.xlane.f32.xlu0 %v1158
      %v1172 = vpop.xlane.xlu0 %1171
      %1173 = vadd.xlane.f32.xlu0 %v1159
      %v1174 = vpop.xlane.xlu0 %1173
      %1175 = vadd.xlane.f32.xlu0 %v1160
      %v1176 = vpop.xlane.xlu0 %1175
      %v1177 = vmul.f32 %v1162, 0.0625
      %v1178 = vmul.f32 %v1164, 0.0625
      %v1179 = vmul.f32 %v1166, 0.0625
      %v1180 = vmul.f32 %v1168, 0.0625
      %v1181 = vmul.f32 %v1170, 0.0625
      %v1182 = vmul.f32 %v1172, 0.0625
      %v1183 = vmul.f32 %v1174, 0.0625
      %v1184 = vmul.f32 %v1176, 0.0625
      %v1185 = vmul.f32 %v1145, %v1145
      %v1186 = vmul.f32 %v1146, %v1146
      %v1187 = vmul.f32 %v1147, %v1147
      %v1188 = vmul.f32 %v1148, %v1148
      %v1189 = vmul.f32 %v1149, %v1149
      %v1190 = vmul.f32 %v1150, %v1150
      %v1191 = vmul.f32 %v1151, %v1151
      %v1192 = vmul.f32 %v1152, %v1152
      %v1193 = vsub.f32 %v1177, %v1185
      %v1194 = vsub.f32 %v1178, %v1186
      %v1195 = vsub.f32 %v1179, %v1187
      %v1196 = vsub.f32 %v1180, %v1188
      %v1197 = vsub.f32 %v1181, %v1189
      %v1198 = vsub.f32 %v1182, %v1190
      %v1199 = vsub.f32 %v1183, %v1191
      %v1200 = vsub.f32 %v1184, %v1192
      %v1201 = vmax.f32 %v1193, 0.0
      %v1202 = vmax.f32 %v1194, 0.0
      %v1203 = vmax.f32 %v1195, 0.0
      %v1204 = vmax.f32 %v1196, 0.0
      %v1205 = vmax.f32 %v1197, 0.0
      %v1206 = vmax.f32 %v1198, 0.0
      %v1207 = vmax.f32 %v1199, 0.0
      %v1208 = vmax.f32 %v1200, 0.0
      %v1209 = vsub.f32 %v1119, %v1145
      %v1210 = vsub.f32 %v1120, %v1146
      %v1211 = vsub.f32 %v1121, %v1147
      %v1212 = vsub.f32 %v1122, %v1148
      %v1213 = vsub.f32 %v1123, %v1149
      %v1214 = vsub.f32 %v1124, %v1150
      %v1215 = vsub.f32 %v1125, %v1151
      %v1216 = vsub.f32 %v1126, %v1152
      %v1217 = vadd.f32 %v1201, 1e-05
      %v1218 = vadd.f32 %v1202, 1e-05
      %v1219 = vadd.f32 %v1203, 1e-05
      %v1220 = vadd.f32 %v1204, 1e-05
      %v1221 = vadd.f32 %v1205, 1e-05
      %v1222 = vadd.f32 %v1206, 1e-05
      %v1223 = vadd.f32 %v1207, 1e-05
      %v1224 = vadd.f32 %v1208, 1e-05
      %v1225 = vrsqrt.pop %v1217
      %v1226 = vmul.f32 %v1225, %v1217
      %v1227 = vmul.f32 %v1226, %v1225
      %v1228 = vmul.f32 0.5, %v1227
      %v1229 = vsub.f32 1.5, %v1228
      %v1230 = vmul.f32 %v1225, %v1229
      %vm1231 = vweird.f32 %v1217
      %vm1232 = vweird.f32 %v1225
      %vm1233 = vmor %vm1231, %vm1232
      %v1234 = vsel %vm1233, %v1225, %v1230
      %v1235 = vrsqrt.pop %v1218
      %v1236 = vmul.f32 %v1235, %v1218
      %v1237 = vmul.f32 %v1236, %v1235
      %v1238 = vmul.f32 0.5, %v1237
      %v1239 = vsub.f32 1.5, %v1238
      %v1240 = vmul.f32 %v1235, %v1239
      %vm1241 = vweird.f32 %v1218
      %vm1242 = vweird.f32 %v1235
      %vm1243 = vmor %vm1241, %vm1242
      %v1244 = vsel %vm1243, %v1235, %v1240
      %v1245 = vrsqrt.pop %v1219
      %v1246 = vmul.f32 %v1245, %v1219
      %v1247 = vmul.f32 %v1246, %v1245
      %v1248 = vmul.f32 0.5, %v1247
      %v1249 = vsub.f32 1.5, %v1248
      %v1250 = vmul.f32 %v1245, %v1249
      %vm1251 = vweird.f32 %v1219
      %vm1252 = vweird.f32 %v1245
      %vm1253 = vmor %vm1251, %vm1252
      %v1254 = vsel %vm1253, %v1245, %v1250
      %v1255 = vrsqrt.pop %v1220
      %v1256 = vmul.f32 %v1255, %v1220
      %v1257 = vmul.f32 %v1256, %v1255
      %v1258 = vmul.f32 0.5, %v1257
      %v1259 = vsub.f32 1.5, %v1258
      %v1260 = vmul.f32 %v1255, %v1259
      %vm1261 = vweird.f32 %v1220
      %vm1262 = vweird.f32 %v1255
      %vm1263 = vmor %vm1261, %vm1262
      %v1264 = vsel %vm1263, %v1255, %v1260
      %v1265 = vrsqrt.pop %v1221
      %v1266 = vmul.f32 %v1265, %v1221
      %v1267 = vmul.f32 %v1266, %v1265
      %v1268 = vmul.f32 0.5, %v1267
      %v1269 = vsub.f32 1.5, %v1268
      %v1270 = vmul.f32 %v1265, %v1269
      %vm1271 = vweird.f32 %v1221
      %vm1272 = vweird.f32 %v1265
      %vm1273 = vmor %vm1271, %vm1272
      %v1274 = vsel %vm1273, %v1265, %v1270
      %v1275 = vrsqrt.pop %v1222
      %v1276 = vmul.f32 %v1275, %v1222
      %v1277 = vmul.f32 %v1276, %v1275
      %v1278 = vmul.f32 0.5, %v1277
      %v1279 = vsub.f32 1.5, %v1278
      %v1280 = vmul.f32 %v1275, %v1279
      %vm1281 = vweird.f32 %v1222
      %vm1282 = vweird.f32 %v1275
      %vm1283 = vmor %vm1281, %vm1282
      %v1284 = vsel %vm1283, %v1275, %v1280
      %v1285 = vrsqrt.pop %v1223
      %v1286 = vmul.f32 %v1285, %v1223
      %v1287 = vmul.f32 %v1286, %v1285
      %v1288 = vmul.f32 0.5, %v1287
      %v1289 = vsub.f32 1.5, %v1288
      %v1290 = vmul.f32 %v1285, %v1289
      %vm1291 = vweird.f32 %v1223
      %vm1292 = vweird.f32 %v1285
      %vm1293 = vmor %vm1291, %vm1292
      %v1294 = vsel %vm1293, %v1285, %v1290
      %v1295 = vrsqrt.pop %v1224
      %v1296 = vmul.f32 %v1295, %v1224
      %v1297 = vmul.f32 %v1296, %v1295
      %v1298 = vmul.f32 0.5, %v1297
      %v1299 = vsub.f32 1.5, %v1298
      %v1300 = vmul.f32 %v1295, %v1299
      %vm1301 = vweird.f32 %v1224
      %vm1302 = vweird.f32 %v1295
      %vm1303 = vmor %vm1301, %vm1302
      %v1304 = vsel %vm1303, %v1295, %v1300
      %v1305 = vmul.f32 %v1209, %v1234
      %v1306 = vmul.f32 %v1210, %v1244
      %v1307 = vmul.f32 %v1211, %v1254
      %v1308 = vmul.f32 %v1212, %v1264
      %v1309 = vmul.f32 %v1213, %v1274
      %v1310 = vmul.f32 %v1214, %v1284
      %v1311 = vmul.f32 %v1215, %v1294
      %v1312 = vmul.f32 %v1216, %v1304
      %v1314 = vperm.slane %v1127, 0
      %v1316 = vmul.f32 %v1305, %v1314
      %v1317 = vmul.f32 %v1306, %v1314
      %v1318 = vmul.f32 %v1307, %v1314
      %v1319 = vmul.f32 %v1308, %v1314
      %v1320 = vmul.f32 %v1309, %v1314
      %v1321 = vmul.f32 %v1310, %v1314
      %v1322 = vmul.f32 %v1311, %v1314
      %v1323 = vmul.f32 %v1312, %v1314
      %v1325 = vperm.slane %v1128, 0
      %v1327 = vadd.f32 %v1316, %v1325
      %v1328 = vadd.f32 %v1317, %v1325
      %v1329 = vadd.f32 %v1318, %v1325
      %v1330 = vadd.f32 %v1319, %v1325
      %v1331 = vadd.f32 %v1320, %v1325
      %v1332 = vadd.f32 %v1321, %v1325
      %v1333 = vadd.f32 %v1322, %v1325
      %v1334 = vadd.f32 %v1323, %v1325
      %v1335 = vpack.c.bf16 %v1328, %v1327
      %v1336 = vpack.c.bf16 %v1330, %v1329
      %v1337 = vpack.c.bf16 %v1332, %v1331
      %v1338 = vpack.c.bf16 %v1334, %v1333
      %v1339 = vld [vmem:[%s7] sm:$0xf]
      %v1340 = vld [vmem:[%s7 + $0x4] sm:$0xf]
      %v1341 = vld [vmem:[%s7 + $0x8] sm:$0xf]
      %v1342 = vld [vmem:[%s7 + $0xc] sm:$0xf]
      %v1343 = vld [vmem:[%s7 + $0x10] sm:$0xf]
      %v1344 = vld [vmem:[%s7 + $0x14] sm:$0xf]
      %v1345 = vld [vmem:[%s7 + $0x18] sm:$0xf]
      %v1346 = vld [vmem:[%s7 + $0x1c] sm:$0xf]
      %v1347 = vld [vmem:[%s7 + $0x20] sm:$0xf]
      %v1348 = vld [vmem:[%s7 + $0x24] sm:$0xf]
      %v1349 = vld [vmem:[%s7 + $0x28] sm:$0xf]
      %v1350 = vld [vmem:[%s7 + $0x2c] sm:$0xf]
      %v1351 = vld [vmem:[%s7 + $0x30] sm:$0xf]
      %v1352 = vld [vmem:[%s7 + $0x34] sm:$0xf]
      %v1353 = vld [vmem:[%s7 + $0x38] sm:$0xf]
      %v1354 = vld [vmem:[%s7 + $0x3c] sm:$0xf]
      %v1355 = vld [vmem:[%s8] sm:$0x1]
      %v1357 = vperm.slane %v1355, 0
      %v1375 = vunpack.c.l.b16 %v1339
      %v1376 = vunpack.c.l.b16 %v1340
      %v1377 = vunpack.c.l.b16 %v1341
      %v1378 = vunpack.c.l.b16 %v1342
      %v1379 = vunpack.c.l.b16 %v1343
      %v1380 = vunpack.c.l.b16 %v1344
      %v1381 = vunpack.c.l.b16 %v1345
      %v1382 = vunpack.c.l.b16 %v1346
      %v1383 = vunpack.c.l.b16 %v1347
      %v1384 = vunpack.c.l.b16 %v1348
      %v1385 = vunpack.c.l.b16 %v1349
      %v1386 = vunpack.c.l.b16 %v1350
      %v1387 = vunpack.c.l.b16 %v1351
      %v1388 = vunpack.c.l.b16 %v1352
      %v1389 = vunpack.c.l.b16 %v1353
      %v1390 = vunpack.c.l.b16 %v1354
      %v1391 = vpack.c.b16 %v1376, %v1375
      %v1392 = vpack.c.b16 %v1378, %v1377
      %v1393 = vpack.c.b16 %v1380, %v1379
      %v1394 = vpack.c.b16 %v1382, %v1381
      %v1395 = vpack.c.b16 %v1384, %v1383
      %v1396 = vpack.c.b16 %v1386, %v1385
      %v1397 = vpack.c.b16 %v1388, %v1387
      %v1398 = vpack.c.b16 %v1390, %v1389
      %1407 = vmatpush.bf16.msra.mxu0 %v1398
      %1408 = vmatpush.bf16.msra.mxu0 %v1397
      %1409 = vmatpush.bf16.msra.mxu0 %v1396
      %1410 = vmatpush.bf16.msra.mxu0 %v1395
      %1411 = vmatpush.bf16.msra.mxu0 %v1394
      %1412 = vmatpush.bf16.msra.mxu0 %v1393
      %1413 = vmatpush.bf16.msra.mxu0 %v1392
      %1414 = vmatpush.bf16.msra.mxu0 %v1391
      %1415 = vmatmul.bf16.gmra.mxu0 %v1335
      %v1416 = vpop.f32.mrf.mxu0
      %v1417 = vadd.f32 %v1357, %v1416
      %v1418 = vpop.f32.mrf.mxu0
      %v1419 = vadd.f32 %v1357, %v1418
      %1420 = vmatmul.bf16.gmra.mxu0 %v1336
      %v1421 = vpop.f32.mrf.mxu0
      %v1422 = vadd.f32 %v1357, %v1421
      %v1423 = vpop.f32.mrf.mxu0
      %v1424 = vadd.f32 %v1357, %v1423
      %1425 = vmatmul.bf16.gmra.mxu0 %v1337
      %v1426 = vpop.f32.mrf.mxu0
      %v1427 = vadd.f32 %v1357, %v1426
      %v1428 = vpop.f32.mrf.mxu0
      %v1429 = vadd.f32 %v1357, %v1428
      %1430 = vmatmul.bf16.gmra.mxu0 %v1338
      %v1431 = vpop.f32.mrf.mxu0
      %v1432 = vadd.f32 %v1357, %v1431
      %v1433 = vpop.f32.mrf.mxu0
      %v1434 = vadd.f32 %v1357, %v1433
      %1435 = vdwg.mxu0
      %v1436 = vmul.f32 %v1417, %v1417
      %v1437 = vmul.f32 %v1419, %v1419
      %v1438 = vmul.f32 %v1422, %v1422
      %v1439 = vmul.f32 %v1424, %v1424
      %v1440 = vmul.f32 %v1427, %v1427
      %v1441 = vmul.f32 %v1429, %v1429
      %v1442 = vmul.f32 %v1432, %v1432
      %v1443 = vmul.f32 %v1434, %v1434
      %v1444 = vmul.f32 %v1417, %v1436
      %v1445 = vmul.f32 %v1419, %v1437
      %v1446 = vmul.f32 %v1422, %v1438
      %v1447 = vmul.f32 %v1424, %v1439
      %v1448 = vmul.f32 %v1427, %v1440
      %v1449 = vmul.f32 %v1429, %v1441
      %v1450 = vmul.f32 %v1432, %v1442
      %v1451 = vmul.f32 %v1434, %v1443
      %v1452 = vmul.f32 %v1444, 0.044715
      %v1453 = vmul.f32 %v1445, 0.044715
      %v1454 = vmul.f32 %v1446, 0.044715
      %v1455 = vmul.f32 %v1447, 0.044715
      %v1456 = vmul.f32 %v1448, 0.044715
      %v1457 = vmul.f32 %v1449, 0.044715
      %v1458 = vmul.f32 %v1450, 0.044715
      %v1459 = vmul.f32 %v1451, 0.044715
      %v1460 = vadd.f32 %v1417, %v1452
      %v1461 = vadd.f32 %v1419, %v1453
      %v1462 = vadd.f32 %v1422, %v1454
      %v1463 = vadd.f32 %v1424, %v1455
      %v1464 = vadd.f32 %v1427, %v1456
      %v1465 = vadd.f32 %v1429, %v1457
      %v1466 = vadd.f32 %v1432, %v1458
      %v1467 = vadd.f32 %v1434, %v1459
      %v1468 = vmul.f32 %v1460, 0.7978846
      %v1469 = vmul.f32 %v1461, 0.7978846
      %v1470 = vmul.f32 %v1462, 0.7978846
      %v1471 = vmul.f32 %v1463, 0.7978846
      %v1472 = vmul.f32 %v1464, 0.7978846
      %v1473 = vmul.f32 %v1465, 0.7978846
      %v1474 = vmul.f32 %v1466, 0.7978846
      %v1475 = vmul.f32 %v1467, 0.7978846
      %v1476 = vtanh.pop %v1468
      %v1477 = vtanh.pop %v1469
      %v1478 = vtanh.pop %v1470
      %v1479 = vtanh.pop %v1471
      %v1480 = vtanh.pop %v1472
      %v1481 = vtanh.pop %v1473
      %v1482 = vtanh.pop %v1474
      %v1483 = vtanh.pop %v1475
      %v1484 = vadd.f32 %v1476, 1.0
      %v1485 = vadd.f32 %v1477, 1.0
      %v1486 = vadd.f32 %v1478, 1.0
      %v1487 = vadd.f32 %v1479, 1.0
      %v1488 = vadd.f32 %v1480, 1.0
      %v1489 = vadd.f32 %v1481, 1.0
      %v1490 = vadd.f32 %v1482, 1.0
      %v1491 = vadd.f32 %v1483, 1.0
      %v1492 = vmul.f32 %v1484, 0.5
      %v1493 = vmul.f32 %v1485, 0.5
      %v1494 = vmul.f32 %v1486, 0.5
      %v1495 = vmul.f32 %v1487, 0.5
      %v1496 = vmul.f32 %v1488, 0.5
      %v1497 = vmul.f32 %v1489, 0.5
      %v1498 = vmul.f32 %v1490, 0.5
      %v1499 = vmul.f32 %v1491, 0.5
      %v1500 = vmul.f32 %v1417, %v1492
      %v1501 = vmul.f32 %v1419, %v1493
      %v1502 = vmul.f32 %v1422, %v1494
      %v1503 = vmul.f32 %v1424, %v1495
      %v1504 = vmul.f32 %v1427, %v1496
      %v1505 = vmul.f32 %v1429, %v1497
      %v1506 = vmul.f32 %v1432, %v1498
      %v1507 = vmul.f32 %v1434, %v1499
      %v1508 = vpack.c.bf16 %v1501, %v1500
      %v1509 = vpack.c.bf16 %v1503, %v1502
      %v1510 = vpack.c.bf16 %v1505, %v1504
      %v1511 = vpack.c.bf16 %v1507, %v1506
      %v1512 = vld [vmem:[%s9] sm:$0xf]
      %v1513 = vld [vmem:[%s9 + $0x4] sm:$0xf]
      %v1514 = vld [vmem:[%s9 + $0x8] sm:$0xf]
      %v1515 = vld [vmem:[%s9 + $0xc] sm:$0xf]
      %v1516 = vld [vmem:[%s9 + $0x10] sm:$0xf]
      %v1517 = vld [vmem:[%s9 + $0x14] sm:$0xf]
      %v1518 = vld [vmem:[%s9 + $0x18] sm:$0xf]
      %v1519 = vld [vmem:[%s9 + $0x1c] sm:$0xf]
      %v1520 = vld [vmem:[%s9 + $0x20] sm:$0xf]
      %v1521 = vld [vmem:[%s9 + $0x24] sm:$0xf]
      %v1522 = vld [vmem:[%s9 + $0x28] sm:$0xf]
      %v1523 = vld [vmem:[%s9 + $0x2c] sm:$0xf]
      %v1524 = vld [vmem:[%s9 + $0x30] sm:$0xf]
      %v1525 = vld [vmem:[%s9 + $0x34] sm:$0xf]
      %v1526 = vld [vmem:[%s9 + $0x38] sm:$0xf]
      %v1527 = vld [vmem:[%s9 + $0x3c] sm:$0xf]
      %v1528 = vld [vmem:[%s10] sm:$0x1]
      %v1530 = vperm.slane %v1528, 0
      %v1548 = vunpack.c.l.b16 %v1512
      %v1549 = vunpack.c.l.b16 %v1513
      %v1550 = vunpack.c.l.b16 %v1514
      %v1551 = vunpack.c.l.b16 %v1515
      %v1552 = vunpack.c.l.b16 %v1516
      %v1553 = vunpack.c.l.b16 %v1517
      %v1554 = vunpack.c.l.b16 %v1518
      %v1555 = vunpack.c.l.b16 %v1519
      %v1556 = vunpack.c.l.b16 %v1520
      %v1557 = vunpack.c.l.b16 %v1521
      %v1558 = vunpack.c.l.b16 %v1522
      %v1559 = vunpack.c.l.b16 %v1523
      %v1560 = vunpack.c.l.b16 %v1524
      %v1561 = vunpack.c.l.b16 %v1525
      %v1562 = vunpack.c.l.b16 %v1526
      %v1563 = vunpack.c.l.b16 %v1527
      %v1564 = vpack.c.b16 %v1549, %v1548
      %v1565 = vpack.c.b16 %v1551, %v1550
      %v1566 = vpack.c.b16 %v1553, %v1552
      %v1567 = vpack.c.b16 %v1555, %v1554
      %v1568 = vpack.c.b16 %v1557, %v1556
      %v1569 = vpack.c.b16 %v1559, %v1558
      %v1570 = vpack.c.b16 %v1561, %v1560
      %v1571 = vpack.c.b16 %v1563, %v1562
      %1580 = vmatpush.bf16.msra.mxu0 %v1571
      %1581 = vmatpush.bf16.msra.mxu0 %v1570
      %1582 = vmatpush.bf16.msra.mxu0 %v1569
      %1583 = vmatpush.bf16.msra.mxu0 %v1568
      %1584 = vmatpush.bf16.msra.mxu0 %v1567
      %1585 = vmatpush.bf16.msra.mxu0 %v1566
      %1586 = vmatpush.bf16.msra.mxu0 %v1565
      %1587 = vmatpush.bf16.msra.mxu0 %v1564
      %1588 = vmatmul.bf16.gmra.mxu0 %v1508
      %v1589 = vpop.f32.mrf.mxu0
      %v1590 = vadd.f32 %v1530, %v1589
      %v1591 = vpop.f32.mrf.mxu0
      %v1592 = vadd.f32 %v1530, %v1591
      %1593 = vmatmul.bf16.gmra.mxu0 %v1509
      %v1594 = vpop.f32.mrf.mxu0
      %v1595 = vadd.f32 %v1530, %v1594
      %v1596 = vpop.f32.mrf.mxu0
      %v1597 = vadd.f32 %v1530, %v1596
      %1598 = vmatmul.bf16.gmra.mxu0 %v1510
      %v1599 = vpop.f32.mrf.mxu0
      %v1600 = vadd.f32 %v1530, %v1599
      %v1601 = vpop.f32.mrf.mxu0
      %v1602 = vadd.f32 %v1530, %v1601
      %1603 = vmatmul.bf16.gmra.mxu0 %v1511
      %v1604 = vpop.f32.mrf.mxu0
      %v1605 = vadd.f32 %v1530, %v1604
      %v1606 = vpop.f32.mrf.mxu0
      %v1607 = vadd.f32 %v1530, %v1606
      %1608 = vdwg.mxu0
      %v1609 = vadd.f32 %v1119, %v1590
      %v1610 = vadd.f32 %v1120, %v1592
      %v1611 = vadd.f32 %v1121, %v1595
      %v1612 = vadd.f32 %v1122, %v1597
      %v1613 = vadd.f32 %v1123, %v1600
      %v1614 = vadd.f32 %v1124, %v1602
      %v1615 = vadd.f32 %v1125, %v1605
      %v1616 = vadd.f32 %v1126, %v1607
      %v1617 = vld [vmem:[%s11] sm:$0x1]
      %v1618 = vld [vmem:[%s12] sm:$0x1]
      %1619 = vadd.xlane.f32.xlu0 %v1609
      %v1620 = vpop.xlane.xlu0 %1619
      %1621 = vadd.xlane.f32.xlu0 %v1610
      %v1622 = vpop.xlane.xlu0 %1621
      %1623 = vadd.xlane.f32.xlu0 %v1611
      %v1624 = vpop.xlane.xlu0 %1623
      %1625 = vadd.xlane.f32.xlu0 %v1612
      %v1626 = vpop.xlane.xlu0 %1625
      %1627 = vadd.xlane.f32.xlu0 %v1613
      %v1628 = vpop.xlane.xlu0 %1627
      %1629 = vadd.xlane.f32.xlu0 %v1614
      %v1630 = vpop.xlane.xlu0 %1629
      %1631 = vadd.xlane.f32.xlu0 %v1615
      %v1632 = vpop.xlane.xlu0 %1631
      %1633 = vadd.xlane.f32.xlu0 %v1616
      %v1634 = vpop.xlane.xlu0 %1633
      %v1635 = vmul.f32 %v1620, 0.0625
      %v1636 = vmul.f32 %v1622, 0.0625
      %v1637 = vmul.f32 %v1624, 0.0625
      %v1638 = vmul.f32 %v1626, 0.0625
      %v1639 = vmul.f32 %v1628, 0.0625
      %v1640 = vmul.f32 %v1630, 0.0625
      %v1641 = vmul.f32 %v1632, 0.0625
      %v1642 = vmul.f32 %v1634, 0.0625
      %v1643 = vmul.f32 %v1609, %v1609
      %v1644 = vmul.f32 %v1610, %v1610
      %v1645 = vmul.f32 %v1611, %v1611
      %v1646 = vmul.f32 %v1612, %v1612
      %v1647 = vmul.f32 %v1613, %v1613
      %v1648 = vmul.f32 %v1614, %v1614
      %v1649 = vmul.f32 %v1615, %v1615
      %v1650 = vmul.f32 %v1616, %v1616
      %1651 = vadd.xlane.f32.xlu0 %v1643
      %v1652 = vpop.xlane.xlu0 %1651
      %1653 = vadd.xlane.f32.xlu0 %v1644
      %v1654 = vpop.xlane.xlu0 %1653
      %1655 = vadd.xlane.f32.xlu0 %v1645
      %v1656 = vpop.xlane.xlu0 %1655
      %1657 = vadd.xlane.f32.xlu0 %v1646
      %v1658 = vpop.xlane.xlu0 %1657
      %1659 = vadd.xlane.f32.xlu0 %v1647
      %v1660 = vpop.xlane.xlu0 %1659
      %1661 = vadd.xlane.f32.xlu0 %v1648
      %v1662 = vpop.xlane.xlu0 %1661
      %1663 = vadd.xlane.f32.xlu0 %v1649
      %v1664 = vpop.xlane.xlu0 %1663
      %1665 = vadd.xlane.f32.xlu0 %v1650
      %v1666 = vpop.xlane.xlu0 %1665
      %v1667 = vmul.f32 %v1652, 0.0625
      %v1668 = vmul.f32 %v1654, 0.0625
      %v1669 = vmul.f32 %v1656, 0.0625
      %v1670 = vmul.f32 %v1658, 0.0625
      %v1671 = vmul.f32 %v1660, 0.0625
      %v1672 = vmul.f32 %v1662, 0.0625
      %v1673 = vmul.f32 %v1664, 0.0625
      %v1674 = vmul.f32 %v1666, 0.0625
      %v1675 = vmul.f32 %v1635, %v1635
      %v1676 = vmul.f32 %v1636, %v1636
      %v1677 = vmul.f32 %v1637, %v1637
      %v1678 = vmul.f32 %v1638, %v1638
      %v1679 = vmul.f32 %v1639, %v1639
      %v1680 = vmul.f32 %v1640, %v1640
      %v1681 = vmul.f32 %v1641, %v1641
      %v1682 = vmul.f32 %v1642, %v1642
      %v1683 = vsub.f32 %v1667, %v1675
      %v1684 = vsub.f32 %v1668, %v1676
      %v1685 = vsub.f32 %v1669, %v1677
      %v1686 = vsub.f32 %v1670, %v1678
      %v1687 = vsub.f32 %v1671, %v1679
      %v1688 = vsub.f32 %v1672, %v1680
      %v1689 = vsub.f32 %v1673, %v1681
      %v1690 = vsub.f32 %v1674, %v1682
      %v1691 = vmax.f32 %v1683, 0.0
      %v1692 = vmax.f32 %v1684, 0.0
      %v1693 = vmax.f32 %v1685, 0.0
      %v1694 = vmax.f32 %v1686, 0.0
      %v1695 = vmax.f32 %v1687, 0.0
      %v1696 = vmax.f32 %v1688, 0.0
      %v1697 = vmax.f32 %v1689, 0.0
      %v1698 = vmax.f32 %v1690, 0.0
      %v1699 = vsub.f32 %v1609, %v1635
      %v1700 = vsub.f32 %v1610, %v1636
      %v1701 = vsub.f32 %v1611, %v1637
      %v1702 = vsub.f32 %v1612, %v1638
      %v1703 = vsub.f32 %v1613, %v1639
      %v1704 = vsub.f32 %v1614, %v1640
      %v1705 = vsub.f32 %v1615, %v1641
      %v1706 = vsub.f32 %v1616, %v1642
      %v1707 = vadd.f32 %v1691, 1e-05
      %v1708 = vadd.f32 %v1692, 1e-05
      %v1709 = vadd.f32 %v1693, 1e-05
      %v1710 = vadd.f32 %v1694, 1e-05
      %v1711 = vadd.f32 %v1695, 1e-05
      %v1712 = vadd.f32 %v1696, 1e-05
      %v1713 = vadd.f32 %v1697, 1e-05
      %v1714 = vadd.f32 %v1698, 1e-05
      %v1715 = vrsqrt.pop %v1707
      %v1716 = vmul.f32 %v1715, %v1707
      %v1717 = vmul.f32 %v1716, %v1715
      %v1718 = vmul.f32 0.5, %v1717
      %v1719 = vsub.f32 1.5, %v1718
      %v1720 = vmul.f32 %v1715, %v1719
      %vm1721 = vweird.f32 %v1707
      %vm1722 = vweird.f32 %v1715
      %vm1723 = vmor %vm1721, %vm1722
      %v1724 = vsel %vm1723, %v1715, %v1720
      %v1725 = vrsqrt.pop %v1708
      %v1726 = vmul.f32 %v1725, %v1708
      %v1727 = vmul.f32 %v1726, %v1725
      %v1728 = vmul.f32 0.5, %v1727
      %v1729 = vsub.f32 1.5, %v1728
      %v1730 = vmul.f32 %v1725, %v1729
      %vm1731 = vweird.f32 %v1708
      %vm1732 = vweird.f32 %v1725
      %vm1733 = vmor %vm1731, %vm1732
      %v1734 = vsel %vm1733, %v1725, %v1730
      %v1735 = vrsqrt.pop %v1709
      %v1736 = vmul.f32 %v1735, %v1709
      %v1737 = vmul.f32 %v1736, %v1735
      %v1738 = vmul.f32 0.5, %v1737
      %v1739 = vsub.f32 1.5, %v1738
      %v1740 = vmul.f32 %v1735, %v1739
      %vm1741 = vweird.f32 %v1709
      %vm1742 = vweird.f32 %v1735
      %vm1743 = vmor %vm1741, %vm1742
      %v1744 = vsel %vm1743, %v1735, %v1740
      %v1745 = vrsqrt.pop %v1710
      %v1746 = vmul.f32 %v1745, %v1710
      %v1747 = vmul.f32 %v1746, %v1745
      %v1748 = vmul.f32 0.5, %v1747
      %v1749 = vsub.f32 1.5, %v1748
      %v1750 = vmul.f32 %v1745, %v1749
      %vm1751 = vweird.f32 %v1710
      %vm1752 = vweird.f32 %v1745
      %vm1753 = vmor %vm1751, %vm1752
      %v1754 = vsel %vm1753, %v1745, %v1750
      %v1755 = vrsqrt.pop %v1711
      %v1756 = vmul.f32 %v1755, %v1711
      %v1757 = vmul.f32 %v1756, %v1755
      %v1758 = vmul.f32 0.5, %v1757
      %v1759 = vsub.f32 1.5, %v1758
      %v1760 = vmul.f32 %v1755, %v1759
      %vm1761 = vweird.f32 %v1711
      %vm1762 = vweird.f32 %v1755
      %vm1763 = vmor %vm1761, %vm1762
      %v1764 = vsel %vm1763, %v1755, %v1760
      %v1765 = vrsqrt.pop %v1712
      %v1766 = vmul.f32 %v1765, %v1712
      %v1767 = vmul.f32 %v1766, %v1765
      %v1768 = vmul.f32 0.5, %v1767
      %v1769 = vsub.f32 1.5, %v1768
      %v1770 = vmul.f32 %v1765, %v1769
      %vm1771 = vweird.f32 %v1712
      %vm1772 = vweird.f32 %v1765
      %vm1773 = vmor %vm1771, %vm1772
      %v1774 = vsel %vm1773, %v1765, %v1770
      %v1775 = vrsqrt.pop %v1713
      %v1776 = vmul.f32 %v1775, %v1713
      %v1777 = vmul.f32 %v1776, %v1775
      %v1778 = vmul.f32 0.5, %v1777
      %v1779 = vsub.f32 1.5, %v1778
      %v1780 = vmul.f32 %v1775, %v1779
      %vm1781 = vweird.f32 %v1713
      %vm1782 = vweird.f32 %v1775
      %vm1783 = vmor %vm1781, %vm1782
      %v1784 = vsel %vm1783, %v1775, %v1780
      %v1785 = vrsqrt.pop %v1714
      %v1786 = vmul.f32 %v1785, %v1714
      %v1787 = vmul.f32 %v1786, %v1785
      %v1788 = vmul.f32 0.5, %v1787
      %v1789 = vsub.f32 1.5, %v1788
      %v1790 = vmul.f32 %v1785, %v1789
      %vm1791 = vweird.f32 %v1714
      %vm1792 = vweird.f32 %v1785
      %vm1793 = vmor %vm1791, %vm1792
      %v1794 = vsel %vm1793, %v1785, %v1790
      %v1795 = vmul.f32 %v1699, %v1724
      %v1796 = vmul.f32 %v1700, %v1734
      %v1797 = vmul.f32 %v1701, %v1744
      %v1798 = vmul.f32 %v1702, %v1754
      %v1799 = vmul.f32 %v1703, %v1764
      %v1800 = vmul.f32 %v1704, %v1774
      %v1801 = vmul.f32 %v1705, %v1784
      %v1802 = vmul.f32 %v1706, %v1794
      %v1804 = vperm.slane %v1617, 0
      %v1806 = vmul.f32 %v1795, %v1804
      %v1807 = vmul.f32 %v1796, %v1804
      %v1808 = vmul.f32 %v1797, %v1804
      %v1809 = vmul.f32 %v1798, %v1804
      %v1810 = vmul.f32 %v1799, %v1804
      %v1811 = vmul.f32 %v1800, %v1804
      %v1812 = vmul.f32 %v1801, %v1804
      %v1813 = vmul.f32 %v1802, %v1804
      %v1815 = vperm.slane %v1618, 0
      %v1817 = vadd.f32 %v1806, %v1815
      %v1818 = vadd.f32 %v1807, %v1815
      %v1819 = vadd.f32 %v1808, %v1815
      %v1820 = vadd.f32 %v1809, %v1815
      %v1821 = vadd.f32 %v1810, %v1815
      %v1822 = vadd.f32 %v1811, %v1815
      %v1823 = vadd.f32 %v1812, %v1815
      %v1824 = vadd.f32 %v1813, %v1815
      %v1825 = vpack.c.bf16 %v1817, %v1817
      %v1826 = vpack.c.bf16 %v1818, %v1818
      %v1827 = vpack.c.bf16 %v1819, %v1819
      %v1828 = vpack.c.bf16 %v1820, %v1820
      %v1829 = vpack.c.bf16 %v1821, %v1821
      %v1830 = vpack.c.bf16 %v1822, %v1822
      %v1831 = vpack.c.bf16 %v1823, %v1823
      %v1832 = vpack.c.bf16 %v1824, %v1824
      %1833 = vst [vmem:[%s445] sm:$0xf] %v1825
      %1834 = vst [vmem:[%s445 + $0x4] sm:$0xf] %v1826
      %1835 = vst [vmem:[%s445 + $0x8] sm:$0xf] %v1827
      %1836 = vst [vmem:[%s445 + $0xc] sm:$0xf] %v1828
      %1837 = vst [vmem:[%s445 + $0x10] sm:$0xf] %v1829
      %1838 = vst [vmem:[%s445 + $0x14] sm:$0xf] %v1830
      %1839 = vst [vmem:[%s445 + $0x18] sm:$0xf] %v1831
      %1840 = vst [vmem:[%s445 + $0x1c] sm:$0xf] %v1832
      %s1841 = smul.u32 8, %s24
      %p1842 = scmp.lt.s32.totalorder %s1841, 15
      %s1843 = scalar_select %p1842, %s1841, 15
      %s1844 = smul.addr %s1843, 4
      %s1845 = scalar_lea.vmem %s13, %s1844
      // Predicated region
      $region73: #{transwcd_single_forward.5} parent=71 // pred_check
        %p1846 = pneg %p320
      $region74: #{transwcd_single_forward.5} parent=71 // pred_check_branch
        %1848 = sbr.rel (%p1846) target = $region76
      $region75: #{transwcd_single_forward.5} parent=71 // pred_region
        %s1849 = smul.u32 8, %s24
      $region76: #{transwcd_single_forward.5} parent=71 // pred_fallthru
        _
    $region72: #{transwcd_single_forward.5} parent=5 // pred_fallthru
      _
    %p1850 = scmp.le.s32.totalorder 2, %s19
    // Predicated region
    $region77: #{transwcd_single_forward.5} parent=5 // pred_check
      %p1851 = pneg %p1850
    $region78: #{transwcd_single_forward.5} parent=5 // pred_check_branch
      %1853 = sbr.rel (%p1851) target = $region80
    $region79: #{transwcd_single_forward.5} parent=5 // pred_region
      %s1854 = ssub.s32 %s19, 2
      // Predicated region
      $region81: #{transwcd_single_forward.5} parent=79 // pred_check
        %p1855 = pneg %p326
      $region82: #{transwcd_single_forward.5} parent=79 // pred_check_branch
        %1857 = sbr.rel (%p1855) target = $region84
      $region83: #{transwcd_single_forward.5} parent=79 // pred_region
        %s1858 = smul.u32 8, %s25
        %p1859 = scmp.lt.s32.totalorder %s1858, 15
        %s1860 = scalar_select %p1859, %s1858, 15
        %s1861 = smul.addr %s1860, 4
        %s1862 = scalar_lea.vmem %s13, %s1861
      $region84: #{transwcd_single_forward.5} parent=79 // pred_fallthru
        _
    $region80: #{transwcd_single_forward.5} parent=5 // pred_fallthru
      _
  $region6: #{transwcd_single_forward.5} parent=0 // loop_footer
    %s23 = sadd.s32 1, %s19
  $region7: #{transwcd_single_forward.5} parent=0 // loop_footer_branch
    %18 = sbr.rel target = $region3
  $region8: #{transwcd_single_forward.5} parent=0 // loop_exit
    _

// kernel: transwcd_single_forward.6
$region0: #{transwcd_single_forward.6}
  #allocation0 [shape = 'u32[]', space=smem, size = 0x4, offset = 0x4, fixed_abs, tag = 'smem constant byte address 0x4 - core index']
  #allocation1 [shape = 'u32[72,128]{1,0:T(1,128)}', space=vmem, size = 0x9000, scoped, tag = 'internal scratch']
  %s0 = inlined_call_operand.vmem [shape: bf16[32,512], index: 0, kind: input, shape index: {}]
  %s1 = inlined_call_operand.vmem [shape: bf16[512,128], index: 1, kind: input, shape index: {}]
  %s2 = inlined_call_operand.vmem [shape: f32[1,128], index: 2, kind: input, shape index: {}]
  %s3 = inlined_call_operand.vmem [shape: f32[1,128], index: 3, kind: input, shape index: {}]
  %s4 = inlined_call_operand.vmem [shape: f32[1,128], index: 4, kind: input, shape index: {}]
  %s5 = inlined_call_operand.vmem [shape: f32[1,128], index: 5, kind: input, shape index: {}]
  %s6 = inlined_call_operand.vmem [shape: f32[1,128], index: 6, kind: input, shape index: {}]
  %s7 = inlined_call_operand.vmem [shape: bf16[128,128], index: 7, kind: input, shape index: {}]
  %s8 = inlined_call_operand.vmem [shape: f32[1,128], index: 8, kind: input, shape index: {}]
  %s9 = inlined_call_operand.vmem [shape: bf16[128,128], index: 9, kind: input, shape index: {}]
  %s10 = inlined_call_operand.vmem [shape: f32[1,128], index: 10, kind: input, shape index: {}]
  %s11 = inlined_call_operand.vmem [shape: f32[1,128], index: 11, kind: input, shape index: {}]
  %s12 = inlined_call_operand.hbm [shape: f32[1,128], index: 12, kind: input, shape index: {}]
  %s13 = inlined_call_operand.vmem [shape: bf16[32,128], index: 13, kind: output, shape index: {}]
  %s14 = sld [smem:[#allocation0]]
  $region89: #{transwcd_single_forward.6} parent=0
    _
  %s16 = ssub.s32 1, %s14
  %s17 = scalar_select 0, %s16, %s14
  $region1: #{transwcd_single_forward.6} parent=0
    #allocation2 [shape = 'u8[512]{0}', space=vmem, size = 0x400, scoped, tag = 'input window, operand 12, single buffered']
    #allocation3 [shape = 's32[2]{0}', space=sflag, size = 0x8, scoped, tag = 'scoped memory for transwcd_single_forward.6']
    %18 = vsyncpa [#allocation3], 0
    loop: start=0, step=1, limit=4
    $region2: #{transwcd_single_forward.6} parent=1 // loop_pre_header
      _
    $region3: #{transwcd_single_forward.6} parent=1 // loop_header
      %s20 = sphi 0, %s24
      %p21 = scmp.ge.s32.totalorder %s20, 4
      %s30 = sphi 0, %s32
      %s33 = sphi 0, %s30
      %s34 = sphi 0, %s33
      %s50 = sphi 0, %s34
      %s54 = sphi 0, %s54
      %s56 = sphi 0, %s54
      %s57 = sphi 0, %s56
      %s71 = sphi 0, %s57
      %s75 = sphi 0, %s75
      %s77 = sphi 0, %s75
      %s78 = sphi 0, %s77
      %s92 = sphi 0, %s78
      %s96 = sphi 0, %s96
      %s98 = sphi 0, %s96
      %s99 = sphi 0, %s98
      %s113 = sphi 0, %s99
      %s117 = sphi 0, %s117
      %s119 = sphi 0, %s117
      %s120 = sphi 0, %s119
      %s134 = sphi 0, %s120
      %s138 = sphi 0, %s138
      %s140 = sphi 0, %s138
      %s141 = sphi 0, %s140
      %s155 = sphi 0, %s141
      %s159 = sphi 0, %s159
      %s161 = sphi 0, %s159
      %s162 = sphi 0, %s161
      %s176 = sphi 0, %s162
      %s180 = sphi 0, %s180
      %s182 = sphi 0, %s180
      %s183 = sphi 0, %s182
      %s197 = sphi 0, %s183
      %s201 = sphi 0, %s201
      %s203 = sphi 0, %s201
      %s204 = sphi 0, %s203
      %s218 = sphi 0, %s204
      %s222 = sphi 0, %s222
      %s224 = sphi 0, %s222
      %s225 = sphi 0, %s224
      %s239 = sphi 0, %s225
      %s243 = sphi 0, %s243
      %s245 = sphi 0, %s243
      %s246 = sphi 0, %s245
      %s260 = sphi 0, %s246
      %s264 = sphi 0, %s264
      %s266 = sphi 0, %s264
      %s267 = sphi 0, %s266
      %s281 = sphi 0, %s267
      %s285 = sphi 0, %s285
      %s287 = sphi 0, %s285
      %s288 = sphi 0, %s287
      %s302 = sphi 0, %s288
      %s308 = sphi 0, %s310
      %s311 = sphi 0, %s308
      %s312 = sphi 0, %s311
      %s328 = sphi 0, %s312
    $region4: #{transwcd_single_forward.6} parent=1 // loop_header_branch
      %23 = sbr.rel (%p21) target = $region8
    $region5: #{transwcd_single_forward.6} parent=1 // loop_body
      %s25 = ssub.s32 %s20, 1
      %s26 = ssub.s32 %s20, 2
      %s27 = sadd.s32 %s20, 1
      %s28 = ssub.s32 %s20, %s27
      %p29 = scmp.eq.s32.totalorder %s28, 0
      %s31 = sadd.s32 %s30, 1
      %s32 = scalar_select %p29, %s30, %s31
      %p35 = pneg %p29
      %p36 = scmp.eq.s32.totalorder %s20, 1
      %p37 = por %p35, %p36
      %p38 = scmp.ne.s32.totalorder %s30, %s33
      %p39 = scmp.eq.s32.totalorder %s20, 0
      %p40 = por %p38, %p39
      %p41 = scmp.ne.s32.totalorder %s30, %s33
      %p42 = scmp.eq.s32.totalorder %s25, 1
      %p43 = por %p41, %p42
      %p44 = scmp.ne.s32.totalorder %s33, %s34
      %p45 = scmp.eq.s32.totalorder %s25, 0
      %p46 = por %p44, %p45
      %p47 = scmp.ne.s32.totalorder %s33, %s34
      %p48 = scmp.eq.s32.totalorder %s26, 1
      %p49 = por %p47, %p48
      %p51 = scmp.ne.s32.totalorder %s34, %s50
      %p52 = scmp.eq.s32.totalorder %s26, 0
      %p53 = por %p51, %p52
      %s55 = sadd.s32 %s54, 1
      %p58 = scmp.eq.s32.totalorder %s20, 1
      %p59 = scmp.ne.s32.totalorder %s54, %s56
      %p60 = scmp.eq.s32.totalorder %s20, 0
      %p61 = por %p59, %p60
      %p62 = scmp.ne.s32.totalorder %s54, %s56
      %p63 = scmp.eq.s32.totalorder %s25, 1
      %p64 = por %p62, %p63
      %p65 = scmp.ne.s32.totalorder %s56, %s57
      %p66 = scmp.eq.s32.totalorder %s25, 0
      %p67 = por %p65, %p66
      %p68 = scmp.ne.s32.totalorder %s56, %s57
      %p69 = scmp.eq.s32.totalorder %s26, 1
      %p70 = por %p68, %p69
      %p72 = scmp.ne.s32.totalorder %s57, %s71
      %p73 = scmp.eq.s32.totalorder %s26, 0
      %p74 = por %p72, %p73
      %s76 = sadd.s32 %s75, 1
      %p79 = scmp.eq.s32.totalorder %s20, 1
      %p80 = scmp.ne.s32.totalorder %s75, %s77
      %p81 = scmp.eq.s32.totalorder %s20, 0
      %p82 = por %p80, %p81
      %p83 = scmp.ne.s32.totalorder %s75, %s77
      %p84 = scmp.eq.s32.totalorder %s25, 1
      %p85 = por %p83, %p84
      %p86 = scmp.ne.s32.totalorder %s77, %s78
      %p87 = scmp.eq.s32.totalorder %s25, 0
      %p88 = por %p86, %p87
      %p89 = scmp.ne.s32.totalorder %s77, %s78
      %p90 = scmp.eq.s32.totalorder %s26, 1
      %p91 = por %p89, %p90
      %p93 = scmp.ne.s32.totalorder %s78, %s92
      %p94 = scmp.eq.s32.totalorder %s26, 0
      %p95 = por %p93, %p94
      %s97 = sadd.s32 %s96, 1
      %p100 = scmp.eq.s32.totalorder %s20, 1
      %p101 = scmp.ne.s32.totalorder %s96, %s98
      %p102 = scmp.eq.s32.totalorder %s20, 0
      %p103 = por %p101, %p102
      %p104 = scmp.ne.s32.totalorder %s96, %s98
      %p105 = scmp.eq.s32.totalorder %s25, 1
      %p106 = por %p104, %p105
      %p107 = scmp.ne.s32.totalorder %s98, %s99
      %p108 = scmp.eq.s32.totalorder %s25, 0
      %p109 = por %p107, %p108
      %p110 = scmp.ne.s32.totalorder %s98, %s99
      %p111 = scmp.eq.s32.totalorder %s26, 1
      %p112 = por %p110, %p111
      %p114 = scmp.ne.s32.totalorder %s99, %s113
      %p115 = scmp.eq.s32.totalorder %s26, 0
      %p116 = por %p114, %p115
      %s118 = sadd.s32 %s117, 1
      %p121 = scmp.eq.s32.totalorder %s20, 1
      %p122 = scmp.ne.s32.totalorder %s117, %s119
      %p123 = scmp.eq.s32.totalorder %s20, 0
      %p124 = por %p122, %p123
      %p125 = scmp.ne.s32.totalorder %s117, %s119
      %p126 = scmp.eq.s32.totalorder %s25, 1
      %p127 = por %p125, %p126
      %p128 = scmp.ne.s32.totalorder %s119, %s120
      %p129 = scmp.eq.s32.totalorder %s25, 0
      %p130 = por %p128, %p129
      %p131 = scmp.ne.s32.totalorder %s119, %s120
      %p132 = scmp.eq.s32.totalorder %s26, 1
      %p133 = por %p131, %p132
      %p135 = scmp.ne.s32.totalorder %s120, %s134
      %p136 = scmp.eq.s32.totalorder %s26, 0
      %p137 = por %p135, %p136
      %s139 = sadd.s32 %s138, 1
      %p142 = scmp.eq.s32.totalorder %s20, 1
      %p143 = scmp.ne.s32.totalorder %s138, %s140
      %p144 = scmp.eq.s32.totalorder %s20, 0
      %p145 = por %p143, %p144
      %p146 = scmp.ne.s32.totalorder %s138, %s140
      %p147 = scmp.eq.s32.totalorder %s25, 1
      %p148 = por %p146, %p147
      %p149 = scmp.ne.s32.totalorder %s140, %s141
      %p150 = scmp.eq.s32.totalorder %s25, 0
      %p151 = por %p149, %p150
      %p152 = scmp.ne.s32.totalorder %s140, %s141
      %p153 = scmp.eq.s32.totalorder %s26, 1
      %p154 = por %p152, %p153
      %p156 = scmp.ne.s32.totalorder %s141, %s155
      %p157 = scmp.eq.s32.totalorder %s26, 0
      %p158 = por %p156, %p157
      %s160 = sadd.s32 %s159, 1
      %p163 = scmp.eq.s32.totalorder %s20, 1
      %p164 = scmp.ne.s32.totalorder %s159, %s161
      %p165 = scmp.eq.s32.totalorder %s20, 0
      %p166 = por %p164, %p165
      %p167 = scmp.ne.s32.totalorder %s159, %s161
      %p168 = scmp.eq.s32.totalorder %s25, 1
      %p169 = por %p167, %p168
      %p170 = scmp.ne.s32.totalorder %s161, %s162
      %p171 = scmp.eq.s32.totalorder %s25, 0
      %p172 = por %p170, %p171
      %p173 = scmp.ne.s32.totalorder %s161, %s162
      %p174 = scmp.eq.s32.totalorder %s26, 1
      %p175 = por %p173, %p174
      %p177 = scmp.ne.s32.totalorder %s162, %s176
      %p178 = scmp.eq.s32.totalorder %s26, 0
      %p179 = por %p177, %p178
      %s181 = sadd.s32 %s180, 1
      %p184 = scmp.eq.s32.totalorder %s20, 1
      %p185 = scmp.ne.s32.totalorder %s180, %s182
      %p186 = scmp.eq.s32.totalorder %s20, 0
      %p187 = por %p185, %p186
      %p188 = scmp.ne.s32.totalorder %s180, %s182
      %p189 = scmp.eq.s32.totalorder %s25, 1
      %p190 = por %p188, %p189
      %p191 = scmp.ne.s32.totalorder %s182, %s183
      %p192 = scmp.eq.s32.totalorder %s25, 0
      %p193 = por %p191, %p192
      %p194 = scmp.ne.s32.totalorder %s182, %s183
      %p195 = scmp.eq.s32.totalorder %s26, 1
      %p196 = por %p194, %p195
      %p198 = scmp.ne.s32.totalorder %s183, %s197
      %p199 = scmp.eq.s32.totalorder %s26, 0
      %p200 = por %p198, %p199
      %s202 = sadd.s32 %s201, 1
      %p205 = scmp.eq.s32.totalorder %s20, 1
      %p206 = scmp.ne.s32.totalorder %s201, %s203
      %p207 = scmp.eq.s32.totalorder %s20, 0
      %p208 = por %p206, %p207
      %p209 = scmp.ne.s32.totalorder %s201, %s203
      %p210 = scmp.eq.s32.totalorder %s25, 1
      %p211 = por %p209, %p210
      %p212 = scmp.ne.s32.totalorder %s203, %s204
      %p213 = scmp.eq.s32.totalorder %s25, 0
      %p214 = por %p212, %p213
      %p215 = scmp.ne.s32.totalorder %s203, %s204
      %p216 = scmp.eq.s32.totalorder %s26, 1
      %p217 = por %p215, %p216
      %p219 = scmp.ne.s32.totalorder %s204, %s218
      %p220 = scmp.eq.s32.totalorder %s26, 0
      %p221 = por %p219, %p220
      %s223 = sadd.s32 %s222, 1
      %p226 = scmp.eq.s32.totalorder %s20, 1
      %p227 = scmp.ne.s32.totalorder %s222, %s224
      %p228 = scmp.eq.s32.totalorder %s20, 0
      %p229 = por %p227, %p228
      %p230 = scmp.ne.s32.totalorder %s222, %s224
      %p231 = scmp.eq.s32.totalorder %s25, 1
      %p232 = por %p230, %p231
      %p233 = scmp.ne.s32.totalorder %s224, %s225
      %p234 = scmp.eq.s32.totalorder %s25, 0
      %p235 = por %p233, %p234
      %p236 = scmp.ne.s32.totalorder %s224, %s225
      %p237 = scmp.eq.s32.totalorder %s26, 1
      %p238 = por %p236, %p237
      %p240 = scmp.ne.s32.totalorder %s225, %s239
      %p241 = scmp.eq.s32.totalorder %s26, 0
      %p242 = por %p240, %p241
      %s244 = sadd.s32 %s243, 1
      %p247 = scmp.eq.s32.totalorder %s20, 1
      %p248 = scmp.ne.s32.totalorder %s243, %s245
      %p249 = scmp.eq.s32.totalorder %s20, 0
      %p250 = por %p248, %p249
      %p251 = scmp.ne.s32.totalorder %s243, %s245
      %p252 = scmp.eq.s32.totalorder %s25, 1
      %p253 = por %p251, %p252
      %p254 = scmp.ne.s32.totalorder %s245, %s246
      %p255 = scmp.eq.s32.totalorder %s25, 0
      %p256 = por %p254, %p255
      %p257 = scmp.ne.s32.totalorder %s245, %s246
      %p258 = scmp.eq.s32.totalorder %s26, 1
      %p259 = por %p257, %p258
      %p261 = scmp.ne.s32.totalorder %s246, %s260
      %p262 = scmp.eq.s32.totalorder %s26, 0
      %p263 = por %p261, %p262
      %s265 = sadd.s32 %s264, 1
      %p268 = scmp.eq.s32.totalorder %s20, 1
      %p269 = scmp.ne.s32.totalorder %s264, %s266
      %p270 = scmp.eq.s32.totalorder %s20, 0
      %p271 = por %p269, %p270
      %p272 = scmp.ne.s32.totalorder %s264, %s266
      %p273 = scmp.eq.s32.totalorder %s25, 1
      %p274 = por %p272, %p273
      %p275 = scmp.ne.s32.totalorder %s266, %s267
      %p276 = scmp.eq.s32.totalorder %s25, 0
      %p277 = por %p275, %p276
      %p278 = scmp.ne.s32.totalorder %s266, %s267
      %p279 = scmp.eq.s32.totalorder %s26, 1
      %p280 = por %p278, %p279
      %p282 = scmp.ne.s32.totalorder %s267, %s281
      %p283 = scmp.eq.s32.totalorder %s26, 0
      %p284 = por %p282, %p283
      %s286 = sadd.s32 %s285, 1
      %p289 = scmp.eq.s32.totalorder %s20, 1
      %p290 = scmp.ne.s32.totalorder %s285, %s287
      %p291 = scmp.eq.s32.totalorder %s20, 0
      %p292 = por %p290, %p291
      %p293 = scmp.ne.s32.totalorder %s285, %s287
      %p294 = scmp.eq.s32.totalorder %s25, 1
      %p295 = por %p293, %p294
      %p296 = scmp.ne.s32.totalorder %s287, %s288
      %p297 = scmp.eq.s32.totalorder %s25, 0
      %p298 = por %p296, %p297
      %p299 = scmp.ne.s32.totalorder %s287, %s288
      %p300 = scmp.eq.s32.totalorder %s26, 1
      %p301 = por %p299, %p300
      %p303 = scmp.ne.s32.totalorder %s288, %s302
      %p304 = scmp.eq.s32.totalorder %s26, 0
      %p305 = por %p303, %p304
      %s306 = ssub.s32 %s20, %s27
      %p307 = scmp.eq.s32.totalorder %s306, 0
      %s309 = sadd.s32 %s308, 1
      %s310 = scalar_select %p307, %s308, %s309
      %p313 = pneg %p307
      %p314 = scmp.eq.s32.totalorder %s20, 1
      %p315 = por %p313, %p314
      %p316 = scmp.ne.s32.totalorder %s308, %s311
      %p317 = scmp.eq.s32.totalorder %s20, 0
      %p318 = por %p316, %p317
      %p319 = scmp.ne.s32.totalorder %s308, %s311
      %p320 = scmp.eq.s32.totalorder %s25, 1
      %p321 = por %p319, %p320
      %p322 = scmp.ne.s32.totalorder %s311, %s312
      %p323 = scmp.eq.s32.totalorder %s25, 0
      %p324 = por %p322, %p323
      %p325 = scmp.ne.s32.totalorder %s311, %s312
      %p326 = scmp.eq.s32.totalorder %s26, 1
      %p327 = por %p325, %p326
      %p329 = scmp.ne.s32.totalorder %s312, %s328
      %p330 = scmp.eq.s32.totalorder %s26, 0
      %p331 = por %p329, %p330
      %p332 = scmp.le.s32.totalorder 1, %s20
      %p333 = scmp.lt.s32.totalorder %s20, 3
      %p334 = pnand %p332, %p333
      %p335 = pneg %p334
      // Predicated region
      $region9: #{transwcd_single_forward.6} parent=5 // pred_check
        _
      $region10: #{transwcd_single_forward.6} parent=5 // pred_check_branch
        %337 = sbr.rel (%p334) target = $region12
      $region11: #{transwcd_single_forward.6} parent=5 // pred_region
        %s338 = ssub.s32 %s20, 1
        // Predicated region
        $region13: #{transwcd_single_forward.6} parent=11 // pred_check
          %p339 = pneg %p67
        $region14: #{transwcd_single_forward.6} parent=11 // pred_check_branch
          %341 = sbr.rel (%p339) target = $region16
        $region15: #{transwcd_single_forward.6} parent=11 // pred_region
          _
        $region16: #{transwcd_single_forward.6} parent=11 // pred_fallthru
          _
        // Predicated region
        $region17: #{transwcd_single_forward.6} parent=11 // pred_check
          %p342 = pneg %p88
        $region18: #{transwcd_single_forward.6} parent=11 // pred_check_branch
          %344 = sbr.rel (%p342) target = $region20
        $region19: #{transwcd_single_forward.6} parent=11 // pred_region
          _
        $region20: #{transwcd_single_forward.6} parent=11 // pred_fallthru
          _
        // Predicated region
        $region21: #{transwcd_single_forward.6} parent=11 // pred_check
          %p345 = pneg %p109
        $region22: #{transwcd_single_forward.6} parent=11 // pred_check_branch
          %347 = sbr.rel (%p345) target = $region24
        $region23: #{transwcd_single_forward.6} parent=11 // pred_region
          _
        $region24: #{transwcd_single_forward.6} parent=11 // pred_fallthru
          _
        // Predicated region
        $region25: #{transwcd_single_forward.6} parent=11 // pred_check
          %p348 = pneg %p130
        $region26: #{transwcd_single_forward.6} parent=11 // pred_check_branch
          %350 = sbr.rel (%p348) target = $region28
        $region27: #{transwcd_single_forward.6} parent=11 // pred_region
          _
        $region28: #{transwcd_single_forward.6} parent=11 // pred_fallthru
          _
        // Predicated region
        $region29: #{transwcd_single_forward.6} parent=11 // pred_check
          %p351 = pneg %p151
        $region30: #{transwcd_single_forward.6} parent=11 // pred_check_branch
          %353 = sbr.rel (%p351) target = $region32
        $region31: #{transwcd_single_forward.6} parent=11 // pred_region
          _
        $region32: #{transwcd_single_forward.6} parent=11 // pred_fallthru
          _
        // Predicated region
        $region33: #{transwcd_single_forward.6} parent=11 // pred_check
          %p354 = pneg %p172
        $region34: #{transwcd_single_forward.6} parent=11 // pred_check_branch
          %356 = sbr.rel (%p354) target = $region36
        $region35: #{transwcd_single_forward.6} parent=11 // pred_region
          _
        $region36: #{transwcd_single_forward.6} parent=11 // pred_fallthru
          _
        // Predicated region
        $region37: #{transwcd_single_forward.6} parent=11 // pred_check
          %p357 = pneg %p193
        $region38: #{transwcd_single_forward.6} parent=11 // pred_check_branch
          %359 = sbr.rel (%p357) target = $region40
        $region39: #{transwcd_single_forward.6} parent=11 // pred_region
          _
        $region40: #{transwcd_single_forward.6} parent=11 // pred_fallthru
          _
        // Predicated region
        $region41: #{transwcd_single_forward.6} parent=11 // pred_check
          %p360 = pneg %p214
        $region42: #{transwcd_single_forward.6} parent=11 // pred_check_branch
          %362 = sbr.rel (%p360) target = $region44
        $region43: #{transwcd_single_forward.6} parent=11 // pred_region
          _
        $region44: #{transwcd_single_forward.6} parent=11 // pred_fallthru
          _
        // Predicated region
        $region45: #{transwcd_single_forward.6} parent=11 // pred_check
          %p363 = pneg %p235
        $region46: #{transwcd_single_forward.6} parent=11 // pred_check_branch
          %365 = sbr.rel (%p363) target = $region48
        $region47: #{transwcd_single_forward.6} parent=11 // pred_region
          _
        $region48: #{transwcd_single_forward.6} parent=11 // pred_fallthru
          _
        // Predicated region
        $region49: #{transwcd_single_forward.6} parent=11 // pred_check
          %p366 = pneg %p256
        $region50: #{transwcd_single_forward.6} parent=11 // pred_check_branch
          %368 = sbr.rel (%p366) target = $region52
        $region51: #{transwcd_single_forward.6} parent=11 // pred_region
          _
        $region52: #{transwcd_single_forward.6} parent=11 // pred_fallthru
          _
        // Predicated region
        $region53: #{transwcd_single_forward.6} parent=11 // pred_check
          %p369 = pneg %p277
        $region54: #{transwcd_single_forward.6} parent=11 // pred_check_branch
          %371 = sbr.rel (%p369) target = $region56
        $region55: #{transwcd_single_forward.6} parent=11 // pred_region
          _
        $region56: #{transwcd_single_forward.6} parent=11 // pred_fallthru
          _
        // Predicated region
        $region57: #{transwcd_single_forward.6} parent=11 // pred_check
          %p372 = pneg %p298
        $region58: #{transwcd_single_forward.6} parent=11 // pred_check_branch
          %374 = sbr.rel (%p372) target = $region60
        $region59: #{transwcd_single_forward.6} parent=11 // pred_region
          %376 = vsyncadd [#allocation3], 0
          %s378 = sshll.u32 %s12, 4
          %s379 = int_to_ptr.hbm [resolvable:$true] %s378
          %s380 = sshll.u32 [#allocation2], 4
          %s381 = int_to_ptr.vmem [resolvable:$true] %s380
          %383 = dma.hbm_to_vmem [thread:$0]  %s379, 16, %s381, [#allocation3]
        $region60: #{transwcd_single_forward.6} parent=11 // pred_fallthru
          _
      $region12: #{transwcd_single_forward.6} parent=5 // pred_fallthru
        _
      %p384 = scmp.lt.s32.totalorder %s20, 2
      // Predicated region
      $region61: #{transwcd_single_forward.6} parent=5 // pred_check
        %p385 = pneg %p384
      $region62: #{transwcd_single_forward.6} parent=5 // pred_check_branch
        %387 = sbr.rel (%p385) target = $region64
      $region63: #{transwcd_single_forward.6} parent=5 // pred_region
        // Predicated region
        $region65: #{transwcd_single_forward.6} parent=63 // pred_check
          %p388 = pneg %p40
        $region66: #{transwcd_single_forward.6} parent=63 // pred_check_branch
          %390 = sbr.rel (%p388) target = $region68
        $region67: #{transwcd_single_forward.6} parent=63 // pred_region
          %s391 = smul.u32 2, %s20
          %p392 = scmp.lt.s32.totalorder %s391, 3
          %s393 = scalar_select %p392, %s391, 3
          %s394 = smul.addr %s393, 4
          %s395 = smul.addr %s394, 4
          %s396 = scalar_lea.vmem %s0, %s395
          %s397 = smul.u32 2, %s20
        $region68: #{transwcd_single_forward.6} parent=63 // pred_fallthru
          _
      $region64: #{transwcd_single_forward.6} parent=5 // pred_fallthru
        _
      %p398 = scmp.le.s32.totalorder 1, %s20
      %p399 = scmp.lt.s32.totalorder %s20, 3
      %p400 = pnand %p398, %p399
      %p401 = pneg %p400
      // Predicated region
      $region69: #{transwcd_single_forward.6} parent=5 // pred_check
        _
      $region70: #{transwcd_single_forward.6} parent=5 // pred_check_branch
        %403 = sbr.rel (%p400) target = $region72
      $region71: #{transwcd_single_forward.6} parent=5 // pred_region
        %s404 = ssub.s32 %s20, 1
        // Predicated region
        $region73: #{transwcd_single_forward.6} parent=71 // pred_check
          %p405 = pneg %p298
        $region74: #{transwcd_single_forward.6} parent=71 // pred_check_branch
          %407 = sbr.rel (%p405) target = $region76
        $region75: #{transwcd_single_forward.6} parent=71 // pred_region
          %409 = dma.done [#allocation3], 16
        $region76: #{transwcd_single_forward.6} parent=71 // pred_fallthru
          _
        %s410 = smul.u32 2, %s25
        %p411 = scmp.lt.s32.totalorder %s410, 3
        %s412 = scalar_select %p411, %s410, 3
        %s413 = smul.addr %s412, 4
        %s414 = smul.addr %s413, 4
        %s415 = scalar_lea.vmem %s0, %s414
        %p416 = pneg %p46
        %p417 = pneg %p43
        %p418 = pneg %p67
        %p419 = pneg %p64
        %p420 = pneg %p88
        %p421 = pneg %p85
        %p422 = pneg %p109
        %p423 = pneg %p106
        %p424 = pneg %p130
        %p425 = pneg %p127
        %p426 = pneg %p151
        %p427 = pneg %p148
        %p428 = pneg %p172
        %p429 = pneg %p169
        %p430 = pneg %p193
        %p431 = pneg %p190
        %p432 = pneg %p214
        %p433 = pneg %p211
        %p434 = pneg %p235
        %p435 = pneg %p232
        %p436 = pneg %p256
        %p437 = pneg %p253
        %p438 = pneg %p277
        %p439 = pneg %p274
        %p440 = pneg %p298
        %p441 = pneg %p295
        %p442 = pneg %p324
        %p443 = pneg %p321
        %s444 = smul.u32 2, %s25
        %p445 = scmp.lt.s32.totalorder %s444, 3
        %s446 = scalar_select %p445, %s444, 3
        %s447 = smul.addr %s446, 4
        %s448 = scalar_lea.vmem %s13, %s447
        %s449 = smul.u32 2, %s25
        %p450 = scmp.lt.s32.totalorder %s449, 3
        %s451 = scalar_select %p450, %s449, 3
        %s452 = smul.addr %s451, 4
        %s453 = smul.addr %s452, 4
        %s454 = scalar_lea.vmem %s0, %s453
        %s455 = smul.u32 2, %s25
        %s456 = smul.u32 2, %s25
        %p457 = scmp.lt.s32.totalorder %s456, 3
        %s458 = scalar_select %p457, %s456, 3
        %s459 = smul.addr %s458, 4
        %s460 = scalar_lea.vmem %s13, %s459
        %s461 = smul.u32 2, %s25
        %v462 = vld [vmem:[%s454] sm:$0xff]
        %v463 = vld [vmem:[%s454 + $0x8] sm:$0xff]
        %v464 = vld [vmem:[%s454 + $0x10] sm:$0xff]
        %v465 = vld [vmem:[%s454 + $0x18] sm:$0xff]
        %v466 = vld [vmem:[%s1] sm:$0xf]
        %v467 = vld [vmem:[%s1 + $0x4] sm:$0xf]
        %v468 = vld [vmem:[%s1 + $0x8] sm:$0xf]
        %v469 = vld [vmem:[%s1 + $0xc] sm:$0xf]
        %v470 = vld [vmem:[%s1 + $0x10] sm:$0xf]
        %v471 = vld [vmem:[%s1 + $0x14] sm:$0xf]
        %v472 = vld [vmem:[%s1 + $0x18] sm:$0xf]
        %v473 = vld [vmem:[%s1 + $0x1c] sm:$0xf]
        %v474 = vld [vmem:[%s1 + $0x20] sm:$0xf]
        %v475 = vld [vmem:[%s1 + $0x24] sm:$0xf]
        %v476 = vld [vmem:[%s1 + $0x28] sm:$0xf]
        %v477 = vld [vmem:[%s1 + $0x2c] sm:$0xf]
        %v478 = vld [vmem:[%s1 + $0x30] sm:$0xf]
        %v479 = vld [vmem:[%s1 + $0x34] sm:$0xf]
        %v480 = vld [vmem:[%s1 + $0x38] sm:$0xf]
        %v481 = vld [vmem:[%s1 + $0x3c] sm:$0xf]
        %v482 = vld [vmem:[%s1 + $0x40] sm:$0xf]
        %v483 = vld [vmem:[%s1 + $0x44] sm:$0xf]
        %v484 = vld [vmem:[%s1 + $0x48] sm:$0xf]
        %v485 = vld [vmem:[%s1 + $0x4c] sm:$0xf]
        %v486 = vld [vmem:[%s1 + $0x50] sm:$0xf]
        %v487 = vld [vmem:[%s1 + $0x54] sm:$0xf]
        %v488 = vld [vmem:[%s1 + $0x58] sm:$0xf]
        %v489 = vld [vmem:[%s1 + $0x5c] sm:$0xf]
        %v490 = vld [vmem:[%s1 + $0x60] sm:$0xf]
        %v491 = vld [vmem:[%s1 + $0x64] sm:$0xf]
        %v492 = vld [vmem:[%s1 + $0x68] sm:$0xf]
        %v493 = vld [vmem:[%s1 + $0x6c] sm:$0xf]
        %v494 = vld [vmem:[%s1 + $0x70] sm:$0xf]
        %v495 = vld [vmem:[%s1 + $0x74] sm:$0xf]
        %v496 = vld [vmem:[%s1 + $0x78] sm:$0xf]
        %v497 = vld [vmem:[%s1 + $0x7c] sm:$0xf]
        %v498 = vld [vmem:[%s1 + $0x80] sm:$0xf]
        %v499 = vld [vmem:[%s1 + $0x84] sm:$0xf]
        %v500 = vld [vmem:[%s1 + $0x88] sm:$0xf]
        %v501 = vld [vmem:[%s1 + $0x8c] sm:$0xf]
        %v502 = vld [vmem:[%s1 + $0x90] sm:$0xf]
        %v503 = vld [vmem:[%s1 + $0x94] sm:$0xf]
        %v504 = vld [vmem:[%s1 + $0x98] sm:$0xf]
        %v505 = vld [vmem:[%s1 + $0x9c] sm:$0xf]
        %v506 = vld [vmem:[%s1 + $0xa0] sm:$0xf]
        %v507 = vld [vmem:[%s1 + $0xa4] sm:$0xf]
        %v508 = vld [vmem:[%s1 + $0xa8] sm:$0xf]
        %v509 = vld [vmem:[%s1 + $0xac] sm:$0xf]
        %v510 = vld [vmem:[%s1 + $0xb0] sm:$0xf]
        %v511 = vld [vmem:[%s1 + $0xb4] sm:$0xf]
        %v512 = vld [vmem:[%s1 + $0xb8] sm:$0xf]
        %v513 = vld [vmem:[%s1 + $0xbc] sm:$0xf]
        %v514 = vld [vmem:[%s1 + $0xc0] sm:$0xf]
        %v515 = vld [vmem:[%s1 + $0xc4] sm:$0xf]
        %v516 = vld [vmem:[%s1 + $0xc8] sm:$0xf]
        %v517 = vld [vmem:[%s1 + $0xcc] sm:$0xf]
        %v518 = vld [vmem:[%s1 + $0xd0] sm:$0xf]
        %v519 = vld [vmem:[%s1 + $0xd4] sm:$0xf]
        %v520 = vld [vmem:[%s1 + $0xd8] sm:$0xf]
        %v521 = vld [vmem:[%s1 + $0xdc] sm:$0xf]
        %v522 = vld [vmem:[%s1 + $0xe0] sm:$0xf]
        %v523 = vld [vmem:[%s1 + $0xe4] sm:$0xf]
        %v524 = vld [vmem:[%s1 + $0xe8] sm:$0xf]
        %v525 = vld [vmem:[%s1 + $0xec] sm:$0xf]
        %v526 = vld [vmem:[%s1 + $0xf0] sm:$0xf]
        %v527 = vld [vmem:[%s1 + $0xf4] sm:$0xf]
        %v528 = vld [vmem:[%s1 + $0xf8] sm:$0xf]
        %v529 = vld [vmem:[%s1 + $0xfc] sm:$0xf]
        %v530 = vld [vmem:[%s2] sm:$0x1]
        %v532 = vperm.slane %v530, 0
        %v538 = vunpack.c.l.b16 %v462
        %v539 = vunpack.c.h.b16 %v462
        %v540 = vunpack.c.l.b16 %v463
        %v541 = vunpack.c.h.b16 %v463
        %v542 = vunpack.c.l.b16 %v464
        %v543 = vunpack.c.h.b16 %v464
        %v544 = vunpack.c.l.b16 %v465
        %v545 = vunpack.c.h.b16 %v465
        %v546 = vpack.c.b16 %v542, %v538
        %v547 = vpack.c.b16 %v543, %v539
        %v548 = vpack.c.b16 %v544, %v540
        %v549 = vpack.c.b16 %v545, %v541
        %v618 = vunpack.c.l.b16 %v466
        %v619 = vunpack.c.l.b16 %v467
        %v620 = vunpack.c.l.b16 %v468
        %v621 = vunpack.c.l.b16 %v469
        %v622 = vunpack.c.l.b16 %v470
        %v623 = vunpack.c.l.b16 %v471
        %v624 = vunpack.c.l.b16 %v472
        %v625 = vunpack.c.l.b16 %v473
        %v626 = vunpack.c.l.b16 %v474
        %v627 = vunpack.c.l.b16 %v475
        %v628 = vunpack.c.l.b16 %v476
        %v629 = vunpack.c.l.b16 %v477
        %v630 = vunpack.c.l.b16 %v478
        %v631 = vunpack.c.l.b16 %v479
        %v632 = vunpack.c.l.b16 %v480
        %v633 = vunpack.c.l.b16 %v481
        %v634 = vunpack.c.l.b16 %v482
        %v635 = vunpack.c.l.b16 %v483
        %v636 = vunpack.c.l.b16 %v484
        %v637 = vunpack.c.l.b16 %v485
        %v638 = vunpack.c.l.b16 %v486
        %v639 = vunpack.c.l.b16 %v487
        %v640 = vunpack.c.l.b16 %v488
        %v641 = vunpack.c.l.b16 %v489
        %v642 = vunpack.c.l.b16 %v490
        %v643 = vunpack.c.l.b16 %v491
        %v644 = vunpack.c.l.b16 %v492
        %v645 = vunpack.c.l.b16 %v493
        %v646 = vunpack.c.l.b16 %v494
        %v647 = vunpack.c.l.b16 %v495
        %v648 = vunpack.c.l.b16 %v496
        %v649 = vunpack.c.l.b16 %v497
        %v650 = vunpack.c.l.b16 %v498
        %v651 = vunpack.c.l.b16 %v499
        %v652 = vunpack.c.l.b16 %v500
        %v653 = vunpack.c.l.b16 %v501
        %v654 = vunpack.c.l.b16 %v502
        %v655 = vunpack.c.l.b16 %v503
        %v656 = vunpack.c.l.b16 %v504
        %v657 = vunpack.c.l.b16 %v505
        %v658 = vunpack.c.l.b16 %v506
        %v659 = vunpack.c.l.b16 %v507
        %v660 = vunpack.c.l.b16 %v508
        %v661 = vunpack.c.l.b16 %v509
        %v662 = vunpack.c.l.b16 %v510
        %v663 = vunpack.c.l.b16 %v511
        %v664 = vunpack.c.l.b16 %v512
        %v665 = vunpack.c.l.b16 %v513
        %v666 = vunpack.c.l.b16 %v514
        %v667 = vunpack.c.l.b16 %v515
        %v668 = vunpack.c.l.b16 %v516
        %v669 = vunpack.c.l.b16 %v517
        %v670 = vunpack.c.l.b16 %v518
        %v671 = vunpack.c.l.b16 %v519
        %v672 = vunpack.c.l.b16 %v520
        %v673 = vunpack.c.l.b16 %v521
        %v674 = vunpack.c.l.b16 %v522
        %v675 = vunpack.c.l.b16 %v523
        %v676 = vunpack.c.l.b16 %v524
        %v677 = vunpack.c.l.b16 %v525
        %v678 = vunpack.c.l.b16 %v526
        %v679 = vunpack.c.l.b16 %v527
        %v680 = vunpack.c.l.b16 %v528
        %v681 = vunpack.c.l.b16 %v529
        %v682 = vpack.c.b16 %v619, %v618
        %v683 = vpack.c.b16 %v621, %v620
        %v684 = vpack.c.b16 %v623, %v622
        %v685 = vpack.c.b16 %v625, %v624
        %v686 = vpack.c.b16 %v627, %v626
        %v687 = vpack.c.b16 %v629, %v628
        %v688 = vpack.c.b16 %v631, %v630
        %v689 = vpack.c.b16 %v633, %v632
        %v690 = vpack.c.b16 %v635, %v634
        %v691 = vpack.c.b16 %v637, %v636
        %v692 = vpack.c.b16 %v639, %v638
        %v693 = vpack.c.b16 %v641, %v640
        %v694 = vpack.c.b16 %v643, %v642
        %v695 = vpack.c.b16 %v645, %v644
        %v696 = vpack.c.b16 %v647, %v646
        %v697 = vpack.c.b16 %v649, %v648
        %v698 = vpack.c.b16 %v651, %v650
        %v699 = vpack.c.b16 %v653, %v652
        %v700 = vpack.c.b16 %v655, %v654
        %v701 = vpack.c.b16 %v657, %v656
        %v702 = vpack.c.b16 %v659, %v658
        %v703 = vpack.c.b16 %v661, %v660
        %v704 = vpack.c.b16 %v663, %v662
        %v705 = vpack.c.b16 %v665, %v664
        %v706 = vpack.c.b16 %v667, %v666
        %v707 = vpack.c.b16 %v669, %v668
        %v708 = vpack.c.b16 %v671, %v670
        %v709 = vpack.c.b16 %v673, %v672
        %v710 = vpack.c.b16 %v675, %v674
        %v711 = vpack.c.b16 %v677, %v676
        %v712 = vpack.c.b16 %v679, %v678
        %v713 = vpack.c.b16 %v681, %v680
        %746 = vmatpush.bf16.msra.mxu0 %v689
        %747 = vmatpush.bf16.msra.mxu0 %v688
        %748 = vmatpush.bf16.msra.mxu0 %v687
        %749 = vmatpush.bf16.msra.mxu0 %v686
        %750 = vmatpush.bf16.msra.mxu0 %v685
        %751 = vmatpush.bf16.msra.mxu0 %v684
        %752 = vmatpush.bf16.msra.mxu0 %v683
        %753 = vmatpush.bf16.msra.mxu0 %v682
        %754 = vmatmul.bf16.gmra.mxu0 %v546
        %v755 = vpop.f32.mrf.mxu0
        %v756 = vadd.f32 %v532, %v755
        %v757 = vpop.f32.mrf.mxu0
        %v758 = vadd.f32 %v532, %v757
        %759 = vdwg.mxu0
        %760 = vmatpush.bf16.msra.mxu0 %v697
        %761 = vmatpush.bf16.msra.mxu0 %v696
        %762 = vmatpush.bf16.msra.mxu0 %v695
        %763 = vmatpush.bf16.msra.mxu0 %v694
        %764 = vmatpush.bf16.msra.mxu0 %v693
        %765 = vmatpush.bf16.msra.mxu0 %v692
        %766 = vmatpush.bf16.msra.mxu0 %v691
        %767 = vmatpush.bf16.msra.mxu0 %v690
        %768 = vmatmul.bf16.gmra.mxu0 %v547
        %v769 = vpop.f32.mrf.mxu0
        %v770 = vadd.f32 %v756, %v769
        %v771 = vpop.f32.mrf.mxu0
        %v772 = vadd.f32 %v758, %v771
        %773 = vdwg.mxu0
        %774 = vmatpush.bf16.msra.mxu0 %v705
        %775 = vmatpush.bf16.msra.mxu0 %v704
        %776 = vmatpush.bf16.msra.mxu0 %v703
        %777 = vmatpush.bf16.msra.mxu0 %v702
        %778 = vmatpush.bf16.msra.mxu0 %v701
        %779 = vmatpush.bf16.msra.mxu0 %v700
        %780 = vmatpush.bf16.msra.mxu0 %v699
        %781 = vmatpush.bf16.msra.mxu0 %v698
        %782 = vmatmul.bf16.gmra.mxu0 %v548
        %v783 = vpop.f32.mrf.mxu0
        %v784 = vadd.f32 %v770, %v783
        %v785 = vpop.f32.mrf.mxu0
        %v786 = vadd.f32 %v772, %v785
        %787 = vdwg.mxu0
        %788 = vmatpush.bf16.msra.mxu0 %v713
        %789 = vmatpush.bf16.msra.mxu0 %v712
        %790 = vmatpush.bf16.msra.mxu0 %v711
        %791 = vmatpush.bf16.msra.mxu0 %v710
        %792 = vmatpush.bf16.msra.mxu0 %v709
        %793 = vmatpush.bf16.msra.mxu0 %v708
        %794 = vmatpush.bf16.msra.mxu0 %v707
        %795 = vmatpush.bf16.msra.mxu0 %v706
        %796 = vmatmul.bf16.gmra.mxu0 %v549
        %v797 = vpop.f32.mrf.mxu0
        %v798 = vadd.f32 %v784, %v797
        %v799 = vpop.f32.mrf.mxu0
        %v800 = vadd.f32 %v786, %v799
        %801 = vdwg.mxu0
        %v802 = vld [vmem:[%s3] sm:$0x1]
        %v803 = vld [vmem:[%s4] sm:$0x1]
        %804 = vadd.xlane.f32.xlu0 %v798
        %v805 = vpop.xlane.xlu0 %804
        %806 = vadd.xlane.f32.xlu0 %v800
        %v807 = vpop.xlane.xlu0 %806
        %v808 = vmul.f32 %v805, 0.03125
        %v809 = vmul.f32 %v807, 0.03125
        %v810 = vmul.f32 %v798, %v798
        %v811 = vmul.f32 %v800, %v800
        %812 = vadd.xlane.f32.xlu0 %v810
        %v813 = vpop.xlane.xlu0 %812
        %814 = vadd.xlane.f32.xlu0 %v811
        %v815 = vpop.xlane.xlu0 %814
        %v816 = vmul.f32 %v813, 0.03125
        %v817 = vmul.f32 %v815, 0.03125
        %v818 = vmul.f32 %v808, %v808
        %v819 = vmul.f32 %v809, %v809
        %v820 = vsub.f32 %v816, %v818
        %v821 = vsub.f32 %v817, %v819
        %v822 = vmax.f32 %v820, 0.0
        %v823 = vmax.f32 %v821, 0.0
        %v824 = vsub.f32 %v798, %v808
        %v825 = vsub.f32 %v800, %v809
        %v826 = vadd.f32 %v822, 1e-05
        %v827 = vadd.f32 %v823, 1e-05
        %v828 = vrsqrt.pop %v826
        %v829 = vmul.f32 %v828, %v826
        %v830 = vmul.f32 %v829, %v828
        %v831 = vmul.f32 0.5, %v830
        %v832 = vsub.f32 1.5, %v831
        %v833 = vmul.f32 %v828, %v832
        %vm834 = vweird.f32 %v826
        %vm835 = vweird.f32 %v828
        %vm836 = vmor %vm834, %vm835
        %v837 = vsel %vm836, %v828, %v833
        %v838 = vrsqrt.pop %v827
        %v839 = vmul.f32 %v838, %v827
        %v840 = vmul.f32 %v839, %v838
        %v841 = vmul.f32 0.5, %v840
        %v842 = vsub.f32 1.5, %v841
        %v843 = vmul.f32 %v838, %v842
        %vm844 = vweird.f32 %v827
        %vm845 = vweird.f32 %v838
        %vm846 = vmor %vm844, %vm845
        %v847 = vsel %vm846, %v838, %v843
        %v848 = vmul.f32 %v824, %v837
        %v849 = vmul.f32 %v825, %v847
        %v851 = vperm.slane %v802, 0
        %v853 = vmul.f32 %v848, %v851
        %v854 = vmul.f32 %v849, %v851
        %v856 = vperm.slane %v803, 0
        %v858 = vadd.f32 %v853, %v856
        %v859 = vadd.f32 %v854, %v856
        %v860 = vld [vmem:[%s5] sm:$0x1]
        %v861 = vld [vmem:[%s6] sm:$0x1]
        %862 = vadd.xlane.f32.xlu0 %v858
        %v863 = vpop.xlane.xlu0 %862
        %864 = vadd.xlane.f32.xlu0 %v859
        %v865 = vpop.xlane.xlu0 %864
        %v866 = vmul.f32 %v863, 0.03125
        %v867 = vmul.f32 %v865, 0.03125
        %v868 = vmul.f32 %v858, %v858
        %v869 = vmul.f32 %v859, %v859
        %870 = vadd.xlane.f32.xlu0 %v868
        %v871 = vpop.xlane.xlu0 %870
        %872 = vadd.xlane.f32.xlu0 %v869
        %v873 = vpop.xlane.xlu0 %872
        %v874 = vmul.f32 %v871, 0.03125
        %v875 = vmul.f32 %v873, 0.03125
        %v876 = vmul.f32 %v866, %v866
        %v877 = vmul.f32 %v867, %v867
        %v878 = vsub.f32 %v874, %v876
        %v879 = vsub.f32 %v875, %v877
        %v880 = vmax.f32 %v878, 0.0
        %v881 = vmax.f32 %v879, 0.0
        %v882 = vsub.f32 %v858, %v866
        %v883 = vsub.f32 %v859, %v867
        %v884 = vadd.f32 %v880, 1e-05
        %v885 = vadd.f32 %v881, 1e-05
        %v886 = vrsqrt.pop %v884
        %v887 = vmul.f32 %v886, %v884
        %v888 = vmul.f32 %v887, %v886
        %v889 = vmul.f32 0.5, %v888
        %v890 = vsub.f32 1.5, %v889
        %v891 = vmul.f32 %v886, %v890
        %vm892 = vweird.f32 %v884
        %vm893 = vweird.f32 %v886
        %vm894 = vmor %vm892, %vm893
        %v895 = vsel %vm894, %v886, %v891
        %v896 = vrsqrt.pop %v885
        %v897 = vmul.f32 %v896, %v885
        %v898 = vmul.f32 %v897, %v896
        %v899 = vmul.f32 0.5, %v898
        %v900 = vsub.f32 1.5, %v899
        %v901 = vmul.f32 %v896, %v900
        %vm902 = vweird.f32 %v885
        %vm903 = vweird.f32 %v896
        %vm904 = vmor %vm902, %vm903
        %v905 = vsel %vm904, %v896, %v901
        %v906 = vmul.f32 %v882, %v895
        %v907 = vmul.f32 %v883, %v905
        %v909 = vperm.slane %v860, 0
        %v911 = vmul.f32 %v906, %v909
        %v912 = vmul.f32 %v907, %v909
        %v914 = vperm.slane %v861, 0
        %v916 = vadd.f32 %v911, %v914
        %v917 = vadd.f32 %v912, %v914
        %v918 = vpack.c.bf16 %v917, %v916
        %v919 = vld [vmem:[%s7] sm:$0xf]
        %v920 = vld [vmem:[%s7 + $0x4] sm:$0xf]
        %v921 = vld [vmem:[%s7 + $0x8] sm:$0xf]
        %v922 = vld [vmem:[%s7 + $0xc] sm:$0xf]
        %v923 = vld [vmem:[%s7 + $0x10] sm:$0xf]
        %v924 = vld [vmem:[%s7 + $0x14] sm:$0xf]
        %v925 = vld [vmem:[%s7 + $0x18] sm:$0xf]
        %v926 = vld [vmem:[%s7 + $0x1c] sm:$0xf]
        %v927 = vld [vmem:[%s7 + $0x20] sm:$0xf]
        %v928 = vld [vmem:[%s7 + $0x24] sm:$0xf]
        %v929 = vld [vmem:[%s7 + $0x28] sm:$0xf]
        %v930 = vld [vmem:[%s7 + $0x2c] sm:$0xf]
        %v931 = vld [vmem:[%s7 + $0x30] sm:$0xf]
        %v932 = vld [vmem:[%s7 + $0x34] sm:$0xf]
        %v933 = vld [vmem:[%s7 + $0x38] sm:$0xf]
        %v934 = vld [vmem:[%s7 + $0x3c] sm:$0xf]
        %v935 = vld [vmem:[%s8] sm:$0x1]
        %v937 = vperm.slane %v935, 0
        %v955 = vunpack.c.l.b16 %v919
        %v956 = vunpack.c.l.b16 %v920
        %v957 = vunpack.c.l.b16 %v921
        %v958 = vunpack.c.l.b16 %v922
        %v959 = vunpack.c.l.b16 %v923
        %v960 = vunpack.c.l.b16 %v924
        %v961 = vunpack.c.l.b16 %v925
        %v962 = vunpack.c.l.b16 %v926
        %v963 = vunpack.c.l.b16 %v927
        %v964 = vunpack.c.l.b16 %v928
        %v965 = vunpack.c.l.b16 %v929
        %v966 = vunpack.c.l.b16 %v930
        %v967 = vunpack.c.l.b16 %v931
        %v968 = vunpack.c.l.b16 %v932
        %v969 = vunpack.c.l.b16 %v933
        %v970 = vunpack.c.l.b16 %v934
        %v971 = vpack.c.b16 %v956, %v955
        %v972 = vpack.c.b16 %v958, %v957
        %v973 = vpack.c.b16 %v960, %v959
        %v974 = vpack.c.b16 %v962, %v961
        %v975 = vpack.c.b16 %v964, %v963
        %v976 = vpack.c.b16 %v966, %v965
        %v977 = vpack.c.b16 %v968, %v967
        %v978 = vpack.c.b16 %v970, %v969
        %987 = vmatpush.bf16.msra.mxu0 %v978
        %988 = vmatpush.bf16.msra.mxu0 %v977
        %989 = vmatpush.bf16.msra.mxu0 %v976
        %990 = vmatpush.bf16.msra.mxu0 %v975
        %991 = vmatpush.bf16.msra.mxu0 %v974
        %992 = vmatpush.bf16.msra.mxu0 %v973
        %993 = vmatpush.bf16.msra.mxu0 %v972
        %994 = vmatpush.bf16.msra.mxu0 %v971
        %995 = vmatmul.bf16.gmra.mxu0 %v918
        %v996 = vpop.f32.mrf.mxu0
        %v997 = vadd.f32 %v937, %v996
        %v998 = vpop.f32.mrf.mxu0
        %v999 = vadd.f32 %v937, %v998
        %1000 = vdwg.mxu0
        %v1001 = vmul.f32 %v997, %v997
        %v1002 = vmul.f32 %v999, %v999
        %v1003 = vmul.f32 %v997, %v1001
        %v1004 = vmul.f32 %v999, %v1002
        %v1005 = vmul.f32 %v1003, 0.044715
        %v1006 = vmul.f32 %v1004, 0.044715
        %v1007 = vadd.f32 %v997, %v1005
        %v1008 = vadd.f32 %v999, %v1006
        %v1009 = vmul.f32 %v1007, 0.7978846
        %v1010 = vmul.f32 %v1008, 0.7978846
        %v1011 = vtanh.pop %v1009
        %v1012 = vtanh.pop %v1010
        %v1013 = vadd.f32 %v1011, 1.0
        %v1014 = vadd.f32 %v1012, 1.0
        %v1015 = vmul.f32 %v1013, 0.5
        %v1016 = vmul.f32 %v1014, 0.5
        %v1017 = vmul.f32 %v997, %v1015
        %v1018 = vmul.f32 %v999, %v1016
        %v1019 = vpack.c.bf16 %v1018, %v1017
        %v1020 = vld [vmem:[%s9] sm:$0xf]
        %v1021 = vld [vmem:[%s9 + $0x4] sm:$0xf]
        %v1022 = vld [vmem:[%s9 + $0x8] sm:$0xf]
        %v1023 = vld [vmem:[%s9 + $0xc] sm:$0xf]
        %v1024 = vld [vmem:[%s9 + $0x10] sm:$0xf]
        %v1025 = vld [vmem:[%s9 + $0x14] sm:$0xf]
        %v1026 = vld [vmem:[%s9 + $0x18] sm:$0xf]
        %v1027 = vld [vmem:[%s9 + $0x1c] sm:$0xf]
        %v1028 = vld [vmem:[%s9 + $0x20] sm:$0xf]
        %v1029 = vld [vmem:[%s9 + $0x24] sm:$0xf]
        %v1030 = vld [vmem:[%s9 + $0x28] sm:$0xf]
        %v1031 = vld [vmem:[%s9 + $0x2c] sm:$0xf]
        %v1032 = vld [vmem:[%s9 + $0x30] sm:$0xf]
        %v1033 = vld [vmem:[%s9 + $0x34] sm:$0xf]
        %v1034 = vld [vmem:[%s9 + $0x38] sm:$0xf]
        %v1035 = vld [vmem:[%s9 + $0x3c] sm:$0xf]
        %v1036 = vld [vmem:[%s10] sm:$0x1]
        %v1038 = vperm.slane %v1036, 0
        %v1056 = vunpack.c.l.b16 %v1020
        %v1057 = vunpack.c.l.b16 %v1021
        %v1058 = vunpack.c.l.b16 %v1022
        %v1059 = vunpack.c.l.b16 %v1023
        %v1060 = vunpack.c.l.b16 %v1024
        %v1061 = vunpack.c.l.b16 %v1025
        %v1062 = vunpack.c.l.b16 %v1026
        %v1063 = vunpack.c.l.b16 %v1027
        %v1064 = vunpack.c.l.b16 %v1028
        %v1065 = vunpack.c.l.b16 %v1029
        %v1066 = vunpack.c.l.b16 %v1030
        %v1067 = vunpack.c.l.b16 %v1031
        %v1068 = vunpack.c.l.b16 %v1032
        %v1069 = vunpack.c.l.b16 %v1033
        %v1070 = vunpack.c.l.b16 %v1034
        %v1071 = vunpack.c.l.b16 %v1035
        %v1072 = vpack.c.b16 %v1057, %v1056
        %v1073 = vpack.c.b16 %v1059, %v1058
        %v1074 = vpack.c.b16 %v1061, %v1060
        %v1075 = vpack.c.b16 %v1063, %v1062
        %v1076 = vpack.c.b16 %v1065, %v1064
        %v1077 = vpack.c.b16 %v1067, %v1066
        %v1078 = vpack.c.b16 %v1069, %v1068
        %v1079 = vpack.c.b16 %v1071, %v1070
        %1088 = vmatpush.bf16.msra.mxu0 %v1079
        %1089 = vmatpush.bf16.msra.mxu0 %v1078
        %1090 = vmatpush.bf16.msra.mxu0 %v1077
        %1091 = vmatpush.bf16.msra.mxu0 %v1076
        %1092 = vmatpush.bf16.msra.mxu0 %v1075
        %1093 = vmatpush.bf16.msra.mxu0 %v1074
        %1094 = vmatpush.bf16.msra.mxu0 %v1073
        %1095 = vmatpush.bf16.msra.mxu0 %v1072
        %1096 = vmatmul.bf16.gmra.mxu0 %v1019
        %v1097 = vpop.f32.mrf.mxu0
        %v1098 = vadd.f32 %v1038, %v1097
        %v1099 = vpop.f32.mrf.mxu0
        %v1100 = vadd.f32 %v1038, %v1099
        %1101 = vdwg.mxu0
        %v1102 = vadd.f32 %v858, %v1098
        %v1103 = vadd.f32 %v859, %v1100
        %v1104 = vld [vmem:[%s11] sm:$0x1]
        %v1105 = vld [vmem:[#allocation2] sm:$0x1]
        %1106 = vadd.xlane.f32.xlu0 %v1102
        %v1107 = vpop.xlane.xlu0 %1106
        %1108 = vadd.xlane.f32.xlu0 %v1103
        %v1109 = vpop.xlane.xlu0 %1108
        %v1110 = vmul.f32 %v1107, 0.03125
        %v1111 = vmul.f32 %v1109, 0.03125
        %v1112 = vmul.f32 %v1102, %v1102
        %v1113 = vmul.f32 %v1103, %v1103
        %1114 = vadd.xlane.f32.xlu0 %v1112
        %v1115 = vpop.xlane.xlu0 %1114
        %1116 = vadd.xlane.f32.xlu0 %v1113
        %v1117 = vpop.xlane.xlu0 %1116
        %v1118 = vmul.f32 %v1115, 0.03125
        %v1119 = vmul.f32 %v1117, 0.03125
        %v1120 = vmul.f32 %v1110, %v1110
        %v1121 = vmul.f32 %v1111, %v1111
        %v1122 = vsub.f32 %v1118, %v1120
        %v1123 = vsub.f32 %v1119, %v1121
        %v1124 = vmax.f32 %v1122, 0.0
        %v1125 = vmax.f32 %v1123, 0.0
        %v1126 = vsub.f32 %v1102, %v1110
        %v1127 = vsub.f32 %v1103, %v1111
        %v1128 = vadd.f32 %v1124, 1e-05
        %v1129 = vadd.f32 %v1125, 1e-05
        %v1130 = vrsqrt.pop %v1128
        %v1131 = vmul.f32 %v1130, %v1128
        %v1132 = vmul.f32 %v1131, %v1130
        %v1133 = vmul.f32 0.5, %v1132
        %v1134 = vsub.f32 1.5, %v1133
        %v1135 = vmul.f32 %v1130, %v1134
        %vm1136 = vweird.f32 %v1128
        %vm1137 = vweird.f32 %v1130
        %vm1138 = vmor %vm1136, %vm1137
        %v1139 = vsel %vm1138, %v1130, %v1135
        %v1140 = vrsqrt.pop %v1129
        %v1141 = vmul.f32 %v1140, %v1129
        %v1142 = vmul.f32 %v1141, %v1140
        %v1143 = vmul.f32 0.5, %v1142
        %v1144 = vsub.f32 1.5, %v1143
        %v1145 = vmul.f32 %v1140, %v1144
        %vm1146 = vweird.f32 %v1129
        %vm1147 = vweird.f32 %v1140
        %vm1148 = vmor %vm1146, %vm1147
        %v1149 = vsel %vm1148, %v1140, %v1145
        %v1150 = vmul.f32 %v1126, %v1139
        %v1151 = vmul.f32 %v1127, %v1149
        %v1153 = vperm.slane %v1104, 0
        %v1155 = vmul.f32 %v1150, %v1153
        %v1156 = vmul.f32 %v1151, %v1153
        %v1158 = vperm.slane %v1105, 0
        %v1160 = vadd.f32 %v1155, %v1158
        %v1161 = vadd.f32 %v1156, %v1158
        %v1162 = vpack.c.bf16 %v1160, %v1160
        %v1163 = vpack.c.bf16 %v1161, %v1161
        %1164 = vst [vmem:[%s460] sm:$0xf] %v1162
        %1165 = vst [vmem:[%s460 + $0x4] sm:$0xf] %v1163
        %s1166 = smul.u32 2, %s25
        %p1167 = scmp.lt.s32.totalorder %s1166, 3
        %s1168 = scalar_select %p1167, %s1166, 3
        %s1169 = smul.addr %s1168, 4
        %s1170 = scalar_lea.vmem %s13, %s1169
        // Predicated region
        $region77: #{transwcd_single_forward.6} parent=71 // pred_check
          %p1171 = pneg %p321
        $region78: #{transwcd_single_forward.6} parent=71 // pred_check_branch
          %1173 = sbr.rel (%p1171) target = $region80
        $region79: #{transwcd_single_forward.6} parent=71 // pred_region
          %s1174 = smul.u32 2, %s25
        $region80: #{transwcd_single_forward.6} parent=71 // pred_fallthru
          _
      $region72: #{transwcd_single_forward.6} parent=5 // pred_fallthru
        _
      %p1175 = scmp.le.s32.totalorder 2, %s20
      // Predicated region
      $region81: #{transwcd_single_forward.6} parent=5 // pred_check
        %p1176 = pneg %p1175
      $region82: #{transwcd_single_forward.6} parent=5 // pred_check_branch
        %1178 = sbr.rel (%p1176) target = $region84
      $region83: #{transwcd_single_forward.6} parent=5 // pred_region
        %s1179 = ssub.s32 %s20, 2
        // Predicated region
        $region85: #{transwcd_single_forward.6} parent=83 // pred_check
          %p1180 = pneg %p327
        $region86: #{transwcd_single_forward.6} parent=83 // pred_check_branch
          %1182 = sbr.rel (%p1180) target = $region88
        $region87: #{transwcd_single_forward.6} parent=83 // pred_region
          %s1183 = smul.u32 2, %s26
          %p1184 = scmp.lt.s32.totalorder %s1183, 3
          %s1185 = scalar_select %p1184, %s1183, 3
          %s1186 = smul.addr %s1185, 4
          %s1187 = scalar_lea.vmem %s13, %s1186
        $region88: #{transwcd_single_forward.6} parent=83 // pred_fallthru
          _
      $region84: #{transwcd_single_forward.6} parent=5 // pred_fallthru
        _
    $region6: #{transwcd_single_forward.6} parent=1 // loop_footer
      %s24 = sadd.s32 1, %s20
    $region7: #{transwcd_single_forward.6} parent=1 // loop_footer_branch
      %19 = sbr.rel target = $region3
    $region8: #{transwcd_single_forward.6} parent=1 // loop_exit
      _
    %1188 = vsyncpa [#allocation3], 1
    %s1189 = scalar_lea.sflag [#allocation3], 1
    %1190 = vsyncpa %s1189, 1

// kernel: transwcd_single_forward.7
$region0: #{transwcd_single_forward.7}
  #allocation0 [shape = 'u32[]', space=smem, size = 0x4, offset = 0x4, fixed_abs, tag = 'smem constant byte address 0x4 - core index']
  #allocation1 [shape = 'u32[72,128]{1,0:T(1,128)}', space=vmem, size = 0x9000, scoped, tag = 'internal scratch']
  %s0 = inlined_call_operand.vmem [shape: bf16[8,512], index: 0, kind: input, shape index: {}]
  %s1 = inlined_call_operand.vmem [shape: bf16[512,128], index: 1, kind: input, shape index: {}]
  %s2 = inlined_call_operand.hbm [shape: f32[1,128], index: 2, kind: input, shape index: {}]
  %s3 = inlined_call_operand.hbm [shape: f32[1,128], index: 3, kind: input, shape index: {}]
  %s4 = inlined_call_operand.hbm [shape: f32[1,128], index: 4, kind: input, shape index: {}]
  %s5 = inlined_call_operand.hbm [shape: f32[1,128], index: 5, kind: input, shape index: {}]
  %s6 = inlined_call_operand.hbm [shape: f32[1,128], index: 6, kind: input, shape index: {}]
  %s7 = inlined_call_operand.vmem [shape: bf16[128,256], index: 7, kind: input, shape index: {}]
  %s8 = inlined_call_operand.vmem [shape: f32[1,256], index: 8, kind: input, shape index: {}]
  %s9 = inlined_call_operand.vmem [shape: bf16[256,128], index: 9, kind: input, shape index: {}]
  %s10 = inlined_call_operand.hbm [shape: f32[1,128], index: 10, kind: input, shape index: {}]
  %s11 = inlined_call_operand.hbm [shape: f32[1,128], index: 11, kind: input, shape index: {}]
  %s12 = inlined_call_operand.hbm [shape: f32[1,128], index: 12, kind: input, shape index: {}]
  %s13 = inlined_call_operand.vmem [shape: f32[128,128], index: 13, kind: input, shape index: {}]
  %s14 = inlined_call_operand.vmem [shape: f32[2,128], index: 14, kind: output, shape index: {}]
  %s15 = sld [smem:[#allocation0]]
  $region98: #{transwcd_single_forward.7} parent=0
    _
  %s17 = ssub.s32 1, %s15
  %s18 = scalar_select 0, %s17, %s15
  $region1: #{transwcd_single_forward.7} parent=0
    #allocation2 [shape = 'u8[512]{0}', space=vmem, size = 0x400, scoped, tag = 'input window, operand 2, single buffered']
    #allocation3 [shape = 's32[1]{0}', space=sflag, size = 0x4, scoped, tag = 'scoped memory for transwcd_single_forward.7']
    #allocation4 [shape = 'u8[512]{0}', space=vmem, size = 0x400, scoped, tag = 'input window, operand 3, single buffered']
    #allocation5 [shape = 's32[1]{0}', space=sflag, size = 0x4, scoped, tag = 'scoped memory for transwcd_single_forward.7']
    #allocation6 [shape = 'u8[512]{0}', space=vmem, size = 0x400, scoped, tag = 'input window, operand 4, single buffered']
    #allocation7 [shape = 'u8[512]{0}', space=vmem, size = 0x400, scoped, tag = 'input window, operand 5, single buffered']
    #allocation8 [shape = 's32[1]{0}', space=sflag, size = 0x4, scoped, tag = 'scoped memory for transwcd_single_forward.7']
    #allocation9 [shape = 'u8[512]{0}', space=vmem, size = 0x400, scoped, tag = 'input window, operand 6, single buffered']
    #allocation10 [shape = 'u8[512]{0}', space=vmem, size = 0x400, scoped, tag = 'input window, operand 10, single buffered']
    #allocation11 [shape = 's32[1]{0}', space=sflag, size = 0x4, scoped, tag = 'scoped memory for transwcd_single_forward.7']
    #allocation12 [shape = 'u8[512]{0}', space=vmem, size = 0x400, scoped, tag = 'input window, operand 11, single buffered']
    #allocation13 [shape = 'u8[512]{0}', space=vmem, size = 0x400, scoped, tag = 'input window, operand 12, single buffered']
    #allocation14 [shape = 's32[1]{0}', space=sflag, size = 0x4, scoped, tag = 'scoped memory for transwcd_single_forward.7']
    %19 = vsyncpa [#allocation3], 0
    %20 = vsyncpa [#allocation5], 0
    %21 = vsyncpa [#allocation8], 0
    %22 = vsyncpa [#allocation11], 0
    %23 = vsyncpa [#allocation14], 0
    // Predicated region
    $region2: #{transwcd_single_forward.7} parent=1 // pred_check
      _
    $region3: #{transwcd_single_forward.7} parent=1 // pred_check_branch
      %25 = sbr.rel (0) target = $region5
    $region4: #{transwcd_single_forward.7} parent=1 // pred_region
      _
    $region5: #{transwcd_single_forward.7} parent=1 // pred_fallthru
      _
    // Predicated region
    $region6: #{transwcd_single_forward.7} parent=1 // pred_check
      _
    $region7: #{transwcd_single_forward.7} parent=1 // pred_check_branch
      %27 = sbr.rel (0) target = $region9
    $region8: #{transwcd_single_forward.7} parent=1 // pred_region
      _
    $region9: #{transwcd_single_forward.7} parent=1 // pred_fallthru
      _
    // Predicated region
    $region10: #{transwcd_single_forward.7} parent=1 // pred_check
      _
    $region11: #{transwcd_single_forward.7} parent=1 // pred_check_branch
      %29 = sbr.rel (0) target = $region13
    $region12: #{transwcd_single_forward.7} parent=1 // pred_region
      %31 = vsyncadd [#allocation3], 0
      %s33 = sshll.u32 %s2, 4
      %s34 = int_to_ptr.hbm [resolvable:$true] %s33
      %s35 = sshll.u32 [#allocation2], 4
      %s36 = int_to_ptr.vmem [resolvable:$true] %s35
      %38 = dma.hbm_to_vmem [thread:$0]  %s34, 16, %s36, [#allocation3]
    $region13: #{transwcd_single_forward.7} parent=1 // pred_fallthru
      _
    // Predicated region
    $region14: #{transwcd_single_forward.7} parent=1 // pred_check
      _
    $region15: #{transwcd_single_forward.7} parent=1 // pred_check_branch
      %40 = sbr.rel (0) target = $region17
    $region16: #{transwcd_single_forward.7} parent=1 // pred_region
      %42 = vsyncadd [#allocation5], 0
      %s44 = sshll.u32 %s3, 4
      %s45 = int_to_ptr.hbm [resolvable:$true] %s44
      %s46 = sshll.u32 [#allocation4], 4
      %s47 = int_to_ptr.vmem [resolvable:$true] %s46
      %49 = dma.hbm_to_vmem [thread:$0]  %s45, 16, %s47, [#allocation5]
    $region17: #{transwcd_single_forward.7} parent=1 // pred_fallthru
      _
    // Predicated region
    $region18: #{transwcd_single_forward.7} parent=1 // pred_check
      _
    $region19: #{transwcd_single_forward.7} parent=1 // pred_check_branch
      %51 = sbr.rel (0) target = $region21
    $region20: #{transwcd_single_forward.7} parent=1 // pred_region
      %53 = vsyncadd [#allocation5], 0
      %s55 = sshll.u32 %s4, 4
      %s56 = int_to_ptr.hbm [resolvable:$true] %s55
      %s57 = sshll.u32 [#allocation6], 4
      %s58 = int_to_ptr.vmem [resolvable:$true] %s57
      %60 = dma.hbm_to_vmem [thread:$0]  %s56, 16, %s58, [#allocation5]
    $region21: #{transwcd_single_forward.7} parent=1 // pred_fallthru
      _
    // Predicated region
    $region22: #{transwcd_single_forward.7} parent=1 // pred_check
      _
    $region23: #{transwcd_single_forward.7} parent=1 // pred_check_branch
      %62 = sbr.rel (0) target = $region25
    $region24: #{transwcd_single_forward.7} parent=1 // pred_region
      %64 = vsyncadd [#allocation8], 0
      %s66 = sshll.u32 %s5, 4
      %s67 = int_to_ptr.hbm [resolvable:$true] %s66
      %s68 = sshll.u32 [#allocation7], 4
      %s69 = int_to_ptr.vmem [resolvable:$true] %s68
      %71 = dma.hbm_to_vmem [thread:$0]  %s67, 16, %s69, [#allocation8]
    $region25: #{transwcd_single_forward.7} parent=1 // pred_fallthru
      _
    // Predicated region
    $region26: #{transwcd_single_forward.7} parent=1 // pred_check
      _
    $region27: #{transwcd_single_forward.7} parent=1 // pred_check_branch
      %73 = sbr.rel (0) target = $region29
    $region28: #{transwcd_single_forward.7} parent=1 // pred_region
      %75 = vsyncadd [#allocation8], 0
      %s77 = sshll.u32 %s6, 4
      %s78 = int_to_ptr.hbm [resolvable:$true] %s77
      %s79 = sshll.u32 [#allocation9], 4
      %s80 = int_to_ptr.vmem [resolvable:$true] %s79
      %82 = dma.hbm_to_vmem [thread:$0]  %s78, 16, %s80, [#allocation8]
    $region29: #{transwcd_single_forward.7} parent=1 // pred_fallthru
      _
    // Predicated region
    $region30: #{transwcd_single_forward.7} parent=1 // pred_check
      _
    $region31: #{transwcd_single_forward.7} parent=1 // pred_check_branch
      %84 = sbr.rel (0) target = $region33
    $region32: #{transwcd_single_forward.7} parent=1 // pred_region
      _
    $region33: #{transwcd_single_forward.7} parent=1 // pred_fallthru
      _
    // Predicated region
    $region34: #{transwcd_single_forward.7} parent=1 // pred_check
      _
    $region35: #{transwcd_single_forward.7} parent=1 // pred_check_branch
      %86 = sbr.rel (0) target = $region37
    $region36: #{transwcd_single_forward.7} parent=1 // pred_region
      _
    $region37: #{transwcd_single_forward.7} parent=1 // pred_fallthru
      _
    // Predicated region
    $region38: #{transwcd_single_forward.7} parent=1 // pred_check
      _
    $region39: #{transwcd_single_forward.7} parent=1 // pred_check_branch
      %88 = sbr.rel (0) target = $region41
    $region40: #{transwcd_single_forward.7} parent=1 // pred_region
      _
    $region41: #{transwcd_single_forward.7} parent=1 // pred_fallthru
      _
    // Predicated region
    $region42: #{transwcd_single_forward.7} parent=1 // pred_check
      _
    $region43: #{transwcd_single_forward.7} parent=1 // pred_check_branch
      %90 = sbr.rel (0) target = $region45
    $region44: #{transwcd_single_forward.7} parent=1 // pred_region
      %92 = vsyncadd [#allocation11], 0
      %s94 = sshll.u32 %s10, 4
      %s95 = int_to_ptr.hbm [resolvable:$true] %s94
      %s96 = sshll.u32 [#allocation10], 4
      %s97 = int_to_ptr.vmem [resolvable:$true] %s96
      %99 = dma.hbm_to_vmem [thread:$0]  %s95, 16, %s97, [#allocation11]
    $region45: #{transwcd_single_forward.7} parent=1 // pred_fallthru
      _
    // Predicated region
    $region46: #{transwcd_single_forward.7} parent=1 // pred_check
      _
    $region47: #{transwcd_single_forward.7} parent=1 // pred_check_branch
      %101 = sbr.rel (0) target = $region49
    $region48: #{transwcd_single_forward.7} parent=1 // pred_region
      %103 = vsyncadd [#allocation11], 0
      %s105 = sshll.u32 %s11, 4
      %s106 = int_to_ptr.hbm [resolvable:$true] %s105
      %s107 = sshll.u32 [#allocation12], 4
      %s108 = int_to_ptr.vmem [resolvable:$true] %s107
      %110 = dma.hbm_to_vmem [thread:$0]  %s106, 16, %s108, [#allocation11]
    $region49: #{transwcd_single_forward.7} parent=1 // pred_fallthru
      _
    // Predicated region
    $region50: #{transwcd_single_forward.7} parent=1 // pred_check
      _
    $region51: #{transwcd_single_forward.7} parent=1 // pred_check_branch
      %112 = sbr.rel (0) target = $region53
    $region52: #{transwcd_single_forward.7} parent=1 // pred_region
      %114 = vsyncadd [#allocation14], 0
      %s116 = sshll.u32 %s12, 4
      %s117 = int_to_ptr.hbm [resolvable:$true] %s116
      %s118 = sshll.u32 [#allocation13], 4
      %s119 = int_to_ptr.vmem [resolvable:$true] %s118
      %121 = dma.hbm_to_vmem [thread:$0]  %s117, 16, %s119, [#allocation14]
    $region53: #{transwcd_single_forward.7} parent=1 // pred_fallthru
      _
    // Predicated region
    $region54: #{transwcd_single_forward.7} parent=1 // pred_check
      _
    $region55: #{transwcd_single_forward.7} parent=1 // pred_check_branch
      %123 = sbr.rel (0) target = $region57
    $region56: #{transwcd_single_forward.7} parent=1 // pred_region
      _
    $region57: #{transwcd_single_forward.7} parent=1 // pred_fallthru
      _
    // Predicated region
    $region58: #{transwcd_single_forward.7} parent=1 // pred_check
      _
    $region59: #{transwcd_single_forward.7} parent=1 // pred_check_branch
      %125 = sbr.rel (0) target = $region61
    $region60: #{transwcd_single_forward.7} parent=1 // pred_region
      %127 = dma.done [#allocation3], 16
    $region61: #{transwcd_single_forward.7} parent=1 // pred_fallthru
      _
    // Predicated region
    $region62: #{transwcd_single_forward.7} parent=1 // pred_check
      _
    $region63: #{transwcd_single_forward.7} parent=1 // pred_check_branch
      %129 = sbr.rel (0) target = $region65
    $region64: #{transwcd_single_forward.7} parent=1 // pred_region
      %131 = dma.done [#allocation5], 16
    $region65: #{transwcd_single_forward.7} parent=1 // pred_fallthru
      _
    // Predicated region
    $region66: #{transwcd_single_forward.7} parent=1 // pred_check
      _
    $region67: #{transwcd_single_forward.7} parent=1 // pred_check_branch
      %133 = sbr.rel (0) target = $region69
    $region68: #{transwcd_single_forward.7} parent=1 // pred_region
      %135 = dma.done [#allocation5], 16
    $region69: #{transwcd_single_forward.7} parent=1 // pred_fallthru
      _
    // Predicated region
    $region70: #{transwcd_single_forward.7} parent=1 // pred_check
      _
    $region71: #{transwcd_single_forward.7} parent=1 // pred_check_branch
      %137 = sbr.rel (0) target = $region73
    $region72: #{transwcd_single_forward.7} parent=1 // pred_region
      %139 = dma.done [#allocation8], 16
    $region73: #{transwcd_single_forward.7} parent=1 // pred_fallthru
      _
    // Predicated region
    $region74: #{transwcd_single_forward.7} parent=1 // pred_check
      _
    $region75: #{transwcd_single_forward.7} parent=1 // pred_check_branch
      %141 = sbr.rel (0) target = $region77
    $region76: #{transwcd_single_forward.7} parent=1 // pred_region
      %143 = dma.done [#allocation8], 16
    $region77: #{transwcd_single_forward.7} parent=1 // pred_fallthru
      _
    // Predicated region
    $region78: #{transwcd_single_forward.7} parent=1 // pred_check
      _
    $region79: #{transwcd_single_forward.7} parent=1 // pred_check_branch
      %145 = sbr.rel (0) target = $region81
    $region80: #{transwcd_single_forward.7} parent=1 // pred_region
      %147 = dma.done [#allocation11], 16
    $region81: #{transwcd_single_forward.7} parent=1 // pred_fallthru
      _
    // Predicated region
    $region82: #{transwcd_single_forward.7} parent=1 // pred_check
      _
    $region83: #{transwcd_single_forward.7} parent=1 // pred_check_branch
      %149 = sbr.rel (0) target = $region85
    $region84: #{transwcd_single_forward.7} parent=1 // pred_region
      %151 = dma.done [#allocation11], 16
    $region85: #{transwcd_single_forward.7} parent=1 // pred_fallthru
      _
    // Predicated region
    $region86: #{transwcd_single_forward.7} parent=1 // pred_check
      _
    $region87: #{transwcd_single_forward.7} parent=1 // pred_check_branch
      %153 = sbr.rel (0) target = $region89
    $region88: #{transwcd_single_forward.7} parent=1 // pred_region
      %155 = dma.done [#allocation14], 16
    $region89: #{transwcd_single_forward.7} parent=1 // pred_fallthru
      _
    %v156 = vld [vmem:[%s0] sm:$0xff]
    %v157 = vld [vmem:[%s0 + $0x8] sm:$0xff]
    %v158 = vld [vmem:[%s1] sm:$0xf]
    %v159 = vld [vmem:[%s1 + $0x4] sm:$0xf]
    %v160 = vld [vmem:[%s1 + $0x8] sm:$0xf]
    %v161 = vld [vmem:[%s1 + $0xc] sm:$0xf]
    %v162 = vld [vmem:[%s1 + $0x10] sm:$0xf]
    %v163 = vld [vmem:[%s1 + $0x14] sm:$0xf]
    %v164 = vld [vmem:[%s1 + $0x18] sm:$0xf]
    %v165 = vld [vmem:[%s1 + $0x1c] sm:$0xf]
    %v166 = vld [vmem:[%s1 + $0x20] sm:$0xf]
    %v167 = vld [vmem:[%s1 + $0x24] sm:$0xf]
    %v168 = vld [vmem:[%s1 + $0x28] sm:$0xf]
    %v169 = vld [vmem:[%s1 + $0x2c] sm:$0xf]
    %v170 = vld [vmem:[%s1 + $0x30] sm:$0xf]
    %v171 = vld [vmem:[%s1 + $0x34] sm:$0xf]
    %v172 = vld [vmem:[%s1 + $0x38] sm:$0xf]
    %v173 = vld [vmem:[%s1 + $0x3c] sm:$0xf]
    %v174 = vld [vmem:[%s1 + $0x40] sm:$0xf]
    %v175 = vld [vmem:[%s1 + $0x44] sm:$0xf]
    %v176 = vld [vmem:[%s1 + $0x48] sm:$0xf]
    %v177 = vld [vmem:[%s1 + $0x4c] sm:$0xf]
    %v178 = vld [vmem:[%s1 + $0x50] sm:$0xf]
    %v179 = vld [vmem:[%s1 + $0x54] sm:$0xf]
    %v180 = vld [vmem:[%s1 + $0x58] sm:$0xf]
    %v181 = vld [vmem:[%s1 + $0x5c] sm:$0xf]
    %v182 = vld [vmem:[%s1 + $0x60] sm:$0xf]
    %v183 = vld [vmem:[%s1 + $0x64] sm:$0xf]
    %v184 = vld [vmem:[%s1 + $0x68] sm:$0xf]
    %v185 = vld [vmem:[%s1 + $0x6c] sm:$0xf]
    %v186 = vld [vmem:[%s1 + $0x70] sm:$0xf]
    %v187 = vld [vmem:[%s1 + $0x74] sm:$0xf]
    %v188 = vld [vmem:[%s1 + $0x78] sm:$0xf]
    %v189 = vld [vmem:[%s1 + $0x7c] sm:$0xf]
    %v190 = vld [vmem:[%s1 + $0x80] sm:$0xf]
    %v191 = vld [vmem:[%s1 + $0x84] sm:$0xf]
    %v192 = vld [vmem:[%s1 + $0x88] sm:$0xf]
    %v193 = vld [vmem:[%s1 + $0x8c] sm:$0xf]
    %v194 = vld [vmem:[%s1 + $0x90] sm:$0xf]
    %v195 = vld [vmem:[%s1 + $0x94] sm:$0xf]
    %v196 = vld [vmem:[%s1 + $0x98] sm:$0xf]
    %v197 = vld [vmem:[%s1 + $0x9c] sm:$0xf]
    %v198 = vld [vmem:[%s1 + $0xa0] sm:$0xf]
    %v199 = vld [vmem:[%s1 + $0xa4] sm:$0xf]
    %v200 = vld [vmem:[%s1 + $0xa8] sm:$0xf]
    %v201 = vld [vmem:[%s1 + $0xac] sm:$0xf]
    %v202 = vld [vmem:[%s1 + $0xb0] sm:$0xf]
    %v203 = vld [vmem:[%s1 + $0xb4] sm:$0xf]
    %v204 = vld [vmem:[%s1 + $0xb8] sm:$0xf]
    %v205 = vld [vmem:[%s1 + $0xbc] sm:$0xf]
    %v206 = vld [vmem:[%s1 + $0xc0] sm:$0xf]
    %v207 = vld [vmem:[%s1 + $0xc4] sm:$0xf]
    %v208 = vld [vmem:[%s1 + $0xc8] sm:$0xf]
    %v209 = vld [vmem:[%s1 + $0xcc] sm:$0xf]
    %v210 = vld [vmem:[%s1 + $0xd0] sm:$0xf]
    %v211 = vld [vmem:[%s1 + $0xd4] sm:$0xf]
    %v212 = vld [vmem:[%s1 + $0xd8] sm:$0xf]
    %v213 = vld [vmem:[%s1 + $0xdc] sm:$0xf]
    %v214 = vld [vmem:[%s1 + $0xe0] sm:$0xf]
    %v215 = vld [vmem:[%s1 + $0xe4] sm:$0xf]
    %v216 = vld [vmem:[%s1 + $0xe8] sm:$0xf]
    %v217 = vld [vmem:[%s1 + $0xec] sm:$0xf]
    %v218 = vld [vmem:[%s1 + $0xf0] sm:$0xf]
    %v219 = vld [vmem:[%s1 + $0xf4] sm:$0xf]
    %v220 = vld [vmem:[%s1 + $0xf8] sm:$0xf]
    %v221 = vld [vmem:[%s1 + $0xfc] sm:$0xf]
    %v222 = vld [vmem:[#allocation2] sm:$0x1]
    %v224 = vperm.slane %v222, 0
    %v228 = vunpack.c.l.b16 %v156
    %v229 = vunpack.c.h.b16 %v156
    %v230 = vunpack.c.l.b16 %v157
    %v231 = vunpack.c.h.b16 %v157
    %v232 = vpack.c.b16 %v228, %v228
    %v233 = vpack.c.b16 %v229, %v229
    %v234 = vpack.c.b16 %v230, %v230
    %v235 = vpack.c.b16 %v231, %v231
    %v304 = vunpack.c.l.b16 %v158
    %v305 = vunpack.c.l.b16 %v159
    %v306 = vunpack.c.l.b16 %v160
    %v307 = vunpack.c.l.b16 %v161
    %v308 = vunpack.c.l.b16 %v162
    %v309 = vunpack.c.l.b16 %v163
    %v310 = vunpack.c.l.b16 %v164
    %v311 = vunpack.c.l.b16 %v165
    %v312 = vunpack.c.l.b16 %v166
    %v313 = vunpack.c.l.b16 %v167
    %v314 = vunpack.c.l.b16 %v168
    %v315 = vunpack.c.l.b16 %v169
    %v316 = vunpack.c.l.b16 %v170
    %v317 = vunpack.c.l.b16 %v171
    %v318 = vunpack.c.l.b16 %v172
    %v319 = vunpack.c.l.b16 %v173
    %v320 = vunpack.c.l.b16 %v174
    %v321 = vunpack.c.l.b16 %v175
    %v322 = vunpack.c.l.b16 %v176
    %v323 = vunpack.c.l.b16 %v177
    %v324 = vunpack.c.l.b16 %v178
    %v325 = vunpack.c.l.b16 %v179
    %v326 = vunpack.c.l.b16 %v180
    %v327 = vunpack.c.l.b16 %v181
    %v328 = vunpack.c.l.b16 %v182
    %v329 = vunpack.c.l.b16 %v183
    %v330 = vunpack.c.l.b16 %v184
    %v331 = vunpack.c.l.b16 %v185
    %v332 = vunpack.c.l.b16 %v186
    %v333 = vunpack.c.l.b16 %v187
    %v334 = vunpack.c.l.b16 %v188
    %v335 = vunpack.c.l.b16 %v189
    %v336 = vunpack.c.l.b16 %v190
    %v337 = vunpack.c.l.b16 %v191
    %v338 = vunpack.c.l.b16 %v192
    %v339 = vunpack.c.l.b16 %v193
    %v340 = vunpack.c.l.b16 %v194
    %v341 = vunpack.c.l.b16 %v195
    %v342 = vunpack.c.l.b16 %v196
    %v343 = vunpack.c.l.b16 %v197
    %v344 = vunpack.c.l.b16 %v198
    %v345 = vunpack.c.l.b16 %v199
    %v346 = vunpack.c.l.b16 %v200
    %v347 = vunpack.c.l.b16 %v201
    %v348 = vunpack.c.l.b16 %v202
    %v349 = vunpack.c.l.b16 %v203
    %v350 = vunpack.c.l.b16 %v204
    %v351 = vunpack.c.l.b16 %v205
    %v352 = vunpack.c.l.b16 %v206
    %v353 = vunpack.c.l.b16 %v207
    %v354 = vunpack.c.l.b16 %v208
    %v355 = vunpack.c.l.b16 %v209
    %v356 = vunpack.c.l.b16 %v210
    %v357 = vunpack.c.l.b16 %v211
    %v358 = vunpack.c.l.b16 %v212
    %v359 = vunpack.c.l.b16 %v213
    %v360 = vunpack.c.l.b16 %v214
    %v361 = vunpack.c.l.b16 %v215
    %v362 = vunpack.c.l.b16 %v216
    %v363 = vunpack.c.l.b16 %v217
    %v364 = vunpack.c.l.b16 %v218
    %v365 = vunpack.c.l.b16 %v219
    %v366 = vunpack.c.l.b16 %v220
    %v367 = vunpack.c.l.b16 %v221
    %v368 = vpack.c.b16 %v305, %v304
    %v369 = vpack.c.b16 %v307, %v306
    %v370 = vpack.c.b16 %v309, %v308
    %v371 = vpack.c.b16 %v311, %v310
    %v372 = vpack.c.b16 %v313, %v312
    %v373 = vpack.c.b16 %v315, %v314
    %v374 = vpack.c.b16 %v317, %v316
    %v375 = vpack.c.b16 %v319, %v318
    %v376 = vpack.c.b16 %v321, %v320
    %v377 = vpack.c.b16 %v323, %v322
    %v378 = vpack.c.b16 %v325, %v324
    %v379 = vpack.c.b16 %v327, %v326
    %v380 = vpack.c.b16 %v329, %v328
    %v381 = vpack.c.b16 %v331, %v330
    %v382 = vpack.c.b16 %v333, %v332
    %v383 = vpack.c.b16 %v335, %v334
    %v384 = vpack.c.b16 %v337, %v336
    %v385 = vpack.c.b16 %v339, %v338
    %v386 = vpack.c.b16 %v341, %v340
    %v387 = vpack.c.b16 %v343, %v342
    %v388 = vpack.c.b16 %v345, %v344
    %v389 = vpack.c.b16 %v347, %v346
    %v390 = vpack.c.b16 %v349, %v348
    %v391 = vpack.c.b16 %v351, %v350
    %v392 = vpack.c.b16 %v353, %v352
    %v393 = vpack.c.b16 %v355, %v354
    %v394 = vpack.c.b16 %v357, %v356
    %v395 = vpack.c.b16 %v359, %v358
    %v396 = vpack.c.b16 %v361, %v360
    %v397 = vpack.c.b16 %v363, %v362
    %v398 = vpack.c.b16 %v365, %v364
    %v399 = vpack.c.b16 %v367, %v366
    %432 = vmatpush.bf16.msra.mxu0 %v375
    %433 = vmatpush.bf16.msra.mxu0 %v374
    %434 = vmatpush.bf16.msra.mxu0 %v373
    %435 = vmatpush.bf16.msra.mxu0 %v372
    %436 = vmatpush.bf16.msra.mxu0 %v371
    %437 = vmatpush.bf16.msra.mxu0 %v370
    %438 = vmatpush.bf16.msra.mxu0 %v369
    %439 = vmatpush.bf16.msra.mxu0 %v368
    %440 = vmatmul.bf16.gmra.mxu0 %v232
    %v441 = vpop.f32.mrf.mxu0
    %v442 = vadd.f32 %v224, %v441
    %v443 = vpop.f32.mrf.mxu0
    %444 = vdwg.mxu0
    %445 = vmatpush.bf16.msra.mxu0 %v383
    %446 = vmatpush.bf16.msra.mxu0 %v382
    %447 = vmatpush.bf16.msra.mxu0 %v381
    %448 = vmatpush.bf16.msra.mxu0 %v380
    %449 = vmatpush.bf16.msra.mxu0 %v379
    %450 = vmatpush.bf16.msra.mxu0 %v378
    %451 = vmatpush.bf16.msra.mxu0 %v377
    %452 = vmatpush.bf16.msra.mxu0 %v376
    %453 = vmatmul.bf16.gmra.mxu0 %v233
    %v454 = vpop.f32.mrf.mxu0
    %v455 = vadd.f32 %v442, %v454
    %v456 = vpop.f32.mrf.mxu0
    %457 = vdwg.mxu0
    %458 = vmatpush.bf16.msra.mxu0 %v391
    %459 = vmatpush.bf16.msra.mxu0 %v390
    %460 = vmatpush.bf16.msra.mxu0 %v389
    %461 = vmatpush.bf16.msra.mxu0 %v388
    %462 = vmatpush.bf16.msra.mxu0 %v387
    %463 = vmatpush.bf16.msra.mxu0 %v386
    %464 = vmatpush.bf16.msra.mxu0 %v385
    %465 = vmatpush.bf16.msra.mxu0 %v384
    %466 = vmatmul.bf16.gmra.mxu0 %v234
    %v467 = vpop.f32.mrf.mxu0
    %v468 = vadd.f32 %v455, %v467
    %v469 = vpop.f32.mrf.mxu0
    %470 = vdwg.mxu0
    %471 = vmatpush.bf16.msra.mxu0 %v399
    %472 = vmatpush.bf16.msra.mxu0 %v398
    %473 = vmatpush.bf16.msra.mxu0 %v397
    %474 = vmatpush.bf16.msra.mxu0 %v396
    %475 = vmatpush.bf16.msra.mxu0 %v395
    %476 = vmatpush.bf16.msra.mxu0 %v394
    %477 = vmatpush.bf16.msra.mxu0 %v393
    %478 = vmatpush.bf16.msra.mxu0 %v392
    %479 = vmatmul.bf16.gmra.mxu0 %v235
    %v480 = vpop.f32.mrf.mxu0
    %v481 = vadd.f32 %v468, %v480
    %v482 = vpop.f32.mrf.mxu0
    %483 = vdwg.mxu0
    %v484 = vld [vmem:[#allocation4] sm:$0x1]
    %v485 = vld [vmem:[#allocation6] sm:$0x1]
    %486 = vadd.xlane.f32.xlu0 %v481
    %v487 = vpop.xlane.xlu0 %486
    %v488 = vmul.f32 %v487, 0.015625
    %v489 = vmul.f32 %v481, %v481
    %490 = vadd.xlane.f32.xlu0 %v489
    %v491 = vpop.xlane.xlu0 %490
    %v492 = vmul.f32 %v491, 0.015625
    %v493 = vmul.f32 %v488, %v488
    %v494 = vsub.f32 %v492, %v493
    %v495 = vmax.f32 %v494, 0.0
    %v496 = vsub.f32 %v481, %v488
    %v497 = vadd.f32 %v495, 1e-05
    %v498 = vrsqrt.pop %v497
    %v499 = vmul.f32 %v498, %v497
    %v500 = vmul.f32 %v499, %v498
    %v501 = vmul.f32 0.5, %v500
    %v502 = vsub.f32 1.5, %v501
    %v503 = vmul.f32 %v498, %v502
    %vm504 = vweird.f32 %v497
    %vm505 = vweird.f32 %v498
    %vm506 = vmor %vm504, %vm505
    %v507 = vsel %vm506, %v498, %v503
    %v508 = vmul.f32 %v496, %v507
    %v510 = vperm.slane %v484, 0
    %v512 = vmul.f32 %v508, %v510
    %v514 = vperm.slane %v485, 0
    %v516 = vadd.f32 %v512, %v514
    %v517 = vld [vmem:[#allocation7] sm:$0x1]
    %v518 = vld [vmem:[#allocation9] sm:$0x1]
    %519 = vadd.xlane.f32.xlu0 %v516
    %v520 = vpop.xlane.xlu0 %519
    %v521 = vmul.f32 %v520, 0.015625
    %v522 = vmul.f32 %v516, %v516
    %523 = vadd.xlane.f32.xlu0 %v522
    %v524 = vpop.xlane.xlu0 %523
    %v525 = vmul.f32 %v524, 0.015625
    %v526 = vmul.f32 %v521, %v521
    %v527 = vsub.f32 %v525, %v526
    %v528 = vmax.f32 %v527, 0.0
    %v529 = vsub.f32 %v516, %v521
    %v530 = vadd.f32 %v528, 1e-05
    %v531 = vrsqrt.pop %v530
    %v532 = vmul.f32 %v531, %v530
    %v533 = vmul.f32 %v532, %v531
    %v534 = vmul.f32 0.5, %v533
    %v535 = vsub.f32 1.5, %v534
    %v536 = vmul.f32 %v531, %v535
    %vm537 = vweird.f32 %v530
    %vm538 = vweird.f32 %v531
    %vm539 = vmor %vm537, %vm538
    %v540 = vsel %vm539, %v531, %v536
    %v541 = vmul.f32 %v529, %v540
    %v543 = vperm.slane %v517, 0
    %v545 = vmul.f32 %v541, %v543
    %v547 = vperm.slane %v518, 0
    %v549 = vadd.f32 %v545, %v547
    %v550 = vpack.c.bf16 %v549, %v549
    %v551 = vld [vmem:[%s7] sm:$0xff]
    %v552 = vld [vmem:[%s7 + $0x8] sm:$0xff]
    %v553 = vld [vmem:[%s7 + $0x10] sm:$0xff]
    %v554 = vld [vmem:[%s7 + $0x18] sm:$0xff]
    %v555 = vld [vmem:[%s7 + $0x20] sm:$0xff]
    %v556 = vld [vmem:[%s7 + $0x28] sm:$0xff]
    %v557 = vld [vmem:[%s7 + $0x30] sm:$0xff]
    %v558 = vld [vmem:[%s7 + $0x38] sm:$0xff]
    %v559 = vld [vmem:[%s7 + $0x40] sm:$0xff]
    %v560 = vld [vmem:[%s7 + $0x48] sm:$0xff]
    %v561 = vld [vmem:[%s7 + $0x50] sm:$0xff]
    %v562 = vld [vmem:[%s7 + $0x58] sm:$0xff]
    %v563 = vld [vmem:[%s7 + $0x60] sm:$0xff]
    %v564 = vld [vmem:[%s7 + $0x68] sm:$0xff]
    %v565 = vld [vmem:[%s7 + $0x70] sm:$0xff]
    %v566 = vld [vmem:[%s7 + $0x78] sm:$0xff]
    %v567 = vld [vmem:[%s8] sm:$0x3]
    %v569 = vperm.slane %v567, 0
    %v570 = vperm.slane %v567, 1
    %v589 = vunpack.c.l.b16 %v551
    %v590 = vunpack.c.h.b16 %v551
    %v591 = vunpack.c.l.b16 %v552
    %v592 = vunpack.c.h.b16 %v552
    %v593 = vunpack.c.l.b16 %v553
    %v594 = vunpack.c.h.b16 %v553
    %v595 = vunpack.c.l.b16 %v554
    %v596 = vunpack.c.h.b16 %v554
    %v597 = vunpack.c.l.b16 %v555
    %v598 = vunpack.c.h.b16 %v555
    %v599 = vunpack.c.l.b16 %v556
    %v600 = vunpack.c.h.b16 %v556
    %v601 = vunpack.c.l.b16 %v557
    %v602 = vunpack.c.h.b16 %v557
    %v603 = vunpack.c.l.b16 %v558
    %v604 = vunpack.c.h.b16 %v558
    %v605 = vunpack.c.l.b16 %v559
    %v606 = vunpack.c.h.b16 %v559
    %v607 = vunpack.c.l.b16 %v560
    %v608 = vunpack.c.h.b16 %v560
    %v609 = vunpack.c.l.b16 %v561
    %v610 = vunpack.c.h.b16 %v561
    %v611 = vunpack.c.l.b16 %v562
    %v612 = vunpack.c.h.b16 %v562
    %v613 = vunpack.c.l.b16 %v563
    %v614 = vunpack.c.h.b16 %v563
    %v615 = vunpack.c.l.b16 %v564
    %v616 = vunpack.c.h.b16 %v564
    %v617 = vunpack.c.l.b16 %v565
    %v618 = vunpack.c.h.b16 %v565
    %v619 = vunpack.c.l.b16 %v566
    %v620 = vunpack.c.h.b16 %v566
    %v621 = vpack.c.b16 %v591, %v589
    %v622 = vpack.c.b16 %v592, %v590
    %v623 = vpack.c.b16 %v595, %v593
    %v624 = vpack.c.b16 %v596, %v594
    %v625 = vpack.c.b16 %v599, %v597
    %v626 = vpack.c.b16 %v600, %v598
    %v627 = vpack.c.b16 %v603, %v601
    %v628 = vpack.c.b16 %v604, %v602
    %v629 = vpack.c.b16 %v607, %v605
    %v630 = vpack.c.b16 %v608, %v606
    %v631 = vpack.c.b16 %v611, %v609
    %v632 = vpack.c.b16 %v612, %v610
    %v633 = vpack.c.b16 %v615, %v613
    %v634 = vpack.c.b16 %v616, %v614
    %v635 = vpack.c.b16 %v619, %v617
    %v636 = vpack.c.b16 %v620, %v618
    %653 = vmatpush.bf16.msra.mxu0 %v635
    %654 = vmatpush.bf16.msra.mxu0 %v633
    %655 = vmatpush.bf16.msra.mxu0 %v631
    %656 = vmatpush.bf16.msra.mxu0 %v629
    %657 = vmatpush.bf16.msra.mxu0 %v627
    %658 = vmatpush.bf16.msra.mxu0 %v625
    %659 = vmatpush.bf16.msra.mxu0 %v623
    %660 = vmatpush.bf16.msra.mxu0 %v621
    %661 = vmatmul.bf16.gmra.mxu0 %v550
    %v662 = vpop.f32.mrf.mxu0
    %v663 = vadd.f32 %v569, %v662
    %v664 = vpop.f32.mrf.mxu0
    %665 = vdwg.mxu0
    %666 = vmatpush.bf16.msra.mxu0 %v636
    %667 = vmatpush.bf16.msra.mxu0 %v634
    %668 = vmatpush.bf16.msra.mxu0 %v632
    %669 = vmatpush.bf16.msra.mxu0 %v630
    %670 = vmatpush.bf16.msra.mxu0 %v628
    %671 = vmatpush.bf16.msra.mxu0 %v626
    %672 = vmatpush.bf16.msra.mxu0 %v624
    %673 = vmatpush.bf16.msra.mxu0 %v622
    %674 = vmatmul.bf16.gmra.mxu0 %v550
    %v675 = vpop.f32.mrf.mxu0
    %v676 = vadd.f32 %v570, %v675
    %v677 = vpop.f32.mrf.mxu0
    %678 = vdwg.mxu0
    %v679 = vmul.f32 %v663, %v663
    %v680 = vmul.f32 %v676, %v676
    %v681 = vmul.f32 %v663, %v679
    %v682 = vmul.f32 %v676, %v680
    %v683 = vmul.f32 %v681, 0.044715
    %v684 = vmul.f32 %v682, 0.044715
    %v685 = vadd.f32 %v663, %v683
    %v686 = vadd.f32 %v676, %v684
    %v687 = vmul.f32 %v685, 0.7978846
    %v688 = vmul.f32 %v686, 0.7978846
    %v689 = vtanh.pop %v687
    %v690 = vtanh.pop %v688
    %v691 = vadd.f32 %v689, 1.0
    %v692 = vadd.f32 %v690, 1.0
    %v693 = vmul.f32 %v691, 0.5
    %v694 = vmul.f32 %v692, 0.5
    %v695 = vmul.f32 %v663, %v693
    %v696 = vmul.f32 %v676, %v694
    %v697 = vpack.c.bf16 %v695, %v695
    %v698 = vpack.c.bf16 %v696, %v696
    %v699 = vld [vmem:[%s9] sm:$0xf]
    %v700 = vld [vmem:[%s9 + $0x4] sm:$0xf]
    %v701 = vld [vmem:[%s9 + $0x8] sm:$0xf]
    %v702 = vld [vmem:[%s9 + $0xc] sm:$0xf]
    %v703 = vld [vmem:[%s9 + $0x10] sm:$0xf]
    %v704 = vld [vmem:[%s9 + $0x14] sm:$0xf]
    %v705 = vld [vmem:[%s9 + $0x18] sm:$0xf]
    %v706 = vld [vmem:[%s9 + $0x1c] sm:$0xf]
    %v707 = vld [vmem:[%s9 + $0x20] sm:$0xf]
    %v708 = vld [vmem:[%s9 + $0x24] sm:$0xf]
    %v709 = vld [vmem:[%s9 + $0x28] sm:$0xf]
    %v710 = vld [vmem:[%s9 + $0x2c] sm:$0xf]
    %v711 = vld [vmem:[%s9 + $0x30] sm:$0xf]
    %v712 = vld [vmem:[%s9 + $0x34] sm:$0xf]
    %v713 = vld [vmem:[%s9 + $0x38] sm:$0xf]
    %v714 = vld [vmem:[%s9 + $0x3c] sm:$0xf]
    %v715 = vld [vmem:[%s9 + $0x40] sm:$0xf]
    %v716 = vld [vmem:[%s9 + $0x44] sm:$0xf]
    %v717 = vld [vmem:[%s9 + $0x48] sm:$0xf]
    %v718 = vld [vmem:[%s9 + $0x4c] sm:$0xf]
    %v719 = vld [vmem:[%s9 + $0x50] sm:$0xf]
    %v720 = vld [vmem:[%s9 + $0x54] sm:$0xf]
    %v721 = vld [vmem:[%s9 + $0x58] sm:$0xf]
    %v722 = vld [vmem:[%s9 + $0x5c] sm:$0xf]
    %v723 = vld [vmem:[%s9 + $0x60] sm:$0xf]
    %v724 = vld [vmem:[%s9 + $0x64] sm:$0xf]
    %v725 = vld [vmem:[%s9 + $0x68] sm:$0xf]
    %v726 = vld [vmem:[%s9 + $0x6c] sm:$0xf]
    %v727 = vld [vmem:[%s9 + $0x70] sm:$0xf]
    %v728 = vld [vmem:[%s9 + $0x74] sm:$0xf]
    %v729 = vld [vmem:[%s9 + $0x78] sm:$0xf]
    %v730 = vld [vmem:[%s9 + $0x7c] sm:$0xf]
    %v731 = vld [vmem:[#allocation10] sm:$0x1]
    %v733 = vperm.slane %v731, 0
    %v767 = vunpack.c.l.b16 %v699
    %v768 = vunpack.c.l.b16 %v700
    %v769 = vunpack.c.l.b16 %v701
    %v770 = vunpack.c.l.b16 %v702
    %v771 = vunpack.c.l.b16 %v703
    %v772 = vunpack.c.l.b16 %v704
    %v773 = vunpack.c.l.b16 %v705
    %v774 = vunpack.c.l.b16 %v706
    %v775 = vunpack.c.l.b16 %v707
    %v776 = vunpack.c.l.b16 %v708
    %v777 = vunpack.c.l.b16 %v709
    %v778 = vunpack.c.l.b16 %v710
    %v779 = vunpack.c.l.b16 %v711
    %v780 = vunpack.c.l.b16 %v712
    %v781 = vunpack.c.l.b16 %v713
    %v782 = vunpack.c.l.b16 %v714
    %v783 = vunpack.c.l.b16 %v715
    %v784 = vunpack.c.l.b16 %v716
    %v785 = vunpack.c.l.b16 %v717
    %v786 = vunpack.c.l.b16 %v718
    %v787 = vunpack.c.l.b16 %v719
    %v788 = vunpack.c.l.b16 %v720
    %v789 = vunpack.c.l.b16 %v721
    %v790 = vunpack.c.l.b16 %v722
    %v791 = vunpack.c.l.b16 %v723
    %v792 = vunpack.c.l.b16 %v724
    %v793 = vunpack.c.l.b16 %v725
    %v794 = vunpack.c.l.b16 %v726
    %v795 = vunpack.c.l.b16 %v727
    %v796 = vunpack.c.l.b16 %v728
    %v797 = vunpack.c.l.b16 %v729
    %v798 = vunpack.c.l.b16 %v730
    %v799 = vpack.c.b16 %v768, %v767
    %v800 = vpack.c.b16 %v770, %v769
    %v801 = vpack.c.b16 %v772, %v771
    %v802 = vpack.c.b16 %v774, %v773
    %v803 = vpack.c.b16 %v776, %v775
    %v804 = vpack.c.b16 %v778, %v777
    %v805 = vpack.c.b16 %v780, %v779
    %v806 = vpack.c.b16 %v782, %v781
    %v807 = vpack.c.b16 %v784, %v783
    %v808 = vpack.c.b16 %v786, %v785
    %v809 = vpack.c.b16 %v788, %v787
    %v810 = vpack.c.b16 %v790, %v789
    %v811 = vpack.c.b16 %v792, %v791
    %v812 = vpack.c.b16 %v794, %v793
    %v813 = vpack.c.b16 %v796, %v795
    %v814 = vpack.c.b16 %v798, %v797
    %831 = vmatpush.bf16.msra.mxu0 %v806
    %832 = vmatpush.bf16.msra.mxu0 %v805
    %833 = vmatpush.bf16.msra.mxu0 %v804
    %834 = vmatpush.bf16.msra.mxu0 %v803
    %835 = vmatpush.bf16.msra.mxu0 %v802
    %836 = vmatpush.bf16.msra.mxu0 %v801
    %837 = vmatpush.bf16.msra.mxu0 %v800
    %838 = vmatpush.bf16.msra.mxu0 %v799
    %839 = vmatmul.bf16.gmra.mxu0 %v697
    %v840 = vpop.f32.mrf.mxu0
    %v841 = vadd.f32 %v733, %v840
    %v842 = vpop.f32.mrf.mxu0
    %843 = vdwg.mxu0
    %844 = vmatpush.bf16.msra.mxu0 %v814
    %845 = vmatpush.bf16.msra.mxu0 %v813
    %846 = vmatpush.bf16.msra.mxu0 %v812
    %847 = vmatpush.bf16.msra.mxu0 %v811
    %848 = vmatpush.bf16.msra.mxu0 %v810
    %849 = vmatpush.bf16.msra.mxu0 %v809
    %850 = vmatpush.bf16.msra.mxu0 %v808
    %851 = vmatpush.bf16.msra.mxu0 %v807
    %852 = vmatmul.bf16.gmra.mxu0 %v698
    %v853 = vpop.f32.mrf.mxu0
    %v854 = vadd.f32 %v841, %v853
    %v855 = vpop.f32.mrf.mxu0
    %856 = vdwg.mxu0
    %v857 = vadd.f32 %v516, %v854
    %v858 = vld [vmem:[#allocation12] sm:$0x1]
    %v859 = vld [vmem:[#allocation13] sm:$0x1]
    %860 = vadd.xlane.f32.xlu0 %v857
    %v861 = vpop.xlane.xlu0 %860
    %v862 = vmul.f32 %v861, 0.015625
    %v863 = vmul.f32 %v857, %v857
    %864 = vadd.xlane.f32.xlu0 %v863
    %v865 = vpop.xlane.xlu0 %864
    %v866 = vmul.f32 %v865, 0.015625
    %v867 = vmul.f32 %v862, %v862
    %v868 = vsub.f32 %v866, %v867
    %v869 = vmax.f32 %v868, 0.0
    %v870 = vsub.f32 %v857, %v862
    %v871 = vadd.f32 %v869, 1e-05
    %v872 = vrsqrt.pop %v871
    %v873 = vmul.f32 %v872, %v871
    %v874 = vmul.f32 %v873, %v872
    %v875 = vmul.f32 0.5, %v874
    %v876 = vsub.f32 1.5, %v875
    %v877 = vmul.f32 %v872, %v876
    %vm878 = vweird.f32 %v871
    %vm879 = vweird.f32 %v872
    %vm880 = vmor %vm878, %vm879
    %v881 = vsel %vm880, %v872, %v877
    %v882 = vmul.f32 %v870, %v881
    %v884 = vperm.slane %v858, 0
    %v886 = vmul.f32 %v882, %v884
    %v888 = vperm.slane %v859, 0
    %v890 = vadd.f32 %v886, %v888
    %v891 = vlaneseq
    %v892 = vshrl.u32 %v891, 7
    %vm893 = vcmp.ge.s32.totalorder %v892, 0
    %vm894 = vcmp.lt.s32.totalorder %v892, 4
    %vm895 = vmand %vm893, %vm894
    %v896 = vsel %vm895, 1, 0
    %v897 = vcvt.s32.f32 %v896
    %v898 = vmul.f32 %v890, %v897
    %v899 = vrot.slane %v898, 4
    %v900 = vadd.f32 %v898, %v899
    %v901 = vrot.slane %v900, 2
    %v902 = vadd.f32 %v900, %v901
    %v903 = vrot.slane %v902, 1
    %v904 = vadd.f32 %v902, %v903
    %v905 = vmul.f32 %v904, 0.25
    %v906 = vld [vmem:[%s13] sm:$0xff]
    %v907 = vld [vmem:[%s13 + $0x8] sm:$0xff]
    %v908 = vld [vmem:[%s13 + $0x10] sm:$0xff]
    %v909 = vld [vmem:[%s13 + $0x18] sm:$0xff]
    %v910 = vld [vmem:[%s13 + $0x20] sm:$0xff]
    %v911 = vld [vmem:[%s13 + $0x28] sm:$0xff]
    %v912 = vld [vmem:[%s13 + $0x30] sm:$0xff]
    %v913 = vld [vmem:[%s13 + $0x38] sm:$0xff]
    %v914 = vld [vmem:[%s13 + $0x40] sm:$0xff]
    %v915 = vld [vmem:[%s13 + $0x48] sm:$0xff]
    %v916 = vld [vmem:[%s13 + $0x50] sm:$0xff]
    %v917 = vld [vmem:[%s13 + $0x58] sm:$0xff]
    %v918 = vld [vmem:[%s13 + $0x60] sm:$0xff]
    %v919 = vld [vmem:[%s13 + $0x68] sm:$0xff]
    %v920 = vld [vmem:[%s13 + $0x70] sm:$0xff]
    %v921 = vld [vmem:[%s13 + $0x78] sm:$0xff]
    %922 = vmatpush.msra.mxu0 %v921
    %923 = vmatpush.msra.mxu0 %v920
    %924 = vmatpush.msra.mxu0 %v919
    %925 = vmatpush.msra.mxu0 %v918
    %926 = vmatpush.msra.mxu0 %v917
    %927 = vmatpush.msra.mxu0 %v916
    %928 = vmatpush.msra.mxu0 %v915
    %929 = vmatpush.msra.mxu0 %v914
    %930 = vmatpush.msra.mxu0 %v913
    %931 = vmatpush.msra.mxu0 %v912
    %932 = vmatpush.msra.mxu0 %v911
    %933 = vmatpush.msra.mxu0 %v910
    %934 = vmatpush.msra.mxu0 %v909
    %935 = vmatpush.msra.mxu0 %v908
    %936 = vmatpush.msra.mxu0 %v907
    %937 = vmatpush.msra.mxu0 %v906
    %938 = vmatmul.f32.gmra.mxu0 %v905
    %v939 = vpop.f32.mrf.mxu0
    %v940 = vadd.f32 0.0, %v939
    %941 = vdwg.mxu0
    %942 = vst [vmem:[%s14] sm:$0x1] %v940
    %vm943 = vcmp.ge.s32.totalorder %v892, 4
    %vm944 = vcmp.lt.s32.totalorder %v892, 8
    %vm945 = vmand %vm943, %vm944
    %v946 = vsel %vm945, 1, 0
    %v947 = vcvt.s32.f32 %v946
    %v948 = vmul.f32 %v890, %v947
    %v949 = vrot.slane %v948, 4
    %v950 = vadd.f32 %v948, %v949
    %v951 = vrot.slane %v950, 2
    %v952 = vadd.f32 %v950, %v951
    %v953 = vrot.slane %v952, 1
    %v954 = vadd.f32 %v952, %v953
    %v955 = vmul.f32 %v954, 0.25
    %v956 = vld [vmem:[%s13] sm:$0xff]
    %v957 = vld [vmem:[%s13 + $0x8] sm:$0xff]
    %v958 = vld [vmem:[%s13 + $0x10] sm:$0xff]
    %v959 = vld [vmem:[%s13 + $0x18] sm:$0xff]
    %v960 = vld [vmem:[%s13 + $0x20] sm:$0xff]
    %v961 = vld [vmem:[%s13 + $0x28] sm:$0xff]
    %v962 = vld [vmem:[%s13 + $0x30] sm:$0xff]
    %v963 = vld [vmem:[%s13 + $0x38] sm:$0xff]
    %v964 = vld [vmem:[%s13 + $0x40] sm:$0xff]
    %v965 = vld [vmem:[%s13 + $0x48] sm:$0xff]
    %v966 = vld [vmem:[%s13 + $0x50] sm:$0xff]
    %v967 = vld [vmem:[%s13 + $0x58] sm:$0xff]
    %v968 = vld [vmem:[%s13 + $0x60] sm:$0xff]
    %v969 = vld [vmem:[%s13 + $0x68] sm:$0xff]
    %v970 = vld [vmem:[%s13 + $0x70] sm:$0xff]
    %v971 = vld [vmem:[%s13 + $0x78] sm:$0xff]
    %972 = vmatpush.msra.mxu0 %v971
    %973 = vmatpush.msra.mxu0 %v970
    %974 = vmatpush.msra.mxu0 %v969
    %975 = vmatpush.msra.mxu0 %v968
    %976 = vmatpush.msra.mxu0 %v967
    %977 = vmatpush.msra.mxu0 %v966
    %978 = vmatpush.msra.mxu0 %v965
    %979 = vmatpush.msra.mxu0 %v964
    %980 = vmatpush.msra.mxu0 %v963
    %981 = vmatpush.msra.mxu0 %v962
    %982 = vmatpush.msra.mxu0 %v961
    %983 = vmatpush.msra.mxu0 %v960
    %984 = vmatpush.msra.mxu0 %v959
    %985 = vmatpush.msra.mxu0 %v958
    %986 = vmatpush.msra.mxu0 %v957
    %987 = vmatpush.msra.mxu0 %v956
    %988 = vmatmul.f32.gmra.mxu0 %v955
    %v989 = vpop.f32.mrf.mxu0
    %v990 = vadd.f32 0.0, %v989
    %991 = vdwg.mxu0
    %992 = vst [vmem:[%s14 + $0x1] sm:$0x1] %v990
    // Predicated region
    $region90: #{transwcd_single_forward.7} parent=1 // pred_check
      _
    $region91: #{transwcd_single_forward.7} parent=1 // pred_check_branch
      %994 = sbr.rel (0) target = $region93
    $region92: #{transwcd_single_forward.7} parent=1 // pred_region
      _
    $region93: #{transwcd_single_forward.7} parent=1 // pred_fallthru
      _
    // Predicated region
    $region94: #{transwcd_single_forward.7} parent=1 // pred_check
      _
    $region95: #{transwcd_single_forward.7} parent=1 // pred_check_branch
      %996 = sbr.rel (0) target = $region97
    $region96: #{transwcd_single_forward.7} parent=1 // pred_region
      _
    $region97: #{transwcd_single_forward.7} parent=1 // pred_fallthru
      _
    %997 = vsyncpa [#allocation3], 1
    %998 = vsyncpa [#allocation5], 1
    %999 = vsyncpa [#allocation8], 1
    %1000 = vsyncpa [#allocation11], 1
    %1001 = vsyncpa [#allocation14], 1

</llo_original>
